<compile_context>
chip_gen: v7x
topology: tpu7x:2x2x1
jax: 0.10.0
libtpu: 0.0.40
codegen_flags: <defaults>
</compile_context>

<pallas_src>
import functools

import numpy as np

import jax
import jax.numpy as jnp
from jax.experimental import pallas as pl
from jax.experimental.pallas import tpu as pltpu


def _relative_position_index(window_size):
    """Replicates the PyTorch buffer construction exactly (static, numpy)."""
    wd, wh, ww = window_size
    coords = np.stack(
        np.meshgrid(np.arange(wd), np.arange(wh), np.arange(ww), indexing="ij")
    )                                            # (3, wd, wh, ww)
    coords_flat = coords.reshape(3, -1)          # (3, Nw)
    rel = coords_flat[:, :, None] - coords_flat[:, None, :]   # (3, Nw, Nw)
    rel = rel.transpose(1, 2, 0).astype(np.int64)             # (Nw, Nw, 3)
    rel[:, :, 0] += wd - 1
    rel[:, :, 1] += wh - 1
    rel[:, :, 2] += ww - 1
    rel[:, :, 0] *= (2 * wh - 1) * (2 * ww - 1)
    rel[:, :, 1] *= (2 * ww - 1)
    return rel.sum(-1)                           # (Nw, Nw)


def _pick_window_batch(batch, nw, max_bw=8):
    """Pick how many windows to process per grid step.

    Prefers (a) keeping >= 2 grid steps (so v7x's two TensorCores both get work),
    (b) a multiple of nw (static mask index inside the kernel), (c) as large as
    possible to amortize per-step overhead.
    """
    divs = [d for d in range(1, min(batch, max_bw) + 1) if batch % d == 0]
    cands = [d for d in divs if batch // d >= 2] or divs
    mult = [d for d in cands if d % nw == 0]
    return max(mult or cands)


def _window_attention_kernel(x_ref, wqkv_ref, bqkv_ref, bias_ref, wp_ref, bp_ref,
                             o_ref, *, num_heads, nw, bw):
    """One grid step == `bw` attention windows.

    Blocks: x:(bw,N,C)  Wqkv:(C,3C)  bqkv:(1,3C)f32  bias:(nw*nh,N,N)
            WpT:(C,C)   bp:(1,C)f32  out:(bw,N,C)
    """
    n = x_ref.shape[1]
    c = x_ref.shape[2]
    hd = c // num_heads
    cdt = x_ref.dtype                       # MXU operand dtype (bf16 in practice)

    # ---- fused QKV projection for all windows & heads at once (full MXU) ----
    x2 = x_ref[...].reshape(bw * n, c)                               # (bw*N, C)
    qkv = jnp.dot(x2, wqkv_ref[...], preferred_element_type=jnp.float32)
    qkv = (qkv + bqkv_ref[...]).astype(cdt)                          # (bw*N, 3C)

    i = pl.program_id(0)
    per_window = []
    # NOTE: static unroll is fine for small bw*num_heads; for many heads switch
    # to lax.fori_loop(..., unroll=True) to bound live ranges (see review #9).
    for w in range(bw):
        rows = slice(w * n, (w + 1) * n)
        head_outs = []
        for h in range(num_heads):
            q = qkv[rows, 0 * c + h * hd: 0 * c + (h + 1) * hd]      # (N, hd)
            k = qkv[rows, 1 * c + h * hd: 1 * c + (h + 1) * hd]
            v = qkv[rows, 2 * c + h * hd: 2 * c + (h + 1) * hd]

            # scores; `scale` already folded into the q columns of Wqkv.
            attn = jax.lax.dot_general(
                q, k, (((1,), (1,)), ((), ())),
                preferred_element_type=jnp.float32)                  # (N, N) f32

            # combined relative-position bias + shifted-window mask (one add).
            if bw % nw == 0:
                bidx = (w % nw) * num_heads + h                      # static
            else:
                bidx = ((i * bw + w) % nw) * num_heads + h           # dynamic
            attn = attn + bias_ref[bidx].astype(jnp.float32)

            # numerically stable softmax; normalization folded after p @ v.
            attn = attn - jnp.max(attn, axis=-1, keepdims=True)
            p = jnp.exp(attn)
            l = jnp.sum(p, axis=-1, keepdims=True)                   # (N, 1)
            ov = jnp.dot(p.astype(cdt), v,
                         preferred_element_type=jnp.float32)         # (N, hd)
            ov = ov * pl.reciprocal(l, approx=True)
            head_outs.append(ov)
        per_window.append(jnp.concatenate(head_outs, axis=-1))       # (N, C) f32

    # ---- single output projection over all windows (K = C contraction) ------
    hcat = jnp.concatenate(per_window, axis=0).astype(cdt)           # (bw*N, C)
    y = jnp.dot(hcat, wp_ref[...], preferred_element_type=jnp.float32)
    y = y + bp_ref[...]                                              # (1, C) f32
    o_ref[...] = y.reshape(bw, n, c).astype(o_ref.dtype)


def window_attention(x, qkv_weight, qkv_bias, proj_weight, proj_bias,
                     rel_pos_bias_table, *, window_size, num_heads, mask=None,
                     window_batch=None, compute_dtype=None):
    """Forward of WindowAttention.

    x:                  (B, N, C) windows (N = prod(window_size)); window b uses
                        mask[b % nw] (i.e. x flattened as (B//nw, nw, ...)).
    qkv_weight:         (3C, C) torch nn.Linear layout (y = x @ W.T)
    qkv_bias:           (3C,) or None
    proj_weight:        (C, C)
    proj_bias:          (C,)
    rel_pos_bias_table: ((2Wd-1)(2Wh-1)(2Ww-1), num_heads)
    mask:               (nw, N, N) additive mask or None
    returns (B, N, C) with x's dtype.
    """
    B, N, C = x.shape
    assert C % num_heads == 0
    hd = C // num_heads
    scale = float(hd) ** (-0.5)
    out_dtype = x.dtype
    cdt = compute_dtype or x.dtype          # MXU operand dtype (bf16 recommended)

    # ---------- parameter-side prep (tiny, one-time, XLA) --------------------
    rel_idx = _relative_position_index(window_size)
    rpb = jnp.take(rel_pos_bias_table.astype(jnp.float32),
                   jnp.asarray(rel_idx[:N, :N].reshape(-1)), axis=0)
    rpb = rpb.reshape(N, N, num_heads).transpose(2, 0, 1)            # (nh, N, N)

    if mask is None:
        nw = 1
        mask_f = jnp.zeros((1, N, N), jnp.float32)
    else:
        nw = mask.shape[0]
        assert B % nw == 0, "window b must use mask[b % nw]"
        mask_f = mask.astype(jnp.float32)

    # Combined additive bias per (mask-window, head): one resident tensor,
    # one add in-kernel.  bf16 is plenty for a bias term.
    bias = (mask_f[:, None, :, :] + rpb[None, :, :, :]).reshape(
        nw * num_heads, N, N).astype(cdt)

    # QKV weight as one lane-dense (C, 3C) block; fold `scale` into the q part.
    col_scale = jnp.concatenate([jnp.full((C,), scale, jnp.float32),
                                 jnp.ones((2 * C,), jnp.float32)])
    wqkv_t = (jnp.transpose(qkv_weight).astype(jnp.float32)
              * col_scale[None, :]).astype(cdt)                      # (C, 3C)
    if qkv_bias is None:
        bqkv = jnp.zeros((1, 3 * C), jnp.float32)
    else:
        bqkv = (qkv_bias.astype(jnp.float32) * col_scale).reshape(1, 3 * C)

    wp_t = jnp.transpose(proj_weight).astype(cdt)                    # (C, C)
    bp = proj_bias.astype(jnp.float32).reshape(1, C)

    x = x.astype(cdt)

    bw = window_batch or _pick_window_batch(B, nw)
    assert B % bw == 0
    grid = (B // bw,)

    kernel = functools.partial(_window_attention_kernel,
                               num_heads=num_heads, nw=nw, bw=bw)
    const2 = lambda i: (0, 0)
    const3 = lambda i: (0, 0, 0)

    return pl.pallas_call(
        kernel,
        out_shape=jax.ShapeDtypeStruct((B, N, C), out_dtype),
        grid_spec=pltpu.PrefetchScalarGridSpec(
            num_scalar_prefetch=0,
            grid=grid,
            in_specs=[
                pl.BlockSpec((bw, N, C), lambda i: (i, 0, 0)),            # x windows
                pl.BlockSpec((C, 3 * C), const2),                         # Wqkv (resident)
                pl.BlockSpec((1, 3 * C), const2),                         # bqkv
                pl.BlockSpec((nw * num_heads, N, N), const3),             # rpb+mask bias
                pl.BlockSpec((C, C), const2),                             # WpT (resident)
                pl.BlockSpec((1, C), const2),                             # bp
            ],
            out_specs=pl.BlockSpec((bw, N, C), lambda i: (i, 0, 0)),
        ),
        compiler_params=pltpu.CompilerParams(
            dimension_semantics=("parallel",),
            vmem_limit_bytes=64 * 1024 * 1024),
    )(x, wqkv_t, bqkv, bias, wp_t, bp)


if __name__ == "__main__":
    key = jax.random.PRNGKey(0)
    ks = jax.random.split(key, 5)

    num_heads = 4
    window_size = (4, 4, 4)
    C = 128
    N = window_size[0] * window_size[1] * window_size[2]      # 64
    nw = 4                                                    # distinct masks
    B = 2 * nw                                                # 8 windows

    x_f32 = jax.random.normal(ks[0], (B, N, C), dtype=jnp.float32)
    x = x_f32.astype(jnp.bfloat16)                            # bf16 activations

    bound = 1.0 / (C ** 0.5)
    qkv_weight = jax.random.uniform(ks[1], (3 * C, C), minval=-bound,
                                    maxval=bound, dtype=jnp.float32)
    proj_weight = jax.random.uniform(ks[2], (C, C), minval=-bound,
                                     maxval=bound, dtype=jnp.float32)
    proj_bias = jax.random.uniform(ks[3], (C,), minval=-bound,
                                   maxval=bound, dtype=jnp.float32)
    table_len = ((2 * window_size[0] - 1) * (2 * window_size[1] - 1)
                 * (2 * window_size[2] - 1))
    rel_table = 0.02 * jax.random.normal(ks[4], (table_len, num_heads),
                                         dtype=jnp.float32)

    # Swin-style additive shifted-window mask: 0 within a group, -100 across.
    groups = (jnp.arange(N)[None, :] + 5 * jnp.arange(nw)[:, None]) // 16
    mask = jnp.where(groups[:, :, None] == groups[:, None, :],
                     0.0, -100.0).astype(jnp.float32)

    out = window_attention(x, qkv_weight, None, proj_weight, proj_bias,
                           rel_table, window_size=window_size,
                           num_heads=num_heads, mask=mask)
    out = jax.block_until_ready(out)
    assert out.shape == (B, N, C)

    # ---------------- pure-JAX f32 reference (faithful to the PyTorch fwd) ---
    hd = C // num_heads
    scale = hd ** (-0.5)
    rel_idx = _relative_position_index(window_size)
    xr = x.astype(jnp.float32)

    qkv = xr @ qkv_weight.T                                       # bias=False
    qkv = qkv.reshape(B, N, 3, num_heads, hd).transpose(2, 0, 3, 1, 4)
    q, k, v = qkv[0] * scale, qkv[1], qkv[2]
    attn = jnp.einsum("bhnd,bhmd->bhnm", q, k)
    rpb = jnp.take(rel_table, jnp.asarray(rel_idx[:N, :N].reshape(-1)), axis=0)
    rpb = rpb.reshape(N, N, num_heads).transpose(2, 0, 1)
    attn = attn + rpb[None]
    attn = attn.reshape(B // nw, nw, num_heads, N, N) + mask[None, :, None]
    attn = attn.reshape(B, num_heads, N, N)
    attn = jax.nn.softmax(attn, axis=-1)
    ref = jnp.einsum("bhnm,bhmd->bhnd", attn, v)
    ref = ref.transpose(0, 2, 1, 3).reshape(B, N, C)
    ref = ref @ proj_weight.T + proj_bias

    out_f32 = out.astype(jnp.float32)
    max_err = float(jnp.max(jnp.abs(out_f32 - ref)))
    # bf16 MXU operands + bf16 output => looser tolerance than pure-f32.
    assert jnp.allclose(out_f32, ref, atol=2e-2, rtol=2e-2), max_err

    print("KERNEL_OK")
</pallas_src>

<mosaic_0001>
module attributes {stable_mosaic.version = 11 : i64} {
  func.func @_window_attention_kernel(%arg0: i32, %arg1: memref<4x64x128xbf16, #tpu.memory_space<vmem>>, %arg2: memref<128x384xbf16, #tpu.memory_space<vmem>>, %arg3: memref<1x384xf32, #tpu.memory_space<vmem>>, %arg4: memref<16x64x64xbf16, #tpu.memory_space<vmem>>, %arg5: memref<128x128xbf16, #tpu.memory_space<vmem>>, %arg6: memref<1x128xf32, #tpu.memory_space<vmem>>, %arg7: memref<4x64x128xbf16, #tpu.memory_space<vmem>>) attributes {dimension_semantics = [#tpu.dimension_semantics<parallel>], iteration_bounds = array<i64: 2>, scalar_prefetch = 0 : i64, scratch_operands = 0 : i64, tpu.core_type = #tpu.core_type<tc>, window_params = [{transform_indices = @transform_0, window_bounds = array<i64: 4, 64, 128>}, {pipeline_mode = #tpu.pipeline_mode<synchronous>, transform_indices = @transform_1, window_bounds = array<i64: 128, 384>}, {pipeline_mode = #tpu.pipeline_mode<synchronous>, transform_indices = @transform_2, window_bounds = array<i64: 1, 384>}, {pipeline_mode = #tpu.pipeline_mode<synchronous>, transform_indices = @transform_3, window_bounds = array<i64: 16, 64, 64>}, {pipeline_mode = #tpu.pipeline_mode<synchronous>, transform_indices = @transform_4, window_bounds = array<i64: 128, 128>}, {pipeline_mode = #tpu.pipeline_mode<synchronous>, transform_indices = @transform_5, window_bounds = array<i64: 1, 128>}, {transform_indices = @transform_6, window_bounds = array<i64: 4, 64, 128>}]} {
    %c0 = arith.constant 0 : index
    %c0_0 = arith.constant 0 : index
    %c0_1 = arith.constant 0 : index
    %0 = vector.load %arg1[%c0, %c0_0, %c0_1] : memref<4x64x128xbf16, #tpu.memory_space<vmem>>, vector<4x64x128xbf16>
    %1 = vector.shape_cast %0 : vector<4x64x128xbf16> to vector<256x128xbf16>
    %c0_2 = arith.constant 0 : index
    %c0_3 = arith.constant 0 : index
    %2 = vector.load %arg2[%c0_2, %c0_3] : memref<128x384xbf16, #tpu.memory_space<vmem>>, vector<128x384xbf16>
    %cst = arith.constant dense<0.000000e+00> : vector<256x384xf32>
    %3 = tpu.matmul %1, %2, %cst {dimension_numbers = #tpu.dot_dimension_numbers<[1], [0], [0], [1], [0, 0, 1, 1], [], []>} : vector<256x128xbf16>, vector<128x384xbf16>, vector<256x384xf32> -> vector<256x384xf32>
    %c0_4 = arith.constant 0 : index
    %c0_5 = arith.constant 0 : index
    %4 = vector.load %arg3[%c0_4, %c0_5] : memref<1x384xf32, #tpu.memory_space<vmem>>, vector<1x384xf32>
    %5 = vector.broadcast %4 : vector<1x384xf32> to vector<256x384xf32>
    %6 = arith.addf %3, %5 : vector<256x384xf32>
    %7 = arith.truncf %6 : vector<256x384xf32> to vector<256x384xbf16>
    %8 = vector.extract_strided_slice %7 {offsets = [0, 0], sizes = [64, 32], strides = [1, 1]} : vector<256x384xbf16> to vector<64x32xbf16>
    %9 = vector.extract_strided_slice %7 {offsets = [0, 128], sizes = [64, 32], strides = [1, 1]} : vector<256x384xbf16> to vector<64x32xbf16>
    %10 = vector.extract_strided_slice %7 {offsets = [0, 256], sizes = [64, 32], strides = [1, 1]} : vector<256x384xbf16> to vector<64x32xbf16>
    %cst_6 = arith.constant dense<0.000000e+00> : vector<64x64xf32>
    %11 = tpu.matmul %8, %9, %cst_6 {dimension_numbers = #tpu.dot_dimension_numbers<[1], [1], [0], [0], [0, 0, 1, 0], [], []>} : vector<64x32xbf16>, vector<64x32xbf16>, vector<64x64xf32> -> vector<64x64xf32>
    %c0_7 = arith.constant 0 : index
    %c0_8 = arith.constant 0 : index
    %c0_9 = arith.constant 0 : index
    %12 = vector.load %arg4[%c0_7, %c0_8, %c0_9] : memref<16x64x64xbf16, #tpu.memory_space<vmem>>, vector<1x64x64xbf16>
    %13 = vector.shape_cast %12 : vector<1x64x64xbf16> to vector<64x64xbf16>
    %14 = arith.extf %13 : vector<64x64xbf16> to vector<64x64xf32>
    %15 = arith.addf %11, %14 : vector<64x64xf32>
    %cst_10 = arith.constant dense<0xFF800000> : vector<64xf32>
    %16 = vector.multi_reduction <maximumf>, %15, %cst_10 [1] : vector<64x64xf32> to vector<64xf32>
    %17 = vector.shape_cast %16 : vector<64xf32> to vector<64x1xf32>
    %18 = vector.broadcast %17 : vector<64x1xf32> to vector<64x64xf32>
    %19 = arith.subf %15, %18 : vector<64x64xf32>
    %20 = math.exp %19 : vector<64x64xf32>
    %cst_11 = arith.constant dense<0.000000e+00> : vector<64xf32>
    %21 = vector.multi_reduction <add>, %20, %cst_11 [1] : vector<64x64xf32> to vector<64xf32>
    %22 = vector.shape_cast %21 : vector<64xf32> to vector<64x1xf32>
    %23 = arith.truncf %20 : vector<64x64xf32> to vector<64x64xbf16>
    %cst_12 = arith.constant dense<0.000000e+00> : vector<64x32xf32>
    %24 = tpu.matmul %23, %10, %cst_12 {dimension_numbers = #tpu.dot_dimension_numbers<[1], [0], [0], [1], [0, 0, 1, 1], [], []>} : vector<64x64xbf16>, vector<64x32xbf16>, vector<64x32xf32> -> vector<64x32xf32>
    %25 = tpu.reciprocal %22 {approx = true} : vector<64x1xf32> -> vector<64x1xf32>
    %26 = vector.broadcast %25 : vector<64x1xf32> to vector<64x32xf32>
    %27 = arith.mulf %24, %26 : vector<64x32xf32>
    %28 = vector.extract_strided_slice %7 {offsets = [0, 32], sizes = [64, 32], strides = [1, 1]} : vector<256x384xbf16> to vector<64x32xbf16>
    %29 = vector.extract_strided_slice %7 {offsets = [0, 160], sizes = [64, 32], strides = [1, 1]} : vector<256x384xbf16> to vector<64x32xbf16>
    %30 = vector.extract_strided_slice %7 {offsets = [0, 288], sizes = [64, 32], strides = [1, 1]} : vector<256x384xbf16> to vector<64x32xbf16>
    %cst_13 = arith.constant dense<0.000000e+00> : vector<64x64xf32>
    %31 = tpu.matmul %28, %29, %cst_13 {dimension_numbers = #tpu.dot_dimension_numbers<[1], [1], [0], [0], [0, 0, 1, 0], [], []>} : vector<64x32xbf16>, vector<64x32xbf16>, vector<64x64xf32> -> vector<64x64xf32>
    %c1 = arith.constant 1 : index
    %c0_14 = arith.constant 0 : index
    %c0_15 = arith.constant 0 : index
    %32 = vector.load %arg4[%c1, %c0_14, %c0_15] : memref<16x64x64xbf16, #tpu.memory_space<vmem>>, vector<1x64x64xbf16>
    %33 = vector.shape_cast %32 : vector<1x64x64xbf16> to vector<64x64xbf16>
    %34 = arith.extf %33 : vector<64x64xbf16> to vector<64x64xf32>
    %35 = arith.addf %31, %34 : vector<64x64xf32>
    %cst_16 = arith.constant dense<0xFF800000> : vector<64xf32>
    %36 = vector.multi_reduction <maximumf>, %35, %cst_16 [1] : vector<64x64xf32> to vector<64xf32>
    %37 = vector.shape_cast %36 : vector<64xf32> to vector<64x1xf32>
    %38 = vector.broadcast %37 : vector<64x1xf32> to vector<64x64xf32>
    %39 = arith.subf %35, %38 : vector<64x64xf32>
    %40 = math.exp %39 : vector<64x64xf32>
    %cst_17 = arith.constant dense<0.000000e+00> : vector<64xf32>
    %41 = vector.multi_reduction <add>, %40, %cst_17 [1] : vector<64x64xf32> to vector<64xf32>
    %42 = vector.shape_cast %41 : vector<64xf32> to vector<64x1xf32>
    %43 = arith.truncf %40 : vector<64x64xf32> to vector<64x64xbf16>
    %cst_18 = arith.constant dense<0.000000e+00> : vector<64x32xf32>
    %44 = tpu.matmul %43, %30, %cst_18 {dimension_numbers = #tpu.dot_dimension_numbers<[1], [0], [0], [1], [0, 0, 1, 1], [], []>} : vector<64x64xbf16>, vector<64x32xbf16>, vector<64x32xf32> -> vector<64x32xf32>
    %45 = tpu.reciprocal %42 {approx = true} : vector<64x1xf32> -> vector<64x1xf32>
    %46 = vector.broadcast %45 : vector<64x1xf32> to vector<64x32xf32>
    %47 = arith.mulf %44, %46 : vector<64x32xf32>
    %48 = vector.extract_strided_slice %7 {offsets = [0, 64], sizes = [64, 32], strides = [1, 1]} : vector<256x384xbf16> to vector<64x32xbf16>
    %49 = vector.extract_strided_slice %7 {offsets = [0, 192], sizes = [64, 32], strides = [1, 1]} : vector<256x384xbf16> to vector<64x32xbf16>
    %50 = vector.extract_strided_slice %7 {offsets = [0, 320], sizes = [64, 32], strides = [1, 1]} : vector<256x384xbf16> to vector<64x32xbf16>
    %cst_19 = arith.constant dense<0.000000e+00> : vector<64x64xf32>
    %51 = tpu.matmul %48, %49, %cst_19 {dimension_numbers = #tpu.dot_dimension_numbers<[1], [1], [0], [0], [0, 0, 1, 0], [], []>} : vector<64x32xbf16>, vector<64x32xbf16>, vector<64x64xf32> -> vector<64x64xf32>
    %c2 = arith.constant 2 : index
    %c0_20 = arith.constant 0 : index
    %c0_21 = arith.constant 0 : index
    %52 = vector.load %arg4[%c2, %c0_20, %c0_21] : memref<16x64x64xbf16, #tpu.memory_space<vmem>>, vector<1x64x64xbf16>
    %53 = vector.shape_cast %52 : vector<1x64x64xbf16> to vector<64x64xbf16>
    %54 = arith.extf %53 : vector<64x64xbf16> to vector<64x64xf32>
    %55 = arith.addf %51, %54 : vector<64x64xf32>
    %cst_22 = arith.constant dense<0xFF800000> : vector<64xf32>
    %56 = vector.multi_reduction <maximumf>, %55, %cst_22 [1] : vector<64x64xf32> to vector<64xf32>
    %57 = vector.shape_cast %56 : vector<64xf32> to vector<64x1xf32>
    %58 = vector.broadcast %57 : vector<64x1xf32> to vector<64x64xf32>
    %59 = arith.subf %55, %58 : vector<64x64xf32>
    %60 = math.exp %59 : vector<64x64xf32>
    %cst_23 = arith.constant dense<0.000000e+00> : vector<64xf32>
    %61 = vector.multi_reduction <add>, %60, %cst_23 [1] : vector<64x64xf32> to vector<64xf32>
    %62 = vector.shape_cast %61 : vector<64xf32> to vector<64x1xf32>
    %63 = arith.truncf %60 : vector<64x64xf32> to vector<64x64xbf16>
    %cst_24 = arith.constant dense<0.000000e+00> : vector<64x32xf32>
    %64 = tpu.matmul %63, %50, %cst_24 {dimension_numbers = #tpu.dot_dimension_numbers<[1], [0], [0], [1], [0, 0, 1, 1], [], []>} : vector<64x64xbf16>, vector<64x32xbf16>, vector<64x32xf32> -> vector<64x32xf32>
    %65 = tpu.reciprocal %62 {approx = true} : vector<64x1xf32> -> vector<64x1xf32>
    %66 = vector.broadcast %65 : vector<64x1xf32> to vector<64x32xf32>
    %67 = arith.mulf %64, %66 : vector<64x32xf32>
    %68 = vector.extract_strided_slice %7 {offsets = [0, 96], sizes = [64, 32], strides = [1, 1]} : vector<256x384xbf16> to vector<64x32xbf16>
    %69 = vector.extract_strided_slice %7 {offsets = [0, 224], sizes = [64, 32], strides = [1, 1]} : vector<256x384xbf16> to vector<64x32xbf16>
    %70 = vector.extract_strided_slice %7 {offsets = [0, 352], sizes = [64, 32], strides = [1, 1]} : vector<256x384xbf16> to vector<64x32xbf16>
    %cst_25 = arith.constant dense<0.000000e+00> : vector<64x64xf32>
    %71 = tpu.matmul %68, %69, %cst_25 {dimension_numbers = #tpu.dot_dimension_numbers<[1], [1], [0], [0], [0, 0, 1, 0], [], []>} : vector<64x32xbf16>, vector<64x32xbf16>, vector<64x64xf32> -> vector<64x64xf32>
    %c3 = arith.constant 3 : index
    %c0_26 = arith.constant 0 : index
    %c0_27 = arith.constant 0 : index
    %72 = vector.load %arg4[%c3, %c0_26, %c0_27] : memref<16x64x64xbf16, #tpu.memory_space<vmem>>, vector<1x64x64xbf16>
    %73 = vector.shape_cast %72 : vector<1x64x64xbf16> to vector<64x64xbf16>
    %74 = arith.extf %73 : vector<64x64xbf16> to vector<64x64xf32>
    %75 = arith.addf %71, %74 : vector<64x64xf32>
    %cst_28 = arith.constant dense<0xFF800000> : vector<64xf32>
    %76 = vector.multi_reduction <maximumf>, %75, %cst_28 [1] : vector<64x64xf32> to vector<64xf32>
    %77 = vector.shape_cast %76 : vector<64xf32> to vector<64x1xf32>
    %78 = vector.broadcast %77 : vector<64x1xf32> to vector<64x64xf32>
    %79 = arith.subf %75, %78 : vector<64x64xf32>
    %80 = math.exp %79 : vector<64x64xf32>
    %cst_29 = arith.constant dense<0.000000e+00> : vector<64xf32>
    %81 = vector.multi_reduction <add>, %80, %cst_29 [1] : vector<64x64xf32> to vector<64xf32>
    %82 = vector.shape_cast %81 : vector<64xf32> to vector<64x1xf32>
    %83 = arith.truncf %80 : vector<64x64xf32> to vector<64x64xbf16>
    %cst_30 = arith.constant dense<0.000000e+00> : vector<64x32xf32>
    %84 = tpu.matmul %83, %70, %cst_30 {dimension_numbers = #tpu.dot_dimension_numbers<[1], [0], [0], [1], [0, 0, 1, 1], [], []>} : vector<64x64xbf16>, vector<64x32xbf16>, vector<64x32xf32> -> vector<64x32xf32>
    %85 = tpu.reciprocal %82 {approx = true} : vector<64x1xf32> -> vector<64x1xf32>
    %86 = vector.broadcast %85 : vector<64x1xf32> to vector<64x32xf32>
    %87 = arith.mulf %84, %86 : vector<64x32xf32>
    %88 = tpu.concatenate %27, %47, %67, %87 in 1 : vector<64x32xf32>, vector<64x32xf32>, vector<64x32xf32>, vector<64x32xf32> -> vector<64x128xf32>
    %89 = vector.extract_strided_slice %7 {offsets = [64, 0], sizes = [64, 32], strides = [1, 1]} : vector<256x384xbf16> to vector<64x32xbf16>
    %90 = vector.extract_strided_slice %7 {offsets = [64, 128], sizes = [64, 32], strides = [1, 1]} : vector<256x384xbf16> to vector<64x32xbf16>
    %91 = vector.extract_strided_slice %7 {offsets = [64, 256], sizes = [64, 32], strides = [1, 1]} : vector<256x384xbf16> to vector<64x32xbf16>
    %cst_31 = arith.constant dense<0.000000e+00> : vector<64x64xf32>
    %92 = tpu.matmul %89, %90, %cst_31 {dimension_numbers = #tpu.dot_dimension_numbers<[1], [1], [0], [0], [0, 0, 1, 0], [], []>} : vector<64x32xbf16>, vector<64x32xbf16>, vector<64x64xf32> -> vector<64x64xf32>
    %c4 = arith.constant 4 : index
    %c0_32 = arith.constant 0 : index
    %c0_33 = arith.constant 0 : index
    %93 = vector.load %arg4[%c4, %c0_32, %c0_33] : memref<16x64x64xbf16, #tpu.memory_space<vmem>>, vector<1x64x64xbf16>
    %94 = vector.shape_cast %93 : vector<1x64x64xbf16> to vector<64x64xbf16>
    %95 = arith.extf %94 : vector<64x64xbf16> to vector<64x64xf32>
    %96 = arith.addf %92, %95 : vector<64x64xf32>
    %cst_34 = arith.constant dense<0xFF800000> : vector<64xf32>
    %97 = vector.multi_reduction <maximumf>, %96, %cst_34 [1] : vector<64x64xf32> to vector<64xf32>
    %98 = vector.shape_cast %97 : vector<64xf32> to vector<64x1xf32>
    %99 = vector.broadcast %98 : vector<64x1xf32> to vector<64x64xf32>
    %100 = arith.subf %96, %99 : vector<64x64xf32>
    %101 = math.exp %100 : vector<64x64xf32>
    %cst_35 = arith.constant dense<0.000000e+00> : vector<64xf32>
    %102 = vector.multi_reduction <add>, %101, %cst_35 [1] : vector<64x64xf32> to vector<64xf32>
    %103 = vector.shape_cast %102 : vector<64xf32> to vector<64x1xf32>
    %104 = arith.truncf %101 : vector<64x64xf32> to vector<64x64xbf16>
    %cst_36 = arith.constant dense<0.000000e+00> : vector<64x32xf32>
    %105 = tpu.matmul %104, %91, %cst_36 {dimension_numbers = #tpu.dot_dimension_numbers<[1], [0], [0], [1], [0, 0, 1, 1], [], []>} : vector<64x64xbf16>, vector<64x32xbf16>, vector<64x32xf32> -> vector<64x32xf32>
    %106 = tpu.reciprocal %103 {approx = true} : vector<64x1xf32> -> vector<64x1xf32>
    %107 = vector.broadcast %106 : vector<64x1xf32> to vector<64x32xf32>
    %108 = arith.mulf %105, %107 : vector<64x32xf32>
    %109 = vector.extract_strided_slice %7 {offsets = [64, 32], sizes = [64, 32], strides = [1, 1]} : vector<256x384xbf16> to vector<64x32xbf16>
    %110 = vector.extract_strided_slice %7 {offsets = [64, 160], sizes = [64, 32], strides = [1, 1]} : vector<256x384xbf16> to vector<64x32xbf16>
    %111 = vector.extract_strided_slice %7 {offsets = [64, 288], sizes = [64, 32], strides = [1, 1]} : vector<256x384xbf16> to vector<64x32xbf16>
    %cst_37 = arith.constant dense<0.000000e+00> : vector<64x64xf32>
    %112 = tpu.matmul %109, %110, %cst_37 {dimension_numbers = #tpu.dot_dimension_numbers<[1], [1], [0], [0], [0, 0, 1, 0], [], []>} : vector<64x32xbf16>, vector<64x32xbf16>, vector<64x64xf32> -> vector<64x64xf32>
    %c5 = arith.constant 5 : index
    %c0_38 = arith.constant 0 : index
    %c0_39 = arith.constant 0 : index
    %113 = vector.load %arg4[%c5, %c0_38, %c0_39] : memref<16x64x64xbf16, #tpu.memory_space<vmem>>, vector<1x64x64xbf16>
    %114 = vector.shape_cast %113 : vector<1x64x64xbf16> to vector<64x64xbf16>
    %115 = arith.extf %114 : vector<64x64xbf16> to vector<64x64xf32>
    %116 = arith.addf %112, %115 : vector<64x64xf32>
    %cst_40 = arith.constant dense<0xFF800000> : vector<64xf32>
    %117 = vector.multi_reduction <maximumf>, %116, %cst_40 [1] : vector<64x64xf32> to vector<64xf32>
    %118 = vector.shape_cast %117 : vector<64xf32> to vector<64x1xf32>
    %119 = vector.broadcast %118 : vector<64x1xf32> to vector<64x64xf32>
    %120 = arith.subf %116, %119 : vector<64x64xf32>
    %121 = math.exp %120 : vector<64x64xf32>
    %cst_41 = arith.constant dense<0.000000e+00> : vector<64xf32>
    %122 = vector.multi_reduction <add>, %121, %cst_41 [1] : vector<64x64xf32> to vector<64xf32>
    %123 = vector.shape_cast %122 : vector<64xf32> to vector<64x1xf32>
    %124 = arith.truncf %121 : vector<64x64xf32> to vector<64x64xbf16>
    %cst_42 = arith.constant dense<0.000000e+00> : vector<64x32xf32>
    %125 = tpu.matmul %124, %111, %cst_42 {dimension_numbers = #tpu.dot_dimension_numbers<[1], [0], [0], [1], [0, 0, 1, 1], [], []>} : vector<64x64xbf16>, vector<64x32xbf16>, vector<64x32xf32> -> vector<64x32xf32>
    %126 = tpu.reciprocal %123 {approx = true} : vector<64x1xf32> -> vector<64x1xf32>
    %127 = vector.broadcast %126 : vector<64x1xf32> to vector<64x32xf32>
    %128 = arith.mulf %125, %127 : vector<64x32xf32>
    %129 = vector.extract_strided_slice %7 {offsets = [64, 64], sizes = [64, 32], strides = [1, 1]} : vector<256x384xbf16> to vector<64x32xbf16>
    %130 = vector.extract_strided_slice %7 {offsets = [64, 192], sizes = [64, 32], strides = [1, 1]} : vector<256x384xbf16> to vector<64x32xbf16>
    %131 = vector.extract_strided_slice %7 {offsets = [64, 320], sizes = [64, 32], strides = [1, 1]} : vector<256x384xbf16> to vector<64x32xbf16>
    %cst_43 = arith.constant dense<0.000000e+00> : vector<64x64xf32>
    %132 = tpu.matmul %129, %130, %cst_43 {dimension_numbers = #tpu.dot_dimension_numbers<[1], [1], [0], [0], [0, 0, 1, 0], [], []>} : vector<64x32xbf16>, vector<64x32xbf16>, vector<64x64xf32> -> vector<64x64xf32>
    %c6 = arith.constant 6 : index
    %c0_44 = arith.constant 0 : index
    %c0_45 = arith.constant 0 : index
    %133 = vector.load %arg4[%c6, %c0_44, %c0_45] : memref<16x64x64xbf16, #tpu.memory_space<vmem>>, vector<1x64x64xbf16>
    %134 = vector.shape_cast %133 : vector<1x64x64xbf16> to vector<64x64xbf16>
    %135 = arith.extf %134 : vector<64x64xbf16> to vector<64x64xf32>
    %136 = arith.addf %132, %135 : vector<64x64xf32>
    %cst_46 = arith.constant dense<0xFF800000> : vector<64xf32>
    %137 = vector.multi_reduction <maximumf>, %136, %cst_46 [1] : vector<64x64xf32> to vector<64xf32>
    %138 = vector.shape_cast %137 : vector<64xf32> to vector<64x1xf32>
    %139 = vector.broadcast %138 : vector<64x1xf32> to vector<64x64xf32>
    %140 = arith.subf %136, %139 : vector<64x64xf32>
    %141 = math.exp %140 : vector<64x64xf32>
    %cst_47 = arith.constant dense<0.000000e+00> : vector<64xf32>
    %142 = vector.multi_reduction <add>, %141, %cst_47 [1] : vector<64x64xf32> to vector<64xf32>
    %143 = vector.shape_cast %142 : vector<64xf32> to vector<64x1xf32>
    %144 = arith.truncf %141 : vector<64x64xf32> to vector<64x64xbf16>
    %cst_48 = arith.constant dense<0.000000e+00> : vector<64x32xf32>
    %145 = tpu.matmul %144, %131, %cst_48 {dimension_numbers = #tpu.dot_dimension_numbers<[1], [0], [0], [1], [0, 0, 1, 1], [], []>} : vector<64x64xbf16>, vector<64x32xbf16>, vector<64x32xf32> -> vector<64x32xf32>
    %146 = tpu.reciprocal %143 {approx = true} : vector<64x1xf32> -> vector<64x1xf32>
    %147 = vector.broadcast %146 : vector<64x1xf32> to vector<64x32xf32>
    %148 = arith.mulf %145, %147 : vector<64x32xf32>
    %149 = vector.extract_strided_slice %7 {offsets = [64, 96], sizes = [64, 32], strides = [1, 1]} : vector<256x384xbf16> to vector<64x32xbf16>
    %150 = vector.extract_strided_slice %7 {offsets = [64, 224], sizes = [64, 32], strides = [1, 1]} : vector<256x384xbf16> to vector<64x32xbf16>
    %151 = vector.extract_strided_slice %7 {offsets = [64, 352], sizes = [64, 32], strides = [1, 1]} : vector<256x384xbf16> to vector<64x32xbf16>
    %cst_49 = arith.constant dense<0.000000e+00> : vector<64x64xf32>
    %152 = tpu.matmul %149, %150, %cst_49 {dimension_numbers = #tpu.dot_dimension_numbers<[1], [1], [0], [0], [0, 0, 1, 0], [], []>} : vector<64x32xbf16>, vector<64x32xbf16>, vector<64x64xf32> -> vector<64x64xf32>
    %c7 = arith.constant 7 : index
    %c0_50 = arith.constant 0 : index
    %c0_51 = arith.constant 0 : index
    %153 = vector.load %arg4[%c7, %c0_50, %c0_51] : memref<16x64x64xbf16, #tpu.memory_space<vmem>>, vector<1x64x64xbf16>
    %154 = vector.shape_cast %153 : vector<1x64x64xbf16> to vector<64x64xbf16>
    %155 = arith.extf %154 : vector<64x64xbf16> to vector<64x64xf32>
    %156 = arith.addf %152, %155 : vector<64x64xf32>
    %cst_52 = arith.constant dense<0xFF800000> : vector<64xf32>
    %157 = vector.multi_reduction <maximumf>, %156, %cst_52 [1] : vector<64x64xf32> to vector<64xf32>
    %158 = vector.shape_cast %157 : vector<64xf32> to vector<64x1xf32>
    %159 = vector.broadcast %158 : vector<64x1xf32> to vector<64x64xf32>
    %160 = arith.subf %156, %159 : vector<64x64xf32>
    %161 = math.exp %160 : vector<64x64xf32>
    %cst_53 = arith.constant dense<0.000000e+00> : vector<64xf32>
    %162 = vector.multi_reduction <add>, %161, %cst_53 [1] : vector<64x64xf32> to vector<64xf32>
    %163 = vector.shape_cast %162 : vector<64xf32> to vector<64x1xf32>
    %164 = arith.truncf %161 : vector<64x64xf32> to vector<64x64xbf16>
    %cst_54 = arith.constant dense<0.000000e+00> : vector<64x32xf32>
    %165 = tpu.matmul %164, %151, %cst_54 {dimension_numbers = #tpu.dot_dimension_numbers<[1], [0], [0], [1], [0, 0, 1, 1], [], []>} : vector<64x64xbf16>, vector<64x32xbf16>, vector<64x32xf32> -> vector<64x32xf32>
    %166 = tpu.reciprocal %163 {approx = true} : vector<64x1xf32> -> vector<64x1xf32>
    %167 = vector.broadcast %166 : vector<64x1xf32> to vector<64x32xf32>
    %168 = arith.mulf %165, %167 : vector<64x32xf32>
    %169 = tpu.concatenate %108, %128, %148, %168 in 1 : vector<64x32xf32>, vector<64x32xf32>, vector<64x32xf32>, vector<64x32xf32> -> vector<64x128xf32>
    %170 = vector.extract_strided_slice %7 {offsets = [128, 0], sizes = [64, 32], strides = [1, 1]} : vector<256x384xbf16> to vector<64x32xbf16>
    %171 = vector.extract_strided_slice %7 {offsets = [128, 128], sizes = [64, 32], strides = [1, 1]} : vector<256x384xbf16> to vector<64x32xbf16>
    %172 = vector.extract_strided_slice %7 {offsets = [128, 256], sizes = [64, 32], strides = [1, 1]} : vector<256x384xbf16> to vector<64x32xbf16>
    %cst_55 = arith.constant dense<0.000000e+00> : vector<64x64xf32>
    %173 = tpu.matmul %170, %171, %cst_55 {dimension_numbers = #tpu.dot_dimension_numbers<[1], [1], [0], [0], [0, 0, 1, 0], [], []>} : vector<64x32xbf16>, vector<64x32xbf16>, vector<64x64xf32> -> vector<64x64xf32>
    %c8 = arith.constant 8 : index
    %c0_56 = arith.constant 0 : index
    %c0_57 = arith.constant 0 : index
    %174 = vector.load %arg4[%c8, %c0_56, %c0_57] : memref<16x64x64xbf16, #tpu.memory_space<vmem>>, vector<1x64x64xbf16>
    %175 = vector.shape_cast %174 : vector<1x64x64xbf16> to vector<64x64xbf16>
    %176 = arith.extf %175 : vector<64x64xbf16> to vector<64x64xf32>
    %177 = arith.addf %173, %176 : vector<64x64xf32>
    %cst_58 = arith.constant dense<0xFF800000> : vector<64xf32>
    %178 = vector.multi_reduction <maximumf>, %177, %cst_58 [1] : vector<64x64xf32> to vector<64xf32>
    %179 = vector.shape_cast %178 : vector<64xf32> to vector<64x1xf32>
    %180 = vector.broadcast %179 : vector<64x1xf32> to vector<64x64xf32>
    %181 = arith.subf %177, %180 : vector<64x64xf32>
    %182 = math.exp %181 : vector<64x64xf32>
    %cst_59 = arith.constant dense<0.000000e+00> : vector<64xf32>
    %183 = vector.multi_reduction <add>, %182, %cst_59 [1] : vector<64x64xf32> to vector<64xf32>
    %184 = vector.shape_cast %183 : vector<64xf32> to vector<64x1xf32>
    %185 = arith.truncf %182 : vector<64x64xf32> to vector<64x64xbf16>
    %cst_60 = arith.constant dense<0.000000e+00> : vector<64x32xf32>
    %186 = tpu.matmul %185, %172, %cst_60 {dimension_numbers = #tpu.dot_dimension_numbers<[1], [0], [0], [1], [0, 0, 1, 1], [], []>} : vector<64x64xbf16>, vector<64x32xbf16>, vector<64x32xf32> -> vector<64x32xf32>
    %187 = tpu.reciprocal %184 {approx = true} : vector<64x1xf32> -> vector<64x1xf32>
    %188 = vector.broadcast %187 : vector<64x1xf32> to vector<64x32xf32>
    %189 = arith.mulf %186, %188 : vector<64x32xf32>
    %190 = vector.extract_strided_slice %7 {offsets = [128, 32], sizes = [64, 32], strides = [1, 1]} : vector<256x384xbf16> to vector<64x32xbf16>
    %191 = vector.extract_strided_slice %7 {offsets = [128, 160], sizes = [64, 32], strides = [1, 1]} : vector<256x384xbf16> to vector<64x32xbf16>
    %192 = vector.extract_strided_slice %7 {offsets = [128, 288], sizes = [64, 32], strides = [1, 1]} : vector<256x384xbf16> to vector<64x32xbf16>
    %cst_61 = arith.constant dense<0.000000e+00> : vector<64x64xf32>
    %193 = tpu.matmul %190, %191, %cst_61 {dimension_numbers = #tpu.dot_dimension_numbers<[1], [1], [0], [0], [0, 0, 1, 0], [], []>} : vector<64x32xbf16>, vector<64x32xbf16>, vector<64x64xf32> -> vector<64x64xf32>
    %c9 = arith.constant 9 : index
    %c0_62 = arith.constant 0 : index
    %c0_63 = arith.constant 0 : index
    %194 = vector.load %arg4[%c9, %c0_62, %c0_63] : memref<16x64x64xbf16, #tpu.memory_space<vmem>>, vector<1x64x64xbf16>
    %195 = vector.shape_cast %194 : vector<1x64x64xbf16> to vector<64x64xbf16>
    %196 = arith.extf %195 : vector<64x64xbf16> to vector<64x64xf32>
    %197 = arith.addf %193, %196 : vector<64x64xf32>
    %cst_64 = arith.constant dense<0xFF800000> : vector<64xf32>
    %198 = vector.multi_reduction <maximumf>, %197, %cst_64 [1] : vector<64x64xf32> to vector<64xf32>
    %199 = vector.shape_cast %198 : vector<64xf32> to vector<64x1xf32>
    %200 = vector.broadcast %199 : vector<64x1xf32> to vector<64x64xf32>
    %201 = arith.subf %197, %200 : vector<64x64xf32>
    %202 = math.exp %201 : vector<64x64xf32>
    %cst_65 = arith.constant dense<0.000000e+00> : vector<64xf32>
    %203 = vector.multi_reduction <add>, %202, %cst_65 [1] : vector<64x64xf32> to vector<64xf32>
    %204 = vector.shape_cast %203 : vector<64xf32> to vector<64x1xf32>
    %205 = arith.truncf %202 : vector<64x64xf32> to vector<64x64xbf16>
    %cst_66 = arith.constant dense<0.000000e+00> : vector<64x32xf32>
    %206 = tpu.matmul %205, %192, %cst_66 {dimension_numbers = #tpu.dot_dimension_numbers<[1], [0], [0], [1], [0, 0, 1, 1], [], []>} : vector<64x64xbf16>, vector<64x32xbf16>, vector<64x32xf32> -> vector<64x32xf32>
    %207 = tpu.reciprocal %204 {approx = true} : vector<64x1xf32> -> vector<64x1xf32>
    %208 = vector.broadcast %207 : vector<64x1xf32> to vector<64x32xf32>
    %209 = arith.mulf %206, %208 : vector<64x32xf32>
    %210 = vector.extract_strided_slice %7 {offsets = [128, 64], sizes = [64, 32], strides = [1, 1]} : vector<256x384xbf16> to vector<64x32xbf16>
    %211 = vector.extract_strided_slice %7 {offsets = [128, 192], sizes = [64, 32], strides = [1, 1]} : vector<256x384xbf16> to vector<64x32xbf16>
    %212 = vector.extract_strided_slice %7 {offsets = [128, 320], sizes = [64, 32], strides = [1, 1]} : vector<256x384xbf16> to vector<64x32xbf16>
    %cst_67 = arith.constant dense<0.000000e+00> : vector<64x64xf32>
    %213 = tpu.matmul %210, %211, %cst_67 {dimension_numbers = #tpu.dot_dimension_numbers<[1], [1], [0], [0], [0, 0, 1, 0], [], []>} : vector<64x32xbf16>, vector<64x32xbf16>, vector<64x64xf32> -> vector<64x64xf32>
    %c10 = arith.constant 10 : index
    %c0_68 = arith.constant 0 : index
    %c0_69 = arith.constant 0 : index
    %214 = vector.load %arg4[%c10, %c0_68, %c0_69] : memref<16x64x64xbf16, #tpu.memory_space<vmem>>, vector<1x64x64xbf16>
    %215 = vector.shape_cast %214 : vector<1x64x64xbf16> to vector<64x64xbf16>
    %216 = arith.extf %215 : vector<64x64xbf16> to vector<64x64xf32>
    %217 = arith.addf %213, %216 : vector<64x64xf32>
    %cst_70 = arith.constant dense<0xFF800000> : vector<64xf32>
    %218 = vector.multi_reduction <maximumf>, %217, %cst_70 [1] : vector<64x64xf32> to vector<64xf32>
    %219 = vector.shape_cast %218 : vector<64xf32> to vector<64x1xf32>
    %220 = vector.broadcast %219 : vector<64x1xf32> to vector<64x64xf32>
    %221 = arith.subf %217, %220 : vector<64x64xf32>
    %222 = math.exp %221 : vector<64x64xf32>
    %cst_71 = arith.constant dense<0.000000e+00> : vector<64xf32>
    %223 = vector.multi_reduction <add>, %222, %cst_71 [1] : vector<64x64xf32> to vector<64xf32>
    %224 = vector.shape_cast %223 : vector<64xf32> to vector<64x1xf32>
    %225 = arith.truncf %222 : vector<64x64xf32> to vector<64x64xbf16>
    %cst_72 = arith.constant dense<0.000000e+00> : vector<64x32xf32>
    %226 = tpu.matmul %225, %212, %cst_72 {dimension_numbers = #tpu.dot_dimension_numbers<[1], [0], [0], [1], [0, 0, 1, 1], [], []>} : vector<64x64xbf16>, vector<64x32xbf16>, vector<64x32xf32> -> vector<64x32xf32>
    %227 = tpu.reciprocal %224 {approx = true} : vector<64x1xf32> -> vector<64x1xf32>
    %228 = vector.broadcast %227 : vector<64x1xf32> to vector<64x32xf32>
    %229 = arith.mulf %226, %228 : vector<64x32xf32>
    %230 = vector.extract_strided_slice %7 {offsets = [128, 96], sizes = [64, 32], strides = [1, 1]} : vector<256x384xbf16> to vector<64x32xbf16>
    %231 = vector.extract_strided_slice %7 {offsets = [128, 224], sizes = [64, 32], strides = [1, 1]} : vector<256x384xbf16> to vector<64x32xbf16>
    %232 = vector.extract_strided_slice %7 {offsets = [128, 352], sizes = [64, 32], strides = [1, 1]} : vector<256x384xbf16> to vector<64x32xbf16>
    %cst_73 = arith.constant dense<0.000000e+00> : vector<64x64xf32>
    %233 = tpu.matmul %230, %231, %cst_73 {dimension_numbers = #tpu.dot_dimension_numbers<[1], [1], [0], [0], [0, 0, 1, 0], [], []>} : vector<64x32xbf16>, vector<64x32xbf16>, vector<64x64xf32> -> vector<64x64xf32>
    %c11 = arith.constant 11 : index
    %c0_74 = arith.constant 0 : index
    %c0_75 = arith.constant 0 : index
    %234 = vector.load %arg4[%c11, %c0_74, %c0_75] : memref<16x64x64xbf16, #tpu.memory_space<vmem>>, vector<1x64x64xbf16>
    %235 = vector.shape_cast %234 : vector<1x64x64xbf16> to vector<64x64xbf16>
    %236 = arith.extf %235 : vector<64x64xbf16> to vector<64x64xf32>
    %237 = arith.addf %233, %236 : vector<64x64xf32>
    %cst_76 = arith.constant dense<0xFF800000> : vector<64xf32>
    %238 = vector.multi_reduction <maximumf>, %237, %cst_76 [1] : vector<64x64xf32> to vector<64xf32>
    %239 = vector.shape_cast %238 : vector<64xf32> to vector<64x1xf32>
    %240 = vector.broadcast %239 : vector<64x1xf32> to vector<64x64xf32>
    %241 = arith.subf %237, %240 : vector<64x64xf32>
    %242 = math.exp %241 : vector<64x64xf32>
    %cst_77 = arith.constant dense<0.000000e+00> : vector<64xf32>
    %243 = vector.multi_reduction <add>, %242, %cst_77 [1] : vector<64x64xf32> to vector<64xf32>
    %244 = vector.shape_cast %243 : vector<64xf32> to vector<64x1xf32>
    %245 = arith.truncf %242 : vector<64x64xf32> to vector<64x64xbf16>
    %cst_78 = arith.constant dense<0.000000e+00> : vector<64x32xf32>
    %246 = tpu.matmul %245, %232, %cst_78 {dimension_numbers = #tpu.dot_dimension_numbers<[1], [0], [0], [1], [0, 0, 1, 1], [], []>} : vector<64x64xbf16>, vector<64x32xbf16>, vector<64x32xf32> -> vector<64x32xf32>
    %247 = tpu.reciprocal %244 {approx = true} : vector<64x1xf32> -> vector<64x1xf32>
    %248 = vector.broadcast %247 : vector<64x1xf32> to vector<64x32xf32>
    %249 = arith.mulf %246, %248 : vector<64x32xf32>
    %250 = tpu.concatenate %189, %209, %229, %249 in 1 : vector<64x32xf32>, vector<64x32xf32>, vector<64x32xf32>, vector<64x32xf32> -> vector<64x128xf32>
    %251 = vector.extract_strided_slice %7 {offsets = [192, 0], sizes = [64, 32], strides = [1, 1]} : vector<256x384xbf16> to vector<64x32xbf16>
    %252 = vector.extract_strided_slice %7 {offsets = [192, 128], sizes = [64, 32], strides = [1, 1]} : vector<256x384xbf16> to vector<64x32xbf16>
    %253 = vector.extract_strided_slice %7 {offsets = [192, 256], sizes = [64, 32], strides = [1, 1]} : vector<256x384xbf16> to vector<64x32xbf16>
    %cst_79 = arith.constant dense<0.000000e+00> : vector<64x64xf32>
    %254 = tpu.matmul %251, %252, %cst_79 {dimension_numbers = #tpu.dot_dimension_numbers<[1], [1], [0], [0], [0, 0, 1, 0], [], []>} : vector<64x32xbf16>, vector<64x32xbf16>, vector<64x64xf32> -> vector<64x64xf32>
    %c12 = arith.constant 12 : index
    %c0_80 = arith.constant 0 : index
    %c0_81 = arith.constant 0 : index
    %255 = vector.load %arg4[%c12, %c0_80, %c0_81] : memref<16x64x64xbf16, #tpu.memory_space<vmem>>, vector<1x64x64xbf16>
    %256 = vector.shape_cast %255 : vector<1x64x64xbf16> to vector<64x64xbf16>
    %257 = arith.extf %256 : vector<64x64xbf16> to vector<64x64xf32>
    %258 = arith.addf %254, %257 : vector<64x64xf32>
    %cst_82 = arith.constant dense<0xFF800000> : vector<64xf32>
    %259 = vector.multi_reduction <maximumf>, %258, %cst_82 [1] : vector<64x64xf32> to vector<64xf32>
    %260 = vector.shape_cast %259 : vector<64xf32> to vector<64x1xf32>
    %261 = vector.broadcast %260 : vector<64x1xf32> to vector<64x64xf32>
    %262 = arith.subf %258, %261 : vector<64x64xf32>
    %263 = math.exp %262 : vector<64x64xf32>
    %cst_83 = arith.constant dense<0.000000e+00> : vector<64xf32>
    %264 = vector.multi_reduction <add>, %263, %cst_83 [1] : vector<64x64xf32> to vector<64xf32>
    %265 = vector.shape_cast %264 : vector<64xf32> to vector<64x1xf32>
    %266 = arith.truncf %263 : vector<64x64xf32> to vector<64x64xbf16>
    %cst_84 = arith.constant dense<0.000000e+00> : vector<64x32xf32>
    %267 = tpu.matmul %266, %253, %cst_84 {dimension_numbers = #tpu.dot_dimension_numbers<[1], [0], [0], [1], [0, 0, 1, 1], [], []>} : vector<64x64xbf16>, vector<64x32xbf16>, vector<64x32xf32> -> vector<64x32xf32>
    %268 = tpu.reciprocal %265 {approx = true} : vector<64x1xf32> -> vector<64x1xf32>
    %269 = vector.broadcast %268 : vector<64x1xf32> to vector<64x32xf32>
    %270 = arith.mulf %267, %269 : vector<64x32xf32>
    %271 = vector.extract_strided_slice %7 {offsets = [192, 32], sizes = [64, 32], strides = [1, 1]} : vector<256x384xbf16> to vector<64x32xbf16>
    %272 = vector.extract_strided_slice %7 {offsets = [192, 160], sizes = [64, 32], strides = [1, 1]} : vector<256x384xbf16> to vector<64x32xbf16>
    %273 = vector.extract_strided_slice %7 {offsets = [192, 288], sizes = [64, 32], strides = [1, 1]} : vector<256x384xbf16> to vector<64x32xbf16>
    %cst_85 = arith.constant dense<0.000000e+00> : vector<64x64xf32>
    %274 = tpu.matmul %271, %272, %cst_85 {dimension_numbers = #tpu.dot_dimension_numbers<[1], [1], [0], [0], [0, 0, 1, 0], [], []>} : vector<64x32xbf16>, vector<64x32xbf16>, vector<64x64xf32> -> vector<64x64xf32>
    %c13 = arith.constant 13 : index
    %c0_86 = arith.constant 0 : index
    %c0_87 = arith.constant 0 : index
    %275 = vector.load %arg4[%c13, %c0_86, %c0_87] : memref<16x64x64xbf16, #tpu.memory_space<vmem>>, vector<1x64x64xbf16>
    %276 = vector.shape_cast %275 : vector<1x64x64xbf16> to vector<64x64xbf16>
    %277 = arith.extf %276 : vector<64x64xbf16> to vector<64x64xf32>
    %278 = arith.addf %274, %277 : vector<64x64xf32>
    %cst_88 = arith.constant dense<0xFF800000> : vector<64xf32>
    %279 = vector.multi_reduction <maximumf>, %278, %cst_88 [1] : vector<64x64xf32> to vector<64xf32>
    %280 = vector.shape_cast %279 : vector<64xf32> to vector<64x1xf32>
    %281 = vector.broadcast %280 : vector<64x1xf32> to vector<64x64xf32>
    %282 = arith.subf %278, %281 : vector<64x64xf32>
    %283 = math.exp %282 : vector<64x64xf32>
    %cst_89 = arith.constant dense<0.000000e+00> : vector<64xf32>
    %284 = vector.multi_reduction <add>, %283, %cst_89 [1] : vector<64x64xf32> to vector<64xf32>
    %285 = vector.shape_cast %284 : vector<64xf32> to vector<64x1xf32>
    %286 = arith.truncf %283 : vector<64x64xf32> to vector<64x64xbf16>
    %cst_90 = arith.constant dense<0.000000e+00> : vector<64x32xf32>
    %287 = tpu.matmul %286, %273, %cst_90 {dimension_numbers = #tpu.dot_dimension_numbers<[1], [0], [0], [1], [0, 0, 1, 1], [], []>} : vector<64x64xbf16>, vector<64x32xbf16>, vector<64x32xf32> -> vector<64x32xf32>
    %288 = tpu.reciprocal %285 {approx = true} : vector<64x1xf32> -> vector<64x1xf32>
    %289 = vector.broadcast %288 : vector<64x1xf32> to vector<64x32xf32>
    %290 = arith.mulf %287, %289 : vector<64x32xf32>
    %291 = vector.extract_strided_slice %7 {offsets = [192, 64], sizes = [64, 32], strides = [1, 1]} : vector<256x384xbf16> to vector<64x32xbf16>
    %292 = vector.extract_strided_slice %7 {offsets = [192, 192], sizes = [64, 32], strides = [1, 1]} : vector<256x384xbf16> to vector<64x32xbf16>
    %293 = vector.extract_strided_slice %7 {offsets = [192, 320], sizes = [64, 32], strides = [1, 1]} : vector<256x384xbf16> to vector<64x32xbf16>
    %cst_91 = arith.constant dense<0.000000e+00> : vector<64x64xf32>
    %294 = tpu.matmul %291, %292, %cst_91 {dimension_numbers = #tpu.dot_dimension_numbers<[1], [1], [0], [0], [0, 0, 1, 0], [], []>} : vector<64x32xbf16>, vector<64x32xbf16>, vector<64x64xf32> -> vector<64x64xf32>
    %c14 = arith.constant 14 : index
    %c0_92 = arith.constant 0 : index
    %c0_93 = arith.constant 0 : index
    %295 = vector.load %arg4[%c14, %c0_92, %c0_93] : memref<16x64x64xbf16, #tpu.memory_space<vmem>>, vector<1x64x64xbf16>
    %296 = vector.shape_cast %295 : vector<1x64x64xbf16> to vector<64x64xbf16>
    %297 = arith.extf %296 : vector<64x64xbf16> to vector<64x64xf32>
    %298 = arith.addf %294, %297 : vector<64x64xf32>
    %cst_94 = arith.constant dense<0xFF800000> : vector<64xf32>
    %299 = vector.multi_reduction <maximumf>, %298, %cst_94 [1] : vector<64x64xf32> to vector<64xf32>
    %300 = vector.shape_cast %299 : vector<64xf32> to vector<64x1xf32>
    %301 = vector.broadcast %300 : vector<64x1xf32> to vector<64x64xf32>
    %302 = arith.subf %298, %301 : vector<64x64xf32>
    %303 = math.exp %302 : vector<64x64xf32>
    %cst_95 = arith.constant dense<0.000000e+00> : vector<64xf32>
    %304 = vector.multi_reduction <add>, %303, %cst_95 [1] : vector<64x64xf32> to vector<64xf32>
    %305 = vector.shape_cast %304 : vector<64xf32> to vector<64x1xf32>
    %306 = arith.truncf %303 : vector<64x64xf32> to vector<64x64xbf16>
    %cst_96 = arith.constant dense<0.000000e+00> : vector<64x32xf32>
    %307 = tpu.matmul %306, %293, %cst_96 {dimension_numbers = #tpu.dot_dimension_numbers<[1], [0], [0], [1], [0, 0, 1, 1], [], []>} : vector<64x64xbf16>, vector<64x32xbf16>, vector<64x32xf32> -> vector<64x32xf32>
    %308 = tpu.reciprocal %305 {approx = true} : vector<64x1xf32> -> vector<64x1xf32>
    %309 = vector.broadcast %308 : vector<64x1xf32> to vector<64x32xf32>
    %310 = arith.mulf %307, %309 : vector<64x32xf32>
    %311 = vector.extract_strided_slice %7 {offsets = [192, 96], sizes = [64, 32], strides = [1, 1]} : vector<256x384xbf16> to vector<64x32xbf16>
    %312 = vector.extract_strided_slice %7 {offsets = [192, 224], sizes = [64, 32], strides = [1, 1]} : vector<256x384xbf16> to vector<64x32xbf16>
    %313 = vector.extract_strided_slice %7 {offsets = [192, 352], sizes = [64, 32], strides = [1, 1]} : vector<256x384xbf16> to vector<64x32xbf16>
    %cst_97 = arith.constant dense<0.000000e+00> : vector<64x64xf32>
    %314 = tpu.matmul %311, %312, %cst_97 {dimension_numbers = #tpu.dot_dimension_numbers<[1], [1], [0], [0], [0, 0, 1, 0], [], []>} : vector<64x32xbf16>, vector<64x32xbf16>, vector<64x64xf32> -> vector<64x64xf32>
    %c15 = arith.constant 15 : index
    %c0_98 = arith.constant 0 : index
    %c0_99 = arith.constant 0 : index
    %315 = vector.load %arg4[%c15, %c0_98, %c0_99] : memref<16x64x64xbf16, #tpu.memory_space<vmem>>, vector<1x64x64xbf16>
    %316 = vector.shape_cast %315 : vector<1x64x64xbf16> to vector<64x64xbf16>
    %317 = arith.extf %316 : vector<64x64xbf16> to vector<64x64xf32>
    %318 = arith.addf %314, %317 : vector<64x64xf32>
    %cst_100 = arith.constant dense<0xFF800000> : vector<64xf32>
    %319 = vector.multi_reduction <maximumf>, %318, %cst_100 [1] : vector<64x64xf32> to vector<64xf32>
    %320 = vector.shape_cast %319 : vector<64xf32> to vector<64x1xf32>
    %321 = vector.broadcast %320 : vector<64x1xf32> to vector<64x64xf32>
    %322 = arith.subf %318, %321 : vector<64x64xf32>
    %323 = math.exp %322 : vector<64x64xf32>
    %cst_101 = arith.constant dense<0.000000e+00> : vector<64xf32>
    %324 = vector.multi_reduction <add>, %323, %cst_101 [1] : vector<64x64xf32> to vector<64xf32>
    %325 = vector.shape_cast %324 : vector<64xf32> to vector<64x1xf32>
    %326 = arith.truncf %323 : vector<64x64xf32> to vector<64x64xbf16>
    %cst_102 = arith.constant dense<0.000000e+00> : vector<64x32xf32>
    %327 = tpu.matmul %326, %313, %cst_102 {dimension_numbers = #tpu.dot_dimension_numbers<[1], [0], [0], [1], [0, 0, 1, 1], [], []>} : vector<64x64xbf16>, vector<64x32xbf16>, vector<64x32xf32> -> vector<64x32xf32>
    %328 = tpu.reciprocal %325 {approx = true} : vector<64x1xf32> -> vector<64x1xf32>
    %329 = vector.broadcast %328 : vector<64x1xf32> to vector<64x32xf32>
    %330 = arith.mulf %327, %329 : vector<64x32xf32>
    %331 = tpu.concatenate %270, %290, %310, %330 in 1 : vector<64x32xf32>, vector<64x32xf32>, vector<64x32xf32>, vector<64x32xf32> -> vector<64x128xf32>
    %332 = tpu.concatenate %88, %169, %250, %331 in 0 : vector<64x128xf32>, vector<64x128xf32>, vector<64x128xf32>, vector<64x128xf32> -> vector<256x128xf32>
    %333 = arith.truncf %332 : vector<256x128xf32> to vector<256x128xbf16>
    %c0_103 = arith.constant 0 : index
    %c0_104 = arith.constant 0 : index
    %334 = vector.load %arg5[%c0_103, %c0_104] : memref<128x128xbf16, #tpu.memory_space<vmem>>, vector<128x128xbf16>
    %cst_105 = arith.constant dense<0.000000e+00> : vector<256x128xf32>
    %335 = tpu.matmul %333, %334, %cst_105 {dimension_numbers = #tpu.dot_dimension_numbers<[1], [0], [0], [1], [0, 0, 1, 1], [], []>} : vector<256x128xbf16>, vector<128x128xbf16>, vector<256x128xf32> -> vector<256x128xf32>
    %c0_106 = arith.constant 0 : index
    %c0_107 = arith.constant 0 : index
    %336 = vector.load %arg6[%c0_106, %c0_107] : memref<1x128xf32, #tpu.memory_space<vmem>>, vector<1x128xf32>
    %337 = vector.broadcast %336 : vector<1x128xf32> to vector<256x128xf32>
    %338 = arith.addf %335, %337 : vector<256x128xf32>
    %339 = vector.shape_cast %338 : vector<256x128xf32> to vector<4x64x128xf32>
    %340 = arith.truncf %339 : vector<4x64x128xf32> to vector<4x64x128xbf16>
    %c0_108 = arith.constant 0 : index
    %c0_109 = arith.constant 0 : index
    %c0_110 = arith.constant 0 : index
    %341 = vector.load %arg7[%c0_108, %c0_109, %c0_110] : memref<4x64x128xbf16, #tpu.memory_space<vmem>>, vector<4x64x128xbf16>
    tpu.vector_store %arg7[%c0_108, %c0_109, %c0_110], %340 {strides = array<i32>} : memref<4x64x128xbf16, #tpu.memory_space<vmem>>, vector<4x64x128xbf16>,
    return
  }
  func.func @transform_0(%arg0: i32) -> (i32, i32, i32) {
    %c0_i32 = arith.constant 0 : i32
    %c0_i32_0 = arith.constant 0 : i32
    %c0_i32_1 = arith.constant 0 : i32
    return %arg0, %c0_i32, %c0_i32_0 : i32, i32, i32
  }
  func.func @transform_1(%arg0: i32) -> (i32, i32) {
    %c0_i32 = arith.constant 0 : i32
    %c0_i32_0 = arith.constant 0 : i32
    %c0_i32_1 = arith.constant 0 : i32
    return %c0_i32, %c0_i32_0 : i32, i32
  }
  func.func @transform_2(%arg0: i32) -> (i32, i32) {
    %c0_i32 = arith.constant 0 : i32
    %c0_i32_0 = arith.constant 0 : i32
    %c0_i32_1 = arith.constant 0 : i32
    return %c0_i32, %c0_i32_0 : i32, i32
  }
  func.func @transform_3(%arg0: i32) -> (i32, i32, i32) {
    %c0_i32 = arith.constant 0 : i32
    %c0_i32_0 = arith.constant 0 : i32
    %c0_i32_1 = arith.constant 0 : i32
    %c0_i32_2 = arith.constant 0 : i32
    return %c0_i32, %c0_i32_0, %c0_i32_1 : i32, i32, i32
  }
  func.func @transform_4(%arg0: i32) -> (i32, i32) {
    %c0_i32 = arith.constant 0 : i32
    %c0_i32_0 = arith.constant 0 : i32
    %c0_i32_1 = arith.constant 0 : i32
    return %c0_i32, %c0_i32_0 : i32, i32
  }
  func.func @transform_5(%arg0: i32) -> (i32, i32) {
    %c0_i32 = arith.constant 0 : i32
    %c0_i32_0 = arith.constant 0 : i32
    %c0_i32_1 = arith.constant 0 : i32
    return %c0_i32, %c0_i32_0 : i32, i32
  }
  func.func @transform_6(%arg0: i32) -> (i32, i32, i32) {
    %c0_i32 = arith.constant 0 : i32
    %c0_i32_0 = arith.constant 0 : i32
    %c0_i32_1 = arith.constant 0 : i32
    return %arg0, %c0_i32, %c0_i32_0 : i32, i32, i32
  }
}

</mosaic_0001>

<llo_original>
// kernel: tpu_custom_call.1
$region0: #{tpu_custom_call.1}
  #allocation0 [shape = 'u32[]', space=smem, size = 0x4, offset = 0x4, fixed_abs, tag = 'smem constant byte address 0x4 - core index']
  #allocation1 [shape = 'u32[144,128]{1,0:T(1,128)}', space=vmem, size = 0x12000, scoped, tag = 'internal scratch']
  %s0 = inlined_call_operand.hbm [shape: bf16[8,64,128], index: 0, kind: input, shape index: {}]
  %s1 = inlined_call_operand.hbm [shape: bf16[128,384], index: 1, kind: input, shape index: {}]
  %s2 = inlined_call_operand.hbm [shape: f32[1,384], index: 2, kind: input, shape index: {}]
  %s3 = inlined_call_operand.hbm [shape: bf16[16,64,64], index: 3, kind: input, shape index: {}]
  %s4 = inlined_call_operand.hbm [shape: bf16[128,128], index: 4, kind: input, shape index: {}]
  %s5 = inlined_call_operand.hbm [shape: f32[1,128], index: 5, kind: input, shape index: {}]
  %s6 = inlined_call_operand.hbm [shape: bf16[8,64,128], index: 6, kind: output, shape index: {}]
  %s7 = sld [smem:[#allocation0]]
  $region81: #{tpu_custom_call.1} parent=0
    _
  %s9 = ssub.s32 1, %s7
  %s10 = scalar_select 0, %s9, %s7
  $region1: #{tpu_custom_call.1} parent=0
    #allocation2 [shape = 'u8[131072]{0}', space=vmem, size = 0x20000, scoped, tag = 'input window, operand 0']
    #allocation3 [shape = 's32[2]{0}', space=sflag, size = 0x8, scoped, tag = 'scoped memory for tpu_custom_call.1']
    #allocation4 [shape = 's32[2]{0}', space=sflag, size = 0x8, scoped, tag = 'scoped memory for tpu_custom_call.1']
    #allocation5 [shape = 'u8[98304]{0}', space=vmem, size = 0x18000, scoped, tag = 'input window, operand 1, single buffered']
    #allocation6 [shape = 's32[1]{0}', space=sflag, size = 0x4, scoped, tag = 'scoped memory for tpu_custom_call.1']
    #allocation7 [shape = 'u8[1536]{0}', space=vmem, size = 0x800, scoped, tag = 'input window, operand 2, single buffered']
    #allocation8 [shape = 'u8[262144]{0}', space=vmem, size = 0x40000, scoped, tag = 'input window, operand 3, single buffered']
    #allocation9 [shape = 's32[1]{0}', space=sflag, size = 0x4, scoped, tag = 'scoped memory for tpu_custom_call.1']
    #allocation10 [shape = 'u8[32768]{0}', space=vmem, size = 0x8000, scoped, tag = 'input window, operand 4, single buffered']
    #allocation11 [shape = 'u8[512]{0}', space=vmem, size = 0x400, scoped, tag = 'input window, operand 5, single buffered']
    #allocation12 [shape = 's32[1]{0}', space=sflag, size = 0x4, scoped, tag = 'scoped memory for tpu_custom_call.1']
    #allocation13 [shape = 'u8[131072]{0}', space=vmem, size = 0x20000, scoped, tag = 'output window, operand 0']
    %11 = vsyncpa [#allocation3], 0
    %s12 = scalar_lea.sflag [#allocation3], 1
    %13 = vsyncpa %s12, 0
    %14 = vsyncpa [#allocation6], 0
    %15 = vsyncpa [#allocation9], 0
    %16 = vsyncpa [#allocation12], 0
    %17 = vsyncpa [#allocation4], 0
    %s18 = scalar_lea.sflag [#allocation4], 1
    %19 = vsyncpa %s18, 0
    loop: start=0, step=1, limit=4
    $region2: #{tpu_custom_call.1} parent=1 // loop_pre_header
      _
    $region3: #{tpu_custom_call.1} parent=1 // loop_header
      %s21 = sphi 0, %s25
      %p22 = scmp.ge.s32.totalorder %s21, 4
      %s31 = sphi 0, %s33
      %s34 = sphi 0, %s31
      %s35 = sphi 0, %s34
      %s51 = sphi 0, %s35
      %s55 = sphi 0, %s55
      %s57 = sphi 0, %s55
      %s58 = sphi 0, %s57
      %s72 = sphi 0, %s58
      %s76 = sphi 0, %s76
      %s78 = sphi 0, %s76
      %s79 = sphi 0, %s78
      %s93 = sphi 0, %s79
      %s97 = sphi 0, %s97
      %s99 = sphi 0, %s97
      %s100 = sphi 0, %s99
      %s114 = sphi 0, %s100
      %s118 = sphi 0, %s118
      %s120 = sphi 0, %s118
      %s121 = sphi 0, %s120
      %s135 = sphi 0, %s121
      %s139 = sphi 0, %s139
      %s141 = sphi 0, %s139
      %s142 = sphi 0, %s141
      %s156 = sphi 0, %s142
      %s162 = sphi 0, %s164
      %s165 = sphi 0, %s162
      %s166 = sphi 0, %s165
      %s182 = sphi 0, %s166
    $region4: #{tpu_custom_call.1} parent=1 // loop_header_branch
      %24 = sbr.rel (%p22) target = $region8
    $region5: #{tpu_custom_call.1} parent=1 // loop_body
      %s26 = ssub.s32 %s21, 1
      %s27 = ssub.s32 %s21, 2
      %s28 = sadd.s32 %s21, 1
      %s29 = ssub.s32 %s21, %s28
      %p30 = scmp.eq.s32.totalorder %s29, 0
      %s32 = sadd.s32 %s31, 1
      %s33 = scalar_select %p30, %s31, %s32
      %p36 = pneg %p30
      %p37 = scmp.eq.s32.totalorder %s21, 1
      %p38 = por %p36, %p37
      %p39 = scmp.ne.s32.totalorder %s31, %s34
      %p40 = scmp.eq.s32.totalorder %s21, 0
      %p41 = por %p39, %p40
      %p42 = scmp.ne.s32.totalorder %s31, %s34
      %p43 = scmp.eq.s32.totalorder %s26, 1
      %p44 = por %p42, %p43
      %p45 = scmp.ne.s32.totalorder %s34, %s35
      %p46 = scmp.eq.s32.totalorder %s26, 0
      %p47 = por %p45, %p46
      %p48 = scmp.ne.s32.totalorder %s34, %s35
      %p49 = scmp.eq.s32.totalorder %s27, 1
      %p50 = por %p48, %p49
      %p52 = scmp.ne.s32.totalorder %s35, %s51
      %p53 = scmp.eq.s32.totalorder %s27, 0
      %p54 = por %p52, %p53
      %s56 = sadd.s32 %s55, 1
      %p59 = scmp.eq.s32.totalorder %s21, 1
      %p60 = scmp.ne.s32.totalorder %s55, %s57
      %p61 = scmp.eq.s32.totalorder %s21, 0
      %p62 = por %p60, %p61
      %p63 = scmp.ne.s32.totalorder %s55, %s57
      %p64 = scmp.eq.s32.totalorder %s26, 1
      %p65 = por %p63, %p64
      %p66 = scmp.ne.s32.totalorder %s57, %s58
      %p67 = scmp.eq.s32.totalorder %s26, 0
      %p68 = por %p66, %p67
      %p69 = scmp.ne.s32.totalorder %s57, %s58
      %p70 = scmp.eq.s32.totalorder %s27, 1
      %p71 = por %p69, %p70
      %p73 = scmp.ne.s32.totalorder %s58, %s72
      %p74 = scmp.eq.s32.totalorder %s27, 0
      %p75 = por %p73, %p74
      %s77 = sadd.s32 %s76, 1
      %p80 = scmp.eq.s32.totalorder %s21, 1
      %p81 = scmp.ne.s32.totalorder %s76, %s78
      %p82 = scmp.eq.s32.totalorder %s21, 0
      %p83 = por %p81, %p82
      %p84 = scmp.ne.s32.totalorder %s76, %s78
      %p85 = scmp.eq.s32.totalorder %s26, 1
      %p86 = por %p84, %p85
      %p87 = scmp.ne.s32.totalorder %s78, %s79
      %p88 = scmp.eq.s32.totalorder %s26, 0
      %p89 = por %p87, %p88
      %p90 = scmp.ne.s32.totalorder %s78, %s79
      %p91 = scmp.eq.s32.totalorder %s27, 1
      %p92 = por %p90, %p91
      %p94 = scmp.ne.s32.totalorder %s79, %s93
      %p95 = scmp.eq.s32.totalorder %s27, 0
      %p96 = por %p94, %p95
      %s98 = sadd.s32 %s97, 1
      %p101 = scmp.eq.s32.totalorder %s21, 1
      %p102 = scmp.ne.s32.totalorder %s97, %s99
      %p103 = scmp.eq.s32.totalorder %s21, 0
      %p104 = por %p102, %p103
      %p105 = scmp.ne.s32.totalorder %s97, %s99
      %p106 = scmp.eq.s32.totalorder %s26, 1
      %p107 = por %p105, %p106
      %p108 = scmp.ne.s32.totalorder %s99, %s100
      %p109 = scmp.eq.s32.totalorder %s26, 0
      %p110 = por %p108, %p109
      %p111 = scmp.ne.s32.totalorder %s99, %s100
      %p112 = scmp.eq.s32.totalorder %s27, 1
      %p113 = por %p111, %p112
      %p115 = scmp.ne.s32.totalorder %s100, %s114
      %p116 = scmp.eq.s32.totalorder %s27, 0
      %p117 = por %p115, %p116
      %s119 = sadd.s32 %s118, 1
      %p122 = scmp.eq.s32.totalorder %s21, 1
      %p123 = scmp.ne.s32.totalorder %s118, %s120
      %p124 = scmp.eq.s32.totalorder %s21, 0
      %p125 = por %p123, %p124
      %p126 = scmp.ne.s32.totalorder %s118, %s120
      %p127 = scmp.eq.s32.totalorder %s26, 1
      %p128 = por %p126, %p127
      %p129 = scmp.ne.s32.totalorder %s120, %s121
      %p130 = scmp.eq.s32.totalorder %s26, 0
      %p131 = por %p129, %p130
      %p132 = scmp.ne.s32.totalorder %s120, %s121
      %p133 = scmp.eq.s32.totalorder %s27, 1
      %p134 = por %p132, %p133
      %p136 = scmp.ne.s32.totalorder %s121, %s135
      %p137 = scmp.eq.s32.totalorder %s27, 0
      %p138 = por %p136, %p137
      %s140 = sadd.s32 %s139, 1
      %p143 = scmp.eq.s32.totalorder %s21, 1
      %p144 = scmp.ne.s32.totalorder %s139, %s141
      %p145 = scmp.eq.s32.totalorder %s21, 0
      %p146 = por %p144, %p145
      %p147 = scmp.ne.s32.totalorder %s139, %s141
      %p148 = scmp.eq.s32.totalorder %s26, 1
      %p149 = por %p147, %p148
      %p150 = scmp.ne.s32.totalorder %s141, %s142
      %p151 = scmp.eq.s32.totalorder %s26, 0
      %p152 = por %p150, %p151
      %p153 = scmp.ne.s32.totalorder %s141, %s142
      %p154 = scmp.eq.s32.totalorder %s27, 1
      %p155 = por %p153, %p154
      %p157 = scmp.ne.s32.totalorder %s142, %s156
      %p158 = scmp.eq.s32.totalorder %s27, 0
      %p159 = por %p157, %p158
      %s160 = ssub.s32 %s21, %s28
      %p161 = scmp.eq.s32.totalorder %s160, 0
      %s163 = sadd.s32 %s162, 1
      %s164 = scalar_select %p161, %s162, %s163
      %p167 = pneg %p161
      %p168 = scmp.eq.s32.totalorder %s21, 1
      %p169 = por %p167, %p168
      %p170 = scmp.ne.s32.totalorder %s162, %s165
      %p171 = scmp.eq.s32.totalorder %s21, 0
      %p172 = por %p170, %p171
      %p173 = scmp.ne.s32.totalorder %s162, %s165
      %p174 = scmp.eq.s32.totalorder %s26, 1
      %p175 = por %p173, %p174
      %p176 = scmp.ne.s32.totalorder %s165, %s166
      %p177 = scmp.eq.s32.totalorder %s26, 0
      %p178 = por %p176, %p177
      %p179 = scmp.ne.s32.totalorder %s165, %s166
      %p180 = scmp.eq.s32.totalorder %s27, 1
      %p181 = por %p179, %p180
      %p183 = scmp.ne.s32.totalorder %s166, %s182
      %p184 = scmp.eq.s32.totalorder %s27, 0
      %p185 = por %p183, %p184
      %p186 = scmp.le.s32.totalorder 1, %s21
      %p187 = scmp.lt.s32.totalorder %s21, 3
      %p188 = pnand %p186, %p187
      %p189 = pneg %p188
      // Predicated region
      $region9: #{tpu_custom_call.1} parent=5 // pred_check
        _
      $region10: #{tpu_custom_call.1} parent=5 // pred_check_branch
        %191 = sbr.rel (%p188) target = $region12
      $region11: #{tpu_custom_call.1} parent=5 // pred_region
        %s192 = ssub.s32 %s21, 1
        // Predicated region
        $region13: #{tpu_custom_call.1} parent=11 // pred_check
          %p193 = pneg %p68
        $region14: #{tpu_custom_call.1} parent=11 // pred_check_branch
          %195 = sbr.rel (%p193) target = $region16
        $region15: #{tpu_custom_call.1} parent=11 // pred_region
          %s197 = ssub.s32 3072, 3072
          %198 = vsyncadd [#allocation6], %s197
          %s199 = sshll.u32 [#allocation5], 4
          %s200 = int_to_ptr.vmem [resolvable:$true] %s199
          %205 = dma.hbm_to_vmem [thread:$0]  %s1, 3072, %s200, [#allocation6], 192, 192, 12
        $region16: #{tpu_custom_call.1} parent=11 // pred_fallthru
          _
        // Predicated region
        $region17: #{tpu_custom_call.1} parent=11 // pred_check
          %p206 = pneg %p89
        $region18: #{tpu_custom_call.1} parent=11 // pred_check_branch
          %208 = sbr.rel (%p206) target = $region20
        $region19: #{tpu_custom_call.1} parent=11 // pred_region
          %s210 = ssub.s32 48, 48
          %211 = vsyncadd [#allocation6], %s210
          %s213 = sshll.u32 [#allocation7], 4
          %s214 = int_to_ptr.vmem [resolvable:$true] %s213
          %216 = dma.hbm_to_vmem [thread:$0]  %s2, 48, %s214, [#allocation6]
        $region20: #{tpu_custom_call.1} parent=11 // pred_fallthru
          _
        // Predicated region
        $region21: #{tpu_custom_call.1} parent=11 // pred_check
          %p217 = pneg %p110
        $region22: #{tpu_custom_call.1} parent=11 // pred_check_branch
          %219 = sbr.rel (%p217) target = $region24
        $region23: #{tpu_custom_call.1} parent=11 // pred_region
          %s221 = ssub.s32 8192, 8192
          %222 = vsyncadd [#allocation9], %s221
          %s223 = sshll.u32 [#allocation8], 4
          %s224 = int_to_ptr.vmem [resolvable:$true] %s223
          %229 = dma.hbm_to_vmem [thread:$0]  %s3, 8192, %s224, [#allocation9], 64, 64, 4
        $region24: #{tpu_custom_call.1} parent=11 // pred_fallthru
          _
        // Predicated region
        $region25: #{tpu_custom_call.1} parent=11 // pred_check
          %p230 = pneg %p131
        $region26: #{tpu_custom_call.1} parent=11 // pred_check_branch
          %232 = sbr.rel (%p230) target = $region28
        $region27: #{tpu_custom_call.1} parent=11 // pred_region
          %s234 = ssub.s32 1024, 1024
          %235 = vsyncadd [#allocation9], %s234
          %s236 = sshll.u32 [#allocation10], 4
          %s237 = int_to_ptr.vmem [resolvable:$true] %s236
          %242 = dma.hbm_to_vmem [thread:$0]  %s4, 1024, %s237, [#allocation9], 64, 64, 4
        $region28: #{tpu_custom_call.1} parent=11 // pred_fallthru
          _
        // Predicated region
        $region29: #{tpu_custom_call.1} parent=11 // pred_check
          %p243 = pneg %p152
        $region30: #{tpu_custom_call.1} parent=11 // pred_check_branch
          %245 = sbr.rel (%p243) target = $region32
        $region31: #{tpu_custom_call.1} parent=11 // pred_region
          %s247 = ssub.s32 16, 16
          %248 = vsyncadd [#allocation12], %s247
          %s250 = sshll.u32 [#allocation11], 4
          %s251 = int_to_ptr.vmem [resolvable:$true] %s250
          %253 = dma.hbm_to_vmem [thread:$0]  %s5, 16, %s251, [#allocation12]
        $region32: #{tpu_custom_call.1} parent=11 // pred_fallthru
          _
      $region12: #{tpu_custom_call.1} parent=5 // pred_fallthru
        _
      %p254 = scmp.lt.s32.totalorder %s21, 2
      // Predicated region
      $region33: #{tpu_custom_call.1} parent=5 // pred_check
        %p255 = pneg %p254
      $region34: #{tpu_custom_call.1} parent=5 // pred_check_branch
        %257 = sbr.rel (%p255) target = $region36
      $region35: #{tpu_custom_call.1} parent=5 // pred_region
        // Predicated region
        $region37: #{tpu_custom_call.1} parent=35 // pred_check
          %p258 = pneg %p41
        $region38: #{tpu_custom_call.1} parent=35 // pred_check_branch
          %260 = sbr.rel (%p258) target = $region40
        $region39: #{tpu_custom_call.1} parent=35 // pred_region
          %s261 = sand.u32 %s31, 1
          %s262 = scalar_lea.sflag [#allocation3], %s261
          %s263 = sand.u32 %s31, 1
          %s264 = smul.addr %s263, 128
          %s265 = scalar_lea.vmem [#allocation2], %s264
          %s266 = smul.u32 4, %s21
          %s268 = ssub.s32 2048, 2048
          %269 = vsyncadd %s262, %s268
          %s270 = smul.addr %s266, 8
          %s271 = smul.addr %s270, 64
          %s272 = scalar_lea.hbm %s0, %s271
          %s273 = sshll.u32 %s265, 4
          %s274 = int_to_ptr.vmem [resolvable:$true] %s273
          %279 = dma.hbm_to_vmem [thread:$0]  %s272, 2048, %s274, %s262, 64, 64, 4
        $region40: #{tpu_custom_call.1} parent=35 // pred_fallthru
          _
      $region36: #{tpu_custom_call.1} parent=5 // pred_fallthru
        _
      %p280 = scmp.le.s32.totalorder 1, %s21
      %p281 = scmp.lt.s32.totalorder %s21, 3
      %p282 = pnand %p280, %p281
      %p283 = pneg %p282
      // Predicated region
      $region41: #{tpu_custom_call.1} parent=5 // pred_check
        _
      $region42: #{tpu_custom_call.1} parent=5 // pred_check_branch
        %285 = sbr.rel (%p282) target = $region44
      $region43: #{tpu_custom_call.1} parent=5 // pred_region
        %s286 = ssub.s32 %s21, 1
        %s287 = sand.u32 %s34, 1
        %s288 = scalar_lea.sflag [#allocation3], %s287
        %s289 = sand.u32 %s34, 1
        %s290 = smul.addr %s289, 128
        %s291 = scalar_lea.vmem [#allocation2], %s290
        // Predicated region
        $region45: #{tpu_custom_call.1} parent=43 // pred_check
          %p292 = pneg %p47
        $region46: #{tpu_custom_call.1} parent=43 // pred_check_branch
          %294 = sbr.rel (%p292) target = $region48
        $region47: #{tpu_custom_call.1} parent=43 // pred_region
          %295 = dma.done %s288, 2048
        $region48: #{tpu_custom_call.1} parent=43 // pred_fallthru
          _
        // Predicated region
        $region49: #{tpu_custom_call.1} parent=43 // pred_check
          %p296 = pneg %p68
        $region50: #{tpu_custom_call.1} parent=43 // pred_check_branch
          %298 = sbr.rel (%p296) target = $region52
        $region51: #{tpu_custom_call.1} parent=43 // pred_region
          %299 = dma.done [#allocation6], 3072
        $region52: #{tpu_custom_call.1} parent=43 // pred_fallthru
          _
        // Predicated region
        $region53: #{tpu_custom_call.1} parent=43 // pred_check
          %p300 = pneg %p89
        $region54: #{tpu_custom_call.1} parent=43 // pred_check_branch
          %302 = sbr.rel (%p300) target = $region56
        $region55: #{tpu_custom_call.1} parent=43 // pred_region
          %303 = dma.done [#allocation6], 48
        $region56: #{tpu_custom_call.1} parent=43 // pred_fallthru
          _
        // Predicated region
        $region57: #{tpu_custom_call.1} parent=43 // pred_check
          %p304 = pneg %p110
        $region58: #{tpu_custom_call.1} parent=43 // pred_check_branch
          %306 = sbr.rel (%p304) target = $region60
        $region59: #{tpu_custom_call.1} parent=43 // pred_region
          %307 = dma.done [#allocation9], 8192
        $region60: #{tpu_custom_call.1} parent=43 // pred_fallthru
          _
        // Predicated region
        $region61: #{tpu_custom_call.1} parent=43 // pred_check
          %p308 = pneg %p131
        $region62: #{tpu_custom_call.1} parent=43 // pred_check_branch
          %310 = sbr.rel (%p308) target = $region64
        $region63: #{tpu_custom_call.1} parent=43 // pred_region
          %311 = dma.done [#allocation9], 1024
        $region64: #{tpu_custom_call.1} parent=43 // pred_fallthru
          _
        // Predicated region
        $region65: #{tpu_custom_call.1} parent=43 // pred_check
          %p312 = pneg %p152
        $region66: #{tpu_custom_call.1} parent=43 // pred_check_branch
          %314 = sbr.rel (%p312) target = $region68
        $region67: #{tpu_custom_call.1} parent=43 // pred_region
          %315 = dma.done [#allocation12], 16
        $region68: #{tpu_custom_call.1} parent=43 // pred_fallthru
          _
        %s316 = sand.u32 %s34, 1
        %s317 = scalar_lea.sflag [#allocation3], %s316
        %s318 = sand.u32 %s34, 1
        %s319 = smul.addr %s318, 128
        %s320 = scalar_lea.vmem [#allocation2], %s319
        %p321 = pneg %p47
        %p322 = pneg %p44
        %p323 = pneg %p68
        %p324 = pneg %p65
        %p325 = pneg %p89
        %p326 = pneg %p86
        %p327 = pneg %p110
        %p328 = pneg %p107
        %p329 = pneg %p131
        %p330 = pneg %p128
        %p331 = pneg %p152
        %p332 = pneg %p149
        %p333 = pneg %p178
        %p334 = pneg %p175
        %s335 = sand.u32 %s165, 1
        %s336 = scalar_lea.sflag [#allocation4], %s335
        %s337 = sand.u32 %s165, 1
        %s338 = smul.addr %s337, 128
        %s339 = scalar_lea.vmem [#allocation13], %s338
        %s340 = smul.u32 4, %s26
        %s341 = smul.u32 4, %s26
        %v343 = vld [vmem:[%s291] sm:$0xf]
        %v344 = vld [vmem:[%s291 + $0x4] sm:$0xf]
        %v345 = vld [vmem:[%s291 + $0x8] sm:$0xf]
        %v346 = vld [vmem:[%s291 + $0xc] sm:$0xf]
        %v347 = vld [vmem:[%s291 + $0x10] sm:$0xf]
        %v348 = vld [vmem:[%s291 + $0x14] sm:$0xf]
        %v349 = vld [vmem:[%s291 + $0x18] sm:$0xf]
        %v350 = vld [vmem:[%s291 + $0x1c] sm:$0xf]
        %v351 = vld [vmem:[%s291 + $0x20] sm:$0xf]
        %v352 = vld [vmem:[%s291 + $0x24] sm:$0xf]
        %v353 = vld [vmem:[%s291 + $0x28] sm:$0xf]
        %v354 = vld [vmem:[%s291 + $0x2c] sm:$0xf]
        %v355 = vld [vmem:[%s291 + $0x30] sm:$0xf]
        %v356 = vld [vmem:[%s291 + $0x34] sm:$0xf]
        %v357 = vld [vmem:[%s291 + $0x38] sm:$0xf]
        %v358 = vld [vmem:[%s291 + $0x3c] sm:$0xf]
        %v359 = vld [vmem:[%s291 + $0x40] sm:$0xf]
        %v360 = vld [vmem:[%s291 + $0x44] sm:$0xf]
        %v361 = vld [vmem:[%s291 + $0x48] sm:$0xf]
        %v362 = vld [vmem:[%s291 + $0x4c] sm:$0xf]
        %v363 = vld [vmem:[%s291 + $0x50] sm:$0xf]
        %v364 = vld [vmem:[%s291 + $0x54] sm:$0xf]
        %v365 = vld [vmem:[%s291 + $0x58] sm:$0xf]
        %v366 = vld [vmem:[%s291 + $0x5c] sm:$0xf]
        %v367 = vld [vmem:[%s291 + $0x60] sm:$0xf]
        %v368 = vld [vmem:[%s291 + $0x64] sm:$0xf]
        %v369 = vld [vmem:[%s291 + $0x68] sm:$0xf]
        %v370 = vld [vmem:[%s291 + $0x6c] sm:$0xf]
        %v371 = vld [vmem:[%s291 + $0x70] sm:$0xf]
        %v372 = vld [vmem:[%s291 + $0x74] sm:$0xf]
        %v373 = vld [vmem:[%s291 + $0x78] sm:$0xf]
        %v374 = vld [vmem:[%s291 + $0x7c] sm:$0xf]
        %v375 = vld [vmem:[#allocation5] sm:$0xff]
        %v376 = vld [vmem:[#allocation5 + $0x8] sm:$0xf]
        %v377 = vld [vmem:[#allocation5 + $0xc] sm:$0xff]
        %v378 = vld [vmem:[#allocation5 + $0x14] sm:$0xf]
        %v379 = vld [vmem:[#allocation5 + $0x18] sm:$0xff]
        %v380 = vld [vmem:[#allocation5 + $0x20] sm:$0xf]
        %v381 = vld [vmem:[#allocation5 + $0x24] sm:$0xff]
        %v382 = vld [vmem:[#allocation5 + $0x2c] sm:$0xf]
        %v383 = vld [vmem:[#allocation5 + $0x30] sm:$0xff]
        %v384 = vld [vmem:[#allocation5 + $0x38] sm:$0xf]
        %v385 = vld [vmem:[#allocation5 + $0x3c] sm:$0xff]
        %v386 = vld [vmem:[#allocation5 + $0x44] sm:$0xf]
        %v387 = vld [vmem:[#allocation5 + $0x48] sm:$0xff]
        %v388 = vld [vmem:[#allocation5 + $0x50] sm:$0xf]
        %v389 = vld [vmem:[#allocation5 + $0x54] sm:$0xff]
        %v390 = vld [vmem:[#allocation5 + $0x5c] sm:$0xf]
        %v391 = vld [vmem:[#allocation5 + $0x60] sm:$0xff]
        %v392 = vld [vmem:[#allocation5 + $0x68] sm:$0xf]
        %v393 = vld [vmem:[#allocation5 + $0x6c] sm:$0xff]
        %v394 = vld [vmem:[#allocation5 + $0x74] sm:$0xf]
        %v395 = vld [vmem:[#allocation5 + $0x78] sm:$0xff]
        %v396 = vld [vmem:[#allocation5 + $0x80] sm:$0xf]
        %v397 = vld [vmem:[#allocation5 + $0x84] sm:$0xff]
        %v398 = vld [vmem:[#allocation5 + $0x8c] sm:$0xf]
        %v399 = vld [vmem:[#allocation5 + $0x90] sm:$0xff]
        %v400 = vld [vmem:[#allocation5 + $0x98] sm:$0xf]
        %v401 = vld [vmem:[#allocation5 + $0x9c] sm:$0xff]
        %v402 = vld [vmem:[#allocation5 + $0xa4] sm:$0xf]
        %v403 = vld [vmem:[#allocation5 + $0xa8] sm:$0xff]
        %v404 = vld [vmem:[#allocation5 + $0xb0] sm:$0xf]
        %v405 = vld [vmem:[#allocation5 + $0xb4] sm:$0xff]
        %v406 = vld [vmem:[#allocation5 + $0xbc] sm:$0xf]
        %v407 = vld [vmem:[#allocation7] sm:$0x7]
        %v409 = vlaneseq
        %v410 = vshrl.u32 %v409, 7
        %v411 = vsub.s32 0, %v410
        %v412 = vrot.slane %v407, %v411
        %v413 = vlaneseq
        %v414 = vshrl.u32 %v413, 7
        %v415 = vsub.s32 1, %v414
        %v416 = vrot.slane %v407, %v415
        %v417 = vlaneseq
        %v418 = vshrl.u32 %v417, 7
        %v419 = vsub.s32 2, %v418
        %v420 = vrot.slane %v407, %v419
        %v456 = vunpack.c.l.b16 %v343
        %v457 = vunpack.c.l.b16 %v344
        %v458 = vunpack.c.l.b16 %v345
        %v459 = vunpack.c.l.b16 %v346
        %v460 = vunpack.c.l.b16 %v347
        %v461 = vunpack.c.l.b16 %v348
        %v462 = vunpack.c.l.b16 %v349
        %v463 = vunpack.c.l.b16 %v350
        %v464 = vunpack.c.l.b16 %v351
        %v465 = vunpack.c.l.b16 %v352
        %v466 = vunpack.c.l.b16 %v353
        %v467 = vunpack.c.l.b16 %v354
        %v468 = vunpack.c.l.b16 %v355
        %v469 = vunpack.c.l.b16 %v356
        %v470 = vunpack.c.l.b16 %v357
        %v471 = vunpack.c.l.b16 %v358
        %v472 = vunpack.c.l.b16 %v359
        %v473 = vunpack.c.l.b16 %v360
        %v474 = vunpack.c.l.b16 %v361
        %v475 = vunpack.c.l.b16 %v362
        %v476 = vunpack.c.l.b16 %v363
        %v477 = vunpack.c.l.b16 %v364
        %v478 = vunpack.c.l.b16 %v365
        %v479 = vunpack.c.l.b16 %v366
        %v480 = vunpack.c.l.b16 %v367
        %v481 = vunpack.c.l.b16 %v368
        %v482 = vunpack.c.l.b16 %v369
        %v483 = vunpack.c.l.b16 %v370
        %v484 = vunpack.c.l.b16 %v371
        %v485 = vunpack.c.l.b16 %v372
        %v486 = vunpack.c.l.b16 %v373
        %v487 = vunpack.c.l.b16 %v374
        %v488 = vpack.c.b16 %v457, %v456
        %v489 = vpack.c.b16 %v459, %v458
        %v490 = vpack.c.b16 %v461, %v460
        %v491 = vpack.c.b16 %v463, %v462
        %v492 = vpack.c.b16 %v465, %v464
        %v493 = vpack.c.b16 %v467, %v466
        %v494 = vpack.c.b16 %v469, %v468
        %v495 = vpack.c.b16 %v471, %v470
        %v496 = vpack.c.b16 %v473, %v472
        %v497 = vpack.c.b16 %v475, %v474
        %v498 = vpack.c.b16 %v477, %v476
        %v499 = vpack.c.b16 %v479, %v478
        %v500 = vpack.c.b16 %v481, %v480
        %v501 = vpack.c.b16 %v483, %v482
        %v502 = vpack.c.b16 %v485, %v484
        %v503 = vpack.c.b16 %v487, %v486
        %v552 = vunpack.c.l.b16 %v375
        %v553 = vunpack.c.h.b16 %v375
        %v554 = vunpack.c.l.b16 %v376
        %v555 = vunpack.c.l.b16 %v377
        %v556 = vunpack.c.h.b16 %v377
        %v557 = vunpack.c.l.b16 %v378
        %v558 = vunpack.c.l.b16 %v379
        %v559 = vunpack.c.h.b16 %v379
        %v560 = vunpack.c.l.b16 %v380
        %v561 = vunpack.c.l.b16 %v381
        %v562 = vunpack.c.h.b16 %v381
        %v563 = vunpack.c.l.b16 %v382
        %v564 = vunpack.c.l.b16 %v383
        %v565 = vunpack.c.h.b16 %v383
        %v566 = vunpack.c.l.b16 %v384
        %v567 = vunpack.c.l.b16 %v385
        %v568 = vunpack.c.h.b16 %v385
        %v569 = vunpack.c.l.b16 %v386
        %v570 = vunpack.c.l.b16 %v387
        %v571 = vunpack.c.h.b16 %v387
        %v572 = vunpack.c.l.b16 %v388
        %v573 = vunpack.c.l.b16 %v389
        %v574 = vunpack.c.h.b16 %v389
        %v575 = vunpack.c.l.b16 %v390
        %v576 = vunpack.c.l.b16 %v391
        %v577 = vunpack.c.h.b16 %v391
        %v578 = vunpack.c.l.b16 %v392
        %v579 = vunpack.c.l.b16 %v393
        %v580 = vunpack.c.h.b16 %v393
        %v581 = vunpack.c.l.b16 %v394
        %v582 = vunpack.c.l.b16 %v395
        %v583 = vunpack.c.h.b16 %v395
        %v584 = vunpack.c.l.b16 %v396
        %v585 = vunpack.c.l.b16 %v397
        %v586 = vunpack.c.h.b16 %v397
        %v587 = vunpack.c.l.b16 %v398
        %v588 = vunpack.c.l.b16 %v399
        %v589 = vunpack.c.h.b16 %v399
        %v590 = vunpack.c.l.b16 %v400
        %v591 = vunpack.c.l.b16 %v401
        %v592 = vunpack.c.h.b16 %v401
        %v593 = vunpack.c.l.b16 %v402
        %v594 = vunpack.c.l.b16 %v403
        %v595 = vunpack.c.h.b16 %v403
        %v596 = vunpack.c.l.b16 %v404
        %v597 = vunpack.c.l.b16 %v405
        %v598 = vunpack.c.h.b16 %v405
        %v599 = vunpack.c.l.b16 %v406
        %v600 = vpack.c.b16 %v555, %v552
        %v601 = vpack.c.b16 %v556, %v553
        %v602 = vpack.c.b16 %v557, %v554
        %v603 = vpack.c.b16 %v561, %v558
        %v604 = vpack.c.b16 %v562, %v559
        %v605 = vpack.c.b16 %v563, %v560
        %v606 = vpack.c.b16 %v567, %v564
        %v607 = vpack.c.b16 %v568, %v565
        %v608 = vpack.c.b16 %v569, %v566
        %v609 = vpack.c.b16 %v573, %v570
        %v610 = vpack.c.b16 %v574, %v571
        %v611 = vpack.c.b16 %v575, %v572
        %v612 = vpack.c.b16 %v579, %v576
        %v613 = vpack.c.b16 %v580, %v577
        %v614 = vpack.c.b16 %v581, %v578
        %v615 = vpack.c.b16 %v585, %v582
        %v616 = vpack.c.b16 %v586, %v583
        %v617 = vpack.c.b16 %v587, %v584
        %v618 = vpack.c.b16 %v591, %v588
        %v619 = vpack.c.b16 %v592, %v589
        %v620 = vpack.c.b16 %v593, %v590
        %v621 = vpack.c.b16 %v597, %v594
        %v622 = vpack.c.b16 %v598, %v595
        %v623 = vpack.c.b16 %v599, %v596
        %648 = vmatprep.subr.bf16.mxu0 %v601
        %649 = vmatpush1.bf16.msra.mxu0 %v600
        %650 = vmatprep.subr.bf16.mxu0 %v604
        %651 = vmatpush1.bf16.msra.mxu0 %v603
        %652 = vmatprep.subr.bf16.mxu0 %v607
        %653 = vmatpush1.bf16.msra.mxu0 %v606
        %654 = vmatprep.subr.bf16.mxu0 %v610
        %655 = vmatpush1.bf16.msra.mxu0 %v609
        %656 = vmatprep.subr.bf16.mxu0 %v613
        %657 = vmatpush1.bf16.msra.mxu0 %v612
        %658 = vmatprep.subr.bf16.mxu0 %v616
        %659 = vmatpush1.bf16.msra.mxu0 %v615
        %660 = vmatprep.subr.bf16.mxu0 %v619
        %661 = vmatpush1.bf16.msra.mxu0 %v618
        %662 = vmatprep.subr.bf16.mxu0 %v622
        %663 = vmatpush1.bf16.msra.mxu0 %v621
        %664 = vmatprep.subr.bf16.mxu0 0
        %665 = vmatpush1.bf16.msra.mxu0 0
        %666 = vmatprep.subr.bf16.mxu0 0
        %667 = vmatpush1.bf16.msra.mxu0 0
        %668 = vmatprep.subr.bf16.mxu0 0
        %669 = vmatpush1.bf16.msra.mxu0 0
        %670 = vmatprep.subr.bf16.mxu0 0
        %671 = vmatpush1.bf16.msra.mxu0 0
        %672 = vmatprep.subr.bf16.mxu0 0
        %673 = vmatpush1.bf16.msra.mxu0 0
        %674 = vmatprep.subr.bf16.mxu0 0
        %675 = vmatpush1.bf16.msra.mxu0 0
        %676 = vmatprep.subr.bf16.mxu0 0
        %677 = vmatpush1.bf16.msra.mxu0 0
        %678 = vmatprep.subr.bf16.mxu0 0
        %679 = vmatpush1.bf16.msra.mxu0 0
        %680 = vmatprep.mubr.bf16.mxu0 0
        %681 = vmatmul.mubr.bf16.gmra.mrb[0].mxu0 %v488
        %v682 = vpop.f32.mrb[0].mxu0
        %v683 = vadd.f32 %v412, %v682
        %v684 = vpop.f32.mrb[0].mxu0
        %v685 = vadd.f32 %v416, %v684
        %v686 = vpop.f32.mrb[0].mxu0
        %v687 = vadd.f32 %v412, %v686
        %v688 = vpop.f32.mrb[0].mxu0
        %v689 = vadd.f32 %v416, %v688
        %690 = vmatprep.mubr.bf16.mxu0 0
        %691 = vmatmul.mubr.bf16.gmra.mrb[0].mxu0 %v489
        %v692 = vpop.f32.mrb[0].mxu0
        %v693 = vadd.f32 %v412, %v692
        %v694 = vpop.f32.mrb[0].mxu0
        %v695 = vadd.f32 %v416, %v694
        %v696 = vpop.f32.mrb[0].mxu0
        %v697 = vadd.f32 %v412, %v696
        %v698 = vpop.f32.mrb[0].mxu0
        %v699 = vadd.f32 %v416, %v698
        %700 = vmatprep.mubr.bf16.mxu0 0
        %701 = vmatmul.mubr.bf16.gmra.mrb[0].mxu0 %v490
        %v702 = vpop.f32.mrb[0].mxu0
        %v703 = vadd.f32 %v412, %v702
        %v704 = vpop.f32.mrb[0].mxu0
        %v705 = vadd.f32 %v416, %v704
        %v706 = vpop.f32.mrb[0].mxu0
        %v707 = vadd.f32 %v412, %v706
        %v708 = vpop.f32.mrb[0].mxu0
        %v709 = vadd.f32 %v416, %v708
        %710 = vmatprep.mubr.bf16.mxu0 0
        %711 = vmatmul.mubr.bf16.gmra.mrb[0].mxu0 %v491
        %v712 = vpop.f32.mrb[0].mxu0
        %v713 = vadd.f32 %v412, %v712
        %v714 = vpop.f32.mrb[0].mxu0
        %v715 = vadd.f32 %v416, %v714
        %v716 = vpop.f32.mrb[0].mxu0
        %v717 = vadd.f32 %v412, %v716
        %v718 = vpop.f32.mrb[0].mxu0
        %v719 = vadd.f32 %v416, %v718
        %720 = vmatprep.mubr.bf16.mxu0 0
        %721 = vmatmul.mubr.bf16.gmra.mrb[0].mxu0 %v492
        %v722 = vpop.f32.mrb[0].mxu0
        %v723 = vadd.f32 %v412, %v722
        %v724 = vpop.f32.mrb[0].mxu0
        %v725 = vadd.f32 %v416, %v724
        %v726 = vpop.f32.mrb[0].mxu0
        %v727 = vadd.f32 %v412, %v726
        %v728 = vpop.f32.mrb[0].mxu0
        %v729 = vadd.f32 %v416, %v728
        %730 = vmatprep.mubr.bf16.mxu0 0
        %731 = vmatmul.mubr.bf16.gmra.mrb[0].mxu0 %v493
        %v732 = vpop.f32.mrb[0].mxu0
        %v733 = vadd.f32 %v412, %v732
        %v734 = vpop.f32.mrb[0].mxu0
        %v735 = vadd.f32 %v416, %v734
        %v736 = vpop.f32.mrb[0].mxu0
        %v737 = vadd.f32 %v412, %v736
        %v738 = vpop.f32.mrb[0].mxu0
        %v739 = vadd.f32 %v416, %v738
        %740 = vmatprep.mubr.bf16.mxu0 0
        %741 = vmatmul.mubr.bf16.gmra.mrb[0].mxu0 %v494
        %v742 = vpop.f32.mrb[0].mxu0
        %v743 = vadd.f32 %v412, %v742
        %v744 = vpop.f32.mrb[0].mxu0
        %v745 = vadd.f32 %v416, %v744
        %v746 = vpop.f32.mrb[0].mxu0
        %v747 = vadd.f32 %v412, %v746
        %v748 = vpop.f32.mrb[0].mxu0
        %v749 = vadd.f32 %v416, %v748
        %750 = vmatprep.mubr.bf16.mxu0 0
        %751 = vmatmul.mubr.bf16.gmra.mrb[0].mxu0 %v495
        %v752 = vpop.f32.mrb[0].mxu0
        %v753 = vadd.f32 %v412, %v752
        %v754 = vpop.f32.mrb[0].mxu0
        %v755 = vadd.f32 %v416, %v754
        %v756 = vpop.f32.mrb[0].mxu0
        %v757 = vadd.f32 %v412, %v756
        %v758 = vpop.f32.mrb[0].mxu0
        %v759 = vadd.f32 %v416, %v758
        %760 = vmatprep.mubr.bf16.mxu0 0
        %761 = vmatmul.mubr.bf16.gmra.mrb[0].mxu0 %v496
        %v762 = vpop.f32.mrb[0].mxu0
        %v763 = vadd.f32 %v412, %v762
        %v764 = vpop.f32.mrb[0].mxu0
        %v765 = vadd.f32 %v416, %v764
        %v766 = vpop.f32.mrb[0].mxu0
        %v767 = vadd.f32 %v412, %v766
        %v768 = vpop.f32.mrb[0].mxu0
        %v769 = vadd.f32 %v416, %v768
        %770 = vmatprep.mubr.bf16.mxu0 0
        %771 = vmatmul.mubr.bf16.gmra.mrb[0].mxu0 %v497
        %v772 = vpop.f32.mrb[0].mxu0
        %v773 = vadd.f32 %v412, %v772
        %v774 = vpop.f32.mrb[0].mxu0
        %v775 = vadd.f32 %v416, %v774
        %v776 = vpop.f32.mrb[0].mxu0
        %v777 = vadd.f32 %v412, %v776
        %v778 = vpop.f32.mrb[0].mxu0
        %v779 = vadd.f32 %v416, %v778
        %780 = vmatprep.mubr.bf16.mxu0 0
        %781 = vmatmul.mubr.bf16.gmra.mrb[0].mxu0 %v498
        %v782 = vpop.f32.mrb[0].mxu0
        %v783 = vadd.f32 %v412, %v782
        %v784 = vpop.f32.mrb[0].mxu0
        %v785 = vadd.f32 %v416, %v784
        %v786 = vpop.f32.mrb[0].mxu0
        %v787 = vadd.f32 %v412, %v786
        %v788 = vpop.f32.mrb[0].mxu0
        %v789 = vadd.f32 %v416, %v788
        %790 = vmatprep.mubr.bf16.mxu0 0
        %791 = vmatmul.mubr.bf16.gmra.mrb[0].mxu0 %v499
        %v792 = vpop.f32.mrb[0].mxu0
        %v793 = vadd.f32 %v412, %v792
        %v794 = vpop.f32.mrb[0].mxu0
        %v795 = vadd.f32 %v416, %v794
        %v796 = vpop.f32.mrb[0].mxu0
        %v797 = vadd.f32 %v412, %v796
        %v798 = vpop.f32.mrb[0].mxu0
        %v799 = vadd.f32 %v416, %v798
        %800 = vmatprep.mubr.bf16.mxu0 0
        %801 = vmatmul.mubr.bf16.gmra.mrb[0].mxu0 %v500
        %v802 = vpop.f32.mrb[0].mxu0
        %v803 = vadd.f32 %v412, %v802
        %v804 = vpop.f32.mrb[0].mxu0
        %v805 = vadd.f32 %v416, %v804
        %v806 = vpop.f32.mrb[0].mxu0
        %v807 = vadd.f32 %v412, %v806
        %v808 = vpop.f32.mrb[0].mxu0
        %v809 = vadd.f32 %v416, %v808
        %810 = vmatprep.mubr.bf16.mxu0 0
        %811 = vmatmul.mubr.bf16.gmra.mrb[0].mxu0 %v501
        %v812 = vpop.f32.mrb[0].mxu0
        %v813 = vadd.f32 %v412, %v812
        %v814 = vpop.f32.mrb[0].mxu0
        %v815 = vadd.f32 %v416, %v814
        %v816 = vpop.f32.mrb[0].mxu0
        %v817 = vadd.f32 %v412, %v816
        %v818 = vpop.f32.mrb[0].mxu0
        %v819 = vadd.f32 %v416, %v818
        %820 = vmatprep.mubr.bf16.mxu0 0
        %821 = vmatmul.mubr.bf16.gmra.mrb[0].mxu0 %v502
        %v822 = vpop.f32.mrb[0].mxu0
        %v823 = vadd.f32 %v412, %v822
        %v824 = vpop.f32.mrb[0].mxu0
        %v825 = vadd.f32 %v416, %v824
        %v826 = vpop.f32.mrb[0].mxu0
        %v827 = vadd.f32 %v412, %v826
        %v828 = vpop.f32.mrb[0].mxu0
        %v829 = vadd.f32 %v416, %v828
        %830 = vmatprep.mubr.bf16.mxu0 0
        %831 = vmatmul.mubr.bf16.gmra.mrb[0].mxu0 %v503
        %v832 = vpop.f32.mrb[0].mxu0
        %v833 = vadd.f32 %v412, %v832
        %v834 = vpop.f32.mrb[0].mxu0
        %v835 = vadd.f32 %v416, %v834
        %v836 = vpop.f32.mrb[0].mxu0
        %v837 = vadd.f32 %v412, %v836
        %v838 = vpop.f32.mrb[0].mxu0
        %v839 = vadd.f32 %v416, %v838
        %840 = vdwg.mxu0
        %841 = vmatprep.subr.bf16.mxu0 0
        %842 = vmatpush1.bf16.msra.mxu0 %v602
        %843 = vmatprep.subr.bf16.mxu0 0
        %844 = vmatpush1.bf16.msra.mxu0 %v605
        %845 = vmatprep.subr.bf16.mxu0 0
        %846 = vmatpush1.bf16.msra.mxu0 %v608
        %847 = vmatprep.subr.bf16.mxu0 0
        %848 = vmatpush1.bf16.msra.mxu0 %v611
        %849 = vmatprep.subr.bf16.mxu0 0
        %850 = vmatpush1.bf16.msra.mxu0 %v614
        %851 = vmatprep.subr.bf16.mxu0 0
        %852 = vmatpush1.bf16.msra.mxu0 %v617
        %853 = vmatprep.subr.bf16.mxu0 0
        %854 = vmatpush1.bf16.msra.mxu0 %v620
        %855 = vmatprep.subr.bf16.mxu0 0
        %856 = vmatpush1.bf16.msra.mxu0 %v623
        %857 = vmatprep.subr.bf16.mxu0 0
        %858 = vmatpush1.bf16.msra.mxu0 0
        %859 = vmatprep.subr.bf16.mxu0 0
        %860 = vmatpush1.bf16.msra.mxu0 0
        %861 = vmatprep.subr.bf16.mxu0 0
        %862 = vmatpush1.bf16.msra.mxu0 0
        %863 = vmatprep.subr.bf16.mxu0 0
        %864 = vmatpush1.bf16.msra.mxu0 0
        %865 = vmatprep.subr.bf16.mxu0 0
        %866 = vmatpush1.bf16.msra.mxu0 0
        %867 = vmatprep.subr.bf16.mxu0 0
        %868 = vmatpush1.bf16.msra.mxu0 0
        %869 = vmatprep.subr.bf16.mxu0 0
        %870 = vmatpush1.bf16.msra.mxu0 0
        %871 = vmatprep.subr.bf16.mxu0 0
        %872 = vmatpush1.bf16.msra.mxu0 0
        %873 = vmatprep.mubr.bf16.mxu0 0
        %874 = vmatmul.mubr.bf16.gmra.mrb[0].mxu0 %v488
        %v875 = vpop.f32.mrb[0].mxu0
        %v876 = vadd.f32 %v420, %v875
        %v877 = vpop.f32.mrb[0].mxu0
        %v878 = vpop.f32.mrb[0].mxu0
        %v879 = vadd.f32 %v420, %v878
        %v880 = vpop.f32.mrb[0].mxu0
        %881 = vmatprep.mubr.bf16.mxu0 0
        %882 = vmatmul.mubr.bf16.gmra.mrb[0].mxu0 %v489
        %v883 = vpop.f32.mrb[0].mxu0
        %v884 = vadd.f32 %v420, %v883
        %v885 = vpop.f32.mrb[0].mxu0
        %v886 = vpop.f32.mrb[0].mxu0
        %v887 = vadd.f32 %v420, %v886
        %v888 = vpop.f32.mrb[0].mxu0
        %889 = vmatprep.mubr.bf16.mxu0 0
        %890 = vmatmul.mubr.bf16.gmra.mrb[0].mxu0 %v490
        %v891 = vpop.f32.mrb[0].mxu0
        %v892 = vadd.f32 %v420, %v891
        %v893 = vpop.f32.mrb[0].mxu0
        %v894 = vpop.f32.mrb[0].mxu0
        %v895 = vadd.f32 %v420, %v894
        %v896 = vpop.f32.mrb[0].mxu0
        %897 = vmatprep.mubr.bf16.mxu0 0
        %898 = vmatmul.mubr.bf16.gmra.mrb[0].mxu0 %v491
        %v899 = vpop.f32.mrb[0].mxu0
        %v900 = vadd.f32 %v420, %v899
        %v901 = vpop.f32.mrb[0].mxu0
        %v902 = vpop.f32.mrb[0].mxu0
        %v903 = vadd.f32 %v420, %v902
        %v904 = vpop.f32.mrb[0].mxu0
        %905 = vmatprep.mubr.bf16.mxu0 0
        %906 = vmatmul.mubr.bf16.gmra.mrb[0].mxu0 %v492
        %v907 = vpop.f32.mrb[0].mxu0
        %v908 = vadd.f32 %v420, %v907
        %v909 = vpop.f32.mrb[0].mxu0
        %v910 = vpop.f32.mrb[0].mxu0
        %v911 = vadd.f32 %v420, %v910
        %v912 = vpop.f32.mrb[0].mxu0
        %913 = vmatprep.mubr.bf16.mxu0 0
        %914 = vmatmul.mubr.bf16.gmra.mrb[0].mxu0 %v493
        %v915 = vpop.f32.mrb[0].mxu0
        %v916 = vadd.f32 %v420, %v915
        %v917 = vpop.f32.mrb[0].mxu0
        %v918 = vpop.f32.mrb[0].mxu0
        %v919 = vadd.f32 %v420, %v918
        %v920 = vpop.f32.mrb[0].mxu0
        %921 = vmatprep.mubr.bf16.mxu0 0
        %922 = vmatmul.mubr.bf16.gmra.mrb[0].mxu0 %v494
        %v923 = vpop.f32.mrb[0].mxu0
        %v924 = vadd.f32 %v420, %v923
        %v925 = vpop.f32.mrb[0].mxu0
        %v926 = vpop.f32.mrb[0].mxu0
        %v927 = vadd.f32 %v420, %v926
        %v928 = vpop.f32.mrb[0].mxu0
        %929 = vmatprep.mubr.bf16.mxu0 0
        %930 = vmatmul.mubr.bf16.gmra.mrb[0].mxu0 %v495
        %v931 = vpop.f32.mrb[0].mxu0
        %v932 = vadd.f32 %v420, %v931
        %v933 = vpop.f32.mrb[0].mxu0
        %v934 = vpop.f32.mrb[0].mxu0
        %v935 = vadd.f32 %v420, %v934
        %v936 = vpop.f32.mrb[0].mxu0
        %937 = vmatprep.mubr.bf16.mxu0 0
        %938 = vmatmul.mubr.bf16.gmra.mrb[0].mxu0 %v496
        %v939 = vpop.f32.mrb[0].mxu0
        %v940 = vadd.f32 %v420, %v939
        %v941 = vpop.f32.mrb[0].mxu0
        %v942 = vpop.f32.mrb[0].mxu0
        %v943 = vadd.f32 %v420, %v942
        %v944 = vpop.f32.mrb[0].mxu0
        %945 = vmatprep.mubr.bf16.mxu0 0
        %946 = vmatmul.mubr.bf16.gmra.mrb[0].mxu0 %v497
        %v947 = vpop.f32.mrb[0].mxu0
        %v948 = vadd.f32 %v420, %v947
        %v949 = vpop.f32.mrb[0].mxu0
        %v950 = vpop.f32.mrb[0].mxu0
        %v951 = vadd.f32 %v420, %v950
        %v952 = vpop.f32.mrb[0].mxu0
        %953 = vmatprep.mubr.bf16.mxu0 0
        %954 = vmatmul.mubr.bf16.gmra.mrb[0].mxu0 %v498
        %v955 = vpop.f32.mrb[0].mxu0
        %v956 = vadd.f32 %v420, %v955
        %v957 = vpop.f32.mrb[0].mxu0
        %v958 = vpop.f32.mrb[0].mxu0
        %v959 = vadd.f32 %v420, %v958
        %v960 = vpop.f32.mrb[0].mxu0
        %961 = vmatprep.mubr.bf16.mxu0 0
        %962 = vmatmul.mubr.bf16.gmra.mrb[0].mxu0 %v499
        %v963 = vpop.f32.mrb[0].mxu0
        %v964 = vadd.f32 %v420, %v963
        %v965 = vpop.f32.mrb[0].mxu0
        %v966 = vpop.f32.mrb[0].mxu0
        %v967 = vadd.f32 %v420, %v966
        %v968 = vpop.f32.mrb[0].mxu0
        %969 = vmatprep.mubr.bf16.mxu0 0
        %970 = vmatmul.mubr.bf16.gmra.mrb[0].mxu0 %v500
        %v971 = vpop.f32.mrb[0].mxu0
        %v972 = vadd.f32 %v420, %v971
        %v973 = vpop.f32.mrb[0].mxu0
        %v974 = vpop.f32.mrb[0].mxu0
        %v975 = vadd.f32 %v420, %v974
        %v976 = vpop.f32.mrb[0].mxu0
        %977 = vmatprep.mubr.bf16.mxu0 0
        %978 = vmatmul.mubr.bf16.gmra.mrb[0].mxu0 %v501
        %v979 = vpop.f32.mrb[0].mxu0
        %v980 = vadd.f32 %v420, %v979
        %v981 = vpop.f32.mrb[0].mxu0
        %v982 = vpop.f32.mrb[0].mxu0
        %v983 = vadd.f32 %v420, %v982
        %v984 = vpop.f32.mrb[0].mxu0
        %985 = vmatprep.mubr.bf16.mxu0 0
        %986 = vmatmul.mubr.bf16.gmra.mrb[0].mxu0 %v502
        %v987 = vpop.f32.mrb[0].mxu0
        %v988 = vadd.f32 %v420, %v987
        %v989 = vpop.f32.mrb[0].mxu0
        %v990 = vpop.f32.mrb[0].mxu0
        %v991 = vadd.f32 %v420, %v990
        %v992 = vpop.f32.mrb[0].mxu0
        %993 = vmatprep.mubr.bf16.mxu0 0
        %994 = vmatmul.mubr.bf16.gmra.mrb[0].mxu0 %v503
        %v995 = vpop.f32.mrb[0].mxu0
        %v996 = vadd.f32 %v420, %v995
        %v997 = vpop.f32.mrb[0].mxu0
        %v998 = vpop.f32.mrb[0].mxu0
        %v999 = vadd.f32 %v420, %v998
        %v1000 = vpop.f32.mrb[0].mxu0
        %1001 = vdwg.mxu0
        %v1002 = vpack.c.bf16 %v687, %v683
        %v1003 = vpack.c.bf16 %v689, %v685
        %v1004 = vpack.c.bf16 %v879, %v876
        %v1005 = vpack.c.bf16 %v697, %v693
        %v1006 = vpack.c.bf16 %v699, %v695
        %v1007 = vpack.c.bf16 %v887, %v884
        %v1008 = vpack.c.bf16 %v707, %v703
        %v1009 = vpack.c.bf16 %v709, %v705
        %v1010 = vpack.c.bf16 %v895, %v892
        %v1011 = vpack.c.bf16 %v717, %v713
        %v1012 = vpack.c.bf16 %v719, %v715
        %v1013 = vpack.c.bf16 %v903, %v900
        %v1014 = vpack.c.bf16 %v727, %v723
        %v1015 = vpack.c.bf16 %v729, %v725
        %v1016 = vpack.c.bf16 %v911, %v908
        %v1017 = vpack.c.bf16 %v737, %v733
        %v1018 = vpack.c.bf16 %v739, %v735
        %v1019 = vpack.c.bf16 %v919, %v916
        %v1020 = vpack.c.bf16 %v747, %v743
        %v1021 = vpack.c.bf16 %v749, %v745
        %v1022 = vpack.c.bf16 %v927, %v924
        %v1023 = vpack.c.bf16 %v757, %v753
        %v1024 = vpack.c.bf16 %v759, %v755
        %v1025 = vpack.c.bf16 %v935, %v932
        %v1026 = vpack.c.bf16 %v767, %v763
        %v1027 = vpack.c.bf16 %v769, %v765
        %v1028 = vpack.c.bf16 %v943, %v940
        %v1029 = vpack.c.bf16 %v777, %v773
        %v1030 = vpack.c.bf16 %v779, %v775
        %v1031 = vpack.c.bf16 %v951, %v948
        %v1032 = vpack.c.bf16 %v787, %v783
        %v1033 = vpack.c.bf16 %v789, %v785
        %v1034 = vpack.c.bf16 %v959, %v956
        %v1035 = vpack.c.bf16 %v797, %v793
        %v1036 = vpack.c.bf16 %v799, %v795
        %v1037 = vpack.c.bf16 %v967, %v964
        %v1038 = vpack.c.bf16 %v807, %v803
        %v1039 = vpack.c.bf16 %v809, %v805
        %v1040 = vpack.c.bf16 %v975, %v972
        %v1041 = vpack.c.bf16 %v817, %v813
        %v1042 = vpack.c.bf16 %v819, %v815
        %v1043 = vpack.c.bf16 %v983, %v980
        %v1044 = vpack.c.bf16 %v827, %v823
        %v1045 = vpack.c.bf16 %v829, %v825
        %v1046 = vpack.c.bf16 %v991, %v988
        %v1047 = vpack.c.bf16 %v837, %v833
        %v1048 = vpack.c.bf16 %v839, %v835
        %v1049 = vpack.c.bf16 %v999, %v996
        %v1050 = vld [vmem:[#allocation8] sm:$0xf]
        %v1051 = vld [vmem:[#allocation8 + $0x4] sm:$0xf]
        %v1052 = vld [vmem:[#allocation8 + $0x8] sm:$0xf]
        %v1053 = vld [vmem:[#allocation8 + $0xc] sm:$0xf]
        %v1054 = vld [vmem:[#allocation8 + $0x10] sm:$0xf]
        %v1055 = vld [vmem:[#allocation8 + $0x14] sm:$0xf]
        %v1056 = vld [vmem:[#allocation8 + $0x18] sm:$0xf]
        %v1057 = vld [vmem:[#allocation8 + $0x1c] sm:$0xf]
        %v1058 = vunpack.c.l.bf16 %v1050
        %v1059 = vunpack.c.l.bf16 %v1051
        %v1060 = vunpack.c.l.bf16 %v1052
        %v1061 = vunpack.c.l.bf16 %v1053
        %v1062 = vunpack.c.l.bf16 %v1054
        %v1063 = vunpack.c.l.bf16 %v1055
        %v1064 = vunpack.c.l.bf16 %v1056
        %v1065 = vunpack.c.l.bf16 %v1057
        %vm1066 = vcmask 261120
        %v1068 = vsel %vm1066, %v1002, 0
        %v1071 = vsel %vm1066, %v1005, 0
        %v1074 = vsel %vm1066, %v1008, 0
        %v1077 = vsel %vm1066, %v1011, 0
        %v1080 = vsel %vm1066, %v1003, 0
        %v1083 = vsel %vm1066, %v1006, 0
        %v1086 = vsel %vm1066, %v1009, 0
        %v1089 = vsel %vm1066, %v1012, 0
        %1091 = vmatprep.subr.bf16.mxu0 0
        %1092 = vmatpush1.bf16.xpose.msra.mxu0 %v1080
        %1093 = vmatprep.subr.bf16.mxu0 0
        %1094 = vmatpush1.bf16.xpose.msra.mxu0 %v1083
        %1095 = vmatprep.subr.bf16.mxu0 0
        %1096 = vmatpush1.bf16.xpose.msra.mxu0 %v1086
        %1097 = vmatprep.subr.bf16.mxu0 0
        %1098 = vmatpush1.bf16.xpose.msra.mxu0 %v1089
        %1099 = vmatprep.subr.bf16.mxu0 0
        %1100 = vmatpush1.bf16.xpose.msra.mxu0 0
        %1101 = vmatprep.subr.bf16.mxu0 0
        %1102 = vmatpush1.bf16.xpose.msra.mxu0 0
        %1103 = vmatprep.subr.bf16.mxu0 0
        %1104 = vmatpush1.bf16.xpose.msra.mxu0 0
        %1105 = vmatprep.subr.bf16.mxu0 0
        %1106 = vmatpush1.bf16.xpose.msra.mxu0 0
        %1107 = vmatprep.subr.bf16.mxu0 0
        %1108 = vmatpush1.bf16.xpose.msra.mxu0 0
        %1109 = vmatprep.subr.bf16.mxu0 0
        %1110 = vmatpush1.bf16.xpose.msra.mxu0 0
        %1111 = vmatprep.subr.bf16.mxu0 0
        %1112 = vmatpush1.bf16.xpose.msra.mxu0 0
        %1113 = vmatprep.subr.bf16.mxu0 0
        %1114 = vmatpush1.bf16.xpose.msra.mxu0 0
        %1115 = vmatprep.subr.bf16.mxu0 0
        %1116 = vmatpush1.bf16.xpose.msra.mxu0 0
        %1117 = vmatprep.subr.bf16.mxu0 0
        %1118 = vmatpush1.bf16.xpose.msra.mxu0 0
        %1119 = vmatprep.subr.bf16.mxu0 0
        %1120 = vmatpush1.bf16.xpose.msra.mxu0 0
        %1121 = vmatprep.subr.bf16.mxu0 0
        %1122 = vmatpush1.bf16.xpose.msra.mxu0 0
        %1123 = vmatprep.mubr.bf16.mxu0 0
        %1124 = vmatmul.mubr.bf16.gmra.mrb[0].mxu0 %v1068
        %v1125 = vpop.f32.mrb[0].mxu0
        %v1126 = vadd.f32 %v1058, %v1125
        %v1127 = vpop.f32.mrb[0].mxu0
        %v1128 = vpop.f32.mrb[0].mxu0
        %v1129 = vadd.f32 %v1059, %v1128
        %v1130 = vpop.f32.mrb[0].mxu0
        %1131 = vmatprep.mubr.bf16.mxu0 0
        %1132 = vmatmul.mubr.bf16.gmra.mrb[0].mxu0 %v1071
        %v1133 = vpop.f32.mrb[0].mxu0
        %v1134 = vadd.f32 %v1060, %v1133
        %v1135 = vpop.f32.mrb[0].mxu0
        %v1136 = vpop.f32.mrb[0].mxu0
        %v1137 = vadd.f32 %v1061, %v1136
        %v1138 = vpop.f32.mrb[0].mxu0
        %1139 = vmatprep.mubr.bf16.mxu0 0
        %1140 = vmatmul.mubr.bf16.gmra.mrb[0].mxu0 %v1074
        %v1141 = vpop.f32.mrb[0].mxu0
        %v1142 = vadd.f32 %v1062, %v1141
        %v1143 = vpop.f32.mrb[0].mxu0
        %v1144 = vpop.f32.mrb[0].mxu0
        %v1145 = vadd.f32 %v1063, %v1144
        %v1146 = vpop.f32.mrb[0].mxu0
        %1147 = vmatprep.mubr.bf16.mxu0 0
        %1148 = vmatmul.mubr.bf16.gmra.mrb[0].mxu0 %v1077
        %v1149 = vpop.f32.mrb[0].mxu0
        %v1150 = vadd.f32 %v1064, %v1149
        %v1151 = vpop.f32.mrb[0].mxu0
        %v1152 = vpop.f32.mrb[0].mxu0
        %v1153 = vadd.f32 %v1065, %v1152
        %v1154 = vpop.f32.mrb[0].mxu0
        %1155 = vdwg.mxu0
        %vm1156 = vcmask 523264
        %v1157 = vsel %vm1156, %v1126, -inf
        %1158 = vmax.xlane.f32.xlu0 %v1157
        %v1159 = vpop.xlane.xlu0 %1158
        %v1160 = vsel %vm1156, %v1129, -inf
        %1161 = vmax.xlane.f32.xlu0 %v1160
        %v1162 = vpop.xlane.xlu0 %1161
        %v1163 = vsel %vm1156, %v1134, -inf
        %1164 = vmax.xlane.f32.xlu0 %v1163
        %v1165 = vpop.xlane.xlu0 %1164
        %v1166 = vsel %vm1156, %v1137, -inf
        %1167 = vmax.xlane.f32.xlu0 %v1166
        %v1168 = vpop.xlane.xlu0 %1167
        %v1169 = vsel %vm1156, %v1142, -inf
        %1170 = vmax.xlane.f32.xlu0 %v1169
        %v1171 = vpop.xlane.xlu0 %1170
        %v1172 = vsel %vm1156, %v1145, -inf
        %1173 = vmax.xlane.f32.xlu0 %v1172
        %v1174 = vpop.xlane.xlu0 %1173
        %v1175 = vsel %vm1156, %v1150, -inf
        %1176 = vmax.xlane.f32.xlu0 %v1175
        %v1177 = vpop.xlane.xlu0 %1176
        %v1178 = vsel %vm1156, %v1153, -inf
        %1179 = vmax.xlane.f32.xlu0 %v1178
        %v1180 = vpop.xlane.xlu0 %1179
        %v1181 = vsub.f32 %v1126, %v1159
        %v1182 = vsub.f32 %v1129, %v1162
        %v1183 = vsub.f32 %v1134, %v1165
        %v1184 = vsub.f32 %v1137, %v1168
        %v1185 = vsub.f32 %v1142, %v1171
        %v1186 = vsub.f32 %v1145, %v1174
        %v1187 = vsub.f32 %v1150, %v1177
        %v1188 = vsub.f32 %v1153, %v1180
        %v1189 = vmul.f32 %v1181, 1.442695
        %v1190 = vpow.pop %v1189
        %v1191 = vmul.f32 %v1182, 1.442695
        %v1192 = vpow.pop %v1191
        %v1193 = vmul.f32 %v1183, 1.442695
        %v1194 = vpow.pop %v1193
        %v1195 = vmul.f32 %v1184, 1.442695
        %v1196 = vpow.pop %v1195
        %v1197 = vmul.f32 %v1185, 1.442695
        %v1198 = vpow.pop %v1197
        %v1199 = vmul.f32 %v1186, 1.442695
        %v1200 = vpow.pop %v1199
        %v1201 = vmul.f32 %v1187, 1.442695
        %v1202 = vpow.pop %v1201
        %v1203 = vmul.f32 %v1188, 1.442695
        %v1204 = vpow.pop %v1203
        %v1205 = vsel %vm1156, %v1190, 0.0
        %1206 = vadd.xlane.f32.xlu0 %v1205
        %v1207 = vpop.xlane.xlu0 %1206
        %v1208 = vsel %vm1156, %v1192, 0.0
        %1209 = vadd.xlane.f32.xlu0 %v1208
        %v1210 = vpop.xlane.xlu0 %1209
        %v1211 = vsel %vm1156, %v1194, 0.0
        %1212 = vadd.xlane.f32.xlu0 %v1211
        %v1213 = vpop.xlane.xlu0 %1212
        %v1214 = vsel %vm1156, %v1196, 0.0
        %1215 = vadd.xlane.f32.xlu0 %v1214
        %v1216 = vpop.xlane.xlu0 %1215
        %v1217 = vsel %vm1156, %v1198, 0.0
        %1218 = vadd.xlane.f32.xlu0 %v1217
        %v1219 = vpop.xlane.xlu0 %1218
        %v1220 = vsel %vm1156, %v1200, 0.0
        %1221 = vadd.xlane.f32.xlu0 %v1220
        %v1222 = vpop.xlane.xlu0 %1221
        %v1223 = vsel %vm1156, %v1202, 0.0
        %1224 = vadd.xlane.f32.xlu0 %v1223
        %v1225 = vpop.xlane.xlu0 %1224
        %v1226 = vsel %vm1156, %v1204, 0.0
        %1227 = vadd.xlane.f32.xlu0 %v1226
        %v1228 = vpop.xlane.xlu0 %1227
        %v1229 = vpack.c.bf16 %v1192, %v1190
        %v1230 = vpack.c.bf16 %v1196, %v1194
        %v1231 = vpack.c.bf16 %v1200, %v1198
        %v1232 = vpack.c.bf16 %v1204, %v1202
        %v1234 = vsel %vm1156, %v1229, 0
        %v1237 = vsel %vm1156, %v1230, 0
        %v1240 = vsel %vm1156, %v1231, 0
        %v1243 = vsel %vm1156, %v1232, 0
        %1245 = vmatprep.subr.bf16.mxu0 0
        %1246 = vmatpush1.bf16.msra.mxu0 %v1004
        %1247 = vmatprep.subr.bf16.mxu0 0
        %1248 = vmatpush1.bf16.msra.mxu0 %v1007
        %1249 = vmatprep.subr.bf16.mxu0 0
        %1250 = vmatpush1.bf16.msra.mxu0 %v1010
        %1251 = vmatprep.subr.bf16.mxu0 0
        %1252 = vmatpush1.bf16.msra.mxu0 %v1013
        %1253 = vmatprep.subr.bf16.mxu0 0
        %1254 = vmatpush1.bf16.msra.mxu0 0
        %1255 = vmatprep.subr.bf16.mxu0 0
        %1256 = vmatpush1.bf16.msra.mxu0 0
        %1257 = vmatprep.subr.bf16.mxu0 0
        %1258 = vmatpush1.bf16.msra.mxu0 0
        %1259 = vmatprep.subr.bf16.mxu0 0
        %1260 = vmatpush1.bf16.msra.mxu0 0
        %1261 = vmatprep.subr.bf16.mxu0 0
        %1262 = vmatpush1.bf16.msra.mxu0 0
        %1263 = vmatprep.subr.bf16.mxu0 0
        %1264 = vmatpush1.bf16.msra.mxu0 0
        %1265 = vmatprep.subr.bf16.mxu0 0
        %1266 = vmatpush1.bf16.msra.mxu0 0
        %1267 = vmatprep.subr.bf16.mxu0 0
        %1268 = vmatpush1.bf16.msra.mxu0 0
        %1269 = vmatprep.subr.bf16.mxu0 0
        %1270 = vmatpush1.bf16.msra.mxu0 0
        %1271 = vmatprep.subr.bf16.mxu0 0
        %1272 = vmatpush1.bf16.msra.mxu0 0
        %1273 = vmatprep.subr.bf16.mxu0 0
        %1274 = vmatpush1.bf16.msra.mxu0 0
        %1275 = vmatprep.subr.bf16.mxu0 0
        %1276 = vmatpush1.bf16.msra.mxu0 0
        %1277 = vmatprep.mubr.bf16.mxu0 0
        %1278 = vmatmul.mubr.bf16.gmra.mrb[0].mxu0 %v1234
        %v1279 = vpop.f32.mrb[0].mxu0
        %v1280 = vadd.f32 0.0, %v1279
        %v1281 = vpop.f32.mrb[0].mxu0
        %v1282 = vpop.f32.mrb[0].mxu0
        %v1283 = vadd.f32 0.0, %v1282
        %v1284 = vpop.f32.mrb[0].mxu0
        %1285 = vmatprep.mubr.bf16.mxu0 0
        %1286 = vmatmul.mubr.bf16.gmra.mrb[0].mxu0 %v1237
        %v1287 = vpop.f32.mrb[0].mxu0
        %v1288 = vadd.f32 0.0, %v1287
        %v1289 = vpop.f32.mrb[0].mxu0
        %v1290 = vpop.f32.mrb[0].mxu0
        %v1291 = vadd.f32 0.0, %v1290
        %v1292 = vpop.f32.mrb[0].mxu0
        %1293 = vmatprep.mubr.bf16.mxu0 0
        %1294 = vmatmul.mubr.bf16.gmra.mrb[0].mxu0 %v1240
        %v1295 = vpop.f32.mrb[0].mxu0
        %v1296 = vadd.f32 0.0, %v1295
        %v1297 = vpop.f32.mrb[0].mxu0
        %v1298 = vpop.f32.mrb[0].mxu0
        %v1299 = vadd.f32 0.0, %v1298
        %v1300 = vpop.f32.mrb[0].mxu0
        %1301 = vmatprep.mubr.bf16.mxu0 0
        %1302 = vmatmul.mubr.bf16.gmra.mrb[0].mxu0 %v1243
        %v1303 = vpop.f32.mrb[0].mxu0
        %v1304 = vadd.f32 0.0, %v1303
        %v1305 = vpop.f32.mrb[0].mxu0
        %v1306 = vpop.f32.mrb[0].mxu0
        %v1307 = vadd.f32 0.0, %v1306
        %v1308 = vpop.f32.mrb[0].mxu0
        %1309 = vdwg.mxu0
        %v1310 = vrcp.pop %v1207
        %v1311 = vrcp.pop %v1210
        %v1312 = vrcp.pop %v1213
        %v1313 = vrcp.pop %v1216
        %v1314 = vrcp.pop %v1219
        %v1315 = vrcp.pop %v1222
        %v1316 = vrcp.pop %v1225
        %v1317 = vrcp.pop %v1228
        %v1318 = vmul.f32 %v1280, %v1310
        %v1319 = vmul.f32 %v1283, %v1311
        %v1320 = vmul.f32 %v1288, %v1312
        %v1321 = vmul.f32 %v1291, %v1313
        %v1322 = vmul.f32 %v1296, %v1314
        %v1323 = vmul.f32 %v1299, %v1315
        %v1324 = vmul.f32 %v1304, %v1316
        %v1325 = vmul.f32 %v1307, %v1317
        %s1326 = scalar_lea.vmem [#allocation8], 32
        %v1327 = vld [vmem:[%s1326] sm:$0xf]
        %v1328 = vld [vmem:[%s1326 + $0x4] sm:$0xf]
        %v1329 = vld [vmem:[%s1326 + $0x8] sm:$0xf]
        %v1330 = vld [vmem:[%s1326 + $0xc] sm:$0xf]
        %v1331 = vld [vmem:[%s1326 + $0x10] sm:$0xf]
        %v1332 = vld [vmem:[%s1326 + $0x14] sm:$0xf]
        %v1333 = vld [vmem:[%s1326 + $0x18] sm:$0xf]
        %v1334 = vld [vmem:[%s1326 + $0x1c] sm:$0xf]
        %v1335 = vunpack.c.l.bf16 %v1327
        %v1336 = vunpack.c.l.bf16 %v1328
        %v1337 = vunpack.c.l.bf16 %v1329
        %v1338 = vunpack.c.l.bf16 %v1330
        %v1339 = vunpack.c.l.bf16 %v1331
        %v1340 = vunpack.c.l.bf16 %v1332
        %v1341 = vunpack.c.l.bf16 %v1333
        %v1342 = vunpack.c.l.bf16 %v1334
        %1347 = vrot.lane.b32.xlu0 %v1002, 96
        %v1348 = vpop.permute.xlu0 %1347
        %1349 = vrot.lane.b32.xlu0 %v1005, 96
        %v1350 = vpop.permute.xlu0 %1349
        %1351 = vrot.lane.b32.xlu0 %v1008, 96
        %v1352 = vpop.permute.xlu0 %1351
        %1353 = vrot.lane.b32.xlu0 %v1011, 96
        %v1354 = vpop.permute.xlu0 %1353
        %1359 = vrot.lane.b32.xlu0 %v1003, 96
        %v1360 = vpop.permute.xlu0 %1359
        %1361 = vrot.lane.b32.xlu0 %v1006, 96
        %v1362 = vpop.permute.xlu0 %1361
        %1363 = vrot.lane.b32.xlu0 %v1009, 96
        %v1364 = vpop.permute.xlu0 %1363
        %1365 = vrot.lane.b32.xlu0 %v1012, 96
        %v1366 = vpop.permute.xlu0 %1365
        %v1368 = vsel %vm1066, %v1348, 0
        %v1371 = vsel %vm1066, %v1350, 0
        %v1374 = vsel %vm1066, %v1352, 0
        %v1377 = vsel %vm1066, %v1354, 0
        %v1380 = vsel %vm1066, %v1360, 0
        %v1383 = vsel %vm1066, %v1362, 0
        %v1386 = vsel %vm1066, %v1364, 0
        %v1389 = vsel %vm1066, %v1366, 0
        %1391 = vmatprep.subr.bf16.mxu0 0
        %1392 = vmatpush1.bf16.xpose.msra.mxu0 %v1380
        %1393 = vmatprep.subr.bf16.mxu0 0
        %1394 = vmatpush1.bf16.xpose.msra.mxu0 %v1383
        %1395 = vmatprep.subr.bf16.mxu0 0
        %1396 = vmatpush1.bf16.xpose.msra.mxu0 %v1386
        %1397 = vmatprep.subr.bf16.mxu0 0
        %1398 = vmatpush1.bf16.xpose.msra.mxu0 %v1389
        %1399 = vmatprep.subr.bf16.mxu0 0
        %1400 = vmatpush1.bf16.xpose.msra.mxu0 0
        %1401 = vmatprep.subr.bf16.mxu0 0
        %1402 = vmatpush1.bf16.xpose.msra.mxu0 0
        %1403 = vmatprep.subr.bf16.mxu0 0
        %1404 = vmatpush1.bf16.xpose.msra.mxu0 0
        %1405 = vmatprep.subr.bf16.mxu0 0
        %1406 = vmatpush1.bf16.xpose.msra.mxu0 0
        %1407 = vmatprep.subr.bf16.mxu0 0
        %1408 = vmatpush1.bf16.xpose.msra.mxu0 0
        %1409 = vmatprep.subr.bf16.mxu0 0
        %1410 = vmatpush1.bf16.xpose.msra.mxu0 0
        %1411 = vmatprep.subr.bf16.mxu0 0
        %1412 = vmatpush1.bf16.xpose.msra.mxu0 0
        %1413 = vmatprep.subr.bf16.mxu0 0
        %1414 = vmatpush1.bf16.xpose.msra.mxu0 0
        %1415 = vmatprep.subr.bf16.mxu0 0
        %1416 = vmatpush1.bf16.xpose.msra.mxu0 0
        %1417 = vmatprep.subr.bf16.mxu0 0
        %1418 = vmatpush1.bf16.xpose.msra.mxu0 0
        %1419 = vmatprep.subr.bf16.mxu0 0
        %1420 = vmatpush1.bf16.xpose.msra.mxu0 0
        %1421 = vmatprep.subr.bf16.mxu0 0
        %1422 = vmatpush1.bf16.xpose.msra.mxu0 0
        %1423 = vmatprep.mubr.bf16.mxu0 0
        %1424 = vmatmul.mubr.bf16.gmra.mrb[0].mxu0 %v1368
        %v1425 = vpop.f32.mrb[0].mxu0
        %v1426 = vadd.f32 %v1335, %v1425
        %v1427 = vpop.f32.mrb[0].mxu0
        %v1428 = vpop.f32.mrb[0].mxu0
        %v1429 = vadd.f32 %v1336, %v1428
        %v1430 = vpop.f32.mrb[0].mxu0
        %1431 = vmatprep.mubr.bf16.mxu0 0
        %1432 = vmatmul.mubr.bf16.gmra.mrb[0].mxu0 %v1371
        %v1433 = vpop.f32.mrb[0].mxu0
        %v1434 = vadd.f32 %v1337, %v1433
        %v1435 = vpop.f32.mrb[0].mxu0
        %v1436 = vpop.f32.mrb[0].mxu0
        %v1437 = vadd.f32 %v1338, %v1436
        %v1438 = vpop.f32.mrb[0].mxu0
        %1439 = vmatprep.mubr.bf16.mxu0 0
        %1440 = vmatmul.mubr.bf16.gmra.mrb[0].mxu0 %v1374
        %v1441 = vpop.f32.mrb[0].mxu0
        %v1442 = vadd.f32 %v1339, %v1441
        %v1443 = vpop.f32.mrb[0].mxu0
        %v1444 = vpop.f32.mrb[0].mxu0
        %v1445 = vadd.f32 %v1340, %v1444
        %v1446 = vpop.f32.mrb[0].mxu0
        %1447 = vmatprep.mubr.bf16.mxu0 0
        %1448 = vmatmul.mubr.bf16.gmra.mrb[0].mxu0 %v1377
        %v1449 = vpop.f32.mrb[0].mxu0
        %v1450 = vadd.f32 %v1341, %v1449
        %v1451 = vpop.f32.mrb[0].mxu0
        %v1452 = vpop.f32.mrb[0].mxu0
        %v1453 = vadd.f32 %v1342, %v1452
        %v1454 = vpop.f32.mrb[0].mxu0
        %1455 = vdwg.mxu0
        %v1456 = vsel %vm1156, %v1426, -inf
        %1457 = vmax.xlane.f32.xlu0 %v1456
        %v1458 = vpop.xlane.xlu0 %1457
        %v1459 = vsel %vm1156, %v1429, -inf
        %1460 = vmax.xlane.f32.xlu0 %v1459
        %v1461 = vpop.xlane.xlu0 %1460
        %v1462 = vsel %vm1156, %v1434, -inf
        %1463 = vmax.xlane.f32.xlu0 %v1462
        %v1464 = vpop.xlane.xlu0 %1463
        %v1465 = vsel %vm1156, %v1437, -inf
        %1466 = vmax.xlane.f32.xlu0 %v1465
        %v1467 = vpop.xlane.xlu0 %1466
        %v1468 = vsel %vm1156, %v1442, -inf
        %1469 = vmax.xlane.f32.xlu0 %v1468
        %v1470 = vpop.xlane.xlu0 %1469
        %v1471 = vsel %vm1156, %v1445, -inf
        %1472 = vmax.xlane.f32.xlu0 %v1471
        %v1473 = vpop.xlane.xlu0 %1472
        %v1474 = vsel %vm1156, %v1450, -inf
        %1475 = vmax.xlane.f32.xlu0 %v1474
        %v1476 = vpop.xlane.xlu0 %1475
        %v1477 = vsel %vm1156, %v1453, -inf
        %1478 = vmax.xlane.f32.xlu0 %v1477
        %v1479 = vpop.xlane.xlu0 %1478
        %v1480 = vsub.f32 %v1426, %v1458
        %v1481 = vsub.f32 %v1429, %v1461
        %v1482 = vsub.f32 %v1434, %v1464
        %v1483 = vsub.f32 %v1437, %v1467
        %v1484 = vsub.f32 %v1442, %v1470
        %v1485 = vsub.f32 %v1445, %v1473
        %v1486 = vsub.f32 %v1450, %v1476
        %v1487 = vsub.f32 %v1453, %v1479
        %v1488 = vmul.f32 %v1480, 1.442695
        %v1489 = vpow.pop %v1488
        %v1490 = vmul.f32 %v1481, 1.442695
        %v1491 = vpow.pop %v1490
        %v1492 = vmul.f32 %v1482, 1.442695
        %v1493 = vpow.pop %v1492
        %v1494 = vmul.f32 %v1483, 1.442695
        %v1495 = vpow.pop %v1494
        %v1496 = vmul.f32 %v1484, 1.442695
        %v1497 = vpow.pop %v1496
        %v1498 = vmul.f32 %v1485, 1.442695
        %v1499 = vpow.pop %v1498
        %v1500 = vmul.f32 %v1486, 1.442695
        %v1501 = vpow.pop %v1500
        %v1502 = vmul.f32 %v1487, 1.442695
        %v1503 = vpow.pop %v1502
        %v1504 = vsel %vm1156, %v1489, 0.0
        %1505 = vadd.xlane.f32.xlu0 %v1504
        %v1506 = vpop.xlane.xlu0 %1505
        %v1507 = vsel %vm1156, %v1491, 0.0
        %1508 = vadd.xlane.f32.xlu0 %v1507
        %v1509 = vpop.xlane.xlu0 %1508
        %v1510 = vsel %vm1156, %v1493, 0.0
        %1511 = vadd.xlane.f32.xlu0 %v1510
        %v1512 = vpop.xlane.xlu0 %1511
        %v1513 = vsel %vm1156, %v1495, 0.0
        %1514 = vadd.xlane.f32.xlu0 %v1513
        %v1515 = vpop.xlane.xlu0 %1514
        %v1516 = vsel %vm1156, %v1497, 0.0
        %1517 = vadd.xlane.f32.xlu0 %v1516
        %v1518 = vpop.xlane.xlu0 %1517
        %v1519 = vsel %vm1156, %v1499, 0.0
        %1520 = vadd.xlane.f32.xlu0 %v1519
        %v1521 = vpop.xlane.xlu0 %1520
        %v1522 = vsel %vm1156, %v1501, 0.0
        %1523 = vadd.xlane.f32.xlu0 %v1522
        %v1524 = vpop.xlane.xlu0 %1523
        %v1525 = vsel %vm1156, %v1503, 0.0
        %1526 = vadd.xlane.f32.xlu0 %v1525
        %v1527 = vpop.xlane.xlu0 %1526
        %v1528 = vpack.c.bf16 %v1491, %v1489
        %v1529 = vpack.c.bf16 %v1495, %v1493
        %v1530 = vpack.c.bf16 %v1499, %v1497
        %v1531 = vpack.c.bf16 %v1503, %v1501
        %1536 = vrot.lane.b32.xlu0 %v1004, 96
        %v1537 = vpop.permute.xlu0 %1536
        %1538 = vrot.lane.b32.xlu0 %v1007, 96
        %v1539 = vpop.permute.xlu0 %1538
        %1540 = vrot.lane.b32.xlu0 %v1010, 96
        %v1541 = vpop.permute.xlu0 %1540
        %1542 = vrot.lane.b32.xlu0 %v1013, 96
        %v1543 = vpop.permute.xlu0 %1542
        %v1549 = vsel %vm1156, %v1528, 0
        %v1552 = vsel %vm1156, %v1529, 0
        %v1555 = vsel %vm1156, %v1530, 0
        %v1558 = vsel %vm1156, %v1531, 0
        %1560 = vmatprep.subr.bf16.mxu0 0
        %1561 = vmatpush1.bf16.msra.mxu0 %v1537
        %1562 = vmatprep.subr.bf16.mxu0 0
        %1563 = vmatpush1.bf16.msra.mxu0 %v1539
        %1564 = vmatprep.subr.bf16.mxu0 0
        %1565 = vmatpush1.bf16.msra.mxu0 %v1541
        %1566 = vmatprep.subr.bf16.mxu0 0
        %1567 = vmatpush1.bf16.msra.mxu0 %v1543
        %1568 = vmatprep.subr.bf16.mxu0 0
        %1569 = vmatpush1.bf16.msra.mxu0 0
        %1570 = vmatprep.subr.bf16.mxu0 0
        %1571 = vmatpush1.bf16.msra.mxu0 0
        %1572 = vmatprep.subr.bf16.mxu0 0
        %1573 = vmatpush1.bf16.msra.mxu0 0
        %1574 = vmatprep.subr.bf16.mxu0 0
        %1575 = vmatpush1.bf16.msra.mxu0 0
        %1576 = vmatprep.subr.bf16.mxu0 0
        %1577 = vmatpush1.bf16.msra.mxu0 0
        %1578 = vmatprep.subr.bf16.mxu0 0
        %1579 = vmatpush1.bf16.msra.mxu0 0
        %1580 = vmatprep.subr.bf16.mxu0 0
        %1581 = vmatpush1.bf16.msra.mxu0 0
        %1582 = vmatprep.subr.bf16.mxu0 0
        %1583 = vmatpush1.bf16.msra.mxu0 0
        %1584 = vmatprep.subr.bf16.mxu0 0
        %1585 = vmatpush1.bf16.msra.mxu0 0
        %1586 = vmatprep.subr.bf16.mxu0 0
        %1587 = vmatpush1.bf16.msra.mxu0 0
        %1588 = vmatprep.subr.bf16.mxu0 0
        %1589 = vmatpush1.bf16.msra.mxu0 0
        %1590 = vmatprep.subr.bf16.mxu0 0
        %1591 = vmatpush1.bf16.msra.mxu0 0
        %1592 = vmatprep.mubr.bf16.mxu0 0
        %1593 = vmatmul.mubr.bf16.gmra.mrb[0].mxu0 %v1549
        %v1594 = vpop.f32.mrb[0].mxu0
        %v1595 = vadd.f32 0.0, %v1594
        %v1596 = vpop.f32.mrb[0].mxu0
        %v1597 = vpop.f32.mrb[0].mxu0
        %v1598 = vadd.f32 0.0, %v1597
        %v1599 = vpop.f32.mrb[0].mxu0
        %1600 = vmatprep.mubr.bf16.mxu0 0
        %1601 = vmatmul.mubr.bf16.gmra.mrb[0].mxu0 %v1552
        %v1602 = vpop.f32.mrb[0].mxu0
        %v1603 = vadd.f32 0.0, %v1602
        %v1604 = vpop.f32.mrb[0].mxu0
        %v1605 = vpop.f32.mrb[0].mxu0
        %v1606 = vadd.f32 0.0, %v1605
        %v1607 = vpop.f32.mrb[0].mxu0
        %1608 = vmatprep.mubr.bf16.mxu0 0
        %1609 = vmatmul.mubr.bf16.gmra.mrb[0].mxu0 %v1555
        %v1610 = vpop.f32.mrb[0].mxu0
        %v1611 = vadd.f32 0.0, %v1610
        %v1612 = vpop.f32.mrb[0].mxu0
        %v1613 = vpop.f32.mrb[0].mxu0
        %v1614 = vadd.f32 0.0, %v1613
        %v1615 = vpop.f32.mrb[0].mxu0
        %1616 = vmatprep.mubr.bf16.mxu0 0
        %1617 = vmatmul.mubr.bf16.gmra.mrb[0].mxu0 %v1558
        %v1618 = vpop.f32.mrb[0].mxu0
        %v1619 = vadd.f32 0.0, %v1618
        %v1620 = vpop.f32.mrb[0].mxu0
        %v1621 = vpop.f32.mrb[0].mxu0
        %v1622 = vadd.f32 0.0, %v1621
        %v1623 = vpop.f32.mrb[0].mxu0
        %1624 = vdwg.mxu0
        %v1625 = vrcp.pop %v1506
        %v1626 = vrcp.pop %v1509
        %v1627 = vrcp.pop %v1512
        %v1628 = vrcp.pop %v1515
        %v1629 = vrcp.pop %v1518
        %v1630 = vrcp.pop %v1521
        %v1631 = vrcp.pop %v1524
        %v1632 = vrcp.pop %v1527
        %v1633 = vmul.f32 %v1595, %v1625
        %v1634 = vmul.f32 %v1598, %v1626
        %v1635 = vmul.f32 %v1603, %v1627
        %v1636 = vmul.f32 %v1606, %v1628
        %v1637 = vmul.f32 %v1611, %v1629
        %v1638 = vmul.f32 %v1614, %v1630
        %v1639 = vmul.f32 %v1619, %v1631
        %v1640 = vmul.f32 %v1622, %v1632
        %s1641 = scalar_lea.vmem [#allocation8], 64
        %v1642 = vld [vmem:[%s1641] sm:$0xf]
        %v1643 = vld [vmem:[%s1641 + $0x4] sm:$0xf]
        %v1644 = vld [vmem:[%s1641 + $0x8] sm:$0xf]
        %v1645 = vld [vmem:[%s1641 + $0xc] sm:$0xf]
        %v1646 = vld [vmem:[%s1641 + $0x10] sm:$0xf]
        %v1647 = vld [vmem:[%s1641 + $0x14] sm:$0xf]
        %v1648 = vld [vmem:[%s1641 + $0x18] sm:$0xf]
        %v1649 = vld [vmem:[%s1641 + $0x1c] sm:$0xf]
        %v1650 = vunpack.c.l.bf16 %v1642
        %v1651 = vunpack.c.l.bf16 %v1643
        %v1652 = vunpack.c.l.bf16 %v1644
        %v1653 = vunpack.c.l.bf16 %v1645
        %v1654 = vunpack.c.l.bf16 %v1646
        %v1655 = vunpack.c.l.bf16 %v1647
        %v1656 = vunpack.c.l.bf16 %v1648
        %v1657 = vunpack.c.l.bf16 %v1649
        %1658 = vrot.lane.b32.xlu0 %v1002, 64
        %v1659 = vpop.permute.xlu0 %1658
        %1660 = vrot.lane.b32.xlu0 %v1005, 64
        %v1661 = vpop.permute.xlu0 %1660
        %1662 = vrot.lane.b32.xlu0 %v1008, 64
        %v1663 = vpop.permute.xlu0 %1662
        %1664 = vrot.lane.b32.xlu0 %v1011, 64
        %v1665 = vpop.permute.xlu0 %1664
        %1666 = vrot.lane.b32.xlu0 %v1003, 64
        %v1667 = vpop.permute.xlu0 %1666
        %1668 = vrot.lane.b32.xlu0 %v1006, 64
        %v1669 = vpop.permute.xlu0 %1668
        %1670 = vrot.lane.b32.xlu0 %v1009, 64
        %v1671 = vpop.permute.xlu0 %1670
        %1672 = vrot.lane.b32.xlu0 %v1012, 64
        %v1673 = vpop.permute.xlu0 %1672
        %v1675 = vsel %vm1066, %v1659, 0
        %v1678 = vsel %vm1066, %v1661, 0
        %v1681 = vsel %vm1066, %v1663, 0
        %v1684 = vsel %vm1066, %v1665, 0
        %v1687 = vsel %vm1066, %v1667, 0
        %v1690 = vsel %vm1066, %v1669, 0
        %v1693 = vsel %vm1066, %v1671, 0
        %v1696 = vsel %vm1066, %v1673, 0
        %1698 = vmatprep.subr.bf16.mxu0 0
        %1699 = vmatpush1.bf16.xpose.msra.mxu0 %v1687
        %1700 = vmatprep.subr.bf16.mxu0 0
        %1701 = vmatpush1.bf16.xpose.msra.mxu0 %v1690
        %1702 = vmatprep.subr.bf16.mxu0 0
        %1703 = vmatpush1.bf16.xpose.msra.mxu0 %v1693
        %1704 = vmatprep.subr.bf16.mxu0 0
        %1705 = vmatpush1.bf16.xpose.msra.mxu0 %v1696
        %1706 = vmatprep.subr.bf16.mxu0 0
        %1707 = vmatpush1.bf16.xpose.msra.mxu0 0
        %1708 = vmatprep.subr.bf16.mxu0 0
        %1709 = vmatpush1.bf16.xpose.msra.mxu0 0
        %1710 = vmatprep.subr.bf16.mxu0 0
        %1711 = vmatpush1.bf16.xpose.msra.mxu0 0
        %1712 = vmatprep.subr.bf16.mxu0 0
        %1713 = vmatpush1.bf16.xpose.msra.mxu0 0
        %1714 = vmatprep.subr.bf16.mxu0 0
        %1715 = vmatpush1.bf16.xpose.msra.mxu0 0
        %1716 = vmatprep.subr.bf16.mxu0 0
        %1717 = vmatpush1.bf16.xpose.msra.mxu0 0
        %1718 = vmatprep.subr.bf16.mxu0 0
        %1719 = vmatpush1.bf16.xpose.msra.mxu0 0
        %1720 = vmatprep.subr.bf16.mxu0 0
        %1721 = vmatpush1.bf16.xpose.msra.mxu0 0
        %1722 = vmatprep.subr.bf16.mxu0 0
        %1723 = vmatpush1.bf16.xpose.msra.mxu0 0
        %1724 = vmatprep.subr.bf16.mxu0 0
        %1725 = vmatpush1.bf16.xpose.msra.mxu0 0
        %1726 = vmatprep.subr.bf16.mxu0 0
        %1727 = vmatpush1.bf16.xpose.msra.mxu0 0
        %1728 = vmatprep.subr.bf16.mxu0 0
        %1729 = vmatpush1.bf16.xpose.msra.mxu0 0
        %1730 = vmatprep.mubr.bf16.mxu0 0
        %1731 = vmatmul.mubr.bf16.gmra.mrb[0].mxu0 %v1675
        %v1732 = vpop.f32.mrb[0].mxu0
        %v1733 = vadd.f32 %v1650, %v1732
        %v1734 = vpop.f32.mrb[0].mxu0
        %v1735 = vpop.f32.mrb[0].mxu0
        %v1736 = vadd.f32 %v1651, %v1735
        %v1737 = vpop.f32.mrb[0].mxu0
        %1738 = vmatprep.mubr.bf16.mxu0 0
        %1739 = vmatmul.mubr.bf16.gmra.mrb[0].mxu0 %v1678
        %v1740 = vpop.f32.mrb[0].mxu0
        %v1741 = vadd.f32 %v1652, %v1740
        %v1742 = vpop.f32.mrb[0].mxu0
        %v1743 = vpop.f32.mrb[0].mxu0
        %v1744 = vadd.f32 %v1653, %v1743
        %v1745 = vpop.f32.mrb[0].mxu0
        %1746 = vmatprep.mubr.bf16.mxu0 0
        %1747 = vmatmul.mubr.bf16.gmra.mrb[0].mxu0 %v1681
        %v1748 = vpop.f32.mrb[0].mxu0
        %v1749 = vadd.f32 %v1654, %v1748
        %v1750 = vpop.f32.mrb[0].mxu0
        %v1751 = vpop.f32.mrb[0].mxu0
        %v1752 = vadd.f32 %v1655, %v1751
        %v1753 = vpop.f32.mrb[0].mxu0
        %1754 = vmatprep.mubr.bf16.mxu0 0
        %1755 = vmatmul.mubr.bf16.gmra.mrb[0].mxu0 %v1684
        %v1756 = vpop.f32.mrb[0].mxu0
        %v1757 = vadd.f32 %v1656, %v1756
        %v1758 = vpop.f32.mrb[0].mxu0
        %v1759 = vpop.f32.mrb[0].mxu0
        %v1760 = vadd.f32 %v1657, %v1759
        %v1761 = vpop.f32.mrb[0].mxu0
        %1762 = vdwg.mxu0
        %v1763 = vsel %vm1156, %v1733, -inf
        %1764 = vmax.xlane.f32.xlu0 %v1763
        %v1765 = vpop.xlane.xlu0 %1764
        %v1766 = vsel %vm1156, %v1736, -inf
        %1767 = vmax.xlane.f32.xlu0 %v1766
        %v1768 = vpop.xlane.xlu0 %1767
        %v1769 = vsel %vm1156, %v1741, -inf
        %1770 = vmax.xlane.f32.xlu0 %v1769
        %v1771 = vpop.xlane.xlu0 %1770
        %v1772 = vsel %vm1156, %v1744, -inf
        %1773 = vmax.xlane.f32.xlu0 %v1772
        %v1774 = vpop.xlane.xlu0 %1773
        %v1775 = vsel %vm1156, %v1749, -inf
        %1776 = vmax.xlane.f32.xlu0 %v1775
        %v1777 = vpop.xlane.xlu0 %1776
        %v1778 = vsel %vm1156, %v1752, -inf
        %1779 = vmax.xlane.f32.xlu0 %v1778
        %v1780 = vpop.xlane.xlu0 %1779
        %v1781 = vsel %vm1156, %v1757, -inf
        %1782 = vmax.xlane.f32.xlu0 %v1781
        %v1783 = vpop.xlane.xlu0 %1782
        %v1784 = vsel %vm1156, %v1760, -inf
        %1785 = vmax.xlane.f32.xlu0 %v1784
        %v1786 = vpop.xlane.xlu0 %1785
        %v1787 = vsub.f32 %v1733, %v1765
        %v1788 = vsub.f32 %v1736, %v1768
        %v1789 = vsub.f32 %v1741, %v1771
        %v1790 = vsub.f32 %v1744, %v1774
        %v1791 = vsub.f32 %v1749, %v1777
        %v1792 = vsub.f32 %v1752, %v1780
        %v1793 = vsub.f32 %v1757, %v1783
        %v1794 = vsub.f32 %v1760, %v1786
        %v1795 = vmul.f32 %v1787, 1.442695
        %v1796 = vpow.pop %v1795
        %v1797 = vmul.f32 %v1788, 1.442695
        %v1798 = vpow.pop %v1797
        %v1799 = vmul.f32 %v1789, 1.442695
        %v1800 = vpow.pop %v1799
        %v1801 = vmul.f32 %v1790, 1.442695
        %v1802 = vpow.pop %v1801
        %v1803 = vmul.f32 %v1791, 1.442695
        %v1804 = vpow.pop %v1803
        %v1805 = vmul.f32 %v1792, 1.442695
        %v1806 = vpow.pop %v1805
        %v1807 = vmul.f32 %v1793, 1.442695
        %v1808 = vpow.pop %v1807
        %v1809 = vmul.f32 %v1794, 1.442695
        %v1810 = vpow.pop %v1809
        %v1811 = vsel %vm1156, %v1796, 0.0
        %1812 = vadd.xlane.f32.xlu0 %v1811
        %v1813 = vpop.xlane.xlu0 %1812
        %v1814 = vsel %vm1156, %v1798, 0.0
        %1815 = vadd.xlane.f32.xlu0 %v1814
        %v1816 = vpop.xlane.xlu0 %1815
        %v1817 = vsel %vm1156, %v1800, 0.0
        %1818 = vadd.xlane.f32.xlu0 %v1817
        %v1819 = vpop.xlane.xlu0 %1818
        %v1820 = vsel %vm1156, %v1802, 0.0
        %1821 = vadd.xlane.f32.xlu0 %v1820
        %v1822 = vpop.xlane.xlu0 %1821
        %v1823 = vsel %vm1156, %v1804, 0.0
        %1824 = vadd.xlane.f32.xlu0 %v1823
        %v1825 = vpop.xlane.xlu0 %1824
        %v1826 = vsel %vm1156, %v1806, 0.0
        %1827 = vadd.xlane.f32.xlu0 %v1826
        %v1828 = vpop.xlane.xlu0 %1827
        %v1829 = vsel %vm1156, %v1808, 0.0
        %1830 = vadd.xlane.f32.xlu0 %v1829
        %v1831 = vpop.xlane.xlu0 %1830
        %v1832 = vsel %vm1156, %v1810, 0.0
        %1833 = vadd.xlane.f32.xlu0 %v1832
        %v1834 = vpop.xlane.xlu0 %1833
        %v1835 = vpack.c.bf16 %v1798, %v1796
        %v1836 = vpack.c.bf16 %v1802, %v1800
        %v1837 = vpack.c.bf16 %v1806, %v1804
        %v1838 = vpack.c.bf16 %v1810, %v1808
        %1839 = vrot.lane.b32.xlu0 %v1004, 64
        %v1840 = vpop.permute.xlu0 %1839
        %1841 = vrot.lane.b32.xlu0 %v1007, 64
        %v1842 = vpop.permute.xlu0 %1841
        %1843 = vrot.lane.b32.xlu0 %v1010, 64
        %v1844 = vpop.permute.xlu0 %1843
        %1845 = vrot.lane.b32.xlu0 %v1013, 64
        %v1846 = vpop.permute.xlu0 %1845
        %v1852 = vsel %vm1156, %v1835, 0
        %v1855 = vsel %vm1156, %v1836, 0
        %v1858 = vsel %vm1156, %v1837, 0
        %v1861 = vsel %vm1156, %v1838, 0
        %1863 = vmatprep.subr.bf16.mxu0 0
        %1864 = vmatpush1.bf16.msra.mxu0 %v1840
        %1865 = vmatprep.subr.bf16.mxu0 0
        %1866 = vmatpush1.bf16.msra.mxu0 %v1842
        %1867 = vmatprep.subr.bf16.mxu0 0
        %1868 = vmatpush1.bf16.msra.mxu0 %v1844
        %1869 = vmatprep.subr.bf16.mxu0 0
        %1870 = vmatpush1.bf16.msra.mxu0 %v1846
        %1871 = vmatprep.subr.bf16.mxu0 0
        %1872 = vmatpush1.bf16.msra.mxu0 0
        %1873 = vmatprep.subr.bf16.mxu0 0
        %1874 = vmatpush1.bf16.msra.mxu0 0
        %1875 = vmatprep.subr.bf16.mxu0 0
        %1876 = vmatpush1.bf16.msra.mxu0 0
        %1877 = vmatprep.subr.bf16.mxu0 0
        %1878 = vmatpush1.bf16.msra.mxu0 0
        %1879 = vmatprep.subr.bf16.mxu0 0
        %1880 = vmatpush1.bf16.msra.mxu0 0
        %1881 = vmatprep.subr.bf16.mxu0 0
        %1882 = vmatpush1.bf16.msra.mxu0 0
        %1883 = vmatprep.subr.bf16.mxu0 0
        %1884 = vmatpush1.bf16.msra.mxu0 0
        %1885 = vmatprep.subr.bf16.mxu0 0
        %1886 = vmatpush1.bf16.msra.mxu0 0
        %1887 = vmatprep.subr.bf16.mxu0 0
        %1888 = vmatpush1.bf16.msra.mxu0 0
        %1889 = vmatprep.subr.bf16.mxu0 0
        %1890 = vmatpush1.bf16.msra.mxu0 0
        %1891 = vmatprep.subr.bf16.mxu0 0
        %1892 = vmatpush1.bf16.msra.mxu0 0
        %1893 = vmatprep.subr.bf16.mxu0 0
        %1894 = vmatpush1.bf16.msra.mxu0 0
        %1895 = vmatprep.mubr.bf16.mxu0 0
        %1896 = vmatmul.mubr.bf16.gmra.mrb[0].mxu0 %v1852
        %v1897 = vpop.f32.mrb[0].mxu0
        %v1898 = vadd.f32 0.0, %v1897
        %v1899 = vpop.f32.mrb[0].mxu0
        %v1900 = vpop.f32.mrb[0].mxu0
        %v1901 = vadd.f32 0.0, %v1900
        %v1902 = vpop.f32.mrb[0].mxu0
        %1903 = vmatprep.mubr.bf16.mxu0 0
        %1904 = vmatmul.mubr.bf16.gmra.mrb[0].mxu0 %v1855
        %v1905 = vpop.f32.mrb[0].mxu0
        %v1906 = vadd.f32 0.0, %v1905
        %v1907 = vpop.f32.mrb[0].mxu0
        %v1908 = vpop.f32.mrb[0].mxu0
        %v1909 = vadd.f32 0.0, %v1908
        %v1910 = vpop.f32.mrb[0].mxu0
        %1911 = vmatprep.mubr.bf16.mxu0 0
        %1912 = vmatmul.mubr.bf16.gmra.mrb[0].mxu0 %v1858
        %v1913 = vpop.f32.mrb[0].mxu0
        %v1914 = vadd.f32 0.0, %v1913
        %v1915 = vpop.f32.mrb[0].mxu0
        %v1916 = vpop.f32.mrb[0].mxu0
        %v1917 = vadd.f32 0.0, %v1916
        %v1918 = vpop.f32.mrb[0].mxu0
        %1919 = vmatprep.mubr.bf16.mxu0 0
        %1920 = vmatmul.mubr.bf16.gmra.mrb[0].mxu0 %v1861
        %v1921 = vpop.f32.mrb[0].mxu0
        %v1922 = vadd.f32 0.0, %v1921
        %v1923 = vpop.f32.mrb[0].mxu0
        %v1924 = vpop.f32.mrb[0].mxu0
        %v1925 = vadd.f32 0.0, %v1924
        %v1926 = vpop.f32.mrb[0].mxu0
        %1927 = vdwg.mxu0
        %v1928 = vrcp.pop %v1813
        %v1929 = vrcp.pop %v1816
        %v1930 = vrcp.pop %v1819
        %v1931 = vrcp.pop %v1822
        %v1932 = vrcp.pop %v1825
        %v1933 = vrcp.pop %v1828
        %v1934 = vrcp.pop %v1831
        %v1935 = vrcp.pop %v1834
        %v1936 = vmul.f32 %v1898, %v1928
        %v1937 = vmul.f32 %v1901, %v1929
        %v1938 = vmul.f32 %v1906, %v1930
        %v1939 = vmul.f32 %v1909, %v1931
        %v1940 = vmul.f32 %v1914, %v1932
        %v1941 = vmul.f32 %v1917, %v1933
        %v1942 = vmul.f32 %v1922, %v1934
        %v1943 = vmul.f32 %v1925, %v1935
        %s1944 = scalar_lea.vmem [#allocation8], 96
        %v1945 = vld [vmem:[%s1944] sm:$0xf]
        %v1946 = vld [vmem:[%s1944 + $0x4] sm:$0xf]
        %v1947 = vld [vmem:[%s1944 + $0x8] sm:$0xf]
        %v1948 = vld [vmem:[%s1944 + $0xc] sm:$0xf]
        %v1949 = vld [vmem:[%s1944 + $0x10] sm:$0xf]
        %v1950 = vld [vmem:[%s1944 + $0x14] sm:$0xf]
        %v1951 = vld [vmem:[%s1944 + $0x18] sm:$0xf]
        %v1952 = vld [vmem:[%s1944 + $0x1c] sm:$0xf]
        %v1953 = vunpack.c.l.bf16 %v1945
        %v1954 = vunpack.c.l.bf16 %v1946
        %v1955 = vunpack.c.l.bf16 %v1947
        %v1956 = vunpack.c.l.bf16 %v1948
        %v1957 = vunpack.c.l.bf16 %v1949
        %v1958 = vunpack.c.l.bf16 %v1950
        %v1959 = vunpack.c.l.bf16 %v1951
        %v1960 = vunpack.c.l.bf16 %v1952
        %1961 = vrot.lane.b32.xlu0 %v1002, 32
        %v1962 = vpop.permute.xlu0 %1961
        %1963 = vrot.lane.b32.xlu0 %v1005, 32
        %v1964 = vpop.permute.xlu0 %1963
        %1965 = vrot.lane.b32.xlu0 %v1008, 32
        %v1966 = vpop.permute.xlu0 %1965
        %1967 = vrot.lane.b32.xlu0 %v1011, 32
        %v1968 = vpop.permute.xlu0 %1967
        %1969 = vrot.lane.b32.xlu0 %v1003, 32
        %v1970 = vpop.permute.xlu0 %1969
        %1971 = vrot.lane.b32.xlu0 %v1006, 32
        %v1972 = vpop.permute.xlu0 %1971
        %1973 = vrot.lane.b32.xlu0 %v1009, 32
        %v1974 = vpop.permute.xlu0 %1973
        %1975 = vrot.lane.b32.xlu0 %v1012, 32
        %v1976 = vpop.permute.xlu0 %1975
        %v1978 = vsel %vm1066, %v1962, 0
        %v1981 = vsel %vm1066, %v1964, 0
        %v1984 = vsel %vm1066, %v1966, 0
        %v1987 = vsel %vm1066, %v1968, 0
        %v1990 = vsel %vm1066, %v1970, 0
        %v1993 = vsel %vm1066, %v1972, 0
        %v1996 = vsel %vm1066, %v1974, 0
        %v1999 = vsel %vm1066, %v1976, 0
        %2001 = vmatprep.subr.bf16.mxu0 0
        %2002 = vmatpush1.bf16.xpose.msra.mxu0 %v1990
        %2003 = vmatprep.subr.bf16.mxu0 0
        %2004 = vmatpush1.bf16.xpose.msra.mxu0 %v1993
        %2005 = vmatprep.subr.bf16.mxu0 0
        %2006 = vmatpush1.bf16.xpose.msra.mxu0 %v1996
        %2007 = vmatprep.subr.bf16.mxu0 0
        %2008 = vmatpush1.bf16.xpose.msra.mxu0 %v1999
        %2009 = vmatprep.subr.bf16.mxu0 0
        %2010 = vmatpush1.bf16.xpose.msra.mxu0 0
        %2011 = vmatprep.subr.bf16.mxu0 0
        %2012 = vmatpush1.bf16.xpose.msra.mxu0 0
        %2013 = vmatprep.subr.bf16.mxu0 0
        %2014 = vmatpush1.bf16.xpose.msra.mxu0 0
        %2015 = vmatprep.subr.bf16.mxu0 0
        %2016 = vmatpush1.bf16.xpose.msra.mxu0 0
        %2017 = vmatprep.subr.bf16.mxu0 0
        %2018 = vmatpush1.bf16.xpose.msra.mxu0 0
        %2019 = vmatprep.subr.bf16.mxu0 0
        %2020 = vmatpush1.bf16.xpose.msra.mxu0 0
        %2021 = vmatprep.subr.bf16.mxu0 0
        %2022 = vmatpush1.bf16.xpose.msra.mxu0 0
        %2023 = vmatprep.subr.bf16.mxu0 0
        %2024 = vmatpush1.bf16.xpose.msra.mxu0 0
        %2025 = vmatprep.subr.bf16.mxu0 0
        %2026 = vmatpush1.bf16.xpose.msra.mxu0 0
        %2027 = vmatprep.subr.bf16.mxu0 0
        %2028 = vmatpush1.bf16.xpose.msra.mxu0 0
        %2029 = vmatprep.subr.bf16.mxu0 0
        %2030 = vmatpush1.bf16.xpose.msra.mxu0 0
        %2031 = vmatprep.subr.bf16.mxu0 0
        %2032 = vmatpush1.bf16.xpose.msra.mxu0 0
        %2033 = vmatprep.mubr.bf16.mxu0 0
        %2034 = vmatmul.mubr.bf16.gmra.mrb[0].mxu0 %v1978
        %v2035 = vpop.f32.mrb[0].mxu0
        %v2036 = vadd.f32 %v1953, %v2035
        %v2037 = vpop.f32.mrb[0].mxu0
        %v2038 = vpop.f32.mrb[0].mxu0
        %v2039 = vadd.f32 %v1954, %v2038
        %v2040 = vpop.f32.mrb[0].mxu0
        %2041 = vmatprep.mubr.bf16.mxu0 0
        %2042 = vmatmul.mubr.bf16.gmra.mrb[0].mxu0 %v1981
        %v2043 = vpop.f32.mrb[0].mxu0
        %v2044 = vadd.f32 %v1955, %v2043
        %v2045 = vpop.f32.mrb[0].mxu0
        %v2046 = vpop.f32.mrb[0].mxu0
        %v2047 = vadd.f32 %v1956, %v2046
        %v2048 = vpop.f32.mrb[0].mxu0
        %2049 = vmatprep.mubr.bf16.mxu0 0
        %2050 = vmatmul.mubr.bf16.gmra.mrb[0].mxu0 %v1984
        %v2051 = vpop.f32.mrb[0].mxu0
        %v2052 = vadd.f32 %v1957, %v2051
        %v2053 = vpop.f32.mrb[0].mxu0
        %v2054 = vpop.f32.mrb[0].mxu0
        %v2055 = vadd.f32 %v1958, %v2054
        %v2056 = vpop.f32.mrb[0].mxu0
        %2057 = vmatprep.mubr.bf16.mxu0 0
        %2058 = vmatmul.mubr.bf16.gmra.mrb[0].mxu0 %v1987
        %v2059 = vpop.f32.mrb[0].mxu0
        %v2060 = vadd.f32 %v1959, %v2059
        %v2061 = vpop.f32.mrb[0].mxu0
        %v2062 = vpop.f32.mrb[0].mxu0
        %v2063 = vadd.f32 %v1960, %v2062
        %v2064 = vpop.f32.mrb[0].mxu0
        %2065 = vdwg.mxu0
        %v2066 = vsel %vm1156, %v2036, -inf
        %2067 = vmax.xlane.f32.xlu0 %v2066
        %v2068 = vpop.xlane.xlu0 %2067
        %v2069 = vsel %vm1156, %v2039, -inf
        %2070 = vmax.xlane.f32.xlu0 %v2069
        %v2071 = vpop.xlane.xlu0 %2070
        %v2072 = vsel %vm1156, %v2044, -inf
        %2073 = vmax.xlane.f32.xlu0 %v2072
        %v2074 = vpop.xlane.xlu0 %2073
        %v2075 = vsel %vm1156, %v2047, -inf
        %2076 = vmax.xlane.f32.xlu0 %v2075
        %v2077 = vpop.xlane.xlu0 %2076
        %v2078 = vsel %vm1156, %v2052, -inf
        %2079 = vmax.xlane.f32.xlu0 %v2078
        %v2080 = vpop.xlane.xlu0 %2079
        %v2081 = vsel %vm1156, %v2055, -inf
        %2082 = vmax.xlane.f32.xlu0 %v2081
        %v2083 = vpop.xlane.xlu0 %2082
        %v2084 = vsel %vm1156, %v2060, -inf
        %2085 = vmax.xlane.f32.xlu0 %v2084
        %v2086 = vpop.xlane.xlu0 %2085
        %v2087 = vsel %vm1156, %v2063, -inf
        %2088 = vmax.xlane.f32.xlu0 %v2087
        %v2089 = vpop.xlane.xlu0 %2088
        %v2090 = vsub.f32 %v2036, %v2068
        %v2091 = vsub.f32 %v2039, %v2071
        %v2092 = vsub.f32 %v2044, %v2074
        %v2093 = vsub.f32 %v2047, %v2077
        %v2094 = vsub.f32 %v2052, %v2080
        %v2095 = vsub.f32 %v2055, %v2083
        %v2096 = vsub.f32 %v2060, %v2086
        %v2097 = vsub.f32 %v2063, %v2089
        %v2098 = vmul.f32 %v2090, 1.442695
        %v2099 = vpow.pop %v2098
        %v2100 = vmul.f32 %v2091, 1.442695
        %v2101 = vpow.pop %v2100
        %v2102 = vmul.f32 %v2092, 1.442695
        %v2103 = vpow.pop %v2102
        %v2104 = vmul.f32 %v2093, 1.442695
        %v2105 = vpow.pop %v2104
        %v2106 = vmul.f32 %v2094, 1.442695
        %v2107 = vpow.pop %v2106
        %v2108 = vmul.f32 %v2095, 1.442695
        %v2109 = vpow.pop %v2108
        %v2110 = vmul.f32 %v2096, 1.442695
        %v2111 = vpow.pop %v2110
        %v2112 = vmul.f32 %v2097, 1.442695
        %v2113 = vpow.pop %v2112
        %v2114 = vsel %vm1156, %v2099, 0.0
        %2115 = vadd.xlane.f32.xlu0 %v2114
        %v2116 = vpop.xlane.xlu0 %2115
        %v2117 = vsel %vm1156, %v2101, 0.0
        %2118 = vadd.xlane.f32.xlu0 %v2117
        %v2119 = vpop.xlane.xlu0 %2118
        %v2120 = vsel %vm1156, %v2103, 0.0
        %2121 = vadd.xlane.f32.xlu0 %v2120
        %v2122 = vpop.xlane.xlu0 %2121
        %v2123 = vsel %vm1156, %v2105, 0.0
        %2124 = vadd.xlane.f32.xlu0 %v2123
        %v2125 = vpop.xlane.xlu0 %2124
        %v2126 = vsel %vm1156, %v2107, 0.0
        %2127 = vadd.xlane.f32.xlu0 %v2126
        %v2128 = vpop.xlane.xlu0 %2127
        %v2129 = vsel %vm1156, %v2109, 0.0
        %2130 = vadd.xlane.f32.xlu0 %v2129
        %v2131 = vpop.xlane.xlu0 %2130
        %v2132 = vsel %vm1156, %v2111, 0.0
        %2133 = vadd.xlane.f32.xlu0 %v2132
        %v2134 = vpop.xlane.xlu0 %2133
        %v2135 = vsel %vm1156, %v2113, 0.0
        %2136 = vadd.xlane.f32.xlu0 %v2135
        %v2137 = vpop.xlane.xlu0 %2136
        %v2138 = vpack.c.bf16 %v2101, %v2099
        %v2139 = vpack.c.bf16 %v2105, %v2103
        %v2140 = vpack.c.bf16 %v2109, %v2107
        %v2141 = vpack.c.bf16 %v2113, %v2111
        %2142 = vrot.lane.b32.xlu0 %v1004, 32
        %v2143 = vpop.permute.xlu0 %2142
        %2144 = vrot.lane.b32.xlu0 %v1007, 32
        %v2145 = vpop.permute.xlu0 %2144
        %2146 = vrot.lane.b32.xlu0 %v1010, 32
        %v2147 = vpop.permute.xlu0 %2146
        %2148 = vrot.lane.b32.xlu0 %v1013, 32
        %v2149 = vpop.permute.xlu0 %2148
        %v2155 = vsel %vm1156, %v2138, 0
        %v2158 = vsel %vm1156, %v2139, 0
        %v2161 = vsel %vm1156, %v2140, 0
        %v2164 = vsel %vm1156, %v2141, 0
        %2166 = vmatprep.subr.bf16.mxu0 0
        %2167 = vmatpush1.bf16.msra.mxu0 %v2143
        %2168 = vmatprep.subr.bf16.mxu0 0
        %2169 = vmatpush1.bf16.msra.mxu0 %v2145
        %2170 = vmatprep.subr.bf16.mxu0 0
        %2171 = vmatpush1.bf16.msra.mxu0 %v2147
        %2172 = vmatprep.subr.bf16.mxu0 0
        %2173 = vmatpush1.bf16.msra.mxu0 %v2149
        %2174 = vmatprep.subr.bf16.mxu0 0
        %2175 = vmatpush1.bf16.msra.mxu0 0
        %2176 = vmatprep.subr.bf16.mxu0 0
        %2177 = vmatpush1.bf16.msra.mxu0 0
        %2178 = vmatprep.subr.bf16.mxu0 0
        %2179 = vmatpush1.bf16.msra.mxu0 0
        %2180 = vmatprep.subr.bf16.mxu0 0
        %2181 = vmatpush1.bf16.msra.mxu0 0
        %2182 = vmatprep.subr.bf16.mxu0 0
        %2183 = vmatpush1.bf16.msra.mxu0 0
        %2184 = vmatprep.subr.bf16.mxu0 0
        %2185 = vmatpush1.bf16.msra.mxu0 0
        %2186 = vmatprep.subr.bf16.mxu0 0
        %2187 = vmatpush1.bf16.msra.mxu0 0
        %2188 = vmatprep.subr.bf16.mxu0 0
        %2189 = vmatpush1.bf16.msra.mxu0 0
        %2190 = vmatprep.subr.bf16.mxu0 0
        %2191 = vmatpush1.bf16.msra.mxu0 0
        %2192 = vmatprep.subr.bf16.mxu0 0
        %2193 = vmatpush1.bf16.msra.mxu0 0
        %2194 = vmatprep.subr.bf16.mxu0 0
        %2195 = vmatpush1.bf16.msra.mxu0 0
        %2196 = vmatprep.subr.bf16.mxu0 0
        %2197 = vmatpush1.bf16.msra.mxu0 0
        %2198 = vmatprep.mubr.bf16.mxu0 0
        %2199 = vmatmul.mubr.bf16.gmra.mrb[0].mxu0 %v2155
        %v2200 = vpop.f32.mrb[0].mxu0
        %v2201 = vadd.f32 0.0, %v2200
        %v2202 = vpop.f32.mrb[0].mxu0
        %v2203 = vpop.f32.mrb[0].mxu0
        %v2204 = vadd.f32 0.0, %v2203
        %v2205 = vpop.f32.mrb[0].mxu0
        %2206 = vmatprep.mubr.bf16.mxu0 0
        %2207 = vmatmul.mubr.bf16.gmra.mrb[0].mxu0 %v2158
        %v2208 = vpop.f32.mrb[0].mxu0
        %v2209 = vadd.f32 0.0, %v2208
        %v2210 = vpop.f32.mrb[0].mxu0
        %v2211 = vpop.f32.mrb[0].mxu0
        %v2212 = vadd.f32 0.0, %v2211
        %v2213 = vpop.f32.mrb[0].mxu0
        %2214 = vmatprep.mubr.bf16.mxu0 0
        %2215 = vmatmul.mubr.bf16.gmra.mrb[0].mxu0 %v2161
        %v2216 = vpop.f32.mrb[0].mxu0
        %v2217 = vadd.f32 0.0, %v2216
        %v2218 = vpop.f32.mrb[0].mxu0
        %v2219 = vpop.f32.mrb[0].mxu0
        %v2220 = vadd.f32 0.0, %v2219
        %v2221 = vpop.f32.mrb[0].mxu0
        %2222 = vmatprep.mubr.bf16.mxu0 0
        %2223 = vmatmul.mubr.bf16.gmra.mrb[0].mxu0 %v2164
        %v2224 = vpop.f32.mrb[0].mxu0
        %v2225 = vadd.f32 0.0, %v2224
        %v2226 = vpop.f32.mrb[0].mxu0
        %v2227 = vpop.f32.mrb[0].mxu0
        %v2228 = vadd.f32 0.0, %v2227
        %v2229 = vpop.f32.mrb[0].mxu0
        %2230 = vdwg.mxu0
        %v2231 = vrcp.pop %v2116
        %v2232 = vrcp.pop %v2119
        %v2233 = vrcp.pop %v2122
        %v2234 = vrcp.pop %v2125
        %v2235 = vrcp.pop %v2128
        %v2236 = vrcp.pop %v2131
        %v2237 = vrcp.pop %v2134
        %v2238 = vrcp.pop %v2137
        %v2239 = vmul.f32 %v2201, %v2231
        %v2240 = vmul.f32 %v2204, %v2232
        %v2241 = vmul.f32 %v2209, %v2233
        %v2242 = vmul.f32 %v2212, %v2234
        %v2243 = vmul.f32 %v2217, %v2235
        %v2244 = vmul.f32 %v2220, %v2236
        %v2245 = vmul.f32 %v2225, %v2237
        %v2246 = vmul.f32 %v2228, %v2238
        %2255 = vrot.lane.b32.xlu0 %v1633, 32
        %v2256 = vpop.permute.xlu0 %2255
        %2257 = vrot.lane.b32.xlu0 %v1634, 32
        %v2258 = vpop.permute.xlu0 %2257
        %2259 = vrot.lane.b32.xlu0 %v1635, 32
        %v2260 = vpop.permute.xlu0 %2259
        %2261 = vrot.lane.b32.xlu0 %v1636, 32
        %v2262 = vpop.permute.xlu0 %2261
        %2263 = vrot.lane.b32.xlu0 %v1637, 32
        %v2264 = vpop.permute.xlu0 %2263
        %2265 = vrot.lane.b32.xlu0 %v1638, 32
        %v2266 = vpop.permute.xlu0 %2265
        %2267 = vrot.lane.b32.xlu0 %v1639, 32
        %v2268 = vpop.permute.xlu0 %2267
        %2269 = vrot.lane.b32.xlu0 %v1640, 32
        %v2270 = vpop.permute.xlu0 %2269
        %2287 = vrot.lane.b32.xlu0 %v1936, 64
        %v2288 = vpop.permute.xlu0 %2287
        %2289 = vrot.lane.b32.xlu0 %v1937, 64
        %v2290 = vpop.permute.xlu0 %2289
        %2291 = vrot.lane.b32.xlu0 %v1938, 64
        %v2292 = vpop.permute.xlu0 %2291
        %2293 = vrot.lane.b32.xlu0 %v1939, 64
        %v2294 = vpop.permute.xlu0 %2293
        %2295 = vrot.lane.b32.xlu0 %v1940, 64
        %v2296 = vpop.permute.xlu0 %2295
        %2297 = vrot.lane.b32.xlu0 %v1941, 64
        %v2298 = vpop.permute.xlu0 %2297
        %2299 = vrot.lane.b32.xlu0 %v1942, 64
        %v2300 = vpop.permute.xlu0 %2299
        %2301 = vrot.lane.b32.xlu0 %v1943, 64
        %v2302 = vpop.permute.xlu0 %2301
        %2319 = vrot.lane.b32.xlu0 %v2239, 96
        %v2320 = vpop.permute.xlu0 %2319
        %2321 = vrot.lane.b32.xlu0 %v2240, 96
        %v2322 = vpop.permute.xlu0 %2321
        %2323 = vrot.lane.b32.xlu0 %v2241, 96
        %v2324 = vpop.permute.xlu0 %2323
        %2325 = vrot.lane.b32.xlu0 %v2242, 96
        %v2326 = vpop.permute.xlu0 %2325
        %2327 = vrot.lane.b32.xlu0 %v2243, 96
        %v2328 = vpop.permute.xlu0 %2327
        %2329 = vrot.lane.b32.xlu0 %v2244, 96
        %v2330 = vpop.permute.xlu0 %2329
        %2331 = vrot.lane.b32.xlu0 %v2245, 96
        %v2332 = vpop.permute.xlu0 %2331
        %2333 = vrot.lane.b32.xlu0 %v2246, 96
        %v2334 = vpop.permute.xlu0 %2333
        %v2343 = vsel %vm1066, %v1318, %v2256
        %v2344 = vsel %vm1066, %v1319, %v2258
        %v2345 = vsel %vm1066, %v1320, %v2260
        %v2346 = vsel %vm1066, %v1321, %v2262
        %v2347 = vsel %vm1066, %v1322, %v2264
        %v2348 = vsel %vm1066, %v1323, %v2266
        %v2349 = vsel %vm1066, %v1324, %v2268
        %v2350 = vsel %vm1066, %v1325, %v2270
        %v2351 = vsel %vm1156, %v2343, %v2288
        %v2352 = vsel %vm1156, %v2344, %v2290
        %v2353 = vsel %vm1156, %v2345, %v2292
        %v2354 = vsel %vm1156, %v2346, %v2294
        %v2355 = vsel %vm1156, %v2347, %v2296
        %v2356 = vsel %vm1156, %v2348, %v2298
        %v2357 = vsel %vm1156, %v2349, %v2300
        %v2358 = vsel %vm1156, %v2350, %v2302
        %vm2359 = vcmask 785408
        %v2360 = vsel %vm2359, %v2351, %v2320
        %v2361 = vsel %vm2359, %v2352, %v2322
        %v2362 = vsel %vm2359, %v2353, %v2324
        %v2363 = vsel %vm2359, %v2354, %v2326
        %v2364 = vsel %vm2359, %v2355, %v2328
        %v2365 = vsel %vm2359, %v2356, %v2330
        %v2366 = vsel %vm2359, %v2357, %v2332
        %v2367 = vsel %vm2359, %v2358, %v2334
        %s2368 = scalar_lea.vmem [#allocation8], 128
        %v2369 = vld [vmem:[%s2368] sm:$0xf]
        %v2370 = vld [vmem:[%s2368 + $0x4] sm:$0xf]
        %v2371 = vld [vmem:[%s2368 + $0x8] sm:$0xf]
        %v2372 = vld [vmem:[%s2368 + $0xc] sm:$0xf]
        %v2373 = vld [vmem:[%s2368 + $0x10] sm:$0xf]
        %v2374 = vld [vmem:[%s2368 + $0x14] sm:$0xf]
        %v2375 = vld [vmem:[%s2368 + $0x18] sm:$0xf]
        %v2376 = vld [vmem:[%s2368 + $0x1c] sm:$0xf]
        %v2377 = vunpack.c.l.bf16 %v2369
        %v2378 = vunpack.c.l.bf16 %v2370
        %v2379 = vunpack.c.l.bf16 %v2371
        %v2380 = vunpack.c.l.bf16 %v2372
        %v2381 = vunpack.c.l.bf16 %v2373
        %v2382 = vunpack.c.l.bf16 %v2374
        %v2383 = vunpack.c.l.bf16 %v2375
        %v2384 = vunpack.c.l.bf16 %v2376
        %v2386 = vsel %vm1066, %v1014, 0
        %v2389 = vsel %vm1066, %v1017, 0
        %v2392 = vsel %vm1066, %v1020, 0
        %v2395 = vsel %vm1066, %v1023, 0
        %v2398 = vsel %vm1066, %v1015, 0
        %v2401 = vsel %vm1066, %v1018, 0
        %v2404 = vsel %vm1066, %v1021, 0
        %v2407 = vsel %vm1066, %v1024, 0
        %2409 = vmatprep.subr.bf16.mxu0 0
        %2410 = vmatpush1.bf16.xpose.msra.mxu0 %v2398
        %2411 = vmatprep.subr.bf16.mxu0 0
        %2412 = vmatpush1.bf16.xpose.msra.mxu0 %v2401
        %2413 = vmatprep.subr.bf16.mxu0 0
        %2414 = vmatpush1.bf16.xpose.msra.mxu0 %v2404
        %2415 = vmatprep.subr.bf16.mxu0 0
        %2416 = vmatpush1.bf16.xpose.msra.mxu0 %v2407
        %2417 = vmatprep.subr.bf16.mxu0 0
        %2418 = vmatpush1.bf16.xpose.msra.mxu0 0
        %2419 = vmatprep.subr.bf16.mxu0 0
        %2420 = vmatpush1.bf16.xpose.msra.mxu0 0
        %2421 = vmatprep.subr.bf16.mxu0 0
        %2422 = vmatpush1.bf16.xpose.msra.mxu0 0
        %2423 = vmatprep.subr.bf16.mxu0 0
        %2424 = vmatpush1.bf16.xpose.msra.mxu0 0
        %2425 = vmatprep.subr.bf16.mxu0 0
        %2426 = vmatpush1.bf16.xpose.msra.mxu0 0
        %2427 = vmatprep.subr.bf16.mxu0 0
        %2428 = vmatpush1.bf16.xpose.msra.mxu0 0
        %2429 = vmatprep.subr.bf16.mxu0 0
        %2430 = vmatpush1.bf16.xpose.msra.mxu0 0
        %2431 = vmatprep.subr.bf16.mxu0 0
        %2432 = vmatpush1.bf16.xpose.msra.mxu0 0
        %2433 = vmatprep.subr.bf16.mxu0 0
        %2434 = vmatpush1.bf16.xpose.msra.mxu0 0
        %2435 = vmatprep.subr.bf16.mxu0 0
        %2436 = vmatpush1.bf16.xpose.msra.mxu0 0
        %2437 = vmatprep.subr.bf16.mxu0 0
        %2438 = vmatpush1.bf16.xpose.msra.mxu0 0
        %2439 = vmatprep.subr.bf16.mxu0 0
        %2440 = vmatpush1.bf16.xpose.msra.mxu0 0
        %2441 = vmatprep.mubr.bf16.mxu0 0
        %2442 = vmatmul.mubr.bf16.gmra.mrb[0].mxu0 %v2386
        %v2443 = vpop.f32.mrb[0].mxu0
        %v2444 = vadd.f32 %v2377, %v2443
        %v2445 = vpop.f32.mrb[0].mxu0
        %v2446 = vpop.f32.mrb[0].mxu0
        %v2447 = vadd.f32 %v2378, %v2446
        %v2448 = vpop.f32.mrb[0].mxu0
        %2449 = vmatprep.mubr.bf16.mxu0 0
        %2450 = vmatmul.mubr.bf16.gmra.mrb[0].mxu0 %v2389
        %v2451 = vpop.f32.mrb[0].mxu0
        %v2452 = vadd.f32 %v2379, %v2451
        %v2453 = vpop.f32.mrb[0].mxu0
        %v2454 = vpop.f32.mrb[0].mxu0
        %v2455 = vadd.f32 %v2380, %v2454
        %v2456 = vpop.f32.mrb[0].mxu0
        %2457 = vmatprep.mubr.bf16.mxu0 0
        %2458 = vmatmul.mubr.bf16.gmra.mrb[0].mxu0 %v2392
        %v2459 = vpop.f32.mrb[0].mxu0
        %v2460 = vadd.f32 %v2381, %v2459
        %v2461 = vpop.f32.mrb[0].mxu0
        %v2462 = vpop.f32.mrb[0].mxu0
        %v2463 = vadd.f32 %v2382, %v2462
        %v2464 = vpop.f32.mrb[0].mxu0
        %2465 = vmatprep.mubr.bf16.mxu0 0
        %2466 = vmatmul.mubr.bf16.gmra.mrb[0].mxu0 %v2395
        %v2467 = vpop.f32.mrb[0].mxu0
        %v2468 = vadd.f32 %v2383, %v2467
        %v2469 = vpop.f32.mrb[0].mxu0
        %v2470 = vpop.f32.mrb[0].mxu0
        %v2471 = vadd.f32 %v2384, %v2470
        %v2472 = vpop.f32.mrb[0].mxu0
        %2473 = vdwg.mxu0
        %v2474 = vsel %vm1156, %v2444, -inf
        %2475 = vmax.xlane.f32.xlu0 %v2474
        %v2476 = vpop.xlane.xlu0 %2475
        %v2477 = vsel %vm1156, %v2447, -inf
        %2478 = vmax.xlane.f32.xlu0 %v2477
        %v2479 = vpop.xlane.xlu0 %2478
        %v2480 = vsel %vm1156, %v2452, -inf
        %2481 = vmax.xlane.f32.xlu0 %v2480
        %v2482 = vpop.xlane.xlu0 %2481
        %v2483 = vsel %vm1156, %v2455, -inf
        %2484 = vmax.xlane.f32.xlu0 %v2483
        %v2485 = vpop.xlane.xlu0 %2484
        %v2486 = vsel %vm1156, %v2460, -inf
        %2487 = vmax.xlane.f32.xlu0 %v2486
        %v2488 = vpop.xlane.xlu0 %2487
        %v2489 = vsel %vm1156, %v2463, -inf
        %2490 = vmax.xlane.f32.xlu0 %v2489
        %v2491 = vpop.xlane.xlu0 %2490
        %v2492 = vsel %vm1156, %v2468, -inf
        %2493 = vmax.xlane.f32.xlu0 %v2492
        %v2494 = vpop.xlane.xlu0 %2493
        %v2495 = vsel %vm1156, %v2471, -inf
        %2496 = vmax.xlane.f32.xlu0 %v2495
        %v2497 = vpop.xlane.xlu0 %2496
        %v2498 = vsub.f32 %v2444, %v2476
        %v2499 = vsub.f32 %v2447, %v2479
        %v2500 = vsub.f32 %v2452, %v2482
        %v2501 = vsub.f32 %v2455, %v2485
        %v2502 = vsub.f32 %v2460, %v2488
        %v2503 = vsub.f32 %v2463, %v2491
        %v2504 = vsub.f32 %v2468, %v2494
        %v2505 = vsub.f32 %v2471, %v2497
        %v2506 = vmul.f32 %v2498, 1.442695
        %v2507 = vpow.pop %v2506
        %v2508 = vmul.f32 %v2499, 1.442695
        %v2509 = vpow.pop %v2508
        %v2510 = vmul.f32 %v2500, 1.442695
        %v2511 = vpow.pop %v2510
        %v2512 = vmul.f32 %v2501, 1.442695
        %v2513 = vpow.pop %v2512
        %v2514 = vmul.f32 %v2502, 1.442695
        %v2515 = vpow.pop %v2514
        %v2516 = vmul.f32 %v2503, 1.442695
        %v2517 = vpow.pop %v2516
        %v2518 = vmul.f32 %v2504, 1.442695
        %v2519 = vpow.pop %v2518
        %v2520 = vmul.f32 %v2505, 1.442695
        %v2521 = vpow.pop %v2520
        %v2522 = vsel %vm1156, %v2507, 0.0
        %2523 = vadd.xlane.f32.xlu0 %v2522
        %v2524 = vpop.xlane.xlu0 %2523
        %v2525 = vsel %vm1156, %v2509, 0.0
        %2526 = vadd.xlane.f32.xlu0 %v2525
        %v2527 = vpop.xlane.xlu0 %2526
        %v2528 = vsel %vm1156, %v2511, 0.0
        %2529 = vadd.xlane.f32.xlu0 %v2528
        %v2530 = vpop.xlane.xlu0 %2529
        %v2531 = vsel %vm1156, %v2513, 0.0
        %2532 = vadd.xlane.f32.xlu0 %v2531
        %v2533 = vpop.xlane.xlu0 %2532
        %v2534 = vsel %vm1156, %v2515, 0.0
        %2535 = vadd.xlane.f32.xlu0 %v2534
        %v2536 = vpop.xlane.xlu0 %2535
        %v2537 = vsel %vm1156, %v2517, 0.0
        %2538 = vadd.xlane.f32.xlu0 %v2537
        %v2539 = vpop.xlane.xlu0 %2538
        %v2540 = vsel %vm1156, %v2519, 0.0
        %2541 = vadd.xlane.f32.xlu0 %v2540
        %v2542 = vpop.xlane.xlu0 %2541
        %v2543 = vsel %vm1156, %v2521, 0.0
        %2544 = vadd.xlane.f32.xlu0 %v2543
        %v2545 = vpop.xlane.xlu0 %2544
        %v2546 = vpack.c.bf16 %v2509, %v2507
        %v2547 = vpack.c.bf16 %v2513, %v2511
        %v2548 = vpack.c.bf16 %v2517, %v2515
        %v2549 = vpack.c.bf16 %v2521, %v2519
        %v2551 = vsel %vm1156, %v2546, 0
        %v2554 = vsel %vm1156, %v2547, 0
        %v2557 = vsel %vm1156, %v2548, 0
        %v2560 = vsel %vm1156, %v2549, 0
        %2562 = vmatprep.subr.bf16.mxu0 0
        %2563 = vmatpush1.bf16.msra.mxu0 %v1016
        %2564 = vmatprep.subr.bf16.mxu0 0
        %2565 = vmatpush1.bf16.msra.mxu0 %v1019
        %2566 = vmatprep.subr.bf16.mxu0 0
        %2567 = vmatpush1.bf16.msra.mxu0 %v1022
        %2568 = vmatprep.subr.bf16.mxu0 0
        %2569 = vmatpush1.bf16.msra.mxu0 %v1025
        %2570 = vmatprep.subr.bf16.mxu0 0
        %2571 = vmatpush1.bf16.msra.mxu0 0
        %2572 = vmatprep.subr.bf16.mxu0 0
        %2573 = vmatpush1.bf16.msra.mxu0 0
        %2574 = vmatprep.subr.bf16.mxu0 0
        %2575 = vmatpush1.bf16.msra.mxu0 0
        %2576 = vmatprep.subr.bf16.mxu0 0
        %2577 = vmatpush1.bf16.msra.mxu0 0
        %2578 = vmatprep.subr.bf16.mxu0 0
        %2579 = vmatpush1.bf16.msra.mxu0 0
        %2580 = vmatprep.subr.bf16.mxu0 0
        %2581 = vmatpush1.bf16.msra.mxu0 0
        %2582 = vmatprep.subr.bf16.mxu0 0
        %2583 = vmatpush1.bf16.msra.mxu0 0
        %2584 = vmatprep.subr.bf16.mxu0 0
        %2585 = vmatpush1.bf16.msra.mxu0 0
        %2586 = vmatprep.subr.bf16.mxu0 0
        %2587 = vmatpush1.bf16.msra.mxu0 0
        %2588 = vmatprep.subr.bf16.mxu0 0
        %2589 = vmatpush1.bf16.msra.mxu0 0
        %2590 = vmatprep.subr.bf16.mxu0 0
        %2591 = vmatpush1.bf16.msra.mxu0 0
        %2592 = vmatprep.subr.bf16.mxu0 0
        %2593 = vmatpush1.bf16.msra.mxu0 0
        %2594 = vmatprep.mubr.bf16.mxu0 0
        %2595 = vmatmul.mubr.bf16.gmra.mrb[0].mxu0 %v2551
        %v2596 = vpop.f32.mrb[0].mxu0
        %v2597 = vadd.f32 0.0, %v2596
        %v2598 = vpop.f32.mrb[0].mxu0
        %v2599 = vpop.f32.mrb[0].mxu0
        %v2600 = vadd.f32 0.0, %v2599
        %v2601 = vpop.f32.mrb[0].mxu0
        %2602 = vmatprep.mubr.bf16.mxu0 0
        %2603 = vmatmul.mubr.bf16.gmra.mrb[0].mxu0 %v2554
        %v2604 = vpop.f32.mrb[0].mxu0
        %v2605 = vadd.f32 0.0, %v2604
        %v2606 = vpop.f32.mrb[0].mxu0
        %v2607 = vpop.f32.mrb[0].mxu0
        %v2608 = vadd.f32 0.0, %v2607
        %v2609 = vpop.f32.mrb[0].mxu0
        %2610 = vmatprep.mubr.bf16.mxu0 0
        %2611 = vmatmul.mubr.bf16.gmra.mrb[0].mxu0 %v2557
        %v2612 = vpop.f32.mrb[0].mxu0
        %v2613 = vadd.f32 0.0, %v2612
        %v2614 = vpop.f32.mrb[0].mxu0
        %v2615 = vpop.f32.mrb[0].mxu0
        %v2616 = vadd.f32 0.0, %v2615
        %v2617 = vpop.f32.mrb[0].mxu0
        %2618 = vmatprep.mubr.bf16.mxu0 0
        %2619 = vmatmul.mubr.bf16.gmra.mrb[0].mxu0 %v2560
        %v2620 = vpop.f32.mrb[0].mxu0
        %v2621 = vadd.f32 0.0, %v2620
        %v2622 = vpop.f32.mrb[0].mxu0
        %v2623 = vpop.f32.mrb[0].mxu0
        %v2624 = vadd.f32 0.0, %v2623
        %v2625 = vpop.f32.mrb[0].mxu0
        %2626 = vdwg.mxu0
        %v2627 = vrcp.pop %v2524
        %v2628 = vrcp.pop %v2527
        %v2629 = vrcp.pop %v2530
        %v2630 = vrcp.pop %v2533
        %v2631 = vrcp.pop %v2536
        %v2632 = vrcp.pop %v2539
        %v2633 = vrcp.pop %v2542
        %v2634 = vrcp.pop %v2545
        %v2635 = vmul.f32 %v2597, %v2627
        %v2636 = vmul.f32 %v2600, %v2628
        %v2637 = vmul.f32 %v2605, %v2629
        %v2638 = vmul.f32 %v2608, %v2630
        %v2639 = vmul.f32 %v2613, %v2631
        %v2640 = vmul.f32 %v2616, %v2632
        %v2641 = vmul.f32 %v2621, %v2633
        %v2642 = vmul.f32 %v2624, %v2634
        %s2643 = scalar_lea.vmem [#allocation8], 160
        %v2644 = vld [vmem:[%s2643] sm:$0xf]
        %v2645 = vld [vmem:[%s2643 + $0x4] sm:$0xf]
        %v2646 = vld [vmem:[%s2643 + $0x8] sm:$0xf]
        %v2647 = vld [vmem:[%s2643 + $0xc] sm:$0xf]
        %v2648 = vld [vmem:[%s2643 + $0x10] sm:$0xf]
        %v2649 = vld [vmem:[%s2643 + $0x14] sm:$0xf]
        %v2650 = vld [vmem:[%s2643 + $0x18] sm:$0xf]
        %v2651 = vld [vmem:[%s2643 + $0x1c] sm:$0xf]
        %v2652 = vunpack.c.l.bf16 %v2644
        %v2653 = vunpack.c.l.bf16 %v2645
        %v2654 = vunpack.c.l.bf16 %v2646
        %v2655 = vunpack.c.l.bf16 %v2647
        %v2656 = vunpack.c.l.bf16 %v2648
        %v2657 = vunpack.c.l.bf16 %v2649
        %v2658 = vunpack.c.l.bf16 %v2650
        %v2659 = vunpack.c.l.bf16 %v2651
        %2664 = vrot.lane.b32.xlu0 %v1014, 96
        %v2665 = vpop.permute.xlu0 %2664
        %2666 = vrot.lane.b32.xlu0 %v1017, 96
        %v2667 = vpop.permute.xlu0 %2666
        %2668 = vrot.lane.b32.xlu0 %v1020, 96
        %v2669 = vpop.permute.xlu0 %2668
        %2670 = vrot.lane.b32.xlu0 %v1023, 96
        %v2671 = vpop.permute.xlu0 %2670
        %2676 = vrot.lane.b32.xlu0 %v1015, 96
        %v2677 = vpop.permute.xlu0 %2676
        %2678 = vrot.lane.b32.xlu0 %v1018, 96
        %v2679 = vpop.permute.xlu0 %2678
        %2680 = vrot.lane.b32.xlu0 %v1021, 96
        %v2681 = vpop.permute.xlu0 %2680
        %2682 = vrot.lane.b32.xlu0 %v1024, 96
        %v2683 = vpop.permute.xlu0 %2682
        %v2685 = vsel %vm1066, %v2665, 0
        %v2688 = vsel %vm1066, %v2667, 0
        %v2691 = vsel %vm1066, %v2669, 0
        %v2694 = vsel %vm1066, %v2671, 0
        %v2697 = vsel %vm1066, %v2677, 0
        %v2700 = vsel %vm1066, %v2679, 0
        %v2703 = vsel %vm1066, %v2681, 0
        %v2706 = vsel %vm1066, %v2683, 0
        %2708 = vmatprep.subr.bf16.mxu0 0
        %2709 = vmatpush1.bf16.xpose.msra.mxu0 %v2697
        %2710 = vmatprep.subr.bf16.mxu0 0
        %2711 = vmatpush1.bf16.xpose.msra.mxu0 %v2700
        %2712 = vmatprep.subr.bf16.mxu0 0
        %2713 = vmatpush1.bf16.xpose.msra.mxu0 %v2703
        %2714 = vmatprep.subr.bf16.mxu0 0
        %2715 = vmatpush1.bf16.xpose.msra.mxu0 %v2706
        %2716 = vmatprep.subr.bf16.mxu0 0
        %2717 = vmatpush1.bf16.xpose.msra.mxu0 0
        %2718 = vmatprep.subr.bf16.mxu0 0
        %2719 = vmatpush1.bf16.xpose.msra.mxu0 0
        %2720 = vmatprep.subr.bf16.mxu0 0
        %2721 = vmatpush1.bf16.xpose.msra.mxu0 0
        %2722 = vmatprep.subr.bf16.mxu0 0
        %2723 = vmatpush1.bf16.xpose.msra.mxu0 0
        %2724 = vmatprep.subr.bf16.mxu0 0
        %2725 = vmatpush1.bf16.xpose.msra.mxu0 0
        %2726 = vmatprep.subr.bf16.mxu0 0
        %2727 = vmatpush1.bf16.xpose.msra.mxu0 0
        %2728 = vmatprep.subr.bf16.mxu0 0
        %2729 = vmatpush1.bf16.xpose.msra.mxu0 0
        %2730 = vmatprep.subr.bf16.mxu0 0
        %2731 = vmatpush1.bf16.xpose.msra.mxu0 0
        %2732 = vmatprep.subr.bf16.mxu0 0
        %2733 = vmatpush1.bf16.xpose.msra.mxu0 0
        %2734 = vmatprep.subr.bf16.mxu0 0
        %2735 = vmatpush1.bf16.xpose.msra.mxu0 0
        %2736 = vmatprep.subr.bf16.mxu0 0
        %2737 = vmatpush1.bf16.xpose.msra.mxu0 0
        %2738 = vmatprep.subr.bf16.mxu0 0
        %2739 = vmatpush1.bf16.xpose.msra.mxu0 0
        %2740 = vmatprep.mubr.bf16.mxu0 0
        %2741 = vmatmul.mubr.bf16.gmra.mrb[0].mxu0 %v2685
        %v2742 = vpop.f32.mrb[0].mxu0
        %v2743 = vadd.f32 %v2652, %v2742
        %v2744 = vpop.f32.mrb[0].mxu0
        %v2745 = vpop.f32.mrb[0].mxu0
        %v2746 = vadd.f32 %v2653, %v2745
        %v2747 = vpop.f32.mrb[0].mxu0
        %2748 = vmatprep.mubr.bf16.mxu0 0
        %2749 = vmatmul.mubr.bf16.gmra.mrb[0].mxu0 %v2688
        %v2750 = vpop.f32.mrb[0].mxu0
        %v2751 = vadd.f32 %v2654, %v2750
        %v2752 = vpop.f32.mrb[0].mxu0
        %v2753 = vpop.f32.mrb[0].mxu0
        %v2754 = vadd.f32 %v2655, %v2753
        %v2755 = vpop.f32.mrb[0].mxu0
        %2756 = vmatprep.mubr.bf16.mxu0 0
        %2757 = vmatmul.mubr.bf16.gmra.mrb[0].mxu0 %v2691
        %v2758 = vpop.f32.mrb[0].mxu0
        %v2759 = vadd.f32 %v2656, %v2758
        %v2760 = vpop.f32.mrb[0].mxu0
        %v2761 = vpop.f32.mrb[0].mxu0
        %v2762 = vadd.f32 %v2657, %v2761
        %v2763 = vpop.f32.mrb[0].mxu0
        %2764 = vmatprep.mubr.bf16.mxu0 0
        %2765 = vmatmul.mubr.bf16.gmra.mrb[0].mxu0 %v2694
        %v2766 = vpop.f32.mrb[0].mxu0
        %v2767 = vadd.f32 %v2658, %v2766
        %v2768 = vpop.f32.mrb[0].mxu0
        %v2769 = vpop.f32.mrb[0].mxu0
        %v2770 = vadd.f32 %v2659, %v2769
        %v2771 = vpop.f32.mrb[0].mxu0
        %2772 = vdwg.mxu0
        %v2773 = vsel %vm1156, %v2743, -inf
        %2774 = vmax.xlane.f32.xlu0 %v2773
        %v2775 = vpop.xlane.xlu0 %2774
        %v2776 = vsel %vm1156, %v2746, -inf
        %2777 = vmax.xlane.f32.xlu0 %v2776
        %v2778 = vpop.xlane.xlu0 %2777
        %v2779 = vsel %vm1156, %v2751, -inf
        %2780 = vmax.xlane.f32.xlu0 %v2779
        %v2781 = vpop.xlane.xlu0 %2780
        %v2782 = vsel %vm1156, %v2754, -inf
        %2783 = vmax.xlane.f32.xlu0 %v2782
        %v2784 = vpop.xlane.xlu0 %2783
        %v2785 = vsel %vm1156, %v2759, -inf
        %2786 = vmax.xlane.f32.xlu0 %v2785
        %v2787 = vpop.xlane.xlu0 %2786
        %v2788 = vsel %vm1156, %v2762, -inf
        %2789 = vmax.xlane.f32.xlu0 %v2788
        %v2790 = vpop.xlane.xlu0 %2789
        %v2791 = vsel %vm1156, %v2767, -inf
        %2792 = vmax.xlane.f32.xlu0 %v2791
        %v2793 = vpop.xlane.xlu0 %2792
        %v2794 = vsel %vm1156, %v2770, -inf
        %2795 = vmax.xlane.f32.xlu0 %v2794
        %v2796 = vpop.xlane.xlu0 %2795
        %v2797 = vsub.f32 %v2743, %v2775
        %v2798 = vsub.f32 %v2746, %v2778
        %v2799 = vsub.f32 %v2751, %v2781
        %v2800 = vsub.f32 %v2754, %v2784
        %v2801 = vsub.f32 %v2759, %v2787
        %v2802 = vsub.f32 %v2762, %v2790
        %v2803 = vsub.f32 %v2767, %v2793
        %v2804 = vsub.f32 %v2770, %v2796
        %v2805 = vmul.f32 %v2797, 1.442695
        %v2806 = vpow.pop %v2805
        %v2807 = vmul.f32 %v2798, 1.442695
        %v2808 = vpow.pop %v2807
        %v2809 = vmul.f32 %v2799, 1.442695
        %v2810 = vpow.pop %v2809
        %v2811 = vmul.f32 %v2800, 1.442695
        %v2812 = vpow.pop %v2811
        %v2813 = vmul.f32 %v2801, 1.442695
        %v2814 = vpow.pop %v2813
        %v2815 = vmul.f32 %v2802, 1.442695
        %v2816 = vpow.pop %v2815
        %v2817 = vmul.f32 %v2803, 1.442695
        %v2818 = vpow.pop %v2817
        %v2819 = vmul.f32 %v2804, 1.442695
        %v2820 = vpow.pop %v2819
        %v2821 = vsel %vm1156, %v2806, 0.0
        %2822 = vadd.xlane.f32.xlu0 %v2821
        %v2823 = vpop.xlane.xlu0 %2822
        %v2824 = vsel %vm1156, %v2808, 0.0
        %2825 = vadd.xlane.f32.xlu0 %v2824
        %v2826 = vpop.xlane.xlu0 %2825
        %v2827 = vsel %vm1156, %v2810, 0.0
        %2828 = vadd.xlane.f32.xlu0 %v2827
        %v2829 = vpop.xlane.xlu0 %2828
        %v2830 = vsel %vm1156, %v2812, 0.0
        %2831 = vadd.xlane.f32.xlu0 %v2830
        %v2832 = vpop.xlane.xlu0 %2831
        %v2833 = vsel %vm1156, %v2814, 0.0
        %2834 = vadd.xlane.f32.xlu0 %v2833
        %v2835 = vpop.xlane.xlu0 %2834
        %v2836 = vsel %vm1156, %v2816, 0.0
        %2837 = vadd.xlane.f32.xlu0 %v2836
        %v2838 = vpop.xlane.xlu0 %2837
        %v2839 = vsel %vm1156, %v2818, 0.0
        %2840 = vadd.xlane.f32.xlu0 %v2839
        %v2841 = vpop.xlane.xlu0 %2840
        %v2842 = vsel %vm1156, %v2820, 0.0
        %2843 = vadd.xlane.f32.xlu0 %v2842
        %v2844 = vpop.xlane.xlu0 %2843
        %v2845 = vpack.c.bf16 %v2808, %v2806
        %v2846 = vpack.c.bf16 %v2812, %v2810
        %v2847 = vpack.c.bf16 %v2816, %v2814
        %v2848 = vpack.c.bf16 %v2820, %v2818
        %2853 = vrot.lane.b32.xlu0 %v1016, 96
        %v2854 = vpop.permute.xlu0 %2853
        %2855 = vrot.lane.b32.xlu0 %v1019, 96
        %v2856 = vpop.permute.xlu0 %2855
        %2857 = vrot.lane.b32.xlu0 %v1022, 96
        %v2858 = vpop.permute.xlu0 %2857
        %2859 = vrot.lane.b32.xlu0 %v1025, 96
        %v2860 = vpop.permute.xlu0 %2859
        %v2866 = vsel %vm1156, %v2845, 0
        %v2869 = vsel %vm1156, %v2846, 0
        %v2872 = vsel %vm1156, %v2847, 0
        %v2875 = vsel %vm1156, %v2848, 0
        %2877 = vmatprep.subr.bf16.mxu0 0
        %2878 = vmatpush1.bf16.msra.mxu0 %v2854
        %2879 = vmatprep.subr.bf16.mxu0 0
        %2880 = vmatpush1.bf16.msra.mxu0 %v2856
        %2881 = vmatprep.subr.bf16.mxu0 0
        %2882 = vmatpush1.bf16.msra.mxu0 %v2858
        %2883 = vmatprep.subr.bf16.mxu0 0
        %2884 = vmatpush1.bf16.msra.mxu0 %v2860
        %2885 = vmatprep.subr.bf16.mxu0 0
        %2886 = vmatpush1.bf16.msra.mxu0 0
        %2887 = vmatprep.subr.bf16.mxu0 0
        %2888 = vmatpush1.bf16.msra.mxu0 0
        %2889 = vmatprep.subr.bf16.mxu0 0
        %2890 = vmatpush1.bf16.msra.mxu0 0
        %2891 = vmatprep.subr.bf16.mxu0 0
        %2892 = vmatpush1.bf16.msra.mxu0 0
        %2893 = vmatprep.subr.bf16.mxu0 0
        %2894 = vmatpush1.bf16.msra.mxu0 0
        %2895 = vmatprep.subr.bf16.mxu0 0
        %2896 = vmatpush1.bf16.msra.mxu0 0
        %2897 = vmatprep.subr.bf16.mxu0 0
        %2898 = vmatpush1.bf16.msra.mxu0 0
        %2899 = vmatprep.subr.bf16.mxu0 0
        %2900 = vmatpush1.bf16.msra.mxu0 0
        %2901 = vmatprep.subr.bf16.mxu0 0
        %2902 = vmatpush1.bf16.msra.mxu0 0
        %2903 = vmatprep.subr.bf16.mxu0 0
        %2904 = vmatpush1.bf16.msra.mxu0 0
        %2905 = vmatprep.subr.bf16.mxu0 0
        %2906 = vmatpush1.bf16.msra.mxu0 0
        %2907 = vmatprep.subr.bf16.mxu0 0
        %2908 = vmatpush1.bf16.msra.mxu0 0
        %2909 = vmatprep.mubr.bf16.mxu0 0
        %2910 = vmatmul.mubr.bf16.gmra.mrb[0].mxu0 %v2866
        %v2911 = vpop.f32.mrb[0].mxu0
        %v2912 = vadd.f32 0.0, %v2911
        %v2913 = vpop.f32.mrb[0].mxu0
        %v2914 = vpop.f32.mrb[0].mxu0
        %v2915 = vadd.f32 0.0, %v2914
        %v2916 = vpop.f32.mrb[0].mxu0
        %2917 = vmatprep.mubr.bf16.mxu0 0
        %2918 = vmatmul.mubr.bf16.gmra.mrb[0].mxu0 %v2869
        %v2919 = vpop.f32.mrb[0].mxu0
        %v2920 = vadd.f32 0.0, %v2919
        %v2921 = vpop.f32.mrb[0].mxu0
        %v2922 = vpop.f32.mrb[0].mxu0
        %v2923 = vadd.f32 0.0, %v2922
        %v2924 = vpop.f32.mrb[0].mxu0
        %2925 = vmatprep.mubr.bf16.mxu0 0
        %2926 = vmatmul.mubr.bf16.gmra.mrb[0].mxu0 %v2872
        %v2927 = vpop.f32.mrb[0].mxu0
        %v2928 = vadd.f32 0.0, %v2927
        %v2929 = vpop.f32.mrb[0].mxu0
        %v2930 = vpop.f32.mrb[0].mxu0
        %v2931 = vadd.f32 0.0, %v2930
        %v2932 = vpop.f32.mrb[0].mxu0
        %2933 = vmatprep.mubr.bf16.mxu0 0
        %2934 = vmatmul.mubr.bf16.gmra.mrb[0].mxu0 %v2875
        %v2935 = vpop.f32.mrb[0].mxu0
        %v2936 = vadd.f32 0.0, %v2935
        %v2937 = vpop.f32.mrb[0].mxu0
        %v2938 = vpop.f32.mrb[0].mxu0
        %v2939 = vadd.f32 0.0, %v2938
        %v2940 = vpop.f32.mrb[0].mxu0
        %2941 = vdwg.mxu0
        %v2942 = vrcp.pop %v2823
        %v2943 = vrcp.pop %v2826
        %v2944 = vrcp.pop %v2829
        %v2945 = vrcp.pop %v2832
        %v2946 = vrcp.pop %v2835
        %v2947 = vrcp.pop %v2838
        %v2948 = vrcp.pop %v2841
        %v2949 = vrcp.pop %v2844
        %v2950 = vmul.f32 %v2912, %v2942
        %v2951 = vmul.f32 %v2915, %v2943
        %v2952 = vmul.f32 %v2920, %v2944
        %v2953 = vmul.f32 %v2923, %v2945
        %v2954 = vmul.f32 %v2928, %v2946
        %v2955 = vmul.f32 %v2931, %v2947
        %v2956 = vmul.f32 %v2936, %v2948
        %v2957 = vmul.f32 %v2939, %v2949
        %s2958 = scalar_lea.vmem [#allocation8], 192
        %v2959 = vld [vmem:[%s2958] sm:$0xf]
        %v2960 = vld [vmem:[%s2958 + $0x4] sm:$0xf]
        %v2961 = vld [vmem:[%s2958 + $0x8] sm:$0xf]
        %v2962 = vld [vmem:[%s2958 + $0xc] sm:$0xf]
        %v2963 = vld [vmem:[%s2958 + $0x10] sm:$0xf]
        %v2964 = vld [vmem:[%s2958 + $0x14] sm:$0xf]
        %v2965 = vld [vmem:[%s2958 + $0x18] sm:$0xf]
        %v2966 = vld [vmem:[%s2958 + $0x1c] sm:$0xf]
        %v2967 = vunpack.c.l.bf16 %v2959
        %v2968 = vunpack.c.l.bf16 %v2960
        %v2969 = vunpack.c.l.bf16 %v2961
        %v2970 = vunpack.c.l.bf16 %v2962
        %v2971 = vunpack.c.l.bf16 %v2963
        %v2972 = vunpack.c.l.bf16 %v2964
        %v2973 = vunpack.c.l.bf16 %v2965
        %v2974 = vunpack.c.l.bf16 %v2966
        %2975 = vrot.lane.b32.xlu0 %v1014, 64
        %v2976 = vpop.permute.xlu0 %2975
        %2977 = vrot.lane.b32.xlu0 %v1017, 64
        %v2978 = vpop.permute.xlu0 %2977
        %2979 = vrot.lane.b32.xlu0 %v1020, 64
        %v2980 = vpop.permute.xlu0 %2979
        %2981 = vrot.lane.b32.xlu0 %v1023, 64
        %v2982 = vpop.permute.xlu0 %2981
        %2983 = vrot.lane.b32.xlu0 %v1015, 64
        %v2984 = vpop.permute.xlu0 %2983
        %2985 = vrot.lane.b32.xlu0 %v1018, 64
        %v2986 = vpop.permute.xlu0 %2985
        %2987 = vrot.lane.b32.xlu0 %v1021, 64
        %v2988 = vpop.permute.xlu0 %2987
        %2989 = vrot.lane.b32.xlu0 %v1024, 64
        %v2990 = vpop.permute.xlu0 %2989
        %v2992 = vsel %vm1066, %v2976, 0
        %v2995 = vsel %vm1066, %v2978, 0
        %v2998 = vsel %vm1066, %v2980, 0
        %v3001 = vsel %vm1066, %v2982, 0
        %v3004 = vsel %vm1066, %v2984, 0
        %v3007 = vsel %vm1066, %v2986, 0
        %v3010 = vsel %vm1066, %v2988, 0
        %v3013 = vsel %vm1066, %v2990, 0
        %3015 = vmatprep.subr.bf16.mxu0 0
        %3016 = vmatpush1.bf16.xpose.msra.mxu0 %v3004
        %3017 = vmatprep.subr.bf16.mxu0 0
        %3018 = vmatpush1.bf16.xpose.msra.mxu0 %v3007
        %3019 = vmatprep.subr.bf16.mxu0 0
        %3020 = vmatpush1.bf16.xpose.msra.mxu0 %v3010
        %3021 = vmatprep.subr.bf16.mxu0 0
        %3022 = vmatpush1.bf16.xpose.msra.mxu0 %v3013
        %3023 = vmatprep.subr.bf16.mxu0 0
        %3024 = vmatpush1.bf16.xpose.msra.mxu0 0
        %3025 = vmatprep.subr.bf16.mxu0 0
        %3026 = vmatpush1.bf16.xpose.msra.mxu0 0
        %3027 = vmatprep.subr.bf16.mxu0 0
        %3028 = vmatpush1.bf16.xpose.msra.mxu0 0
        %3029 = vmatprep.subr.bf16.mxu0 0
        %3030 = vmatpush1.bf16.xpose.msra.mxu0 0
        %3031 = vmatprep.subr.bf16.mxu0 0
        %3032 = vmatpush1.bf16.xpose.msra.mxu0 0
        %3033 = vmatprep.subr.bf16.mxu0 0
        %3034 = vmatpush1.bf16.xpose.msra.mxu0 0
        %3035 = vmatprep.subr.bf16.mxu0 0
        %3036 = vmatpush1.bf16.xpose.msra.mxu0 0
        %3037 = vmatprep.subr.bf16.mxu0 0
        %3038 = vmatpush1.bf16.xpose.msra.mxu0 0
        %3039 = vmatprep.subr.bf16.mxu0 0
        %3040 = vmatpush1.bf16.xpose.msra.mxu0 0
        %3041 = vmatprep.subr.bf16.mxu0 0
        %3042 = vmatpush1.bf16.xpose.msra.mxu0 0
        %3043 = vmatprep.subr.bf16.mxu0 0
        %3044 = vmatpush1.bf16.xpose.msra.mxu0 0
        %3045 = vmatprep.subr.bf16.mxu0 0
        %3046 = vmatpush1.bf16.xpose.msra.mxu0 0
        %3047 = vmatprep.mubr.bf16.mxu0 0
        %3048 = vmatmul.mubr.bf16.gmra.mrb[0].mxu0 %v2992
        %v3049 = vpop.f32.mrb[0].mxu0
        %v3050 = vadd.f32 %v2967, %v3049
        %v3051 = vpop.f32.mrb[0].mxu0
        %v3052 = vpop.f32.mrb[0].mxu0
        %v3053 = vadd.f32 %v2968, %v3052
        %v3054 = vpop.f32.mrb[0].mxu0
        %3055 = vmatprep.mubr.bf16.mxu0 0
        %3056 = vmatmul.mubr.bf16.gmra.mrb[0].mxu0 %v2995
        %v3057 = vpop.f32.mrb[0].mxu0
        %v3058 = vadd.f32 %v2969, %v3057
        %v3059 = vpop.f32.mrb[0].mxu0
        %v3060 = vpop.f32.mrb[0].mxu0
        %v3061 = vadd.f32 %v2970, %v3060
        %v3062 = vpop.f32.mrb[0].mxu0
        %3063 = vmatprep.mubr.bf16.mxu0 0
        %3064 = vmatmul.mubr.bf16.gmra.mrb[0].mxu0 %v2998
        %v3065 = vpop.f32.mrb[0].mxu0
        %v3066 = vadd.f32 %v2971, %v3065
        %v3067 = vpop.f32.mrb[0].mxu0
        %v3068 = vpop.f32.mrb[0].mxu0
        %v3069 = vadd.f32 %v2972, %v3068
        %v3070 = vpop.f32.mrb[0].mxu0
        %3071 = vmatprep.mubr.bf16.mxu0 0
        %3072 = vmatmul.mubr.bf16.gmra.mrb[0].mxu0 %v3001
        %v3073 = vpop.f32.mrb[0].mxu0
        %v3074 = vadd.f32 %v2973, %v3073
        %v3075 = vpop.f32.mrb[0].mxu0
        %v3076 = vpop.f32.mrb[0].mxu0
        %v3077 = vadd.f32 %v2974, %v3076
        %v3078 = vpop.f32.mrb[0].mxu0
        %3079 = vdwg.mxu0
        %v3080 = vsel %vm1156, %v3050, -inf
        %3081 = vmax.xlane.f32.xlu0 %v3080
        %v3082 = vpop.xlane.xlu0 %3081
        %v3083 = vsel %vm1156, %v3053, -inf
        %3084 = vmax.xlane.f32.xlu0 %v3083
        %v3085 = vpop.xlane.xlu0 %3084
        %v3086 = vsel %vm1156, %v3058, -inf
        %3087 = vmax.xlane.f32.xlu0 %v3086
        %v3088 = vpop.xlane.xlu0 %3087
        %v3089 = vsel %vm1156, %v3061, -inf
        %3090 = vmax.xlane.f32.xlu0 %v3089
        %v3091 = vpop.xlane.xlu0 %3090
        %v3092 = vsel %vm1156, %v3066, -inf
        %3093 = vmax.xlane.f32.xlu0 %v3092
        %v3094 = vpop.xlane.xlu0 %3093
        %v3095 = vsel %vm1156, %v3069, -inf
        %3096 = vmax.xlane.f32.xlu0 %v3095
        %v3097 = vpop.xlane.xlu0 %3096
        %v3098 = vsel %vm1156, %v3074, -inf
        %3099 = vmax.xlane.f32.xlu0 %v3098
        %v3100 = vpop.xlane.xlu0 %3099
        %v3101 = vsel %vm1156, %v3077, -inf
        %3102 = vmax.xlane.f32.xlu0 %v3101
        %v3103 = vpop.xlane.xlu0 %3102
        %v3104 = vsub.f32 %v3050, %v3082
        %v3105 = vsub.f32 %v3053, %v3085
        %v3106 = vsub.f32 %v3058, %v3088
        %v3107 = vsub.f32 %v3061, %v3091
        %v3108 = vsub.f32 %v3066, %v3094
        %v3109 = vsub.f32 %v3069, %v3097
        %v3110 = vsub.f32 %v3074, %v3100
        %v3111 = vsub.f32 %v3077, %v3103
        %v3112 = vmul.f32 %v3104, 1.442695
        %v3113 = vpow.pop %v3112
        %v3114 = vmul.f32 %v3105, 1.442695
        %v3115 = vpow.pop %v3114
        %v3116 = vmul.f32 %v3106, 1.442695
        %v3117 = vpow.pop %v3116
        %v3118 = vmul.f32 %v3107, 1.442695
        %v3119 = vpow.pop %v3118
        %v3120 = vmul.f32 %v3108, 1.442695
        %v3121 = vpow.pop %v3120
        %v3122 = vmul.f32 %v3109, 1.442695
        %v3123 = vpow.pop %v3122
        %v3124 = vmul.f32 %v3110, 1.442695
        %v3125 = vpow.pop %v3124
        %v3126 = vmul.f32 %v3111, 1.442695
        %v3127 = vpow.pop %v3126
        %v3128 = vsel %vm1156, %v3113, 0.0
        %3129 = vadd.xlane.f32.xlu0 %v3128
        %v3130 = vpop.xlane.xlu0 %3129
        %v3131 = vsel %vm1156, %v3115, 0.0
        %3132 = vadd.xlane.f32.xlu0 %v3131
        %v3133 = vpop.xlane.xlu0 %3132
        %v3134 = vsel %vm1156, %v3117, 0.0
        %3135 = vadd.xlane.f32.xlu0 %v3134
        %v3136 = vpop.xlane.xlu0 %3135
        %v3137 = vsel %vm1156, %v3119, 0.0
        %3138 = vadd.xlane.f32.xlu0 %v3137
        %v3139 = vpop.xlane.xlu0 %3138
        %v3140 = vsel %vm1156, %v3121, 0.0
        %3141 = vadd.xlane.f32.xlu0 %v3140
        %v3142 = vpop.xlane.xlu0 %3141
        %v3143 = vsel %vm1156, %v3123, 0.0
        %3144 = vadd.xlane.f32.xlu0 %v3143
        %v3145 = vpop.xlane.xlu0 %3144
        %v3146 = vsel %vm1156, %v3125, 0.0
        %3147 = vadd.xlane.f32.xlu0 %v3146
        %v3148 = vpop.xlane.xlu0 %3147
        %v3149 = vsel %vm1156, %v3127, 0.0
        %3150 = vadd.xlane.f32.xlu0 %v3149
        %v3151 = vpop.xlane.xlu0 %3150
        %v3152 = vpack.c.bf16 %v3115, %v3113
        %v3153 = vpack.c.bf16 %v3119, %v3117
        %v3154 = vpack.c.bf16 %v3123, %v3121
        %v3155 = vpack.c.bf16 %v3127, %v3125
        %3156 = vrot.lane.b32.xlu0 %v1016, 64
        %v3157 = vpop.permute.xlu0 %3156
        %3158 = vrot.lane.b32.xlu0 %v1019, 64
        %v3159 = vpop.permute.xlu0 %3158
        %3160 = vrot.lane.b32.xlu0 %v1022, 64
        %v3161 = vpop.permute.xlu0 %3160
        %3162 = vrot.lane.b32.xlu0 %v1025, 64
        %v3163 = vpop.permute.xlu0 %3162
        %v3169 = vsel %vm1156, %v3152, 0
        %v3172 = vsel %vm1156, %v3153, 0
        %v3175 = vsel %vm1156, %v3154, 0
        %v3178 = vsel %vm1156, %v3155, 0
        %3180 = vmatprep.subr.bf16.mxu0 0
        %3181 = vmatpush1.bf16.msra.mxu0 %v3157
        %3182 = vmatprep.subr.bf16.mxu0 0
        %3183 = vmatpush1.bf16.msra.mxu0 %v3159
        %3184 = vmatprep.subr.bf16.mxu0 0
        %3185 = vmatpush1.bf16.msra.mxu0 %v3161
        %3186 = vmatprep.subr.bf16.mxu0 0
        %3187 = vmatpush1.bf16.msra.mxu0 %v3163
        %3188 = vmatprep.subr.bf16.mxu0 0
        %3189 = vmatpush1.bf16.msra.mxu0 0
        %3190 = vmatprep.subr.bf16.mxu0 0
        %3191 = vmatpush1.bf16.msra.mxu0 0
        %3192 = vmatprep.subr.bf16.mxu0 0
        %3193 = vmatpush1.bf16.msra.mxu0 0
        %3194 = vmatprep.subr.bf16.mxu0 0
        %3195 = vmatpush1.bf16.msra.mxu0 0
        %3196 = vmatprep.subr.bf16.mxu0 0
        %3197 = vmatpush1.bf16.msra.mxu0 0
        %3198 = vmatprep.subr.bf16.mxu0 0
        %3199 = vmatpush1.bf16.msra.mxu0 0
        %3200 = vmatprep.subr.bf16.mxu0 0
        %3201 = vmatpush1.bf16.msra.mxu0 0
        %3202 = vmatprep.subr.bf16.mxu0 0
        %3203 = vmatpush1.bf16.msra.mxu0 0
        %3204 = vmatprep.subr.bf16.mxu0 0
        %3205 = vmatpush1.bf16.msra.mxu0 0
        %3206 = vmatprep.subr.bf16.mxu0 0
        %3207 = vmatpush1.bf16.msra.mxu0 0
        %3208 = vmatprep.subr.bf16.mxu0 0
        %3209 = vmatpush1.bf16.msra.mxu0 0
        %3210 = vmatprep.subr.bf16.mxu0 0
        %3211 = vmatpush1.bf16.msra.mxu0 0
        %3212 = vmatprep.mubr.bf16.mxu0 0
        %3213 = vmatmul.mubr.bf16.gmra.mrb[0].mxu0 %v3169
        %v3214 = vpop.f32.mrb[0].mxu0
        %v3215 = vadd.f32 0.0, %v3214
        %v3216 = vpop.f32.mrb[0].mxu0
        %v3217 = vpop.f32.mrb[0].mxu0
        %v3218 = vadd.f32 0.0, %v3217
        %v3219 = vpop.f32.mrb[0].mxu0
        %3220 = vmatprep.mubr.bf16.mxu0 0
        %3221 = vmatmul.mubr.bf16.gmra.mrb[0].mxu0 %v3172
        %v3222 = vpop.f32.mrb[0].mxu0
        %v3223 = vadd.f32 0.0, %v3222
        %v3224 = vpop.f32.mrb[0].mxu0
        %v3225 = vpop.f32.mrb[0].mxu0
        %v3226 = vadd.f32 0.0, %v3225
        %v3227 = vpop.f32.mrb[0].mxu0
        %3228 = vmatprep.mubr.bf16.mxu0 0
        %3229 = vmatmul.mubr.bf16.gmra.mrb[0].mxu0 %v3175
        %v3230 = vpop.f32.mrb[0].mxu0
        %v3231 = vadd.f32 0.0, %v3230
        %v3232 = vpop.f32.mrb[0].mxu0
        %v3233 = vpop.f32.mrb[0].mxu0
        %v3234 = vadd.f32 0.0, %v3233
        %v3235 = vpop.f32.mrb[0].mxu0
        %3236 = vmatprep.mubr.bf16.mxu0 0
        %3237 = vmatmul.mubr.bf16.gmra.mrb[0].mxu0 %v3178
        %v3238 = vpop.f32.mrb[0].mxu0
        %v3239 = vadd.f32 0.0, %v3238
        %v3240 = vpop.f32.mrb[0].mxu0
        %v3241 = vpop.f32.mrb[0].mxu0
        %v3242 = vadd.f32 0.0, %v3241
        %v3243 = vpop.f32.mrb[0].mxu0
        %3244 = vdwg.mxu0
        %v3245 = vrcp.pop %v3130
        %v3246 = vrcp.pop %v3133
        %v3247 = vrcp.pop %v3136
        %v3248 = vrcp.pop %v3139
        %v3249 = vrcp.pop %v3142
        %v3250 = vrcp.pop %v3145
        %v3251 = vrcp.pop %v3148
        %v3252 = vrcp.pop %v3151
        %v3253 = vmul.f32 %v3215, %v3245
        %v3254 = vmul.f32 %v3218, %v3246
        %v3255 = vmul.f32 %v3223, %v3247
        %v3256 = vmul.f32 %v3226, %v3248
        %v3257 = vmul.f32 %v3231, %v3249
        %v3258 = vmul.f32 %v3234, %v3250
        %v3259 = vmul.f32 %v3239, %v3251
        %v3260 = vmul.f32 %v3242, %v3252
        %s3261 = scalar_lea.vmem [#allocation8], 224
        %v3262 = vld [vmem:[%s3261] sm:$0xf]
        %v3263 = vld [vmem:[%s3261 + $0x4] sm:$0xf]
        %v3264 = vld [vmem:[%s3261 + $0x8] sm:$0xf]
        %v3265 = vld [vmem:[%s3261 + $0xc] sm:$0xf]
        %v3266 = vld [vmem:[%s3261 + $0x10] sm:$0xf]
        %v3267 = vld [vmem:[%s3261 + $0x14] sm:$0xf]
        %v3268 = vld [vmem:[%s3261 + $0x18] sm:$0xf]
        %v3269 = vld [vmem:[%s3261 + $0x1c] sm:$0xf]
        %v3270 = vunpack.c.l.bf16 %v3262
        %v3271 = vunpack.c.l.bf16 %v3263
        %v3272 = vunpack.c.l.bf16 %v3264
        %v3273 = vunpack.c.l.bf16 %v3265
        %v3274 = vunpack.c.l.bf16 %v3266
        %v3275 = vunpack.c.l.bf16 %v3267
        %v3276 = vunpack.c.l.bf16 %v3268
        %v3277 = vunpack.c.l.bf16 %v3269
        %3278 = vrot.lane.b32.xlu0 %v1014, 32
        %v3279 = vpop.permute.xlu0 %3278
        %3280 = vrot.lane.b32.xlu0 %v1017, 32
        %v3281 = vpop.permute.xlu0 %3280
        %3282 = vrot.lane.b32.xlu0 %v1020, 32
        %v3283 = vpop.permute.xlu0 %3282
        %3284 = vrot.lane.b32.xlu0 %v1023, 32
        %v3285 = vpop.permute.xlu0 %3284
        %3286 = vrot.lane.b32.xlu0 %v1015, 32
        %v3287 = vpop.permute.xlu0 %3286
        %3288 = vrot.lane.b32.xlu0 %v1018, 32
        %v3289 = vpop.permute.xlu0 %3288
        %3290 = vrot.lane.b32.xlu0 %v1021, 32
        %v3291 = vpop.permute.xlu0 %3290
        %3292 = vrot.lane.b32.xlu0 %v1024, 32
        %v3293 = vpop.permute.xlu0 %3292
        %v3295 = vsel %vm1066, %v3279, 0
        %v3298 = vsel %vm1066, %v3281, 0
        %v3301 = vsel %vm1066, %v3283, 0
        %v3304 = vsel %vm1066, %v3285, 0
        %v3307 = vsel %vm1066, %v3287, 0
        %v3310 = vsel %vm1066, %v3289, 0
        %v3313 = vsel %vm1066, %v3291, 0
        %v3316 = vsel %vm1066, %v3293, 0
        %3318 = vmatprep.subr.bf16.mxu0 0
        %3319 = vmatpush1.bf16.xpose.msra.mxu0 %v3307
        %3320 = vmatprep.subr.bf16.mxu0 0
        %3321 = vmatpush1.bf16.xpose.msra.mxu0 %v3310
        %3322 = vmatprep.subr.bf16.mxu0 0
        %3323 = vmatpush1.bf16.xpose.msra.mxu0 %v3313
        %3324 = vmatprep.subr.bf16.mxu0 0
        %3325 = vmatpush1.bf16.xpose.msra.mxu0 %v3316
        %3326 = vmatprep.subr.bf16.mxu0 0
        %3327 = vmatpush1.bf16.xpose.msra.mxu0 0
        %3328 = vmatprep.subr.bf16.mxu0 0
        %3329 = vmatpush1.bf16.xpose.msra.mxu0 0
        %3330 = vmatprep.subr.bf16.mxu0 0
        %3331 = vmatpush1.bf16.xpose.msra.mxu0 0
        %3332 = vmatprep.subr.bf16.mxu0 0
        %3333 = vmatpush1.bf16.xpose.msra.mxu0 0
        %3334 = vmatprep.subr.bf16.mxu0 0
        %3335 = vmatpush1.bf16.xpose.msra.mxu0 0
        %3336 = vmatprep.subr.bf16.mxu0 0
        %3337 = vmatpush1.bf16.xpose.msra.mxu0 0
        %3338 = vmatprep.subr.bf16.mxu0 0
        %3339 = vmatpush1.bf16.xpose.msra.mxu0 0
        %3340 = vmatprep.subr.bf16.mxu0 0
        %3341 = vmatpush1.bf16.xpose.msra.mxu0 0
        %3342 = vmatprep.subr.bf16.mxu0 0
        %3343 = vmatpush1.bf16.xpose.msra.mxu0 0
        %3344 = vmatprep.subr.bf16.mxu0 0
        %3345 = vmatpush1.bf16.xpose.msra.mxu0 0
        %3346 = vmatprep.subr.bf16.mxu0 0
        %3347 = vmatpush1.bf16.xpose.msra.mxu0 0
        %3348 = vmatprep.subr.bf16.mxu0 0
        %3349 = vmatpush1.bf16.xpose.msra.mxu0 0
        %3350 = vmatprep.mubr.bf16.mxu0 0
        %3351 = vmatmul.mubr.bf16.gmra.mrb[0].mxu0 %v3295
        %v3352 = vpop.f32.mrb[0].mxu0
        %v3353 = vadd.f32 %v3270, %v3352
        %v3354 = vpop.f32.mrb[0].mxu0
        %v3355 = vpop.f32.mrb[0].mxu0
        %v3356 = vadd.f32 %v3271, %v3355
        %v3357 = vpop.f32.mrb[0].mxu0
        %3358 = vmatprep.mubr.bf16.mxu0 0
        %3359 = vmatmul.mubr.bf16.gmra.mrb[0].mxu0 %v3298
        %v3360 = vpop.f32.mrb[0].mxu0
        %v3361 = vadd.f32 %v3272, %v3360
        %v3362 = vpop.f32.mrb[0].mxu0
        %v3363 = vpop.f32.mrb[0].mxu0
        %v3364 = vadd.f32 %v3273, %v3363
        %v3365 = vpop.f32.mrb[0].mxu0
        %3366 = vmatprep.mubr.bf16.mxu0 0
        %3367 = vmatmul.mubr.bf16.gmra.mrb[0].mxu0 %v3301
        %v3368 = vpop.f32.mrb[0].mxu0
        %v3369 = vadd.f32 %v3274, %v3368
        %v3370 = vpop.f32.mrb[0].mxu0
        %v3371 = vpop.f32.mrb[0].mxu0
        %v3372 = vadd.f32 %v3275, %v3371
        %v3373 = vpop.f32.mrb[0].mxu0
        %3374 = vmatprep.mubr.bf16.mxu0 0
        %3375 = vmatmul.mubr.bf16.gmra.mrb[0].mxu0 %v3304
        %v3376 = vpop.f32.mrb[0].mxu0
        %v3377 = vadd.f32 %v3276, %v3376
        %v3378 = vpop.f32.mrb[0].mxu0
        %v3379 = vpop.f32.mrb[0].mxu0
        %v3380 = vadd.f32 %v3277, %v3379
        %v3381 = vpop.f32.mrb[0].mxu0
        %3382 = vdwg.mxu0
        %v3383 = vsel %vm1156, %v3353, -inf
        %3384 = vmax.xlane.f32.xlu0 %v3383
        %v3385 = vpop.xlane.xlu0 %3384
        %v3386 = vsel %vm1156, %v3356, -inf
        %3387 = vmax.xlane.f32.xlu0 %v3386
        %v3388 = vpop.xlane.xlu0 %3387
        %v3389 = vsel %vm1156, %v3361, -inf
        %3390 = vmax.xlane.f32.xlu0 %v3389
        %v3391 = vpop.xlane.xlu0 %3390
        %v3392 = vsel %vm1156, %v3364, -inf
        %3393 = vmax.xlane.f32.xlu0 %v3392
        %v3394 = vpop.xlane.xlu0 %3393
        %v3395 = vsel %vm1156, %v3369, -inf
        %3396 = vmax.xlane.f32.xlu0 %v3395
        %v3397 = vpop.xlane.xlu0 %3396
        %v3398 = vsel %vm1156, %v3372, -inf
        %3399 = vmax.xlane.f32.xlu0 %v3398
        %v3400 = vpop.xlane.xlu0 %3399
        %v3401 = vsel %vm1156, %v3377, -inf
        %3402 = vmax.xlane.f32.xlu0 %v3401
        %v3403 = vpop.xlane.xlu0 %3402
        %v3404 = vsel %vm1156, %v3380, -inf
        %3405 = vmax.xlane.f32.xlu0 %v3404
        %v3406 = vpop.xlane.xlu0 %3405
        %v3407 = vsub.f32 %v3353, %v3385
        %v3408 = vsub.f32 %v3356, %v3388
        %v3409 = vsub.f32 %v3361, %v3391
        %v3410 = vsub.f32 %v3364, %v3394
        %v3411 = vsub.f32 %v3369, %v3397
        %v3412 = vsub.f32 %v3372, %v3400
        %v3413 = vsub.f32 %v3377, %v3403
        %v3414 = vsub.f32 %v3380, %v3406
        %v3415 = vmul.f32 %v3407, 1.442695
        %v3416 = vpow.pop %v3415
        %v3417 = vmul.f32 %v3408, 1.442695
        %v3418 = vpow.pop %v3417
        %v3419 = vmul.f32 %v3409, 1.442695
        %v3420 = vpow.pop %v3419
        %v3421 = vmul.f32 %v3410, 1.442695
        %v3422 = vpow.pop %v3421
        %v3423 = vmul.f32 %v3411, 1.442695
        %v3424 = vpow.pop %v3423
        %v3425 = vmul.f32 %v3412, 1.442695
        %v3426 = vpow.pop %v3425
        %v3427 = vmul.f32 %v3413, 1.442695
        %v3428 = vpow.pop %v3427
        %v3429 = vmul.f32 %v3414, 1.442695
        %v3430 = vpow.pop %v3429
        %v3431 = vsel %vm1156, %v3416, 0.0
        %3432 = vadd.xlane.f32.xlu0 %v3431
        %v3433 = vpop.xlane.xlu0 %3432
        %v3434 = vsel %vm1156, %v3418, 0.0
        %3435 = vadd.xlane.f32.xlu0 %v3434
        %v3436 = vpop.xlane.xlu0 %3435
        %v3437 = vsel %vm1156, %v3420, 0.0
        %3438 = vadd.xlane.f32.xlu0 %v3437
        %v3439 = vpop.xlane.xlu0 %3438
        %v3440 = vsel %vm1156, %v3422, 0.0
        %3441 = vadd.xlane.f32.xlu0 %v3440
        %v3442 = vpop.xlane.xlu0 %3441
        %v3443 = vsel %vm1156, %v3424, 0.0
        %3444 = vadd.xlane.f32.xlu0 %v3443
        %v3445 = vpop.xlane.xlu0 %3444
        %v3446 = vsel %vm1156, %v3426, 0.0
        %3447 = vadd.xlane.f32.xlu0 %v3446
        %v3448 = vpop.xlane.xlu0 %3447
        %v3449 = vsel %vm1156, %v3428, 0.0
        %3450 = vadd.xlane.f32.xlu0 %v3449
        %v3451 = vpop.xlane.xlu0 %3450
        %v3452 = vsel %vm1156, %v3430, 0.0
        %3453 = vadd.xlane.f32.xlu0 %v3452
        %v3454 = vpop.xlane.xlu0 %3453
        %v3455 = vpack.c.bf16 %v3418, %v3416
        %v3456 = vpack.c.bf16 %v3422, %v3420
        %v3457 = vpack.c.bf16 %v3426, %v3424
        %v3458 = vpack.c.bf16 %v3430, %v3428
        %3459 = vrot.lane.b32.xlu0 %v1016, 32
        %v3460 = vpop.permute.xlu0 %3459
        %3461 = vrot.lane.b32.xlu0 %v1019, 32
        %v3462 = vpop.permute.xlu0 %3461
        %3463 = vrot.lane.b32.xlu0 %v1022, 32
        %v3464 = vpop.permute.xlu0 %3463
        %3465 = vrot.lane.b32.xlu0 %v1025, 32
        %v3466 = vpop.permute.xlu0 %3465
        %v3472 = vsel %vm1156, %v3455, 0
        %v3475 = vsel %vm1156, %v3456, 0
        %v3478 = vsel %vm1156, %v3457, 0
        %v3481 = vsel %vm1156, %v3458, 0
        %3483 = vmatprep.subr.bf16.mxu0 0
        %3484 = vmatpush1.bf16.msra.mxu0 %v3460
        %3485 = vmatprep.subr.bf16.mxu0 0
        %3486 = vmatpush1.bf16.msra.mxu0 %v3462
        %3487 = vmatprep.subr.bf16.mxu0 0
        %3488 = vmatpush1.bf16.msra.mxu0 %v3464
        %3489 = vmatprep.subr.bf16.mxu0 0
        %3490 = vmatpush1.bf16.msra.mxu0 %v3466
        %3491 = vmatprep.subr.bf16.mxu0 0
        %3492 = vmatpush1.bf16.msra.mxu0 0
        %3493 = vmatprep.subr.bf16.mxu0 0
        %3494 = vmatpush1.bf16.msra.mxu0 0
        %3495 = vmatprep.subr.bf16.mxu0 0
        %3496 = vmatpush1.bf16.msra.mxu0 0
        %3497 = vmatprep.subr.bf16.mxu0 0
        %3498 = vmatpush1.bf16.msra.mxu0 0
        %3499 = vmatprep.subr.bf16.mxu0 0
        %3500 = vmatpush1.bf16.msra.mxu0 0
        %3501 = vmatprep.subr.bf16.mxu0 0
        %3502 = vmatpush1.bf16.msra.mxu0 0
        %3503 = vmatprep.subr.bf16.mxu0 0
        %3504 = vmatpush1.bf16.msra.mxu0 0
        %3505 = vmatprep.subr.bf16.mxu0 0
        %3506 = vmatpush1.bf16.msra.mxu0 0
        %3507 = vmatprep.subr.bf16.mxu0 0
        %3508 = vmatpush1.bf16.msra.mxu0 0
        %3509 = vmatprep.subr.bf16.mxu0 0
        %3510 = vmatpush1.bf16.msra.mxu0 0
        %3511 = vmatprep.subr.bf16.mxu0 0
        %3512 = vmatpush1.bf16.msra.mxu0 0
        %3513 = vmatprep.subr.bf16.mxu0 0
        %3514 = vmatpush1.bf16.msra.mxu0 0
        %3515 = vmatprep.mubr.bf16.mxu0 0
        %3516 = vmatmul.mubr.bf16.gmra.mrb[0].mxu0 %v3472
        %v3517 = vpop.f32.mrb[0].mxu0
        %v3518 = vadd.f32 0.0, %v3517
        %v3519 = vpop.f32.mrb[0].mxu0
        %v3520 = vpop.f32.mrb[0].mxu0
        %v3521 = vadd.f32 0.0, %v3520
        %v3522 = vpop.f32.mrb[0].mxu0
        %3523 = vmatprep.mubr.bf16.mxu0 0
        %3524 = vmatmul.mubr.bf16.gmra.mrb[0].mxu0 %v3475
        %v3525 = vpop.f32.mrb[0].mxu0
        %v3526 = vadd.f32 0.0, %v3525
        %v3527 = vpop.f32.mrb[0].mxu0
        %v3528 = vpop.f32.mrb[0].mxu0
        %v3529 = vadd.f32 0.0, %v3528
        %v3530 = vpop.f32.mrb[0].mxu0
        %3531 = vmatprep.mubr.bf16.mxu0 0
        %3532 = vmatmul.mubr.bf16.gmra.mrb[0].mxu0 %v3478
        %v3533 = vpop.f32.mrb[0].mxu0
        %v3534 = vadd.f32 0.0, %v3533
        %v3535 = vpop.f32.mrb[0].mxu0
        %v3536 = vpop.f32.mrb[0].mxu0
        %v3537 = vadd.f32 0.0, %v3536
        %v3538 = vpop.f32.mrb[0].mxu0
        %3539 = vmatprep.mubr.bf16.mxu0 0
        %3540 = vmatmul.mubr.bf16.gmra.mrb[0].mxu0 %v3481
        %v3541 = vpop.f32.mrb[0].mxu0
        %v3542 = vadd.f32 0.0, %v3541
        %v3543 = vpop.f32.mrb[0].mxu0
        %v3544 = vpop.f32.mrb[0].mxu0
        %v3545 = vadd.f32 0.0, %v3544
        %v3546 = vpop.f32.mrb[0].mxu0
        %3547 = vdwg.mxu0
        %v3548 = vrcp.pop %v3433
        %v3549 = vrcp.pop %v3436
        %v3550 = vrcp.pop %v3439
        %v3551 = vrcp.pop %v3442
        %v3552 = vrcp.pop %v3445
        %v3553 = vrcp.pop %v3448
        %v3554 = vrcp.pop %v3451
        %v3555 = vrcp.pop %v3454
        %v3556 = vmul.f32 %v3518, %v3548
        %v3557 = vmul.f32 %v3521, %v3549
        %v3558 = vmul.f32 %v3526, %v3550
        %v3559 = vmul.f32 %v3529, %v3551
        %v3560 = vmul.f32 %v3534, %v3552
        %v3561 = vmul.f32 %v3537, %v3553
        %v3562 = vmul.f32 %v3542, %v3554
        %v3563 = vmul.f32 %v3545, %v3555
        %3572 = vrot.lane.b32.xlu0 %v2950, 32
        %v3573 = vpop.permute.xlu0 %3572
        %3574 = vrot.lane.b32.xlu0 %v2951, 32
        %v3575 = vpop.permute.xlu0 %3574
        %3576 = vrot.lane.b32.xlu0 %v2952, 32
        %v3577 = vpop.permute.xlu0 %3576
        %3578 = vrot.lane.b32.xlu0 %v2953, 32
        %v3579 = vpop.permute.xlu0 %3578
        %3580 = vrot.lane.b32.xlu0 %v2954, 32
        %v3581 = vpop.permute.xlu0 %3580
        %3582 = vrot.lane.b32.xlu0 %v2955, 32
        %v3583 = vpop.permute.xlu0 %3582
        %3584 = vrot.lane.b32.xlu0 %v2956, 32
        %v3585 = vpop.permute.xlu0 %3584
        %3586 = vrot.lane.b32.xlu0 %v2957, 32
        %v3587 = vpop.permute.xlu0 %3586
        %3604 = vrot.lane.b32.xlu0 %v3253, 64
        %v3605 = vpop.permute.xlu0 %3604
        %3606 = vrot.lane.b32.xlu0 %v3254, 64
        %v3607 = vpop.permute.xlu0 %3606
        %3608 = vrot.lane.b32.xlu0 %v3255, 64
        %v3609 = vpop.permute.xlu0 %3608
        %3610 = vrot.lane.b32.xlu0 %v3256, 64
        %v3611 = vpop.permute.xlu0 %3610
        %3612 = vrot.lane.b32.xlu0 %v3257, 64
        %v3613 = vpop.permute.xlu0 %3612
        %3614 = vrot.lane.b32.xlu0 %v3258, 64
        %v3615 = vpop.permute.xlu0 %3614
        %3616 = vrot.lane.b32.xlu0 %v3259, 64
        %v3617 = vpop.permute.xlu0 %3616
        %3618 = vrot.lane.b32.xlu0 %v3260, 64
        %v3619 = vpop.permute.xlu0 %3618
        %3636 = vrot.lane.b32.xlu0 %v3556, 96
        %v3637 = vpop.permute.xlu0 %3636
        %3638 = vrot.lane.b32.xlu0 %v3557, 96
        %v3639 = vpop.permute.xlu0 %3638
        %3640 = vrot.lane.b32.xlu0 %v3558, 96
        %v3641 = vpop.permute.xlu0 %3640
        %3642 = vrot.lane.b32.xlu0 %v3559, 96
        %v3643 = vpop.permute.xlu0 %3642
        %3644 = vrot.lane.b32.xlu0 %v3560, 96
        %v3645 = vpop.permute.xlu0 %3644
        %3646 = vrot.lane.b32.xlu0 %v3561, 96
        %v3647 = vpop.permute.xlu0 %3646
        %3648 = vrot.lane.b32.xlu0 %v3562, 96
        %v3649 = vpop.permute.xlu0 %3648
        %3650 = vrot.lane.b32.xlu0 %v3563, 96
        %v3651 = vpop.permute.xlu0 %3650
        %v3660 = vsel %vm1066, %v2635, %v3573
        %v3661 = vsel %vm1066, %v2636, %v3575
        %v3662 = vsel %vm1066, %v2637, %v3577
        %v3663 = vsel %vm1066, %v2638, %v3579
        %v3664 = vsel %vm1066, %v2639, %v3581
        %v3665 = vsel %vm1066, %v2640, %v3583
        %v3666 = vsel %vm1066, %v2641, %v3585
        %v3667 = vsel %vm1066, %v2642, %v3587
        %v3668 = vsel %vm1156, %v3660, %v3605
        %v3669 = vsel %vm1156, %v3661, %v3607
        %v3670 = vsel %vm1156, %v3662, %v3609
        %v3671 = vsel %vm1156, %v3663, %v3611
        %v3672 = vsel %vm1156, %v3664, %v3613
        %v3673 = vsel %vm1156, %v3665, %v3615
        %v3674 = vsel %vm1156, %v3666, %v3617
        %v3675 = vsel %vm1156, %v3667, %v3619
        %v3676 = vsel %vm2359, %v3668, %v3637
        %v3677 = vsel %vm2359, %v3669, %v3639
        %v3678 = vsel %vm2359, %v3670, %v3641
        %v3679 = vsel %vm2359, %v3671, %v3643
        %v3680 = vsel %vm2359, %v3672, %v3645
        %v3681 = vsel %vm2359, %v3673, %v3647
        %v3682 = vsel %vm2359, %v3674, %v3649
        %v3683 = vsel %vm2359, %v3675, %v3651
        %s3684 = scalar_lea.vmem [#allocation8], 256
        %v3685 = vld [vmem:[%s3684] sm:$0xf]
        %v3686 = vld [vmem:[%s3684 + $0x4] sm:$0xf]
        %v3687 = vld [vmem:[%s3684 + $0x8] sm:$0xf]
        %v3688 = vld [vmem:[%s3684 + $0xc] sm:$0xf]
        %v3689 = vld [vmem:[%s3684 + $0x10] sm:$0xf]
        %v3690 = vld [vmem:[%s3684 + $0x14] sm:$0xf]
        %v3691 = vld [vmem:[%s3684 + $0x18] sm:$0xf]
        %v3692 = vld [vmem:[%s3684 + $0x1c] sm:$0xf]
        %v3693 = vunpack.c.l.bf16 %v3685
        %v3694 = vunpack.c.l.bf16 %v3686
        %v3695 = vunpack.c.l.bf16 %v3687
        %v3696 = vunpack.c.l.bf16 %v3688
        %v3697 = vunpack.c.l.bf16 %v3689
        %v3698 = vunpack.c.l.bf16 %v3690
        %v3699 = vunpack.c.l.bf16 %v3691
        %v3700 = vunpack.c.l.bf16 %v3692
        %v3702 = vsel %vm1066, %v1026, 0
        %v3705 = vsel %vm1066, %v1029, 0
        %v3708 = vsel %vm1066, %v1032, 0
        %v3711 = vsel %vm1066, %v1035, 0
        %v3714 = vsel %vm1066, %v1027, 0
        %v3717 = vsel %vm1066, %v1030, 0
        %v3720 = vsel %vm1066, %v1033, 0
        %v3723 = vsel %vm1066, %v1036, 0
        %3725 = vmatprep.subr.bf16.mxu0 0
        %3726 = vmatpush1.bf16.xpose.msra.mxu0 %v3714
        %3727 = vmatprep.subr.bf16.mxu0 0
        %3728 = vmatpush1.bf16.xpose.msra.mxu0 %v3717
        %3729 = vmatprep.subr.bf16.mxu0 0
        %3730 = vmatpush1.bf16.xpose.msra.mxu0 %v3720
        %3731 = vmatprep.subr.bf16.mxu0 0
        %3732 = vmatpush1.bf16.xpose.msra.mxu0 %v3723
        %3733 = vmatprep.subr.bf16.mxu0 0
        %3734 = vmatpush1.bf16.xpose.msra.mxu0 0
        %3735 = vmatprep.subr.bf16.mxu0 0
        %3736 = vmatpush1.bf16.xpose.msra.mxu0 0
        %3737 = vmatprep.subr.bf16.mxu0 0
        %3738 = vmatpush1.bf16.xpose.msra.mxu0 0
        %3739 = vmatprep.subr.bf16.mxu0 0
        %3740 = vmatpush1.bf16.xpose.msra.mxu0 0
        %3741 = vmatprep.subr.bf16.mxu0 0
        %3742 = vmatpush1.bf16.xpose.msra.mxu0 0
        %3743 = vmatprep.subr.bf16.mxu0 0
        %3744 = vmatpush1.bf16.xpose.msra.mxu0 0
        %3745 = vmatprep.subr.bf16.mxu0 0
        %3746 = vmatpush1.bf16.xpose.msra.mxu0 0
        %3747 = vmatprep.subr.bf16.mxu0 0
        %3748 = vmatpush1.bf16.xpose.msra.mxu0 0
        %3749 = vmatprep.subr.bf16.mxu0 0
        %3750 = vmatpush1.bf16.xpose.msra.mxu0 0
        %3751 = vmatprep.subr.bf16.mxu0 0
        %3752 = vmatpush1.bf16.xpose.msra.mxu0 0
        %3753 = vmatprep.subr.bf16.mxu0 0
        %3754 = vmatpush1.bf16.xpose.msra.mxu0 0
        %3755 = vmatprep.subr.bf16.mxu0 0
        %3756 = vmatpush1.bf16.xpose.msra.mxu0 0
        %3757 = vmatprep.mubr.bf16.mxu0 0
        %3758 = vmatmul.mubr.bf16.gmra.mrb[0].mxu0 %v3702
        %v3759 = vpop.f32.mrb[0].mxu0
        %v3760 = vadd.f32 %v3693, %v3759
        %v3761 = vpop.f32.mrb[0].mxu0
        %v3762 = vpop.f32.mrb[0].mxu0
        %v3763 = vadd.f32 %v3694, %v3762
        %v3764 = vpop.f32.mrb[0].mxu0
        %3765 = vmatprep.mubr.bf16.mxu0 0
        %3766 = vmatmul.mubr.bf16.gmra.mrb[0].mxu0 %v3705
        %v3767 = vpop.f32.mrb[0].mxu0
        %v3768 = vadd.f32 %v3695, %v3767
        %v3769 = vpop.f32.mrb[0].mxu0
        %v3770 = vpop.f32.mrb[0].mxu0
        %v3771 = vadd.f32 %v3696, %v3770
        %v3772 = vpop.f32.mrb[0].mxu0
        %3773 = vmatprep.mubr.bf16.mxu0 0
        %3774 = vmatmul.mubr.bf16.gmra.mrb[0].mxu0 %v3708
        %v3775 = vpop.f32.mrb[0].mxu0
        %v3776 = vadd.f32 %v3697, %v3775
        %v3777 = vpop.f32.mrb[0].mxu0
        %v3778 = vpop.f32.mrb[0].mxu0
        %v3779 = vadd.f32 %v3698, %v3778
        %v3780 = vpop.f32.mrb[0].mxu0
        %3781 = vmatprep.mubr.bf16.mxu0 0
        %3782 = vmatmul.mubr.bf16.gmra.mrb[0].mxu0 %v3711
        %v3783 = vpop.f32.mrb[0].mxu0
        %v3784 = vadd.f32 %v3699, %v3783
        %v3785 = vpop.f32.mrb[0].mxu0
        %v3786 = vpop.f32.mrb[0].mxu0
        %v3787 = vadd.f32 %v3700, %v3786
        %v3788 = vpop.f32.mrb[0].mxu0
        %3789 = vdwg.mxu0
        %v3790 = vsel %vm1156, %v3760, -inf
        %3791 = vmax.xlane.f32.xlu0 %v3790
        %v3792 = vpop.xlane.xlu0 %3791
        %v3793 = vsel %vm1156, %v3763, -inf
        %3794 = vmax.xlane.f32.xlu0 %v3793
        %v3795 = vpop.xlane.xlu0 %3794
        %v3796 = vsel %vm1156, %v3768, -inf
        %3797 = vmax.xlane.f32.xlu0 %v3796
        %v3798 = vpop.xlane.xlu0 %3797
        %v3799 = vsel %vm1156, %v3771, -inf
        %3800 = vmax.xlane.f32.xlu0 %v3799
        %v3801 = vpop.xlane.xlu0 %3800
        %v3802 = vsel %vm1156, %v3776, -inf
        %3803 = vmax.xlane.f32.xlu0 %v3802
        %v3804 = vpop.xlane.xlu0 %3803
        %v3805 = vsel %vm1156, %v3779, -inf
        %3806 = vmax.xlane.f32.xlu0 %v3805
        %v3807 = vpop.xlane.xlu0 %3806
        %v3808 = vsel %vm1156, %v3784, -inf
        %3809 = vmax.xlane.f32.xlu0 %v3808
        %v3810 = vpop.xlane.xlu0 %3809
        %v3811 = vsel %vm1156, %v3787, -inf
        %3812 = vmax.xlane.f32.xlu0 %v3811
        %v3813 = vpop.xlane.xlu0 %3812
        %v3814 = vsub.f32 %v3760, %v3792
        %v3815 = vsub.f32 %v3763, %v3795
        %v3816 = vsub.f32 %v3768, %v3798
        %v3817 = vsub.f32 %v3771, %v3801
        %v3818 = vsub.f32 %v3776, %v3804
        %v3819 = vsub.f32 %v3779, %v3807
        %v3820 = vsub.f32 %v3784, %v3810
        %v3821 = vsub.f32 %v3787, %v3813
        %v3822 = vmul.f32 %v3814, 1.442695
        %v3823 = vpow.pop %v3822
        %v3824 = vmul.f32 %v3815, 1.442695
        %v3825 = vpow.pop %v3824
        %v3826 = vmul.f32 %v3816, 1.442695
        %v3827 = vpow.pop %v3826
        %v3828 = vmul.f32 %v3817, 1.442695
        %v3829 = vpow.pop %v3828
        %v3830 = vmul.f32 %v3818, 1.442695
        %v3831 = vpow.pop %v3830
        %v3832 = vmul.f32 %v3819, 1.442695
        %v3833 = vpow.pop %v3832
        %v3834 = vmul.f32 %v3820, 1.442695
        %v3835 = vpow.pop %v3834
        %v3836 = vmul.f32 %v3821, 1.442695
        %v3837 = vpow.pop %v3836
        %v3838 = vsel %vm1156, %v3823, 0.0
        %3839 = vadd.xlane.f32.xlu0 %v3838
        %v3840 = vpop.xlane.xlu0 %3839
        %v3841 = vsel %vm1156, %v3825, 0.0
        %3842 = vadd.xlane.f32.xlu0 %v3841
        %v3843 = vpop.xlane.xlu0 %3842
        %v3844 = vsel %vm1156, %v3827, 0.0
        %3845 = vadd.xlane.f32.xlu0 %v3844
        %v3846 = vpop.xlane.xlu0 %3845
        %v3847 = vsel %vm1156, %v3829, 0.0
        %3848 = vadd.xlane.f32.xlu0 %v3847
        %v3849 = vpop.xlane.xlu0 %3848
        %v3850 = vsel %vm1156, %v3831, 0.0
        %3851 = vadd.xlane.f32.xlu0 %v3850
        %v3852 = vpop.xlane.xlu0 %3851
        %v3853 = vsel %vm1156, %v3833, 0.0
        %3854 = vadd.xlane.f32.xlu0 %v3853
        %v3855 = vpop.xlane.xlu0 %3854
        %v3856 = vsel %vm1156, %v3835, 0.0
        %3857 = vadd.xlane.f32.xlu0 %v3856
        %v3858 = vpop.xlane.xlu0 %3857
        %v3859 = vsel %vm1156, %v3837, 0.0
        %3860 = vadd.xlane.f32.xlu0 %v3859
        %v3861 = vpop.xlane.xlu0 %3860
        %v3862 = vpack.c.bf16 %v3825, %v3823
        %v3863 = vpack.c.bf16 %v3829, %v3827
        %v3864 = vpack.c.bf16 %v3833, %v3831
        %v3865 = vpack.c.bf16 %v3837, %v3835
        %v3867 = vsel %vm1156, %v3862, 0
        %v3870 = vsel %vm1156, %v3863, 0
        %v3873 = vsel %vm1156, %v3864, 0
        %v3876 = vsel %vm1156, %v3865, 0
        %3878 = vmatprep.subr.bf16.mxu0 0
        %3879 = vmatpush1.bf16.msra.mxu0 %v1028
        %3880 = vmatprep.subr.bf16.mxu0 0
        %3881 = vmatpush1.bf16.msra.mxu0 %v1031
        %3882 = vmatprep.subr.bf16.mxu0 0
        %3883 = vmatpush1.bf16.msra.mxu0 %v1034
        %3884 = vmatprep.subr.bf16.mxu0 0
        %3885 = vmatpush1.bf16.msra.mxu0 %v1037
        %3886 = vmatprep.subr.bf16.mxu0 0
        %3887 = vmatpush1.bf16.msra.mxu0 0
        %3888 = vmatprep.subr.bf16.mxu0 0
        %3889 = vmatpush1.bf16.msra.mxu0 0
        %3890 = vmatprep.subr.bf16.mxu0 0
        %3891 = vmatpush1.bf16.msra.mxu0 0
        %3892 = vmatprep.subr.bf16.mxu0 0
        %3893 = vmatpush1.bf16.msra.mxu0 0
        %3894 = vmatprep.subr.bf16.mxu0 0
        %3895 = vmatpush1.bf16.msra.mxu0 0
        %3896 = vmatprep.subr.bf16.mxu0 0
        %3897 = vmatpush1.bf16.msra.mxu0 0
        %3898 = vmatprep.subr.bf16.mxu0 0
        %3899 = vmatpush1.bf16.msra.mxu0 0
        %3900 = vmatprep.subr.bf16.mxu0 0
        %3901 = vmatpush1.bf16.msra.mxu0 0
        %3902 = vmatprep.subr.bf16.mxu0 0
        %3903 = vmatpush1.bf16.msra.mxu0 0
        %3904 = vmatprep.subr.bf16.mxu0 0
        %3905 = vmatpush1.bf16.msra.mxu0 0
        %3906 = vmatprep.subr.bf16.mxu0 0
        %3907 = vmatpush1.bf16.msra.mxu0 0
        %3908 = vmatprep.subr.bf16.mxu0 0
        %3909 = vmatpush1.bf16.msra.mxu0 0
        %3910 = vmatprep.mubr.bf16.mxu0 0
        %3911 = vmatmul.mubr.bf16.gmra.mrb[0].mxu0 %v3867
        %v3912 = vpop.f32.mrb[0].mxu0
        %v3913 = vadd.f32 0.0, %v3912
        %v3914 = vpop.f32.mrb[0].mxu0
        %v3915 = vpop.f32.mrb[0].mxu0
        %v3916 = vadd.f32 0.0, %v3915
        %v3917 = vpop.f32.mrb[0].mxu0
        %3918 = vmatprep.mubr.bf16.mxu0 0
        %3919 = vmatmul.mubr.bf16.gmra.mrb[0].mxu0 %v3870
        %v3920 = vpop.f32.mrb[0].mxu0
        %v3921 = vadd.f32 0.0, %v3920
        %v3922 = vpop.f32.mrb[0].mxu0
        %v3923 = vpop.f32.mrb[0].mxu0
        %v3924 = vadd.f32 0.0, %v3923
        %v3925 = vpop.f32.mrb[0].mxu0
        %3926 = vmatprep.mubr.bf16.mxu0 0
        %3927 = vmatmul.mubr.bf16.gmra.mrb[0].mxu0 %v3873
        %v3928 = vpop.f32.mrb[0].mxu0
        %v3929 = vadd.f32 0.0, %v3928
        %v3930 = vpop.f32.mrb[0].mxu0
        %v3931 = vpop.f32.mrb[0].mxu0
        %v3932 = vadd.f32 0.0, %v3931
        %v3933 = vpop.f32.mrb[0].mxu0
        %3934 = vmatprep.mubr.bf16.mxu0 0
        %3935 = vmatmul.mubr.bf16.gmra.mrb[0].mxu0 %v3876
        %v3936 = vpop.f32.mrb[0].mxu0
        %v3937 = vadd.f32 0.0, %v3936
        %v3938 = vpop.f32.mrb[0].mxu0
        %v3939 = vpop.f32.mrb[0].mxu0
        %v3940 = vadd.f32 0.0, %v3939
        %v3941 = vpop.f32.mrb[0].mxu0
        %3942 = vdwg.mxu0
        %v3943 = vrcp.pop %v3840
        %v3944 = vrcp.pop %v3843
        %v3945 = vrcp.pop %v3846
        %v3946 = vrcp.pop %v3849
        %v3947 = vrcp.pop %v3852
        %v3948 = vrcp.pop %v3855
        %v3949 = vrcp.pop %v3858
        %v3950 = vrcp.pop %v3861
        %v3951 = vmul.f32 %v3913, %v3943
        %v3952 = vmul.f32 %v3916, %v3944
        %v3953 = vmul.f32 %v3921, %v3945
        %v3954 = vmul.f32 %v3924, %v3946
        %v3955 = vmul.f32 %v3929, %v3947
        %v3956 = vmul.f32 %v3932, %v3948
        %v3957 = vmul.f32 %v3937, %v3949
        %v3958 = vmul.f32 %v3940, %v3950
        %s3959 = scalar_lea.vmem [#allocation8], 288
        %v3960 = vld [vmem:[%s3959] sm:$0xf]
        %v3961 = vld [vmem:[%s3959 + $0x4] sm:$0xf]
        %v3962 = vld [vmem:[%s3959 + $0x8] sm:$0xf]
        %v3963 = vld [vmem:[%s3959 + $0xc] sm:$0xf]
        %v3964 = vld [vmem:[%s3959 + $0x10] sm:$0xf]
        %v3965 = vld [vmem:[%s3959 + $0x14] sm:$0xf]
        %v3966 = vld [vmem:[%s3959 + $0x18] sm:$0xf]
        %v3967 = vld [vmem:[%s3959 + $0x1c] sm:$0xf]
        %v3968 = vunpack.c.l.bf16 %v3960
        %v3969 = vunpack.c.l.bf16 %v3961
        %v3970 = vunpack.c.l.bf16 %v3962
        %v3971 = vunpack.c.l.bf16 %v3963
        %v3972 = vunpack.c.l.bf16 %v3964
        %v3973 = vunpack.c.l.bf16 %v3965
        %v3974 = vunpack.c.l.bf16 %v3966
        %v3975 = vunpack.c.l.bf16 %v3967
        %3980 = vrot.lane.b32.xlu0 %v1026, 96
        %v3981 = vpop.permute.xlu0 %3980
        %3982 = vrot.lane.b32.xlu0 %v1029, 96
        %v3983 = vpop.permute.xlu0 %3982
        %3984 = vrot.lane.b32.xlu0 %v1032, 96
        %v3985 = vpop.permute.xlu0 %3984
        %3986 = vrot.lane.b32.xlu0 %v1035, 96
        %v3987 = vpop.permute.xlu0 %3986
        %3992 = vrot.lane.b32.xlu0 %v1027, 96
        %v3993 = vpop.permute.xlu0 %3992
        %3994 = vrot.lane.b32.xlu0 %v1030, 96
        %v3995 = vpop.permute.xlu0 %3994
        %3996 = vrot.lane.b32.xlu0 %v1033, 96
        %v3997 = vpop.permute.xlu0 %3996
        %3998 = vrot.lane.b32.xlu0 %v1036, 96
        %v3999 = vpop.permute.xlu0 %3998
        %v4001 = vsel %vm1066, %v3981, 0
        %v4004 = vsel %vm1066, %v3983, 0
        %v4007 = vsel %vm1066, %v3985, 0
        %v4010 = vsel %vm1066, %v3987, 0
        %v4013 = vsel %vm1066, %v3993, 0
        %v4016 = vsel %vm1066, %v3995, 0
        %v4019 = vsel %vm1066, %v3997, 0
        %v4022 = vsel %vm1066, %v3999, 0
        %4024 = vmatprep.subr.bf16.mxu0 0
        %4025 = vmatpush1.bf16.xpose.msra.mxu0 %v4013
        %4026 = vmatprep.subr.bf16.mxu0 0
        %4027 = vmatpush1.bf16.xpose.msra.mxu0 %v4016
        %4028 = vmatprep.subr.bf16.mxu0 0
        %4029 = vmatpush1.bf16.xpose.msra.mxu0 %v4019
        %4030 = vmatprep.subr.bf16.mxu0 0
        %4031 = vmatpush1.bf16.xpose.msra.mxu0 %v4022
        %4032 = vmatprep.subr.bf16.mxu0 0
        %4033 = vmatpush1.bf16.xpose.msra.mxu0 0
        %4034 = vmatprep.subr.bf16.mxu0 0
        %4035 = vmatpush1.bf16.xpose.msra.mxu0 0
        %4036 = vmatprep.subr.bf16.mxu0 0
        %4037 = vmatpush1.bf16.xpose.msra.mxu0 0
        %4038 = vmatprep.subr.bf16.mxu0 0
        %4039 = vmatpush1.bf16.xpose.msra.mxu0 0
        %4040 = vmatprep.subr.bf16.mxu0 0
        %4041 = vmatpush1.bf16.xpose.msra.mxu0 0
        %4042 = vmatprep.subr.bf16.mxu0 0
        %4043 = vmatpush1.bf16.xpose.msra.mxu0 0
        %4044 = vmatprep.subr.bf16.mxu0 0
        %4045 = vmatpush1.bf16.xpose.msra.mxu0 0
        %4046 = vmatprep.subr.bf16.mxu0 0
        %4047 = vmatpush1.bf16.xpose.msra.mxu0 0
        %4048 = vmatprep.subr.bf16.mxu0 0
        %4049 = vmatpush1.bf16.xpose.msra.mxu0 0
        %4050 = vmatprep.subr.bf16.mxu0 0
        %4051 = vmatpush1.bf16.xpose.msra.mxu0 0
        %4052 = vmatprep.subr.bf16.mxu0 0
        %4053 = vmatpush1.bf16.xpose.msra.mxu0 0
        %4054 = vmatprep.subr.bf16.mxu0 0
        %4055 = vmatpush1.bf16.xpose.msra.mxu0 0
        %4056 = vmatprep.mubr.bf16.mxu0 0
        %4057 = vmatmul.mubr.bf16.gmra.mrb[0].mxu0 %v4001
        %v4058 = vpop.f32.mrb[0].mxu0
        %v4059 = vadd.f32 %v3968, %v4058
        %v4060 = vpop.f32.mrb[0].mxu0
        %v4061 = vpop.f32.mrb[0].mxu0
        %v4062 = vadd.f32 %v3969, %v4061
        %v4063 = vpop.f32.mrb[0].mxu0
        %4064 = vmatprep.mubr.bf16.mxu0 0
        %4065 = vmatmul.mubr.bf16.gmra.mrb[0].mxu0 %v4004
        %v4066 = vpop.f32.mrb[0].mxu0
        %v4067 = vadd.f32 %v3970, %v4066
        %v4068 = vpop.f32.mrb[0].mxu0
        %v4069 = vpop.f32.mrb[0].mxu0
        %v4070 = vadd.f32 %v3971, %v4069
        %v4071 = vpop.f32.mrb[0].mxu0
        %4072 = vmatprep.mubr.bf16.mxu0 0
        %4073 = vmatmul.mubr.bf16.gmra.mrb[0].mxu0 %v4007
        %v4074 = vpop.f32.mrb[0].mxu0
        %v4075 = vadd.f32 %v3972, %v4074
        %v4076 = vpop.f32.mrb[0].mxu0
        %v4077 = vpop.f32.mrb[0].mxu0
        %v4078 = vadd.f32 %v3973, %v4077
        %v4079 = vpop.f32.mrb[0].mxu0
        %4080 = vmatprep.mubr.bf16.mxu0 0
        %4081 = vmatmul.mubr.bf16.gmra.mrb[0].mxu0 %v4010
        %v4082 = vpop.f32.mrb[0].mxu0
        %v4083 = vadd.f32 %v3974, %v4082
        %v4084 = vpop.f32.mrb[0].mxu0
        %v4085 = vpop.f32.mrb[0].mxu0
        %v4086 = vadd.f32 %v3975, %v4085
        %v4087 = vpop.f32.mrb[0].mxu0
        %4088 = vdwg.mxu0
        %v4089 = vsel %vm1156, %v4059, -inf
        %4090 = vmax.xlane.f32.xlu0 %v4089
        %v4091 = vpop.xlane.xlu0 %4090
        %v4092 = vsel %vm1156, %v4062, -inf
        %4093 = vmax.xlane.f32.xlu0 %v4092
        %v4094 = vpop.xlane.xlu0 %4093
        %v4095 = vsel %vm1156, %v4067, -inf
        %4096 = vmax.xlane.f32.xlu0 %v4095
        %v4097 = vpop.xlane.xlu0 %4096
        %v4098 = vsel %vm1156, %v4070, -inf
        %4099 = vmax.xlane.f32.xlu0 %v4098
        %v4100 = vpop.xlane.xlu0 %4099
        %v4101 = vsel %vm1156, %v4075, -inf
        %4102 = vmax.xlane.f32.xlu0 %v4101
        %v4103 = vpop.xlane.xlu0 %4102
        %v4104 = vsel %vm1156, %v4078, -inf
        %4105 = vmax.xlane.f32.xlu0 %v4104
        %v4106 = vpop.xlane.xlu0 %4105
        %v4107 = vsel %vm1156, %v4083, -inf
        %4108 = vmax.xlane.f32.xlu0 %v4107
        %v4109 = vpop.xlane.xlu0 %4108
        %v4110 = vsel %vm1156, %v4086, -inf
        %4111 = vmax.xlane.f32.xlu0 %v4110
        %v4112 = vpop.xlane.xlu0 %4111
        %v4113 = vsub.f32 %v4059, %v4091
        %v4114 = vsub.f32 %v4062, %v4094
        %v4115 = vsub.f32 %v4067, %v4097
        %v4116 = vsub.f32 %v4070, %v4100
        %v4117 = vsub.f32 %v4075, %v4103
        %v4118 = vsub.f32 %v4078, %v4106
        %v4119 = vsub.f32 %v4083, %v4109
        %v4120 = vsub.f32 %v4086, %v4112
        %v4121 = vmul.f32 %v4113, 1.442695
        %v4122 = vpow.pop %v4121
        %v4123 = vmul.f32 %v4114, 1.442695
        %v4124 = vpow.pop %v4123
        %v4125 = vmul.f32 %v4115, 1.442695
        %v4126 = vpow.pop %v4125
        %v4127 = vmul.f32 %v4116, 1.442695
        %v4128 = vpow.pop %v4127
        %v4129 = vmul.f32 %v4117, 1.442695
        %v4130 = vpow.pop %v4129
        %v4131 = vmul.f32 %v4118, 1.442695
        %v4132 = vpow.pop %v4131
        %v4133 = vmul.f32 %v4119, 1.442695
        %v4134 = vpow.pop %v4133
        %v4135 = vmul.f32 %v4120, 1.442695
        %v4136 = vpow.pop %v4135
        %v4137 = vsel %vm1156, %v4122, 0.0
        %4138 = vadd.xlane.f32.xlu0 %v4137
        %v4139 = vpop.xlane.xlu0 %4138
        %v4140 = vsel %vm1156, %v4124, 0.0
        %4141 = vadd.xlane.f32.xlu0 %v4140
        %v4142 = vpop.xlane.xlu0 %4141
        %v4143 = vsel %vm1156, %v4126, 0.0
        %4144 = vadd.xlane.f32.xlu0 %v4143
        %v4145 = vpop.xlane.xlu0 %4144
        %v4146 = vsel %vm1156, %v4128, 0.0
        %4147 = vadd.xlane.f32.xlu0 %v4146
        %v4148 = vpop.xlane.xlu0 %4147
        %v4149 = vsel %vm1156, %v4130, 0.0
        %4150 = vadd.xlane.f32.xlu0 %v4149
        %v4151 = vpop.xlane.xlu0 %4150
        %v4152 = vsel %vm1156, %v4132, 0.0
        %4153 = vadd.xlane.f32.xlu0 %v4152
        %v4154 = vpop.xlane.xlu0 %4153
        %v4155 = vsel %vm1156, %v4134, 0.0
        %4156 = vadd.xlane.f32.xlu0 %v4155
        %v4157 = vpop.xlane.xlu0 %4156
        %v4158 = vsel %vm1156, %v4136, 0.0
        %4159 = vadd.xlane.f32.xlu0 %v4158
        %v4160 = vpop.xlane.xlu0 %4159
        %v4161 = vpack.c.bf16 %v4124, %v4122
        %v4162 = vpack.c.bf16 %v4128, %v4126
        %v4163 = vpack.c.bf16 %v4132, %v4130
        %v4164 = vpack.c.bf16 %v4136, %v4134
        %4169 = vrot.lane.b32.xlu0 %v1028, 96
        %v4170 = vpop.permute.xlu0 %4169
        %4171 = vrot.lane.b32.xlu0 %v1031, 96
        %v4172 = vpop.permute.xlu0 %4171
        %4173 = vrot.lane.b32.xlu0 %v1034, 96
        %v4174 = vpop.permute.xlu0 %4173
        %4175 = vrot.lane.b32.xlu0 %v1037, 96
        %v4176 = vpop.permute.xlu0 %4175
        %v4182 = vsel %vm1156, %v4161, 0
        %v4185 = vsel %vm1156, %v4162, 0
        %v4188 = vsel %vm1156, %v4163, 0
        %v4191 = vsel %vm1156, %v4164, 0
        %4193 = vmatprep.subr.bf16.mxu0 0
        %4194 = vmatpush1.bf16.msra.mxu0 %v4170
        %4195 = vmatprep.subr.bf16.mxu0 0
        %4196 = vmatpush1.bf16.msra.mxu0 %v4172
        %4197 = vmatprep.subr.bf16.mxu0 0
        %4198 = vmatpush1.bf16.msra.mxu0 %v4174
        %4199 = vmatprep.subr.bf16.mxu0 0
        %4200 = vmatpush1.bf16.msra.mxu0 %v4176
        %4201 = vmatprep.subr.bf16.mxu0 0
        %4202 = vmatpush1.bf16.msra.mxu0 0
        %4203 = vmatprep.subr.bf16.mxu0 0
        %4204 = vmatpush1.bf16.msra.mxu0 0
        %4205 = vmatprep.subr.bf16.mxu0 0
        %4206 = vmatpush1.bf16.msra.mxu0 0
        %4207 = vmatprep.subr.bf16.mxu0 0
        %4208 = vmatpush1.bf16.msra.mxu0 0
        %4209 = vmatprep.subr.bf16.mxu0 0
        %4210 = vmatpush1.bf16.msra.mxu0 0
        %4211 = vmatprep.subr.bf16.mxu0 0
        %4212 = vmatpush1.bf16.msra.mxu0 0
        %4213 = vmatprep.subr.bf16.mxu0 0
        %4214 = vmatpush1.bf16.msra.mxu0 0
        %4215 = vmatprep.subr.bf16.mxu0 0
        %4216 = vmatpush1.bf16.msra.mxu0 0
        %4217 = vmatprep.subr.bf16.mxu0 0
        %4218 = vmatpush1.bf16.msra.mxu0 0
        %4219 = vmatprep.subr.bf16.mxu0 0
        %4220 = vmatpush1.bf16.msra.mxu0 0
        %4221 = vmatprep.subr.bf16.mxu0 0
        %4222 = vmatpush1.bf16.msra.mxu0 0
        %4223 = vmatprep.subr.bf16.mxu0 0
        %4224 = vmatpush1.bf16.msra.mxu0 0
        %4225 = vmatprep.mubr.bf16.mxu0 0
        %4226 = vmatmul.mubr.bf16.gmra.mrb[0].mxu0 %v4182
        %v4227 = vpop.f32.mrb[0].mxu0
        %v4228 = vadd.f32 0.0, %v4227
        %v4229 = vpop.f32.mrb[0].mxu0
        %v4230 = vpop.f32.mrb[0].mxu0
        %v4231 = vadd.f32 0.0, %v4230
        %v4232 = vpop.f32.mrb[0].mxu0
        %4233 = vmatprep.mubr.bf16.mxu0 0
        %4234 = vmatmul.mubr.bf16.gmra.mrb[0].mxu0 %v4185
        %v4235 = vpop.f32.mrb[0].mxu0
        %v4236 = vadd.f32 0.0, %v4235
        %v4237 = vpop.f32.mrb[0].mxu0
        %v4238 = vpop.f32.mrb[0].mxu0
        %v4239 = vadd.f32 0.0, %v4238
        %v4240 = vpop.f32.mrb[0].mxu0
        %4241 = vmatprep.mubr.bf16.mxu0 0
        %4242 = vmatmul.mubr.bf16.gmra.mrb[0].mxu0 %v4188
        %v4243 = vpop.f32.mrb[0].mxu0
        %v4244 = vadd.f32 0.0, %v4243
        %v4245 = vpop.f32.mrb[0].mxu0
        %v4246 = vpop.f32.mrb[0].mxu0
        %v4247 = vadd.f32 0.0, %v4246
        %v4248 = vpop.f32.mrb[0].mxu0
        %4249 = vmatprep.mubr.bf16.mxu0 0
        %4250 = vmatmul.mubr.bf16.gmra.mrb[0].mxu0 %v4191
        %v4251 = vpop.f32.mrb[0].mxu0
        %v4252 = vadd.f32 0.0, %v4251
        %v4253 = vpop.f32.mrb[0].mxu0
        %v4254 = vpop.f32.mrb[0].mxu0
        %v4255 = vadd.f32 0.0, %v4254
        %v4256 = vpop.f32.mrb[0].mxu0
        %4257 = vdwg.mxu0
        %v4258 = vrcp.pop %v4139
        %v4259 = vrcp.pop %v4142
        %v4260 = vrcp.pop %v4145
        %v4261 = vrcp.pop %v4148
        %v4262 = vrcp.pop %v4151
        %v4263 = vrcp.pop %v4154
        %v4264 = vrcp.pop %v4157
        %v4265 = vrcp.pop %v4160
        %v4266 = vmul.f32 %v4228, %v4258
        %v4267 = vmul.f32 %v4231, %v4259
        %v4268 = vmul.f32 %v4236, %v4260
        %v4269 = vmul.f32 %v4239, %v4261
        %v4270 = vmul.f32 %v4244, %v4262
        %v4271 = vmul.f32 %v4247, %v4263
        %v4272 = vmul.f32 %v4252, %v4264
        %v4273 = vmul.f32 %v4255, %v4265
        %s4274 = scalar_lea.vmem [#allocation8], 320
        %v4275 = vld [vmem:[%s4274] sm:$0xf]
        %v4276 = vld [vmem:[%s4274 + $0x4] sm:$0xf]
        %v4277 = vld [vmem:[%s4274 + $0x8] sm:$0xf]
        %v4278 = vld [vmem:[%s4274 + $0xc] sm:$0xf]
        %v4279 = vld [vmem:[%s4274 + $0x10] sm:$0xf]
        %v4280 = vld [vmem:[%s4274 + $0x14] sm:$0xf]
        %v4281 = vld [vmem:[%s4274 + $0x18] sm:$0xf]
        %v4282 = vld [vmem:[%s4274 + $0x1c] sm:$0xf]
        %v4283 = vunpack.c.l.bf16 %v4275
        %v4284 = vunpack.c.l.bf16 %v4276
        %v4285 = vunpack.c.l.bf16 %v4277
        %v4286 = vunpack.c.l.bf16 %v4278
        %v4287 = vunpack.c.l.bf16 %v4279
        %v4288 = vunpack.c.l.bf16 %v4280
        %v4289 = vunpack.c.l.bf16 %v4281
        %v4290 = vunpack.c.l.bf16 %v4282
        %4291 = vrot.lane.b32.xlu0 %v1026, 64
        %v4292 = vpop.permute.xlu0 %4291
        %4293 = vrot.lane.b32.xlu0 %v1029, 64
        %v4294 = vpop.permute.xlu0 %4293
        %4295 = vrot.lane.b32.xlu0 %v1032, 64
        %v4296 = vpop.permute.xlu0 %4295
        %4297 = vrot.lane.b32.xlu0 %v1035, 64
        %v4298 = vpop.permute.xlu0 %4297
        %4299 = vrot.lane.b32.xlu0 %v1027, 64
        %v4300 = vpop.permute.xlu0 %4299
        %4301 = vrot.lane.b32.xlu0 %v1030, 64
        %v4302 = vpop.permute.xlu0 %4301
        %4303 = vrot.lane.b32.xlu0 %v1033, 64
        %v4304 = vpop.permute.xlu0 %4303
        %4305 = vrot.lane.b32.xlu0 %v1036, 64
        %v4306 = vpop.permute.xlu0 %4305
        %v4308 = vsel %vm1066, %v4292, 0
        %v4311 = vsel %vm1066, %v4294, 0
        %v4314 = vsel %vm1066, %v4296, 0
        %v4317 = vsel %vm1066, %v4298, 0
        %v4320 = vsel %vm1066, %v4300, 0
        %v4323 = vsel %vm1066, %v4302, 0
        %v4326 = vsel %vm1066, %v4304, 0
        %v4329 = vsel %vm1066, %v4306, 0
        %4331 = vmatprep.subr.bf16.mxu0 0
        %4332 = vmatpush1.bf16.xpose.msra.mxu0 %v4320
        %4333 = vmatprep.subr.bf16.mxu0 0
        %4334 = vmatpush1.bf16.xpose.msra.mxu0 %v4323
        %4335 = vmatprep.subr.bf16.mxu0 0
        %4336 = vmatpush1.bf16.xpose.msra.mxu0 %v4326
        %4337 = vmatprep.subr.bf16.mxu0 0
        %4338 = vmatpush1.bf16.xpose.msra.mxu0 %v4329
        %4339 = vmatprep.subr.bf16.mxu0 0
        %4340 = vmatpush1.bf16.xpose.msra.mxu0 0
        %4341 = vmatprep.subr.bf16.mxu0 0
        %4342 = vmatpush1.bf16.xpose.msra.mxu0 0
        %4343 = vmatprep.subr.bf16.mxu0 0
        %4344 = vmatpush1.bf16.xpose.msra.mxu0 0
        %4345 = vmatprep.subr.bf16.mxu0 0
        %4346 = vmatpush1.bf16.xpose.msra.mxu0 0
        %4347 = vmatprep.subr.bf16.mxu0 0
        %4348 = vmatpush1.bf16.xpose.msra.mxu0 0
        %4349 = vmatprep.subr.bf16.mxu0 0
        %4350 = vmatpush1.bf16.xpose.msra.mxu0 0
        %4351 = vmatprep.subr.bf16.mxu0 0
        %4352 = vmatpush1.bf16.xpose.msra.mxu0 0
        %4353 = vmatprep.subr.bf16.mxu0 0
        %4354 = vmatpush1.bf16.xpose.msra.mxu0 0
        %4355 = vmatprep.subr.bf16.mxu0 0
        %4356 = vmatpush1.bf16.xpose.msra.mxu0 0
        %4357 = vmatprep.subr.bf16.mxu0 0
        %4358 = vmatpush1.bf16.xpose.msra.mxu0 0
        %4359 = vmatprep.subr.bf16.mxu0 0
        %4360 = vmatpush1.bf16.xpose.msra.mxu0 0
        %4361 = vmatprep.subr.bf16.mxu0 0
        %4362 = vmatpush1.bf16.xpose.msra.mxu0 0
        %4363 = vmatprep.mubr.bf16.mxu0 0
        %4364 = vmatmul.mubr.bf16.gmra.mrb[0].mxu0 %v4308
        %v4365 = vpop.f32.mrb[0].mxu0
        %v4366 = vadd.f32 %v4283, %v4365
        %v4367 = vpop.f32.mrb[0].mxu0
        %v4368 = vpop.f32.mrb[0].mxu0
        %v4369 = vadd.f32 %v4284, %v4368
        %v4370 = vpop.f32.mrb[0].mxu0
        %4371 = vmatprep.mubr.bf16.mxu0 0
        %4372 = vmatmul.mubr.bf16.gmra.mrb[0].mxu0 %v4311
        %v4373 = vpop.f32.mrb[0].mxu0
        %v4374 = vadd.f32 %v4285, %v4373
        %v4375 = vpop.f32.mrb[0].mxu0
        %v4376 = vpop.f32.mrb[0].mxu0
        %v4377 = vadd.f32 %v4286, %v4376
        %v4378 = vpop.f32.mrb[0].mxu0
        %4379 = vmatprep.mubr.bf16.mxu0 0
        %4380 = vmatmul.mubr.bf16.gmra.mrb[0].mxu0 %v4314
        %v4381 = vpop.f32.mrb[0].mxu0
        %v4382 = vadd.f32 %v4287, %v4381
        %v4383 = vpop.f32.mrb[0].mxu0
        %v4384 = vpop.f32.mrb[0].mxu0
        %v4385 = vadd.f32 %v4288, %v4384
        %v4386 = vpop.f32.mrb[0].mxu0
        %4387 = vmatprep.mubr.bf16.mxu0 0
        %4388 = vmatmul.mubr.bf16.gmra.mrb[0].mxu0 %v4317
        %v4389 = vpop.f32.mrb[0].mxu0
        %v4390 = vadd.f32 %v4289, %v4389
        %v4391 = vpop.f32.mrb[0].mxu0
        %v4392 = vpop.f32.mrb[0].mxu0
        %v4393 = vadd.f32 %v4290, %v4392
        %v4394 = vpop.f32.mrb[0].mxu0
        %4395 = vdwg.mxu0
        %v4396 = vsel %vm1156, %v4366, -inf
        %4397 = vmax.xlane.f32.xlu0 %v4396
        %v4398 = vpop.xlane.xlu0 %4397
        %v4399 = vsel %vm1156, %v4369, -inf
        %4400 = vmax.xlane.f32.xlu0 %v4399
        %v4401 = vpop.xlane.xlu0 %4400
        %v4402 = vsel %vm1156, %v4374, -inf
        %4403 = vmax.xlane.f32.xlu0 %v4402
        %v4404 = vpop.xlane.xlu0 %4403
        %v4405 = vsel %vm1156, %v4377, -inf
        %4406 = vmax.xlane.f32.xlu0 %v4405
        %v4407 = vpop.xlane.xlu0 %4406
        %v4408 = vsel %vm1156, %v4382, -inf
        %4409 = vmax.xlane.f32.xlu0 %v4408
        %v4410 = vpop.xlane.xlu0 %4409
        %v4411 = vsel %vm1156, %v4385, -inf
        %4412 = vmax.xlane.f32.xlu0 %v4411
        %v4413 = vpop.xlane.xlu0 %4412
        %v4414 = vsel %vm1156, %v4390, -inf
        %4415 = vmax.xlane.f32.xlu0 %v4414
        %v4416 = vpop.xlane.xlu0 %4415
        %v4417 = vsel %vm1156, %v4393, -inf
        %4418 = vmax.xlane.f32.xlu0 %v4417
        %v4419 = vpop.xlane.xlu0 %4418
        %v4420 = vsub.f32 %v4366, %v4398
        %v4421 = vsub.f32 %v4369, %v4401
        %v4422 = vsub.f32 %v4374, %v4404
        %v4423 = vsub.f32 %v4377, %v4407
        %v4424 = vsub.f32 %v4382, %v4410
        %v4425 = vsub.f32 %v4385, %v4413
        %v4426 = vsub.f32 %v4390, %v4416
        %v4427 = vsub.f32 %v4393, %v4419
        %v4428 = vmul.f32 %v4420, 1.442695
        %v4429 = vpow.pop %v4428
        %v4430 = vmul.f32 %v4421, 1.442695
        %v4431 = vpow.pop %v4430
        %v4432 = vmul.f32 %v4422, 1.442695
        %v4433 = vpow.pop %v4432
        %v4434 = vmul.f32 %v4423, 1.442695
        %v4435 = vpow.pop %v4434
        %v4436 = vmul.f32 %v4424, 1.442695
        %v4437 = vpow.pop %v4436
        %v4438 = vmul.f32 %v4425, 1.442695
        %v4439 = vpow.pop %v4438
        %v4440 = vmul.f32 %v4426, 1.442695
        %v4441 = vpow.pop %v4440
        %v4442 = vmul.f32 %v4427, 1.442695
        %v4443 = vpow.pop %v4442
        %v4444 = vsel %vm1156, %v4429, 0.0
        %4445 = vadd.xlane.f32.xlu0 %v4444
        %v4446 = vpop.xlane.xlu0 %4445
        %v4447 = vsel %vm1156, %v4431, 0.0
        %4448 = vadd.xlane.f32.xlu0 %v4447
        %v4449 = vpop.xlane.xlu0 %4448
        %v4450 = vsel %vm1156, %v4433, 0.0
        %4451 = vadd.xlane.f32.xlu0 %v4450
        %v4452 = vpop.xlane.xlu0 %4451
        %v4453 = vsel %vm1156, %v4435, 0.0
        %4454 = vadd.xlane.f32.xlu0 %v4453
        %v4455 = vpop.xlane.xlu0 %4454
        %v4456 = vsel %vm1156, %v4437, 0.0
        %4457 = vadd.xlane.f32.xlu0 %v4456
        %v4458 = vpop.xlane.xlu0 %4457
        %v4459 = vsel %vm1156, %v4439, 0.0
        %4460 = vadd.xlane.f32.xlu0 %v4459
        %v4461 = vpop.xlane.xlu0 %4460
        %v4462 = vsel %vm1156, %v4441, 0.0
        %4463 = vadd.xlane.f32.xlu0 %v4462
        %v4464 = vpop.xlane.xlu0 %4463
        %v4465 = vsel %vm1156, %v4443, 0.0
        %4466 = vadd.xlane.f32.xlu0 %v4465
        %v4467 = vpop.xlane.xlu0 %4466
        %v4468 = vpack.c.bf16 %v4431, %v4429
        %v4469 = vpack.c.bf16 %v4435, %v4433
        %v4470 = vpack.c.bf16 %v4439, %v4437
        %v4471 = vpack.c.bf16 %v4443, %v4441
        %4472 = vrot.lane.b32.xlu0 %v1028, 64
        %v4473 = vpop.permute.xlu0 %4472
        %4474 = vrot.lane.b32.xlu0 %v1031, 64
        %v4475 = vpop.permute.xlu0 %4474
        %4476 = vrot.lane.b32.xlu0 %v1034, 64
        %v4477 = vpop.permute.xlu0 %4476
        %4478 = vrot.lane.b32.xlu0 %v1037, 64
        %v4479 = vpop.permute.xlu0 %4478
        %v4485 = vsel %vm1156, %v4468, 0
        %v4488 = vsel %vm1156, %v4469, 0
        %v4491 = vsel %vm1156, %v4470, 0
        %v4494 = vsel %vm1156, %v4471, 0
        %4496 = vmatprep.subr.bf16.mxu0 0
        %4497 = vmatpush1.bf16.msra.mxu0 %v4473
        %4498 = vmatprep.subr.bf16.mxu0 0
        %4499 = vmatpush1.bf16.msra.mxu0 %v4475
        %4500 = vmatprep.subr.bf16.mxu0 0
        %4501 = vmatpush1.bf16.msra.mxu0 %v4477
        %4502 = vmatprep.subr.bf16.mxu0 0
        %4503 = vmatpush1.bf16.msra.mxu0 %v4479
        %4504 = vmatprep.subr.bf16.mxu0 0
        %4505 = vmatpush1.bf16.msra.mxu0 0
        %4506 = vmatprep.subr.bf16.mxu0 0
        %4507 = vmatpush1.bf16.msra.mxu0 0
        %4508 = vmatprep.subr.bf16.mxu0 0
        %4509 = vmatpush1.bf16.msra.mxu0 0
        %4510 = vmatprep.subr.bf16.mxu0 0
        %4511 = vmatpush1.bf16.msra.mxu0 0
        %4512 = vmatprep.subr.bf16.mxu0 0
        %4513 = vmatpush1.bf16.msra.mxu0 0
        %4514 = vmatprep.subr.bf16.mxu0 0
        %4515 = vmatpush1.bf16.msra.mxu0 0
        %4516 = vmatprep.subr.bf16.mxu0 0
        %4517 = vmatpush1.bf16.msra.mxu0 0
        %4518 = vmatprep.subr.bf16.mxu0 0
        %4519 = vmatpush1.bf16.msra.mxu0 0
        %4520 = vmatprep.subr.bf16.mxu0 0
        %4521 = vmatpush1.bf16.msra.mxu0 0
        %4522 = vmatprep.subr.bf16.mxu0 0
        %4523 = vmatpush1.bf16.msra.mxu0 0
        %4524 = vmatprep.subr.bf16.mxu0 0
        %4525 = vmatpush1.bf16.msra.mxu0 0
        %4526 = vmatprep.subr.bf16.mxu0 0
        %4527 = vmatpush1.bf16.msra.mxu0 0
        %4528 = vmatprep.mubr.bf16.mxu0 0
        %4529 = vmatmul.mubr.bf16.gmra.mrb[0].mxu0 %v4485
        %v4530 = vpop.f32.mrb[0].mxu0
        %v4531 = vadd.f32 0.0, %v4530
        %v4532 = vpop.f32.mrb[0].mxu0
        %v4533 = vpop.f32.mrb[0].mxu0
        %v4534 = vadd.f32 0.0, %v4533
        %v4535 = vpop.f32.mrb[0].mxu0
        %4536 = vmatprep.mubr.bf16.mxu0 0
        %4537 = vmatmul.mubr.bf16.gmra.mrb[0].mxu0 %v4488
        %v4538 = vpop.f32.mrb[0].mxu0
        %v4539 = vadd.f32 0.0, %v4538
        %v4540 = vpop.f32.mrb[0].mxu0
        %v4541 = vpop.f32.mrb[0].mxu0
        %v4542 = vadd.f32 0.0, %v4541
        %v4543 = vpop.f32.mrb[0].mxu0
        %4544 = vmatprep.mubr.bf16.mxu0 0
        %4545 = vmatmul.mubr.bf16.gmra.mrb[0].mxu0 %v4491
        %v4546 = vpop.f32.mrb[0].mxu0
        %v4547 = vadd.f32 0.0, %v4546
        %v4548 = vpop.f32.mrb[0].mxu0
        %v4549 = vpop.f32.mrb[0].mxu0
        %v4550 = vadd.f32 0.0, %v4549
        %v4551 = vpop.f32.mrb[0].mxu0
        %4552 = vmatprep.mubr.bf16.mxu0 0
        %4553 = vmatmul.mubr.bf16.gmra.mrb[0].mxu0 %v4494
        %v4554 = vpop.f32.mrb[0].mxu0
        %v4555 = vadd.f32 0.0, %v4554
        %v4556 = vpop.f32.mrb[0].mxu0
        %v4557 = vpop.f32.mrb[0].mxu0
        %v4558 = vadd.f32 0.0, %v4557
        %v4559 = vpop.f32.mrb[0].mxu0
        %4560 = vdwg.mxu0
        %v4561 = vrcp.pop %v4446
        %v4562 = vrcp.pop %v4449
        %v4563 = vrcp.pop %v4452
        %v4564 = vrcp.pop %v4455
        %v4565 = vrcp.pop %v4458
        %v4566 = vrcp.pop %v4461
        %v4567 = vrcp.pop %v4464
        %v4568 = vrcp.pop %v4467
        %v4569 = vmul.f32 %v4531, %v4561
        %v4570 = vmul.f32 %v4534, %v4562
        %v4571 = vmul.f32 %v4539, %v4563
        %v4572 = vmul.f32 %v4542, %v4564
        %v4573 = vmul.f32 %v4547, %v4565
        %v4574 = vmul.f32 %v4550, %v4566
        %v4575 = vmul.f32 %v4555, %v4567
        %v4576 = vmul.f32 %v4558, %v4568
        %s4577 = scalar_lea.vmem [#allocation8], 352
        %v4578 = vld [vmem:[%s4577] sm:$0xf]
        %v4579 = vld [vmem:[%s4577 + $0x4] sm:$0xf]
        %v4580 = vld [vmem:[%s4577 + $0x8] sm:$0xf]
        %v4581 = vld [vmem:[%s4577 + $0xc] sm:$0xf]
        %v4582 = vld [vmem:[%s4577 + $0x10] sm:$0xf]
        %v4583 = vld [vmem:[%s4577 + $0x14] sm:$0xf]
        %v4584 = vld [vmem:[%s4577 + $0x18] sm:$0xf]
        %v4585 = vld [vmem:[%s4577 + $0x1c] sm:$0xf]
        %v4586 = vunpack.c.l.bf16 %v4578
        %v4587 = vunpack.c.l.bf16 %v4579
        %v4588 = vunpack.c.l.bf16 %v4580
        %v4589 = vunpack.c.l.bf16 %v4581
        %v4590 = vunpack.c.l.bf16 %v4582
        %v4591 = vunpack.c.l.bf16 %v4583
        %v4592 = vunpack.c.l.bf16 %v4584
        %v4593 = vunpack.c.l.bf16 %v4585
        %4594 = vrot.lane.b32.xlu0 %v1026, 32
        %v4595 = vpop.permute.xlu0 %4594
        %4596 = vrot.lane.b32.xlu0 %v1029, 32
        %v4597 = vpop.permute.xlu0 %4596
        %4598 = vrot.lane.b32.xlu0 %v1032, 32
        %v4599 = vpop.permute.xlu0 %4598
        %4600 = vrot.lane.b32.xlu0 %v1035, 32
        %v4601 = vpop.permute.xlu0 %4600
        %4602 = vrot.lane.b32.xlu0 %v1027, 32
        %v4603 = vpop.permute.xlu0 %4602
        %4604 = vrot.lane.b32.xlu0 %v1030, 32
        %v4605 = vpop.permute.xlu0 %4604
        %4606 = vrot.lane.b32.xlu0 %v1033, 32
        %v4607 = vpop.permute.xlu0 %4606
        %4608 = vrot.lane.b32.xlu0 %v1036, 32
        %v4609 = vpop.permute.xlu0 %4608
        %v4611 = vsel %vm1066, %v4595, 0
        %v4614 = vsel %vm1066, %v4597, 0
        %v4617 = vsel %vm1066, %v4599, 0
        %v4620 = vsel %vm1066, %v4601, 0
        %v4623 = vsel %vm1066, %v4603, 0
        %v4626 = vsel %vm1066, %v4605, 0
        %v4629 = vsel %vm1066, %v4607, 0
        %v4632 = vsel %vm1066, %v4609, 0
        %4634 = vmatprep.subr.bf16.mxu0 0
        %4635 = vmatpush1.bf16.xpose.msra.mxu0 %v4623
        %4636 = vmatprep.subr.bf16.mxu0 0
        %4637 = vmatpush1.bf16.xpose.msra.mxu0 %v4626
        %4638 = vmatprep.subr.bf16.mxu0 0
        %4639 = vmatpush1.bf16.xpose.msra.mxu0 %v4629
        %4640 = vmatprep.subr.bf16.mxu0 0
        %4641 = vmatpush1.bf16.xpose.msra.mxu0 %v4632
        %4642 = vmatprep.subr.bf16.mxu0 0
        %4643 = vmatpush1.bf16.xpose.msra.mxu0 0
        %4644 = vmatprep.subr.bf16.mxu0 0
        %4645 = vmatpush1.bf16.xpose.msra.mxu0 0
        %4646 = vmatprep.subr.bf16.mxu0 0
        %4647 = vmatpush1.bf16.xpose.msra.mxu0 0
        %4648 = vmatprep.subr.bf16.mxu0 0
        %4649 = vmatpush1.bf16.xpose.msra.mxu0 0
        %4650 = vmatprep.subr.bf16.mxu0 0
        %4651 = vmatpush1.bf16.xpose.msra.mxu0 0
        %4652 = vmatprep.subr.bf16.mxu0 0
        %4653 = vmatpush1.bf16.xpose.msra.mxu0 0
        %4654 = vmatprep.subr.bf16.mxu0 0
        %4655 = vmatpush1.bf16.xpose.msra.mxu0 0
        %4656 = vmatprep.subr.bf16.mxu0 0
        %4657 = vmatpush1.bf16.xpose.msra.mxu0 0
        %4658 = vmatprep.subr.bf16.mxu0 0
        %4659 = vmatpush1.bf16.xpose.msra.mxu0 0
        %4660 = vmatprep.subr.bf16.mxu0 0
        %4661 = vmatpush1.bf16.xpose.msra.mxu0 0
        %4662 = vmatprep.subr.bf16.mxu0 0
        %4663 = vmatpush1.bf16.xpose.msra.mxu0 0
        %4664 = vmatprep.subr.bf16.mxu0 0
        %4665 = vmatpush1.bf16.xpose.msra.mxu0 0
        %4666 = vmatprep.mubr.bf16.mxu0 0
        %4667 = vmatmul.mubr.bf16.gmra.mrb[0].mxu0 %v4611
        %v4668 = vpop.f32.mrb[0].mxu0
        %v4669 = vadd.f32 %v4586, %v4668
        %v4670 = vpop.f32.mrb[0].mxu0
        %v4671 = vpop.f32.mrb[0].mxu0
        %v4672 = vadd.f32 %v4587, %v4671
        %v4673 = vpop.f32.mrb[0].mxu0
        %4674 = vmatprep.mubr.bf16.mxu0 0
        %4675 = vmatmul.mubr.bf16.gmra.mrb[0].mxu0 %v4614
        %v4676 = vpop.f32.mrb[0].mxu0
        %v4677 = vadd.f32 %v4588, %v4676
        %v4678 = vpop.f32.mrb[0].mxu0
        %v4679 = vpop.f32.mrb[0].mxu0
        %v4680 = vadd.f32 %v4589, %v4679
        %v4681 = vpop.f32.mrb[0].mxu0
        %4682 = vmatprep.mubr.bf16.mxu0 0
        %4683 = vmatmul.mubr.bf16.gmra.mrb[0].mxu0 %v4617
        %v4684 = vpop.f32.mrb[0].mxu0
        %v4685 = vadd.f32 %v4590, %v4684
        %v4686 = vpop.f32.mrb[0].mxu0
        %v4687 = vpop.f32.mrb[0].mxu0
        %v4688 = vadd.f32 %v4591, %v4687
        %v4689 = vpop.f32.mrb[0].mxu0
        %4690 = vmatprep.mubr.bf16.mxu0 0
        %4691 = vmatmul.mubr.bf16.gmra.mrb[0].mxu0 %v4620
        %v4692 = vpop.f32.mrb[0].mxu0
        %v4693 = vadd.f32 %v4592, %v4692
        %v4694 = vpop.f32.mrb[0].mxu0
        %v4695 = vpop.f32.mrb[0].mxu0
        %v4696 = vadd.f32 %v4593, %v4695
        %v4697 = vpop.f32.mrb[0].mxu0
        %4698 = vdwg.mxu0
        %v4699 = vsel %vm1156, %v4669, -inf
        %4700 = vmax.xlane.f32.xlu0 %v4699
        %v4701 = vpop.xlane.xlu0 %4700
        %v4702 = vsel %vm1156, %v4672, -inf
        %4703 = vmax.xlane.f32.xlu0 %v4702
        %v4704 = vpop.xlane.xlu0 %4703
        %v4705 = vsel %vm1156, %v4677, -inf
        %4706 = vmax.xlane.f32.xlu0 %v4705
        %v4707 = vpop.xlane.xlu0 %4706
        %v4708 = vsel %vm1156, %v4680, -inf
        %4709 = vmax.xlane.f32.xlu0 %v4708
        %v4710 = vpop.xlane.xlu0 %4709
        %v4711 = vsel %vm1156, %v4685, -inf
        %4712 = vmax.xlane.f32.xlu0 %v4711
        %v4713 = vpop.xlane.xlu0 %4712
        %v4714 = vsel %vm1156, %v4688, -inf
        %4715 = vmax.xlane.f32.xlu0 %v4714
        %v4716 = vpop.xlane.xlu0 %4715
        %v4717 = vsel %vm1156, %v4693, -inf
        %4718 = vmax.xlane.f32.xlu0 %v4717
        %v4719 = vpop.xlane.xlu0 %4718
        %v4720 = vsel %vm1156, %v4696, -inf
        %4721 = vmax.xlane.f32.xlu0 %v4720
        %v4722 = vpop.xlane.xlu0 %4721
        %v4723 = vsub.f32 %v4669, %v4701
        %v4724 = vsub.f32 %v4672, %v4704
        %v4725 = vsub.f32 %v4677, %v4707
        %v4726 = vsub.f32 %v4680, %v4710
        %v4727 = vsub.f32 %v4685, %v4713
        %v4728 = vsub.f32 %v4688, %v4716
        %v4729 = vsub.f32 %v4693, %v4719
        %v4730 = vsub.f32 %v4696, %v4722
        %v4731 = vmul.f32 %v4723, 1.442695
        %v4732 = vpow.pop %v4731
        %v4733 = vmul.f32 %v4724, 1.442695
        %v4734 = vpow.pop %v4733
        %v4735 = vmul.f32 %v4725, 1.442695
        %v4736 = vpow.pop %v4735
        %v4737 = vmul.f32 %v4726, 1.442695
        %v4738 = vpow.pop %v4737
        %v4739 = vmul.f32 %v4727, 1.442695
        %v4740 = vpow.pop %v4739
        %v4741 = vmul.f32 %v4728, 1.442695
        %v4742 = vpow.pop %v4741
        %v4743 = vmul.f32 %v4729, 1.442695
        %v4744 = vpow.pop %v4743
        %v4745 = vmul.f32 %v4730, 1.442695
        %v4746 = vpow.pop %v4745
        %v4747 = vsel %vm1156, %v4732, 0.0
        %4748 = vadd.xlane.f32.xlu0 %v4747
        %v4749 = vpop.xlane.xlu0 %4748
        %v4750 = vsel %vm1156, %v4734, 0.0
        %4751 = vadd.xlane.f32.xlu0 %v4750
        %v4752 = vpop.xlane.xlu0 %4751
        %v4753 = vsel %vm1156, %v4736, 0.0
        %4754 = vadd.xlane.f32.xlu0 %v4753
        %v4755 = vpop.xlane.xlu0 %4754
        %v4756 = vsel %vm1156, %v4738, 0.0
        %4757 = vadd.xlane.f32.xlu0 %v4756
        %v4758 = vpop.xlane.xlu0 %4757
        %v4759 = vsel %vm1156, %v4740, 0.0
        %4760 = vadd.xlane.f32.xlu0 %v4759
        %v4761 = vpop.xlane.xlu0 %4760
        %v4762 = vsel %vm1156, %v4742, 0.0
        %4763 = vadd.xlane.f32.xlu0 %v4762
        %v4764 = vpop.xlane.xlu0 %4763
        %v4765 = vsel %vm1156, %v4744, 0.0
        %4766 = vadd.xlane.f32.xlu0 %v4765
        %v4767 = vpop.xlane.xlu0 %4766
        %v4768 = vsel %vm1156, %v4746, 0.0
        %4769 = vadd.xlane.f32.xlu0 %v4768
        %v4770 = vpop.xlane.xlu0 %4769
        %v4771 = vpack.c.bf16 %v4734, %v4732
        %v4772 = vpack.c.bf16 %v4738, %v4736
        %v4773 = vpack.c.bf16 %v4742, %v4740
        %v4774 = vpack.c.bf16 %v4746, %v4744
        %4775 = vrot.lane.b32.xlu0 %v1028, 32
        %v4776 = vpop.permute.xlu0 %4775
        %4777 = vrot.lane.b32.xlu0 %v1031, 32
        %v4778 = vpop.permute.xlu0 %4777
        %4779 = vrot.lane.b32.xlu0 %v1034, 32
        %v4780 = vpop.permute.xlu0 %4779
        %4781 = vrot.lane.b32.xlu0 %v1037, 32
        %v4782 = vpop.permute.xlu0 %4781
        %v4788 = vsel %vm1156, %v4771, 0
        %v4791 = vsel %vm1156, %v4772, 0
        %v4794 = vsel %vm1156, %v4773, 0
        %v4797 = vsel %vm1156, %v4774, 0
        %4799 = vmatprep.subr.bf16.mxu0 0
        %4800 = vmatpush1.bf16.msra.mxu0 %v4776
        %4801 = vmatprep.subr.bf16.mxu0 0
        %4802 = vmatpush1.bf16.msra.mxu0 %v4778
        %4803 = vmatprep.subr.bf16.mxu0 0
        %4804 = vmatpush1.bf16.msra.mxu0 %v4780
        %4805 = vmatprep.subr.bf16.mxu0 0
        %4806 = vmatpush1.bf16.msra.mxu0 %v4782
        %4807 = vmatprep.subr.bf16.mxu0 0
        %4808 = vmatpush1.bf16.msra.mxu0 0
        %4809 = vmatprep.subr.bf16.mxu0 0
        %4810 = vmatpush1.bf16.msra.mxu0 0
        %4811 = vmatprep.subr.bf16.mxu0 0
        %4812 = vmatpush1.bf16.msra.mxu0 0
        %4813 = vmatprep.subr.bf16.mxu0 0
        %4814 = vmatpush1.bf16.msra.mxu0 0
        %4815 = vmatprep.subr.bf16.mxu0 0
        %4816 = vmatpush1.bf16.msra.mxu0 0
        %4817 = vmatprep.subr.bf16.mxu0 0
        %4818 = vmatpush1.bf16.msra.mxu0 0
        %4819 = vmatprep.subr.bf16.mxu0 0
        %4820 = vmatpush1.bf16.msra.mxu0 0
        %4821 = vmatprep.subr.bf16.mxu0 0
        %4822 = vmatpush1.bf16.msra.mxu0 0
        %4823 = vmatprep.subr.bf16.mxu0 0
        %4824 = vmatpush1.bf16.msra.mxu0 0
        %4825 = vmatprep.subr.bf16.mxu0 0
        %4826 = vmatpush1.bf16.msra.mxu0 0
        %4827 = vmatprep.subr.bf16.mxu0 0
        %4828 = vmatpush1.bf16.msra.mxu0 0
        %4829 = vmatprep.subr.bf16.mxu0 0
        %4830 = vmatpush1.bf16.msra.mxu0 0
        %4831 = vmatprep.mubr.bf16.mxu0 0
        %4832 = vmatmul.mubr.bf16.gmra.mrb[0].mxu0 %v4788
        %v4833 = vpop.f32.mrb[0].mxu0
        %v4834 = vadd.f32 0.0, %v4833
        %v4835 = vpop.f32.mrb[0].mxu0
        %v4836 = vpop.f32.mrb[0].mxu0
        %v4837 = vadd.f32 0.0, %v4836
        %v4838 = vpop.f32.mrb[0].mxu0
        %4839 = vmatprep.mubr.bf16.mxu0 0
        %4840 = vmatmul.mubr.bf16.gmra.mrb[0].mxu0 %v4791
        %v4841 = vpop.f32.mrb[0].mxu0
        %v4842 = vadd.f32 0.0, %v4841
        %v4843 = vpop.f32.mrb[0].mxu0
        %v4844 = vpop.f32.mrb[0].mxu0
        %v4845 = vadd.f32 0.0, %v4844
        %v4846 = vpop.f32.mrb[0].mxu0
        %4847 = vmatprep.mubr.bf16.mxu0 0
        %4848 = vmatmul.mubr.bf16.gmra.mrb[0].mxu0 %v4794
        %v4849 = vpop.f32.mrb[0].mxu0
        %v4850 = vadd.f32 0.0, %v4849
        %v4851 = vpop.f32.mrb[0].mxu0
        %v4852 = vpop.f32.mrb[0].mxu0
        %v4853 = vadd.f32 0.0, %v4852
        %v4854 = vpop.f32.mrb[0].mxu0
        %4855 = vmatprep.mubr.bf16.mxu0 0
        %4856 = vmatmul.mubr.bf16.gmra.mrb[0].mxu0 %v4797
        %v4857 = vpop.f32.mrb[0].mxu0
        %v4858 = vadd.f32 0.0, %v4857
        %v4859 = vpop.f32.mrb[0].mxu0
        %v4860 = vpop.f32.mrb[0].mxu0
        %v4861 = vadd.f32 0.0, %v4860
        %v4862 = vpop.f32.mrb[0].mxu0
        %4863 = vdwg.mxu0
        %v4864 = vrcp.pop %v4749
        %v4865 = vrcp.pop %v4752
        %v4866 = vrcp.pop %v4755
        %v4867 = vrcp.pop %v4758
        %v4868 = vrcp.pop %v4761
        %v4869 = vrcp.pop %v4764
        %v4870 = vrcp.pop %v4767
        %v4871 = vrcp.pop %v4770
        %v4872 = vmul.f32 %v4834, %v4864
        %v4873 = vmul.f32 %v4837, %v4865
        %v4874 = vmul.f32 %v4842, %v4866
        %v4875 = vmul.f32 %v4845, %v4867
        %v4876 = vmul.f32 %v4850, %v4868
        %v4877 = vmul.f32 %v4853, %v4869
        %v4878 = vmul.f32 %v4858, %v4870
        %v4879 = vmul.f32 %v4861, %v4871
        %4888 = vrot.lane.b32.xlu0 %v4266, 32
        %v4889 = vpop.permute.xlu0 %4888
        %4890 = vrot.lane.b32.xlu0 %v4267, 32
        %v4891 = vpop.permute.xlu0 %4890
        %4892 = vrot.lane.b32.xlu0 %v4268, 32
        %v4893 = vpop.permute.xlu0 %4892
        %4894 = vrot.lane.b32.xlu0 %v4269, 32
        %v4895 = vpop.permute.xlu0 %4894
        %4896 = vrot.lane.b32.xlu0 %v4270, 32
        %v4897 = vpop.permute.xlu0 %4896
        %4898 = vrot.lane.b32.xlu0 %v4271, 32
        %v4899 = vpop.permute.xlu0 %4898
        %4900 = vrot.lane.b32.xlu0 %v4272, 32
        %v4901 = vpop.permute.xlu0 %4900
        %4902 = vrot.lane.b32.xlu0 %v4273, 32
        %v4903 = vpop.permute.xlu0 %4902
        %4920 = vrot.lane.b32.xlu0 %v4569, 64
        %v4921 = vpop.permute.xlu0 %4920
        %4922 = vrot.lane.b32.xlu0 %v4570, 64
        %v4923 = vpop.permute.xlu0 %4922
        %4924 = vrot.lane.b32.xlu0 %v4571, 64
        %v4925 = vpop.permute.xlu0 %4924
        %4926 = vrot.lane.b32.xlu0 %v4572, 64
        %v4927 = vpop.permute.xlu0 %4926
        %4928 = vrot.lane.b32.xlu0 %v4573, 64
        %v4929 = vpop.permute.xlu0 %4928
        %4930 = vrot.lane.b32.xlu0 %v4574, 64
        %v4931 = vpop.permute.xlu0 %4930
        %4932 = vrot.lane.b32.xlu0 %v4575, 64
        %v4933 = vpop.permute.xlu0 %4932
        %4934 = vrot.lane.b32.xlu0 %v4576, 64
        %v4935 = vpop.permute.xlu0 %4934
        %4952 = vrot.lane.b32.xlu0 %v4872, 96
        %v4953 = vpop.permute.xlu0 %4952
        %4954 = vrot.lane.b32.xlu0 %v4873, 96
        %v4955 = vpop.permute.xlu0 %4954
        %4956 = vrot.lane.b32.xlu0 %v4874, 96
        %v4957 = vpop.permute.xlu0 %4956
        %4958 = vrot.lane.b32.xlu0 %v4875, 96
        %v4959 = vpop.permute.xlu0 %4958
        %4960 = vrot.lane.b32.xlu0 %v4876, 96
        %v4961 = vpop.permute.xlu0 %4960
        %4962 = vrot.lane.b32.xlu0 %v4877, 96
        %v4963 = vpop.permute.xlu0 %4962
        %4964 = vrot.lane.b32.xlu0 %v4878, 96
        %v4965 = vpop.permute.xlu0 %4964
        %4966 = vrot.lane.b32.xlu0 %v4879, 96
        %v4967 = vpop.permute.xlu0 %4966
        %v4976 = vsel %vm1066, %v3951, %v4889
        %v4977 = vsel %vm1066, %v3952, %v4891
        %v4978 = vsel %vm1066, %v3953, %v4893
        %v4979 = vsel %vm1066, %v3954, %v4895
        %v4980 = vsel %vm1066, %v3955, %v4897
        %v4981 = vsel %vm1066, %v3956, %v4899
        %v4982 = vsel %vm1066, %v3957, %v4901
        %v4983 = vsel %vm1066, %v3958, %v4903
        %v4984 = vsel %vm1156, %v4976, %v4921
        %v4985 = vsel %vm1156, %v4977, %v4923
        %v4986 = vsel %vm1156, %v4978, %v4925
        %v4987 = vsel %vm1156, %v4979, %v4927
        %v4988 = vsel %vm1156, %v4980, %v4929
        %v4989 = vsel %vm1156, %v4981, %v4931
        %v4990 = vsel %vm1156, %v4982, %v4933
        %v4991 = vsel %vm1156, %v4983, %v4935
        %v4992 = vsel %vm2359, %v4984, %v4953
        %v4993 = vsel %vm2359, %v4985, %v4955
        %v4994 = vsel %vm2359, %v4986, %v4957
        %v4995 = vsel %vm2359, %v4987, %v4959
        %v4996 = vsel %vm2359, %v4988, %v4961
        %v4997 = vsel %vm2359, %v4989, %v4963
        %v4998 = vsel %vm2359, %v4990, %v4965
        %v4999 = vsel %vm2359, %v4991, %v4967
        %s5000 = scalar_lea.vmem [#allocation8], 384
        %v5001 = vld [vmem:[%s5000] sm:$0xf]
        %v5002 = vld [vmem:[%s5000 + $0x4] sm:$0xf]
        %v5003 = vld [vmem:[%s5000 + $0x8] sm:$0xf]
        %v5004 = vld [vmem:[%s5000 + $0xc] sm:$0xf]
        %v5005 = vld [vmem:[%s5000 + $0x10] sm:$0xf]
        %v5006 = vld [vmem:[%s5000 + $0x14] sm:$0xf]
        %v5007 = vld [vmem:[%s5000 + $0x18] sm:$0xf]
        %v5008 = vld [vmem:[%s5000 + $0x1c] sm:$0xf]
        %v5009 = vunpack.c.l.bf16 %v5001
        %v5010 = vunpack.c.l.bf16 %v5002
        %v5011 = vunpack.c.l.bf16 %v5003
        %v5012 = vunpack.c.l.bf16 %v5004
        %v5013 = vunpack.c.l.bf16 %v5005
        %v5014 = vunpack.c.l.bf16 %v5006
        %v5015 = vunpack.c.l.bf16 %v5007
        %v5016 = vunpack.c.l.bf16 %v5008
        %v5018 = vsel %vm1066, %v1038, 0
        %v5021 = vsel %vm1066, %v1041, 0
        %v5024 = vsel %vm1066, %v1044, 0
        %v5027 = vsel %vm1066, %v1047, 0
        %v5030 = vsel %vm1066, %v1039, 0
        %v5033 = vsel %vm1066, %v1042, 0
        %v5036 = vsel %vm1066, %v1045, 0
        %v5039 = vsel %vm1066, %v1048, 0
        %5041 = vmatprep.subr.bf16.mxu0 0
        %5042 = vmatpush1.bf16.xpose.msra.mxu0 %v5030
        %5043 = vmatprep.subr.bf16.mxu0 0
        %5044 = vmatpush1.bf16.xpose.msra.mxu0 %v5033
        %5045 = vmatprep.subr.bf16.mxu0 0
        %5046 = vmatpush1.bf16.xpose.msra.mxu0 %v5036
        %5047 = vmatprep.subr.bf16.mxu0 0
        %5048 = vmatpush1.bf16.xpose.msra.mxu0 %v5039
        %5049 = vmatprep.subr.bf16.mxu0 0
        %5050 = vmatpush1.bf16.xpose.msra.mxu0 0
        %5051 = vmatprep.subr.bf16.mxu0 0
        %5052 = vmatpush1.bf16.xpose.msra.mxu0 0
        %5053 = vmatprep.subr.bf16.mxu0 0
        %5054 = vmatpush1.bf16.xpose.msra.mxu0 0
        %5055 = vmatprep.subr.bf16.mxu0 0
        %5056 = vmatpush1.bf16.xpose.msra.mxu0 0
        %5057 = vmatprep.subr.bf16.mxu0 0
        %5058 = vmatpush1.bf16.xpose.msra.mxu0 0
        %5059 = vmatprep.subr.bf16.mxu0 0
        %5060 = vmatpush1.bf16.xpose.msra.mxu0 0
        %5061 = vmatprep.subr.bf16.mxu0 0
        %5062 = vmatpush1.bf16.xpose.msra.mxu0 0
        %5063 = vmatprep.subr.bf16.mxu0 0
        %5064 = vmatpush1.bf16.xpose.msra.mxu0 0
        %5065 = vmatprep.subr.bf16.mxu0 0
        %5066 = vmatpush1.bf16.xpose.msra.mxu0 0
        %5067 = vmatprep.subr.bf16.mxu0 0
        %5068 = vmatpush1.bf16.xpose.msra.mxu0 0
        %5069 = vmatprep.subr.bf16.mxu0 0
        %5070 = vmatpush1.bf16.xpose.msra.mxu0 0
        %5071 = vmatprep.subr.bf16.mxu0 0
        %5072 = vmatpush1.bf16.xpose.msra.mxu0 0
        %5073 = vmatprep.mubr.bf16.mxu0 0
        %5074 = vmatmul.mubr.bf16.gmra.mrb[0].mxu0 %v5018
        %v5075 = vpop.f32.mrb[0].mxu0
        %v5076 = vadd.f32 %v5009, %v5075
        %v5077 = vpop.f32.mrb[0].mxu0
        %v5078 = vpop.f32.mrb[0].mxu0
        %v5079 = vadd.f32 %v5010, %v5078
        %v5080 = vpop.f32.mrb[0].mxu0
        %5081 = vmatprep.mubr.bf16.mxu0 0
        %5082 = vmatmul.mubr.bf16.gmra.mrb[0].mxu0 %v5021
        %v5083 = vpop.f32.mrb[0].mxu0
        %v5084 = vadd.f32 %v5011, %v5083
        %v5085 = vpop.f32.mrb[0].mxu0
        %v5086 = vpop.f32.mrb[0].mxu0
        %v5087 = vadd.f32 %v5012, %v5086
        %v5088 = vpop.f32.mrb[0].mxu0
        %5089 = vmatprep.mubr.bf16.mxu0 0
        %5090 = vmatmul.mubr.bf16.gmra.mrb[0].mxu0 %v5024
        %v5091 = vpop.f32.mrb[0].mxu0
        %v5092 = vadd.f32 %v5013, %v5091
        %v5093 = vpop.f32.mrb[0].mxu0
        %v5094 = vpop.f32.mrb[0].mxu0
        %v5095 = vadd.f32 %v5014, %v5094
        %v5096 = vpop.f32.mrb[0].mxu0
        %5097 = vmatprep.mubr.bf16.mxu0 0
        %5098 = vmatmul.mubr.bf16.gmra.mrb[0].mxu0 %v5027
        %v5099 = vpop.f32.mrb[0].mxu0
        %v5100 = vadd.f32 %v5015, %v5099
        %v5101 = vpop.f32.mrb[0].mxu0
        %v5102 = vpop.f32.mrb[0].mxu0
        %v5103 = vadd.f32 %v5016, %v5102
        %v5104 = vpop.f32.mrb[0].mxu0
        %5105 = vdwg.mxu0
        %v5106 = vsel %vm1156, %v5076, -inf
        %5107 = vmax.xlane.f32.xlu0 %v5106
        %v5108 = vpop.xlane.xlu0 %5107
        %v5109 = vsel %vm1156, %v5079, -inf
        %5110 = vmax.xlane.f32.xlu0 %v5109
        %v5111 = vpop.xlane.xlu0 %5110
        %v5112 = vsel %vm1156, %v5084, -inf
        %5113 = vmax.xlane.f32.xlu0 %v5112
        %v5114 = vpop.xlane.xlu0 %5113
        %v5115 = vsel %vm1156, %v5087, -inf
        %5116 = vmax.xlane.f32.xlu0 %v5115
        %v5117 = vpop.xlane.xlu0 %5116
        %v5118 = vsel %vm1156, %v5092, -inf
        %5119 = vmax.xlane.f32.xlu0 %v5118
        %v5120 = vpop.xlane.xlu0 %5119
        %v5121 = vsel %vm1156, %v5095, -inf
        %5122 = vmax.xlane.f32.xlu0 %v5121
        %v5123 = vpop.xlane.xlu0 %5122
        %v5124 = vsel %vm1156, %v5100, -inf
        %5125 = vmax.xlane.f32.xlu0 %v5124
        %v5126 = vpop.xlane.xlu0 %5125
        %v5127 = vsel %vm1156, %v5103, -inf
        %5128 = vmax.xlane.f32.xlu0 %v5127
        %v5129 = vpop.xlane.xlu0 %5128
        %v5130 = vsub.f32 %v5076, %v5108
        %v5131 = vsub.f32 %v5079, %v5111
        %v5132 = vsub.f32 %v5084, %v5114
        %v5133 = vsub.f32 %v5087, %v5117
        %v5134 = vsub.f32 %v5092, %v5120
        %v5135 = vsub.f32 %v5095, %v5123
        %v5136 = vsub.f32 %v5100, %v5126
        %v5137 = vsub.f32 %v5103, %v5129
        %v5138 = vmul.f32 %v5130, 1.442695
        %v5139 = vpow.pop %v5138
        %v5140 = vmul.f32 %v5131, 1.442695
        %v5141 = vpow.pop %v5140
        %v5142 = vmul.f32 %v5132, 1.442695
        %v5143 = vpow.pop %v5142
        %v5144 = vmul.f32 %v5133, 1.442695
        %v5145 = vpow.pop %v5144
        %v5146 = vmul.f32 %v5134, 1.442695
        %v5147 = vpow.pop %v5146
        %v5148 = vmul.f32 %v5135, 1.442695
        %v5149 = vpow.pop %v5148
        %v5150 = vmul.f32 %v5136, 1.442695
        %v5151 = vpow.pop %v5150
        %v5152 = vmul.f32 %v5137, 1.442695
        %v5153 = vpow.pop %v5152
        %v5154 = vsel %vm1156, %v5139, 0.0
        %5155 = vadd.xlane.f32.xlu0 %v5154
        %v5156 = vpop.xlane.xlu0 %5155
        %v5157 = vsel %vm1156, %v5141, 0.0
        %5158 = vadd.xlane.f32.xlu0 %v5157
        %v5159 = vpop.xlane.xlu0 %5158
        %v5160 = vsel %vm1156, %v5143, 0.0
        %5161 = vadd.xlane.f32.xlu0 %v5160
        %v5162 = vpop.xlane.xlu0 %5161
        %v5163 = vsel %vm1156, %v5145, 0.0
        %5164 = vadd.xlane.f32.xlu0 %v5163
        %v5165 = vpop.xlane.xlu0 %5164
        %v5166 = vsel %vm1156, %v5147, 0.0
        %5167 = vadd.xlane.f32.xlu0 %v5166
        %v5168 = vpop.xlane.xlu0 %5167
        %v5169 = vsel %vm1156, %v5149, 0.0
        %5170 = vadd.xlane.f32.xlu0 %v5169
        %v5171 = vpop.xlane.xlu0 %5170
        %v5172 = vsel %vm1156, %v5151, 0.0
        %5173 = vadd.xlane.f32.xlu0 %v5172
        %v5174 = vpop.xlane.xlu0 %5173
        %v5175 = vsel %vm1156, %v5153, 0.0
        %5176 = vadd.xlane.f32.xlu0 %v5175
        %v5177 = vpop.xlane.xlu0 %5176
        %v5178 = vpack.c.bf16 %v5141, %v5139
        %v5179 = vpack.c.bf16 %v5145, %v5143
        %v5180 = vpack.c.bf16 %v5149, %v5147
        %v5181 = vpack.c.bf16 %v5153, %v5151
        %v5183 = vsel %vm1156, %v5178, 0
        %v5186 = vsel %vm1156, %v5179, 0
        %v5189 = vsel %vm1156, %v5180, 0
        %v5192 = vsel %vm1156, %v5181, 0
        %5194 = vmatprep.subr.bf16.mxu0 0
        %5195 = vmatpush1.bf16.msra.mxu0 %v1040
        %5196 = vmatprep.subr.bf16.mxu0 0
        %5197 = vmatpush1.bf16.msra.mxu0 %v1043
        %5198 = vmatprep.subr.bf16.mxu0 0
        %5199 = vmatpush1.bf16.msra.mxu0 %v1046
        %5200 = vmatprep.subr.bf16.mxu0 0
        %5201 = vmatpush1.bf16.msra.mxu0 %v1049
        %5202 = vmatprep.subr.bf16.mxu0 0
        %5203 = vmatpush1.bf16.msra.mxu0 0
        %5204 = vmatprep.subr.bf16.mxu0 0
        %5205 = vmatpush1.bf16.msra.mxu0 0
        %5206 = vmatprep.subr.bf16.mxu0 0
        %5207 = vmatpush1.bf16.msra.mxu0 0
        %5208 = vmatprep.subr.bf16.mxu0 0
        %5209 = vmatpush1.bf16.msra.mxu0 0
        %5210 = vmatprep.subr.bf16.mxu0 0
        %5211 = vmatpush1.bf16.msra.mxu0 0
        %5212 = vmatprep.subr.bf16.mxu0 0
        %5213 = vmatpush1.bf16.msra.mxu0 0
        %5214 = vmatprep.subr.bf16.mxu0 0
        %5215 = vmatpush1.bf16.msra.mxu0 0
        %5216 = vmatprep.subr.bf16.mxu0 0
        %5217 = vmatpush1.bf16.msra.mxu0 0
        %5218 = vmatprep.subr.bf16.mxu0 0
        %5219 = vmatpush1.bf16.msra.mxu0 0
        %5220 = vmatprep.subr.bf16.mxu0 0
        %5221 = vmatpush1.bf16.msra.mxu0 0
        %5222 = vmatprep.subr.bf16.mxu0 0
        %5223 = vmatpush1.bf16.msra.mxu0 0
        %5224 = vmatprep.subr.bf16.mxu0 0
        %5225 = vmatpush1.bf16.msra.mxu0 0
        %5226 = vmatprep.mubr.bf16.mxu0 0
        %5227 = vmatmul.mubr.bf16.gmra.mrb[0].mxu0 %v5183
        %v5228 = vpop.f32.mrb[0].mxu0
        %v5229 = vadd.f32 0.0, %v5228
        %v5230 = vpop.f32.mrb[0].mxu0
        %v5231 = vpop.f32.mrb[0].mxu0
        %v5232 = vadd.f32 0.0, %v5231
        %v5233 = vpop.f32.mrb[0].mxu0
        %5234 = vmatprep.mubr.bf16.mxu0 0
        %5235 = vmatmul.mubr.bf16.gmra.mrb[0].mxu0 %v5186
        %v5236 = vpop.f32.mrb[0].mxu0
        %v5237 = vadd.f32 0.0, %v5236
        %v5238 = vpop.f32.mrb[0].mxu0
        %v5239 = vpop.f32.mrb[0].mxu0
        %v5240 = vadd.f32 0.0, %v5239
        %v5241 = vpop.f32.mrb[0].mxu0
        %5242 = vmatprep.mubr.bf16.mxu0 0
        %5243 = vmatmul.mubr.bf16.gmra.mrb[0].mxu0 %v5189
        %v5244 = vpop.f32.mrb[0].mxu0
        %v5245 = vadd.f32 0.0, %v5244
        %v5246 = vpop.f32.mrb[0].mxu0
        %v5247 = vpop.f32.mrb[0].mxu0
        %v5248 = vadd.f32 0.0, %v5247
        %v5249 = vpop.f32.mrb[0].mxu0
        %5250 = vmatprep.mubr.bf16.mxu0 0
        %5251 = vmatmul.mubr.bf16.gmra.mrb[0].mxu0 %v5192
        %v5252 = vpop.f32.mrb[0].mxu0
        %v5253 = vadd.f32 0.0, %v5252
        %v5254 = vpop.f32.mrb[0].mxu0
        %v5255 = vpop.f32.mrb[0].mxu0
        %v5256 = vadd.f32 0.0, %v5255
        %v5257 = vpop.f32.mrb[0].mxu0
        %5258 = vdwg.mxu0
        %v5259 = vrcp.pop %v5156
        %v5260 = vrcp.pop %v5159
        %v5261 = vrcp.pop %v5162
        %v5262 = vrcp.pop %v5165
        %v5263 = vrcp.pop %v5168
        %v5264 = vrcp.pop %v5171
        %v5265 = vrcp.pop %v5174
        %v5266 = vrcp.pop %v5177
        %v5267 = vmul.f32 %v5229, %v5259
        %v5268 = vmul.f32 %v5232, %v5260
        %v5269 = vmul.f32 %v5237, %v5261
        %v5270 = vmul.f32 %v5240, %v5262
        %v5271 = vmul.f32 %v5245, %v5263
        %v5272 = vmul.f32 %v5248, %v5264
        %v5273 = vmul.f32 %v5253, %v5265
        %v5274 = vmul.f32 %v5256, %v5266
        %s5275 = scalar_lea.vmem [#allocation8], 416
        %v5276 = vld [vmem:[%s5275] sm:$0xf]
        %v5277 = vld [vmem:[%s5275 + $0x4] sm:$0xf]
        %v5278 = vld [vmem:[%s5275 + $0x8] sm:$0xf]
        %v5279 = vld [vmem:[%s5275 + $0xc] sm:$0xf]
        %v5280 = vld [vmem:[%s5275 + $0x10] sm:$0xf]
        %v5281 = vld [vmem:[%s5275 + $0x14] sm:$0xf]
        %v5282 = vld [vmem:[%s5275 + $0x18] sm:$0xf]
        %v5283 = vld [vmem:[%s5275 + $0x1c] sm:$0xf]
        %v5284 = vunpack.c.l.bf16 %v5276
        %v5285 = vunpack.c.l.bf16 %v5277
        %v5286 = vunpack.c.l.bf16 %v5278
        %v5287 = vunpack.c.l.bf16 %v5279
        %v5288 = vunpack.c.l.bf16 %v5280
        %v5289 = vunpack.c.l.bf16 %v5281
        %v5290 = vunpack.c.l.bf16 %v5282
        %v5291 = vunpack.c.l.bf16 %v5283
        %5296 = vrot.lane.b32.xlu0 %v1038, 96
        %v5297 = vpop.permute.xlu0 %5296
        %5298 = vrot.lane.b32.xlu0 %v1041, 96
        %v5299 = vpop.permute.xlu0 %5298
        %5300 = vrot.lane.b32.xlu0 %v1044, 96
        %v5301 = vpop.permute.xlu0 %5300
        %5302 = vrot.lane.b32.xlu0 %v1047, 96
        %v5303 = vpop.permute.xlu0 %5302
        %5308 = vrot.lane.b32.xlu0 %v1039, 96
        %v5309 = vpop.permute.xlu0 %5308
        %5310 = vrot.lane.b32.xlu0 %v1042, 96
        %v5311 = vpop.permute.xlu0 %5310
        %5312 = vrot.lane.b32.xlu0 %v1045, 96
        %v5313 = vpop.permute.xlu0 %5312
        %5314 = vrot.lane.b32.xlu0 %v1048, 96
        %v5315 = vpop.permute.xlu0 %5314
        %v5317 = vsel %vm1066, %v5297, 0
        %v5320 = vsel %vm1066, %v5299, 0
        %v5323 = vsel %vm1066, %v5301, 0
        %v5326 = vsel %vm1066, %v5303, 0
        %v5329 = vsel %vm1066, %v5309, 0
        %v5332 = vsel %vm1066, %v5311, 0
        %v5335 = vsel %vm1066, %v5313, 0
        %v5338 = vsel %vm1066, %v5315, 0
        %5340 = vmatprep.subr.bf16.mxu0 0
        %5341 = vmatpush1.bf16.xpose.msra.mxu0 %v5329
        %5342 = vmatprep.subr.bf16.mxu0 0
        %5343 = vmatpush1.bf16.xpose.msra.mxu0 %v5332
        %5344 = vmatprep.subr.bf16.mxu0 0
        %5345 = vmatpush1.bf16.xpose.msra.mxu0 %v5335
        %5346 = vmatprep.subr.bf16.mxu0 0
        %5347 = vmatpush1.bf16.xpose.msra.mxu0 %v5338
        %5348 = vmatprep.subr.bf16.mxu0 0
        %5349 = vmatpush1.bf16.xpose.msra.mxu0 0
        %5350 = vmatprep.subr.bf16.mxu0 0
        %5351 = vmatpush1.bf16.xpose.msra.mxu0 0
        %5352 = vmatprep.subr.bf16.mxu0 0
        %5353 = vmatpush1.bf16.xpose.msra.mxu0 0
        %5354 = vmatprep.subr.bf16.mxu0 0
        %5355 = vmatpush1.bf16.xpose.msra.mxu0 0
        %5356 = vmatprep.subr.bf16.mxu0 0
        %5357 = vmatpush1.bf16.xpose.msra.mxu0 0
        %5358 = vmatprep.subr.bf16.mxu0 0
        %5359 = vmatpush1.bf16.xpose.msra.mxu0 0
        %5360 = vmatprep.subr.bf16.mxu0 0
        %5361 = vmatpush1.bf16.xpose.msra.mxu0 0
        %5362 = vmatprep.subr.bf16.mxu0 0
        %5363 = vmatpush1.bf16.xpose.msra.mxu0 0
        %5364 = vmatprep.subr.bf16.mxu0 0
        %5365 = vmatpush1.bf16.xpose.msra.mxu0 0
        %5366 = vmatprep.subr.bf16.mxu0 0
        %5367 = vmatpush1.bf16.xpose.msra.mxu0 0
        %5368 = vmatprep.subr.bf16.mxu0 0
        %5369 = vmatpush1.bf16.xpose.msra.mxu0 0
        %5370 = vmatprep.subr.bf16.mxu0 0
        %5371 = vmatpush1.bf16.xpose.msra.mxu0 0
        %5372 = vmatprep.mubr.bf16.mxu0 0
        %5373 = vmatmul.mubr.bf16.gmra.mrb[0].mxu0 %v5317
        %v5374 = vpop.f32.mrb[0].mxu0
        %v5375 = vadd.f32 %v5284, %v5374
        %v5376 = vpop.f32.mrb[0].mxu0
        %v5377 = vpop.f32.mrb[0].mxu0
        %v5378 = vadd.f32 %v5285, %v5377
        %v5379 = vpop.f32.mrb[0].mxu0
        %5380 = vmatprep.mubr.bf16.mxu0 0
        %5381 = vmatmul.mubr.bf16.gmra.mrb[0].mxu0 %v5320
        %v5382 = vpop.f32.mrb[0].mxu0
        %v5383 = vadd.f32 %v5286, %v5382
        %v5384 = vpop.f32.mrb[0].mxu0
        %v5385 = vpop.f32.mrb[0].mxu0
        %v5386 = vadd.f32 %v5287, %v5385
        %v5387 = vpop.f32.mrb[0].mxu0
        %5388 = vmatprep.mubr.bf16.mxu0 0
        %5389 = vmatmul.mubr.bf16.gmra.mrb[0].mxu0 %v5323
        %v5390 = vpop.f32.mrb[0].mxu0
        %v5391 = vadd.f32 %v5288, %v5390
        %v5392 = vpop.f32.mrb[0].mxu0
        %v5393 = vpop.f32.mrb[0].mxu0
        %v5394 = vadd.f32 %v5289, %v5393
        %v5395 = vpop.f32.mrb[0].mxu0
        %5396 = vmatprep.mubr.bf16.mxu0 0
        %5397 = vmatmul.mubr.bf16.gmra.mrb[0].mxu0 %v5326
        %v5398 = vpop.f32.mrb[0].mxu0
        %v5399 = vadd.f32 %v5290, %v5398
        %v5400 = vpop.f32.mrb[0].mxu0
        %v5401 = vpop.f32.mrb[0].mxu0
        %v5402 = vadd.f32 %v5291, %v5401
        %v5403 = vpop.f32.mrb[0].mxu0
        %5404 = vdwg.mxu0
        %v5405 = vsel %vm1156, %v5375, -inf
        %5406 = vmax.xlane.f32.xlu0 %v5405
        %v5407 = vpop.xlane.xlu0 %5406
        %v5408 = vsel %vm1156, %v5378, -inf
        %5409 = vmax.xlane.f32.xlu0 %v5408
        %v5410 = vpop.xlane.xlu0 %5409
        %v5411 = vsel %vm1156, %v5383, -inf
        %5412 = vmax.xlane.f32.xlu0 %v5411
        %v5413 = vpop.xlane.xlu0 %5412
        %v5414 = vsel %vm1156, %v5386, -inf
        %5415 = vmax.xlane.f32.xlu0 %v5414
        %v5416 = vpop.xlane.xlu0 %5415
        %v5417 = vsel %vm1156, %v5391, -inf
        %5418 = vmax.xlane.f32.xlu0 %v5417
        %v5419 = vpop.xlane.xlu0 %5418
        %v5420 = vsel %vm1156, %v5394, -inf
        %5421 = vmax.xlane.f32.xlu0 %v5420
        %v5422 = vpop.xlane.xlu0 %5421
        %v5423 = vsel %vm1156, %v5399, -inf
        %5424 = vmax.xlane.f32.xlu0 %v5423
        %v5425 = vpop.xlane.xlu0 %5424
        %v5426 = vsel %vm1156, %v5402, -inf
        %5427 = vmax.xlane.f32.xlu0 %v5426
        %v5428 = vpop.xlane.xlu0 %5427
        %v5429 = vsub.f32 %v5375, %v5407
        %v5430 = vsub.f32 %v5378, %v5410
        %v5431 = vsub.f32 %v5383, %v5413
        %v5432 = vsub.f32 %v5386, %v5416
        %v5433 = vsub.f32 %v5391, %v5419
        %v5434 = vsub.f32 %v5394, %v5422
        %v5435 = vsub.f32 %v5399, %v5425
        %v5436 = vsub.f32 %v5402, %v5428
        %v5437 = vmul.f32 %v5429, 1.442695
        %v5438 = vpow.pop %v5437
        %v5439 = vmul.f32 %v5430, 1.442695
        %v5440 = vpow.pop %v5439
        %v5441 = vmul.f32 %v5431, 1.442695
        %v5442 = vpow.pop %v5441
        %v5443 = vmul.f32 %v5432, 1.442695
        %v5444 = vpow.pop %v5443
        %v5445 = vmul.f32 %v5433, 1.442695
        %v5446 = vpow.pop %v5445
        %v5447 = vmul.f32 %v5434, 1.442695
        %v5448 = vpow.pop %v5447
        %v5449 = vmul.f32 %v5435, 1.442695
        %v5450 = vpow.pop %v5449
        %v5451 = vmul.f32 %v5436, 1.442695
        %v5452 = vpow.pop %v5451
        %v5453 = vsel %vm1156, %v5438, 0.0
        %5454 = vadd.xlane.f32.xlu0 %v5453
        %v5455 = vpop.xlane.xlu0 %5454
        %v5456 = vsel %vm1156, %v5440, 0.0
        %5457 = vadd.xlane.f32.xlu0 %v5456
        %v5458 = vpop.xlane.xlu0 %5457
        %v5459 = vsel %vm1156, %v5442, 0.0
        %5460 = vadd.xlane.f32.xlu0 %v5459
        %v5461 = vpop.xlane.xlu0 %5460
        %v5462 = vsel %vm1156, %v5444, 0.0
        %5463 = vadd.xlane.f32.xlu0 %v5462
        %v5464 = vpop.xlane.xlu0 %5463
        %v5465 = vsel %vm1156, %v5446, 0.0
        %5466 = vadd.xlane.f32.xlu0 %v5465
        %v5467 = vpop.xlane.xlu0 %5466
        %v5468 = vsel %vm1156, %v5448, 0.0
        %5469 = vadd.xlane.f32.xlu0 %v5468
        %v5470 = vpop.xlane.xlu0 %5469
        %v5471 = vsel %vm1156, %v5450, 0.0
        %5472 = vadd.xlane.f32.xlu0 %v5471
        %v5473 = vpop.xlane.xlu0 %5472
        %v5474 = vsel %vm1156, %v5452, 0.0
        %5475 = vadd.xlane.f32.xlu0 %v5474
        %v5476 = vpop.xlane.xlu0 %5475
        %v5477 = vpack.c.bf16 %v5440, %v5438
        %v5478 = vpack.c.bf16 %v5444, %v5442
        %v5479 = vpack.c.bf16 %v5448, %v5446
        %v5480 = vpack.c.bf16 %v5452, %v5450
        %5485 = vrot.lane.b32.xlu0 %v1040, 96
        %v5486 = vpop.permute.xlu0 %5485
        %5487 = vrot.lane.b32.xlu0 %v1043, 96
        %v5488 = vpop.permute.xlu0 %5487
        %5489 = vrot.lane.b32.xlu0 %v1046, 96
        %v5490 = vpop.permute.xlu0 %5489
        %5491 = vrot.lane.b32.xlu0 %v1049, 96
        %v5492 = vpop.permute.xlu0 %5491
        %v5498 = vsel %vm1156, %v5477, 0
        %v5501 = vsel %vm1156, %v5478, 0
        %v5504 = vsel %vm1156, %v5479, 0
        %v5507 = vsel %vm1156, %v5480, 0
        %5509 = vmatprep.subr.bf16.mxu0 0
        %5510 = vmatpush1.bf16.msra.mxu0 %v5486
        %5511 = vmatprep.subr.bf16.mxu0 0
        %5512 = vmatpush1.bf16.msra.mxu0 %v5488
        %5513 = vmatprep.subr.bf16.mxu0 0
        %5514 = vmatpush1.bf16.msra.mxu0 %v5490
        %5515 = vmatprep.subr.bf16.mxu0 0
        %5516 = vmatpush1.bf16.msra.mxu0 %v5492
        %5517 = vmatprep.subr.bf16.mxu0 0
        %5518 = vmatpush1.bf16.msra.mxu0 0
        %5519 = vmatprep.subr.bf16.mxu0 0
        %5520 = vmatpush1.bf16.msra.mxu0 0
        %5521 = vmatprep.subr.bf16.mxu0 0
        %5522 = vmatpush1.bf16.msra.mxu0 0
        %5523 = vmatprep.subr.bf16.mxu0 0
        %5524 = vmatpush1.bf16.msra.mxu0 0
        %5525 = vmatprep.subr.bf16.mxu0 0
        %5526 = vmatpush1.bf16.msra.mxu0 0
        %5527 = vmatprep.subr.bf16.mxu0 0
        %5528 = vmatpush1.bf16.msra.mxu0 0
        %5529 = vmatprep.subr.bf16.mxu0 0
        %5530 = vmatpush1.bf16.msra.mxu0 0
        %5531 = vmatprep.subr.bf16.mxu0 0
        %5532 = vmatpush1.bf16.msra.mxu0 0
        %5533 = vmatprep.subr.bf16.mxu0 0
        %5534 = vmatpush1.bf16.msra.mxu0 0
        %5535 = vmatprep.subr.bf16.mxu0 0
        %5536 = vmatpush1.bf16.msra.mxu0 0
        %5537 = vmatprep.subr.bf16.mxu0 0
        %5538 = vmatpush1.bf16.msra.mxu0 0
        %5539 = vmatprep.subr.bf16.mxu0 0
        %5540 = vmatpush1.bf16.msra.mxu0 0
        %5541 = vmatprep.mubr.bf16.mxu0 0
        %5542 = vmatmul.mubr.bf16.gmra.mrb[0].mxu0 %v5498
        %v5543 = vpop.f32.mrb[0].mxu0
        %v5544 = vadd.f32 0.0, %v5543
        %v5545 = vpop.f32.mrb[0].mxu0
        %v5546 = vpop.f32.mrb[0].mxu0
        %v5547 = vadd.f32 0.0, %v5546
        %v5548 = vpop.f32.mrb[0].mxu0
        %5549 = vmatprep.mubr.bf16.mxu0 0
        %5550 = vmatmul.mubr.bf16.gmra.mrb[0].mxu0 %v5501
        %v5551 = vpop.f32.mrb[0].mxu0
        %v5552 = vadd.f32 0.0, %v5551
        %v5553 = vpop.f32.mrb[0].mxu0
        %v5554 = vpop.f32.mrb[0].mxu0
        %v5555 = vadd.f32 0.0, %v5554
        %v5556 = vpop.f32.mrb[0].mxu0
        %5557 = vmatprep.mubr.bf16.mxu0 0
        %5558 = vmatmul.mubr.bf16.gmra.mrb[0].mxu0 %v5504
        %v5559 = vpop.f32.mrb[0].mxu0
        %v5560 = vadd.f32 0.0, %v5559
        %v5561 = vpop.f32.mrb[0].mxu0
        %v5562 = vpop.f32.mrb[0].mxu0
        %v5563 = vadd.f32 0.0, %v5562
        %v5564 = vpop.f32.mrb[0].mxu0
        %5565 = vmatprep.mubr.bf16.mxu0 0
        %5566 = vmatmul.mubr.bf16.gmra.mrb[0].mxu0 %v5507
        %v5567 = vpop.f32.mrb[0].mxu0
        %v5568 = vadd.f32 0.0, %v5567
        %v5569 = vpop.f32.mrb[0].mxu0
        %v5570 = vpop.f32.mrb[0].mxu0
        %v5571 = vadd.f32 0.0, %v5570
        %v5572 = vpop.f32.mrb[0].mxu0
        %5573 = vdwg.mxu0
        %v5574 = vrcp.pop %v5455
        %v5575 = vrcp.pop %v5458
        %v5576 = vrcp.pop %v5461
        %v5577 = vrcp.pop %v5464
        %v5578 = vrcp.pop %v5467
        %v5579 = vrcp.pop %v5470
        %v5580 = vrcp.pop %v5473
        %v5581 = vrcp.pop %v5476
        %v5582 = vmul.f32 %v5544, %v5574
        %v5583 = vmul.f32 %v5547, %v5575
        %v5584 = vmul.f32 %v5552, %v5576
        %v5585 = vmul.f32 %v5555, %v5577
        %v5586 = vmul.f32 %v5560, %v5578
        %v5587 = vmul.f32 %v5563, %v5579
        %v5588 = vmul.f32 %v5568, %v5580
        %v5589 = vmul.f32 %v5571, %v5581
        %s5590 = scalar_lea.vmem [#allocation8], 448
        %v5591 = vld [vmem:[%s5590] sm:$0xf]
        %v5592 = vld [vmem:[%s5590 + $0x4] sm:$0xf]
        %v5593 = vld [vmem:[%s5590 + $0x8] sm:$0xf]
        %v5594 = vld [vmem:[%s5590 + $0xc] sm:$0xf]
        %v5595 = vld [vmem:[%s5590 + $0x10] sm:$0xf]
        %v5596 = vld [vmem:[%s5590 + $0x14] sm:$0xf]
        %v5597 = vld [vmem:[%s5590 + $0x18] sm:$0xf]
        %v5598 = vld [vmem:[%s5590 + $0x1c] sm:$0xf]
        %v5599 = vunpack.c.l.bf16 %v5591
        %v5600 = vunpack.c.l.bf16 %v5592
        %v5601 = vunpack.c.l.bf16 %v5593
        %v5602 = vunpack.c.l.bf16 %v5594
        %v5603 = vunpack.c.l.bf16 %v5595
        %v5604 = vunpack.c.l.bf16 %v5596
        %v5605 = vunpack.c.l.bf16 %v5597
        %v5606 = vunpack.c.l.bf16 %v5598
        %5607 = vrot.lane.b32.xlu0 %v1038, 64
        %v5608 = vpop.permute.xlu0 %5607
        %5609 = vrot.lane.b32.xlu0 %v1041, 64
        %v5610 = vpop.permute.xlu0 %5609
        %5611 = vrot.lane.b32.xlu0 %v1044, 64
        %v5612 = vpop.permute.xlu0 %5611
        %5613 = vrot.lane.b32.xlu0 %v1047, 64
        %v5614 = vpop.permute.xlu0 %5613
        %5615 = vrot.lane.b32.xlu0 %v1039, 64
        %v5616 = vpop.permute.xlu0 %5615
        %5617 = vrot.lane.b32.xlu0 %v1042, 64
        %v5618 = vpop.permute.xlu0 %5617
        %5619 = vrot.lane.b32.xlu0 %v1045, 64
        %v5620 = vpop.permute.xlu0 %5619
        %5621 = vrot.lane.b32.xlu0 %v1048, 64
        %v5622 = vpop.permute.xlu0 %5621
        %v5624 = vsel %vm1066, %v5608, 0
        %v5627 = vsel %vm1066, %v5610, 0
        %v5630 = vsel %vm1066, %v5612, 0
        %v5633 = vsel %vm1066, %v5614, 0
        %v5636 = vsel %vm1066, %v5616, 0
        %v5639 = vsel %vm1066, %v5618, 0
        %v5642 = vsel %vm1066, %v5620, 0
        %v5645 = vsel %vm1066, %v5622, 0
        %5647 = vmatprep.subr.bf16.mxu0 0
        %5648 = vmatpush1.bf16.xpose.msra.mxu0 %v5636
        %5649 = vmatprep.subr.bf16.mxu0 0
        %5650 = vmatpush1.bf16.xpose.msra.mxu0 %v5639
        %5651 = vmatprep.subr.bf16.mxu0 0
        %5652 = vmatpush1.bf16.xpose.msra.mxu0 %v5642
        %5653 = vmatprep.subr.bf16.mxu0 0
        %5654 = vmatpush1.bf16.xpose.msra.mxu0 %v5645
        %5655 = vmatprep.subr.bf16.mxu0 0
        %5656 = vmatpush1.bf16.xpose.msra.mxu0 0
        %5657 = vmatprep.subr.bf16.mxu0 0
        %5658 = vmatpush1.bf16.xpose.msra.mxu0 0
        %5659 = vmatprep.subr.bf16.mxu0 0
        %5660 = vmatpush1.bf16.xpose.msra.mxu0 0
        %5661 = vmatprep.subr.bf16.mxu0 0
        %5662 = vmatpush1.bf16.xpose.msra.mxu0 0
        %5663 = vmatprep.subr.bf16.mxu0 0
        %5664 = vmatpush1.bf16.xpose.msra.mxu0 0
        %5665 = vmatprep.subr.bf16.mxu0 0
        %5666 = vmatpush1.bf16.xpose.msra.mxu0 0
        %5667 = vmatprep.subr.bf16.mxu0 0
        %5668 = vmatpush1.bf16.xpose.msra.mxu0 0
        %5669 = vmatprep.subr.bf16.mxu0 0
        %5670 = vmatpush1.bf16.xpose.msra.mxu0 0
        %5671 = vmatprep.subr.bf16.mxu0 0
        %5672 = vmatpush1.bf16.xpose.msra.mxu0 0
        %5673 = vmatprep.subr.bf16.mxu0 0
        %5674 = vmatpush1.bf16.xpose.msra.mxu0 0
        %5675 = vmatprep.subr.bf16.mxu0 0
        %5676 = vmatpush1.bf16.xpose.msra.mxu0 0
        %5677 = vmatprep.subr.bf16.mxu0 0
        %5678 = vmatpush1.bf16.xpose.msra.mxu0 0
        %5679 = vmatprep.mubr.bf16.mxu0 0
        %5680 = vmatmul.mubr.bf16.gmra.mrb[0].mxu0 %v5624
        %v5681 = vpop.f32.mrb[0].mxu0
        %v5682 = vadd.f32 %v5599, %v5681
        %v5683 = vpop.f32.mrb[0].mxu0
        %v5684 = vpop.f32.mrb[0].mxu0
        %v5685 = vadd.f32 %v5600, %v5684
        %v5686 = vpop.f32.mrb[0].mxu0
        %5687 = vmatprep.mubr.bf16.mxu0 0
        %5688 = vmatmul.mubr.bf16.gmra.mrb[0].mxu0 %v5627
        %v5689 = vpop.f32.mrb[0].mxu0
        %v5690 = vadd.f32 %v5601, %v5689
        %v5691 = vpop.f32.mrb[0].mxu0
        %v5692 = vpop.f32.mrb[0].mxu0
        %v5693 = vadd.f32 %v5602, %v5692
        %v5694 = vpop.f32.mrb[0].mxu0
        %5695 = vmatprep.mubr.bf16.mxu0 0
        %5696 = vmatmul.mubr.bf16.gmra.mrb[0].mxu0 %v5630
        %v5697 = vpop.f32.mrb[0].mxu0
        %v5698 = vadd.f32 %v5603, %v5697
        %v5699 = vpop.f32.mrb[0].mxu0
        %v5700 = vpop.f32.mrb[0].mxu0
        %v5701 = vadd.f32 %v5604, %v5700
        %v5702 = vpop.f32.mrb[0].mxu0
        %5703 = vmatprep.mubr.bf16.mxu0 0
        %5704 = vmatmul.mubr.bf16.gmra.mrb[0].mxu0 %v5633
        %v5705 = vpop.f32.mrb[0].mxu0
        %v5706 = vadd.f32 %v5605, %v5705
        %v5707 = vpop.f32.mrb[0].mxu0
        %v5708 = vpop.f32.mrb[0].mxu0
        %v5709 = vadd.f32 %v5606, %v5708
        %v5710 = vpop.f32.mrb[0].mxu0
        %5711 = vdwg.mxu0
        %v5712 = vsel %vm1156, %v5682, -inf
        %5713 = vmax.xlane.f32.xlu0 %v5712
        %v5714 = vpop.xlane.xlu0 %5713
        %v5715 = vsel %vm1156, %v5685, -inf
        %5716 = vmax.xlane.f32.xlu0 %v5715
        %v5717 = vpop.xlane.xlu0 %5716
        %v5718 = vsel %vm1156, %v5690, -inf
        %5719 = vmax.xlane.f32.xlu0 %v5718
        %v5720 = vpop.xlane.xlu0 %5719
        %v5721 = vsel %vm1156, %v5693, -inf
        %5722 = vmax.xlane.f32.xlu0 %v5721
        %v5723 = vpop.xlane.xlu0 %5722
        %v5724 = vsel %vm1156, %v5698, -inf
        %5725 = vmax.xlane.f32.xlu0 %v5724
        %v5726 = vpop.xlane.xlu0 %5725
        %v5727 = vsel %vm1156, %v5701, -inf
        %5728 = vmax.xlane.f32.xlu0 %v5727
        %v5729 = vpop.xlane.xlu0 %5728
        %v5730 = vsel %vm1156, %v5706, -inf
        %5731 = vmax.xlane.f32.xlu0 %v5730
        %v5732 = vpop.xlane.xlu0 %5731
        %v5733 = vsel %vm1156, %v5709, -inf
        %5734 = vmax.xlane.f32.xlu0 %v5733
        %v5735 = vpop.xlane.xlu0 %5734
        %v5736 = vsub.f32 %v5682, %v5714
        %v5737 = vsub.f32 %v5685, %v5717
        %v5738 = vsub.f32 %v5690, %v5720
        %v5739 = vsub.f32 %v5693, %v5723
        %v5740 = vsub.f32 %v5698, %v5726
        %v5741 = vsub.f32 %v5701, %v5729
        %v5742 = vsub.f32 %v5706, %v5732
        %v5743 = vsub.f32 %v5709, %v5735
        %v5744 = vmul.f32 %v5736, 1.442695
        %v5745 = vpow.pop %v5744
        %v5746 = vmul.f32 %v5737, 1.442695
        %v5747 = vpow.pop %v5746
        %v5748 = vmul.f32 %v5738, 1.442695
        %v5749 = vpow.pop %v5748
        %v5750 = vmul.f32 %v5739, 1.442695
        %v5751 = vpow.pop %v5750
        %v5752 = vmul.f32 %v5740, 1.442695
        %v5753 = vpow.pop %v5752
        %v5754 = vmul.f32 %v5741, 1.442695
        %v5755 = vpow.pop %v5754
        %v5756 = vmul.f32 %v5742, 1.442695
        %v5757 = vpow.pop %v5756
        %v5758 = vmul.f32 %v5743, 1.442695
        %v5759 = vpow.pop %v5758
        %v5760 = vsel %vm1156, %v5745, 0.0
        %5761 = vadd.xlane.f32.xlu0 %v5760
        %v5762 = vpop.xlane.xlu0 %5761
        %v5763 = vsel %vm1156, %v5747, 0.0
        %5764 = vadd.xlane.f32.xlu0 %v5763
        %v5765 = vpop.xlane.xlu0 %5764
        %v5766 = vsel %vm1156, %v5749, 0.0
        %5767 = vadd.xlane.f32.xlu0 %v5766
        %v5768 = vpop.xlane.xlu0 %5767
        %v5769 = vsel %vm1156, %v5751, 0.0
        %5770 = vadd.xlane.f32.xlu0 %v5769
        %v5771 = vpop.xlane.xlu0 %5770
        %v5772 = vsel %vm1156, %v5753, 0.0
        %5773 = vadd.xlane.f32.xlu0 %v5772
        %v5774 = vpop.xlane.xlu0 %5773
        %v5775 = vsel %vm1156, %v5755, 0.0
        %5776 = vadd.xlane.f32.xlu0 %v5775
        %v5777 = vpop.xlane.xlu0 %5776
        %v5778 = vsel %vm1156, %v5757, 0.0
        %5779 = vadd.xlane.f32.xlu0 %v5778
        %v5780 = vpop.xlane.xlu0 %5779
        %v5781 = vsel %vm1156, %v5759, 0.0
        %5782 = vadd.xlane.f32.xlu0 %v5781
        %v5783 = vpop.xlane.xlu0 %5782
        %v5784 = vpack.c.bf16 %v5747, %v5745
        %v5785 = vpack.c.bf16 %v5751, %v5749
        %v5786 = vpack.c.bf16 %v5755, %v5753
        %v5787 = vpack.c.bf16 %v5759, %v5757
        %5788 = vrot.lane.b32.xlu0 %v1040, 64
        %v5789 = vpop.permute.xlu0 %5788
        %5790 = vrot.lane.b32.xlu0 %v1043, 64
        %v5791 = vpop.permute.xlu0 %5790
        %5792 = vrot.lane.b32.xlu0 %v1046, 64
        %v5793 = vpop.permute.xlu0 %5792
        %5794 = vrot.lane.b32.xlu0 %v1049, 64
        %v5795 = vpop.permute.xlu0 %5794
        %v5801 = vsel %vm1156, %v5784, 0
        %v5804 = vsel %vm1156, %v5785, 0
        %v5807 = vsel %vm1156, %v5786, 0
        %v5810 = vsel %vm1156, %v5787, 0
        %5812 = vmatprep.subr.bf16.mxu0 0
        %5813 = vmatpush1.bf16.msra.mxu0 %v5789
        %5814 = vmatprep.subr.bf16.mxu0 0
        %5815 = vmatpush1.bf16.msra.mxu0 %v5791
        %5816 = vmatprep.subr.bf16.mxu0 0
        %5817 = vmatpush1.bf16.msra.mxu0 %v5793
        %5818 = vmatprep.subr.bf16.mxu0 0
        %5819 = vmatpush1.bf16.msra.mxu0 %v5795
        %5820 = vmatprep.subr.bf16.mxu0 0
        %5821 = vmatpush1.bf16.msra.mxu0 0
        %5822 = vmatprep.subr.bf16.mxu0 0
        %5823 = vmatpush1.bf16.msra.mxu0 0
        %5824 = vmatprep.subr.bf16.mxu0 0
        %5825 = vmatpush1.bf16.msra.mxu0 0
        %5826 = vmatprep.subr.bf16.mxu0 0
        %5827 = vmatpush1.bf16.msra.mxu0 0
        %5828 = vmatprep.subr.bf16.mxu0 0
        %5829 = vmatpush1.bf16.msra.mxu0 0
        %5830 = vmatprep.subr.bf16.mxu0 0
        %5831 = vmatpush1.bf16.msra.mxu0 0
        %5832 = vmatprep.subr.bf16.mxu0 0
        %5833 = vmatpush1.bf16.msra.mxu0 0
        %5834 = vmatprep.subr.bf16.mxu0 0
        %5835 = vmatpush1.bf16.msra.mxu0 0
        %5836 = vmatprep.subr.bf16.mxu0 0
        %5837 = vmatpush1.bf16.msra.mxu0 0
        %5838 = vmatprep.subr.bf16.mxu0 0
        %5839 = vmatpush1.bf16.msra.mxu0 0
        %5840 = vmatprep.subr.bf16.mxu0 0
        %5841 = vmatpush1.bf16.msra.mxu0 0
        %5842 = vmatprep.subr.bf16.mxu0 0
        %5843 = vmatpush1.bf16.msra.mxu0 0
        %5844 = vmatprep.mubr.bf16.mxu0 0
        %5845 = vmatmul.mubr.bf16.gmra.mrb[0].mxu0 %v5801
        %v5846 = vpop.f32.mrb[0].mxu0
        %v5847 = vadd.f32 0.0, %v5846
        %v5848 = vpop.f32.mrb[0].mxu0
        %v5849 = vpop.f32.mrb[0].mxu0
        %v5850 = vadd.f32 0.0, %v5849
        %v5851 = vpop.f32.mrb[0].mxu0
        %5852 = vmatprep.mubr.bf16.mxu0 0
        %5853 = vmatmul.mubr.bf16.gmra.mrb[0].mxu0 %v5804
        %v5854 = vpop.f32.mrb[0].mxu0
        %v5855 = vadd.f32 0.0, %v5854
        %v5856 = vpop.f32.mrb[0].mxu0
        %v5857 = vpop.f32.mrb[0].mxu0
        %v5858 = vadd.f32 0.0, %v5857
        %v5859 = vpop.f32.mrb[0].mxu0
        %5860 = vmatprep.mubr.bf16.mxu0 0
        %5861 = vmatmul.mubr.bf16.gmra.mrb[0].mxu0 %v5807
        %v5862 = vpop.f32.mrb[0].mxu0
        %v5863 = vadd.f32 0.0, %v5862
        %v5864 = vpop.f32.mrb[0].mxu0
        %v5865 = vpop.f32.mrb[0].mxu0
        %v5866 = vadd.f32 0.0, %v5865
        %v5867 = vpop.f32.mrb[0].mxu0
        %5868 = vmatprep.mubr.bf16.mxu0 0
        %5869 = vmatmul.mubr.bf16.gmra.mrb[0].mxu0 %v5810
        %v5870 = vpop.f32.mrb[0].mxu0
        %v5871 = vadd.f32 0.0, %v5870
        %v5872 = vpop.f32.mrb[0].mxu0
        %v5873 = vpop.f32.mrb[0].mxu0
        %v5874 = vadd.f32 0.0, %v5873
        %v5875 = vpop.f32.mrb[0].mxu0
        %5876 = vdwg.mxu0
        %v5877 = vrcp.pop %v5762
        %v5878 = vrcp.pop %v5765
        %v5879 = vrcp.pop %v5768
        %v5880 = vrcp.pop %v5771
        %v5881 = vrcp.pop %v5774
        %v5882 = vrcp.pop %v5777
        %v5883 = vrcp.pop %v5780
        %v5884 = vrcp.pop %v5783
        %v5885 = vmul.f32 %v5847, %v5877
        %v5886 = vmul.f32 %v5850, %v5878
        %v5887 = vmul.f32 %v5855, %v5879
        %v5888 = vmul.f32 %v5858, %v5880
        %v5889 = vmul.f32 %v5863, %v5881
        %v5890 = vmul.f32 %v5866, %v5882
        %v5891 = vmul.f32 %v5871, %v5883
        %v5892 = vmul.f32 %v5874, %v5884
        %s5893 = scalar_lea.vmem [#allocation8], 480
        %v5894 = vld [vmem:[%s5893] sm:$0xf]
        %v5895 = vld [vmem:[%s5893 + $0x4] sm:$0xf]
        %v5896 = vld [vmem:[%s5893 + $0x8] sm:$0xf]
        %v5897 = vld [vmem:[%s5893 + $0xc] sm:$0xf]
        %v5898 = vld [vmem:[%s5893 + $0x10] sm:$0xf]
        %v5899 = vld [vmem:[%s5893 + $0x14] sm:$0xf]
        %v5900 = vld [vmem:[%s5893 + $0x18] sm:$0xf]
        %v5901 = vld [vmem:[%s5893 + $0x1c] sm:$0xf]
        %v5902 = vunpack.c.l.bf16 %v5894
        %v5903 = vunpack.c.l.bf16 %v5895
        %v5904 = vunpack.c.l.bf16 %v5896
        %v5905 = vunpack.c.l.bf16 %v5897
        %v5906 = vunpack.c.l.bf16 %v5898
        %v5907 = vunpack.c.l.bf16 %v5899
        %v5908 = vunpack.c.l.bf16 %v5900
        %v5909 = vunpack.c.l.bf16 %v5901
        %5910 = vrot.lane.b32.xlu0 %v1038, 32
        %v5911 = vpop.permute.xlu0 %5910
        %5912 = vrot.lane.b32.xlu0 %v1041, 32
        %v5913 = vpop.permute.xlu0 %5912
        %5914 = vrot.lane.b32.xlu0 %v1044, 32
        %v5915 = vpop.permute.xlu0 %5914
        %5916 = vrot.lane.b32.xlu0 %v1047, 32
        %v5917 = vpop.permute.xlu0 %5916
        %5918 = vrot.lane.b32.xlu0 %v1039, 32
        %v5919 = vpop.permute.xlu0 %5918
        %5920 = vrot.lane.b32.xlu0 %v1042, 32
        %v5921 = vpop.permute.xlu0 %5920
        %5922 = vrot.lane.b32.xlu0 %v1045, 32
        %v5923 = vpop.permute.xlu0 %5922
        %5924 = vrot.lane.b32.xlu0 %v1048, 32
        %v5925 = vpop.permute.xlu0 %5924
        %v5927 = vsel %vm1066, %v5911, 0
        %v5930 = vsel %vm1066, %v5913, 0
        %v5933 = vsel %vm1066, %v5915, 0
        %v5936 = vsel %vm1066, %v5917, 0
        %v5939 = vsel %vm1066, %v5919, 0
        %v5942 = vsel %vm1066, %v5921, 0
        %v5945 = vsel %vm1066, %v5923, 0
        %v5948 = vsel %vm1066, %v5925, 0
        %5950 = vmatprep.subr.bf16.mxu0 0
        %5951 = vmatpush1.bf16.xpose.msra.mxu0 %v5939
        %5952 = vmatprep.subr.bf16.mxu0 0
        %5953 = vmatpush1.bf16.xpose.msra.mxu0 %v5942
        %5954 = vmatprep.subr.bf16.mxu0 0
        %5955 = vmatpush1.bf16.xpose.msra.mxu0 %v5945
        %5956 = vmatprep.subr.bf16.mxu0 0
        %5957 = vmatpush1.bf16.xpose.msra.mxu0 %v5948
        %5958 = vmatprep.subr.bf16.mxu0 0
        %5959 = vmatpush1.bf16.xpose.msra.mxu0 0
        %5960 = vmatprep.subr.bf16.mxu0 0
        %5961 = vmatpush1.bf16.xpose.msra.mxu0 0
        %5962 = vmatprep.subr.bf16.mxu0 0
        %5963 = vmatpush1.bf16.xpose.msra.mxu0 0
        %5964 = vmatprep.subr.bf16.mxu0 0
        %5965 = vmatpush1.bf16.xpose.msra.mxu0 0
        %5966 = vmatprep.subr.bf16.mxu0 0
        %5967 = vmatpush1.bf16.xpose.msra.mxu0 0
        %5968 = vmatprep.subr.bf16.mxu0 0
        %5969 = vmatpush1.bf16.xpose.msra.mxu0 0
        %5970 = vmatprep.subr.bf16.mxu0 0
        %5971 = vmatpush1.bf16.xpose.msra.mxu0 0
        %5972 = vmatprep.subr.bf16.mxu0 0
        %5973 = vmatpush1.bf16.xpose.msra.mxu0 0
        %5974 = vmatprep.subr.bf16.mxu0 0
        %5975 = vmatpush1.bf16.xpose.msra.mxu0 0
        %5976 = vmatprep.subr.bf16.mxu0 0
        %5977 = vmatpush1.bf16.xpose.msra.mxu0 0
        %5978 = vmatprep.subr.bf16.mxu0 0
        %5979 = vmatpush1.bf16.xpose.msra.mxu0 0
        %5980 = vmatprep.subr.bf16.mxu0 0
        %5981 = vmatpush1.bf16.xpose.msra.mxu0 0
        %5982 = vmatprep.mubr.bf16.mxu0 0
        %5983 = vmatmul.mubr.bf16.gmra.mrb[0].mxu0 %v5927
        %v5984 = vpop.f32.mrb[0].mxu0
        %v5985 = vadd.f32 %v5902, %v5984
        %v5986 = vpop.f32.mrb[0].mxu0
        %v5987 = vpop.f32.mrb[0].mxu0
        %v5988 = vadd.f32 %v5903, %v5987
        %v5989 = vpop.f32.mrb[0].mxu0
        %5990 = vmatprep.mubr.bf16.mxu0 0
        %5991 = vmatmul.mubr.bf16.gmra.mrb[0].mxu0 %v5930
        %v5992 = vpop.f32.mrb[0].mxu0
        %v5993 = vadd.f32 %v5904, %v5992
        %v5994 = vpop.f32.mrb[0].mxu0
        %v5995 = vpop.f32.mrb[0].mxu0
        %v5996 = vadd.f32 %v5905, %v5995
        %v5997 = vpop.f32.mrb[0].mxu0
        %5998 = vmatprep.mubr.bf16.mxu0 0
        %5999 = vmatmul.mubr.bf16.gmra.mrb[0].mxu0 %v5933
        %v6000 = vpop.f32.mrb[0].mxu0
        %v6001 = vadd.f32 %v5906, %v6000
        %v6002 = vpop.f32.mrb[0].mxu0
        %v6003 = vpop.f32.mrb[0].mxu0
        %v6004 = vadd.f32 %v5907, %v6003
        %v6005 = vpop.f32.mrb[0].mxu0
        %6006 = vmatprep.mubr.bf16.mxu0 0
        %6007 = vmatmul.mubr.bf16.gmra.mrb[0].mxu0 %v5936
        %v6008 = vpop.f32.mrb[0].mxu0
        %v6009 = vadd.f32 %v5908, %v6008
        %v6010 = vpop.f32.mrb[0].mxu0
        %v6011 = vpop.f32.mrb[0].mxu0
        %v6012 = vadd.f32 %v5909, %v6011
        %v6013 = vpop.f32.mrb[0].mxu0
        %6014 = vdwg.mxu0
        %v6015 = vsel %vm1156, %v5985, -inf
        %6016 = vmax.xlane.f32.xlu0 %v6015
        %v6017 = vpop.xlane.xlu0 %6016
        %v6018 = vsel %vm1156, %v5988, -inf
        %6019 = vmax.xlane.f32.xlu0 %v6018
        %v6020 = vpop.xlane.xlu0 %6019
        %v6021 = vsel %vm1156, %v5993, -inf
        %6022 = vmax.xlane.f32.xlu0 %v6021
        %v6023 = vpop.xlane.xlu0 %6022
        %v6024 = vsel %vm1156, %v5996, -inf
        %6025 = vmax.xlane.f32.xlu0 %v6024
        %v6026 = vpop.xlane.xlu0 %6025
        %v6027 = vsel %vm1156, %v6001, -inf
        %6028 = vmax.xlane.f32.xlu0 %v6027
        %v6029 = vpop.xlane.xlu0 %6028
        %v6030 = vsel %vm1156, %v6004, -inf
        %6031 = vmax.xlane.f32.xlu0 %v6030
        %v6032 = vpop.xlane.xlu0 %6031
        %v6033 = vsel %vm1156, %v6009, -inf
        %6034 = vmax.xlane.f32.xlu0 %v6033
        %v6035 = vpop.xlane.xlu0 %6034
        %v6036 = vsel %vm1156, %v6012, -inf
        %6037 = vmax.xlane.f32.xlu0 %v6036
        %v6038 = vpop.xlane.xlu0 %6037
        %v6039 = vsub.f32 %v5985, %v6017
        %v6040 = vsub.f32 %v5988, %v6020
        %v6041 = vsub.f32 %v5993, %v6023
        %v6042 = vsub.f32 %v5996, %v6026
        %v6043 = vsub.f32 %v6001, %v6029
        %v6044 = vsub.f32 %v6004, %v6032
        %v6045 = vsub.f32 %v6009, %v6035
        %v6046 = vsub.f32 %v6012, %v6038
        %v6047 = vmul.f32 %v6039, 1.442695
        %v6048 = vpow.pop %v6047
        %v6049 = vmul.f32 %v6040, 1.442695
        %v6050 = vpow.pop %v6049
        %v6051 = vmul.f32 %v6041, 1.442695
        %v6052 = vpow.pop %v6051
        %v6053 = vmul.f32 %v6042, 1.442695
        %v6054 = vpow.pop %v6053
        %v6055 = vmul.f32 %v6043, 1.442695
        %v6056 = vpow.pop %v6055
        %v6057 = vmul.f32 %v6044, 1.442695
        %v6058 = vpow.pop %v6057
        %v6059 = vmul.f32 %v6045, 1.442695
        %v6060 = vpow.pop %v6059
        %v6061 = vmul.f32 %v6046, 1.442695
        %v6062 = vpow.pop %v6061
        %v6063 = vsel %vm1156, %v6048, 0.0
        %6064 = vadd.xlane.f32.xlu0 %v6063
        %v6065 = vpop.xlane.xlu0 %6064
        %v6066 = vsel %vm1156, %v6050, 0.0
        %6067 = vadd.xlane.f32.xlu0 %v6066
        %v6068 = vpop.xlane.xlu0 %6067
        %v6069 = vsel %vm1156, %v6052, 0.0
        %6070 = vadd.xlane.f32.xlu0 %v6069
        %v6071 = vpop.xlane.xlu0 %6070
        %v6072 = vsel %vm1156, %v6054, 0.0
        %6073 = vadd.xlane.f32.xlu0 %v6072
        %v6074 = vpop.xlane.xlu0 %6073
        %v6075 = vsel %vm1156, %v6056, 0.0
        %6076 = vadd.xlane.f32.xlu0 %v6075
        %v6077 = vpop.xlane.xlu0 %6076
        %v6078 = vsel %vm1156, %v6058, 0.0
        %6079 = vadd.xlane.f32.xlu0 %v6078
        %v6080 = vpop.xlane.xlu0 %6079
        %v6081 = vsel %vm1156, %v6060, 0.0
        %6082 = vadd.xlane.f32.xlu0 %v6081
        %v6083 = vpop.xlane.xlu0 %6082
        %v6084 = vsel %vm1156, %v6062, 0.0
        %6085 = vadd.xlane.f32.xlu0 %v6084
        %v6086 = vpop.xlane.xlu0 %6085
        %v6087 = vpack.c.bf16 %v6050, %v6048
        %v6088 = vpack.c.bf16 %v6054, %v6052
        %v6089 = vpack.c.bf16 %v6058, %v6056
        %v6090 = vpack.c.bf16 %v6062, %v6060
        %6091 = vrot.lane.b32.xlu0 %v1040, 32
        %v6092 = vpop.permute.xlu0 %6091
        %6093 = vrot.lane.b32.xlu0 %v1043, 32
        %v6094 = vpop.permute.xlu0 %6093
        %6095 = vrot.lane.b32.xlu0 %v1046, 32
        %v6096 = vpop.permute.xlu0 %6095
        %6097 = vrot.lane.b32.xlu0 %v1049, 32
        %v6098 = vpop.permute.xlu0 %6097
        %v6104 = vsel %vm1156, %v6087, 0
        %v6107 = vsel %vm1156, %v6088, 0
        %v6110 = vsel %vm1156, %v6089, 0
        %v6113 = vsel %vm1156, %v6090, 0
        %6115 = vmatprep.subr.bf16.mxu0 0
        %6116 = vmatpush1.bf16.msra.mxu0 %v6092
        %6117 = vmatprep.subr.bf16.mxu0 0
        %6118 = vmatpush1.bf16.msra.mxu0 %v6094
        %6119 = vmatprep.subr.bf16.mxu0 0
        %6120 = vmatpush1.bf16.msra.mxu0 %v6096
        %6121 = vmatprep.subr.bf16.mxu0 0
        %6122 = vmatpush1.bf16.msra.mxu0 %v6098
        %6123 = vmatprep.subr.bf16.mxu0 0
        %6124 = vmatpush1.bf16.msra.mxu0 0
        %6125 = vmatprep.subr.bf16.mxu0 0
        %6126 = vmatpush1.bf16.msra.mxu0 0
        %6127 = vmatprep.subr.bf16.mxu0 0
        %6128 = vmatpush1.bf16.msra.mxu0 0
        %6129 = vmatprep.subr.bf16.mxu0 0
        %6130 = vmatpush1.bf16.msra.mxu0 0
        %6131 = vmatprep.subr.bf16.mxu0 0
        %6132 = vmatpush1.bf16.msra.mxu0 0
        %6133 = vmatprep.subr.bf16.mxu0 0
        %6134 = vmatpush1.bf16.msra.mxu0 0
        %6135 = vmatprep.subr.bf16.mxu0 0
        %6136 = vmatpush1.bf16.msra.mxu0 0
        %6137 = vmatprep.subr.bf16.mxu0 0
        %6138 = vmatpush1.bf16.msra.mxu0 0
        %6139 = vmatprep.subr.bf16.mxu0 0
        %6140 = vmatpush1.bf16.msra.mxu0 0
        %6141 = vmatprep.subr.bf16.mxu0 0
        %6142 = vmatpush1.bf16.msra.mxu0 0
        %6143 = vmatprep.subr.bf16.mxu0 0
        %6144 = vmatpush1.bf16.msra.mxu0 0
        %6145 = vmatprep.subr.bf16.mxu0 0
        %6146 = vmatpush1.bf16.msra.mxu0 0
        %6147 = vmatprep.mubr.bf16.mxu0 0
        %6148 = vmatmul.mubr.bf16.gmra.mrb[0].mxu0 %v6104
        %v6149 = vpop.f32.mrb[0].mxu0
        %v6150 = vadd.f32 0.0, %v6149
        %v6151 = vpop.f32.mrb[0].mxu0
        %v6152 = vpop.f32.mrb[0].mxu0
        %v6153 = vadd.f32 0.0, %v6152
        %v6154 = vpop.f32.mrb[0].mxu0
        %6155 = vmatprep.mubr.bf16.mxu0 0
        %6156 = vmatmul.mubr.bf16.gmra.mrb[0].mxu0 %v6107
        %v6157 = vpop.f32.mrb[0].mxu0
        %v6158 = vadd.f32 0.0, %v6157
        %v6159 = vpop.f32.mrb[0].mxu0
        %v6160 = vpop.f32.mrb[0].mxu0
        %v6161 = vadd.f32 0.0, %v6160
        %v6162 = vpop.f32.mrb[0].mxu0
        %6163 = vmatprep.mubr.bf16.mxu0 0
        %6164 = vmatmul.mubr.bf16.gmra.mrb[0].mxu0 %v6110
        %v6165 = vpop.f32.mrb[0].mxu0
        %v6166 = vadd.f32 0.0, %v6165
        %v6167 = vpop.f32.mrb[0].mxu0
        %v6168 = vpop.f32.mrb[0].mxu0
        %v6169 = vadd.f32 0.0, %v6168
        %v6170 = vpop.f32.mrb[0].mxu0
        %6171 = vmatprep.mubr.bf16.mxu0 0
        %6172 = vmatmul.mubr.bf16.gmra.mrb[0].mxu0 %v6113
        %v6173 = vpop.f32.mrb[0].mxu0
        %v6174 = vadd.f32 0.0, %v6173
        %v6175 = vpop.f32.mrb[0].mxu0
        %v6176 = vpop.f32.mrb[0].mxu0
        %v6177 = vadd.f32 0.0, %v6176
        %v6178 = vpop.f32.mrb[0].mxu0
        %6179 = vdwg.mxu0
        %v6180 = vrcp.pop %v6065
        %v6181 = vrcp.pop %v6068
        %v6182 = vrcp.pop %v6071
        %v6183 = vrcp.pop %v6074
        %v6184 = vrcp.pop %v6077
        %v6185 = vrcp.pop %v6080
        %v6186 = vrcp.pop %v6083
        %v6187 = vrcp.pop %v6086
        %v6188 = vmul.f32 %v6150, %v6180
        %v6189 = vmul.f32 %v6153, %v6181
        %v6190 = vmul.f32 %v6158, %v6182
        %v6191 = vmul.f32 %v6161, %v6183
        %v6192 = vmul.f32 %v6166, %v6184
        %v6193 = vmul.f32 %v6169, %v6185
        %v6194 = vmul.f32 %v6174, %v6186
        %v6195 = vmul.f32 %v6177, %v6187
        %6204 = vrot.lane.b32.xlu0 %v5582, 32
        %v6205 = vpop.permute.xlu0 %6204
        %6206 = vrot.lane.b32.xlu0 %v5583, 32
        %v6207 = vpop.permute.xlu0 %6206
        %6208 = vrot.lane.b32.xlu0 %v5584, 32
        %v6209 = vpop.permute.xlu0 %6208
        %6210 = vrot.lane.b32.xlu0 %v5585, 32
        %v6211 = vpop.permute.xlu0 %6210
        %6212 = vrot.lane.b32.xlu0 %v5586, 32
        %v6213 = vpop.permute.xlu0 %6212
        %6214 = vrot.lane.b32.xlu0 %v5587, 32
        %v6215 = vpop.permute.xlu0 %6214
        %6216 = vrot.lane.b32.xlu0 %v5588, 32
        %v6217 = vpop.permute.xlu0 %6216
        %6218 = vrot.lane.b32.xlu0 %v5589, 32
        %v6219 = vpop.permute.xlu0 %6218
        %6236 = vrot.lane.b32.xlu0 %v5885, 64
        %v6237 = vpop.permute.xlu0 %6236
        %6238 = vrot.lane.b32.xlu0 %v5886, 64
        %v6239 = vpop.permute.xlu0 %6238
        %6240 = vrot.lane.b32.xlu0 %v5887, 64
        %v6241 = vpop.permute.xlu0 %6240
        %6242 = vrot.lane.b32.xlu0 %v5888, 64
        %v6243 = vpop.permute.xlu0 %6242
        %6244 = vrot.lane.b32.xlu0 %v5889, 64
        %v6245 = vpop.permute.xlu0 %6244
        %6246 = vrot.lane.b32.xlu0 %v5890, 64
        %v6247 = vpop.permute.xlu0 %6246
        %6248 = vrot.lane.b32.xlu0 %v5891, 64
        %v6249 = vpop.permute.xlu0 %6248
        %6250 = vrot.lane.b32.xlu0 %v5892, 64
        %v6251 = vpop.permute.xlu0 %6250
        %6268 = vrot.lane.b32.xlu0 %v6188, 96
        %v6269 = vpop.permute.xlu0 %6268
        %6270 = vrot.lane.b32.xlu0 %v6189, 96
        %v6271 = vpop.permute.xlu0 %6270
        %6272 = vrot.lane.b32.xlu0 %v6190, 96
        %v6273 = vpop.permute.xlu0 %6272
        %6274 = vrot.lane.b32.xlu0 %v6191, 96
        %v6275 = vpop.permute.xlu0 %6274
        %6276 = vrot.lane.b32.xlu0 %v6192, 96
        %v6277 = vpop.permute.xlu0 %6276
        %6278 = vrot.lane.b32.xlu0 %v6193, 96
        %v6279 = vpop.permute.xlu0 %6278
        %6280 = vrot.lane.b32.xlu0 %v6194, 96
        %v6281 = vpop.permute.xlu0 %6280
        %6282 = vrot.lane.b32.xlu0 %v6195, 96
        %v6283 = vpop.permute.xlu0 %6282
        %v6292 = vsel %vm1066, %v5267, %v6205
        %v6293 = vsel %vm1066, %v5268, %v6207
        %v6294 = vsel %vm1066, %v5269, %v6209
        %v6295 = vsel %vm1066, %v5270, %v6211
        %v6296 = vsel %vm1066, %v5271, %v6213
        %v6297 = vsel %vm1066, %v5272, %v6215
        %v6298 = vsel %vm1066, %v5273, %v6217
        %v6299 = vsel %vm1066, %v5274, %v6219
        %v6300 = vsel %vm1156, %v6292, %v6237
        %v6301 = vsel %vm1156, %v6293, %v6239
        %v6302 = vsel %vm1156, %v6294, %v6241
        %v6303 = vsel %vm1156, %v6295, %v6243
        %v6304 = vsel %vm1156, %v6296, %v6245
        %v6305 = vsel %vm1156, %v6297, %v6247
        %v6306 = vsel %vm1156, %v6298, %v6249
        %v6307 = vsel %vm1156, %v6299, %v6251
        %v6308 = vsel %vm2359, %v6300, %v6269
        %v6309 = vsel %vm2359, %v6301, %v6271
        %v6310 = vsel %vm2359, %v6302, %v6273
        %v6311 = vsel %vm2359, %v6303, %v6275
        %v6312 = vsel %vm2359, %v6304, %v6277
        %v6313 = vsel %vm2359, %v6305, %v6279
        %v6314 = vsel %vm2359, %v6306, %v6281
        %v6315 = vsel %vm2359, %v6307, %v6283
        %v6316 = vpack.c.bf16 %v2361, %v2360
        %v6317 = vpack.c.bf16 %v2363, %v2362
        %v6318 = vpack.c.bf16 %v2365, %v2364
        %v6319 = vpack.c.bf16 %v2367, %v2366
        %v6320 = vpack.c.bf16 %v3677, %v3676
        %v6321 = vpack.c.bf16 %v3679, %v3678
        %v6322 = vpack.c.bf16 %v3681, %v3680
        %v6323 = vpack.c.bf16 %v3683, %v3682
        %v6324 = vpack.c.bf16 %v4993, %v4992
        %v6325 = vpack.c.bf16 %v4995, %v4994
        %v6326 = vpack.c.bf16 %v4997, %v4996
        %v6327 = vpack.c.bf16 %v4999, %v4998
        %v6328 = vpack.c.bf16 %v6309, %v6308
        %v6329 = vpack.c.bf16 %v6311, %v6310
        %v6330 = vpack.c.bf16 %v6313, %v6312
        %v6331 = vpack.c.bf16 %v6315, %v6314
        %v6332 = vld [vmem:[#allocation10] sm:$0xf]
        %v6333 = vld [vmem:[#allocation10 + $0x4] sm:$0xf]
        %v6334 = vld [vmem:[#allocation10 + $0x8] sm:$0xf]
        %v6335 = vld [vmem:[#allocation10 + $0xc] sm:$0xf]
        %v6336 = vld [vmem:[#allocation10 + $0x10] sm:$0xf]
        %v6337 = vld [vmem:[#allocation10 + $0x14] sm:$0xf]
        %v6338 = vld [vmem:[#allocation10 + $0x18] sm:$0xf]
        %v6339 = vld [vmem:[#allocation10 + $0x1c] sm:$0xf]
        %v6340 = vld [vmem:[#allocation10 + $0x20] sm:$0xf]
        %v6341 = vld [vmem:[#allocation10 + $0x24] sm:$0xf]
        %v6342 = vld [vmem:[#allocation10 + $0x28] sm:$0xf]
        %v6343 = vld [vmem:[#allocation10 + $0x2c] sm:$0xf]
        %v6344 = vld [vmem:[#allocation10 + $0x30] sm:$0xf]
        %v6345 = vld [vmem:[#allocation10 + $0x34] sm:$0xf]
        %v6346 = vld [vmem:[#allocation10 + $0x38] sm:$0xf]
        %v6347 = vld [vmem:[#allocation10 + $0x3c] sm:$0xf]
        %v6348 = vld [vmem:[#allocation11] sm:$0x1]
        %v6350 = vlaneseq
        %v6351 = vshrl.u32 %v6350, 7
        %v6352 = vsub.s32 0, %v6351
        %v6353 = vrot.slane %v6348, %v6352
        %v6371 = vunpack.c.l.b16 %v6332
        %v6372 = vunpack.c.l.b16 %v6333
        %v6373 = vunpack.c.l.b16 %v6334
        %v6374 = vunpack.c.l.b16 %v6335
        %v6375 = vunpack.c.l.b16 %v6336
        %v6376 = vunpack.c.l.b16 %v6337
        %v6377 = vunpack.c.l.b16 %v6338
        %v6378 = vunpack.c.l.b16 %v6339
        %v6379 = vunpack.c.l.b16 %v6340
        %v6380 = vunpack.c.l.b16 %v6341
        %v6381 = vunpack.c.l.b16 %v6342
        %v6382 = vunpack.c.l.b16 %v6343
        %v6383 = vunpack.c.l.b16 %v6344
        %v6384 = vunpack.c.l.b16 %v6345
        %v6385 = vunpack.c.l.b16 %v6346
        %v6386 = vunpack.c.l.b16 %v6347
        %v6387 = vpack.c.b16 %v6372, %v6371
        %v6388 = vpack.c.b16 %v6374, %v6373
        %v6389 = vpack.c.b16 %v6376, %v6375
        %v6390 = vpack.c.b16 %v6378, %v6377
        %v6391 = vpack.c.b16 %v6380, %v6379
        %v6392 = vpack.c.b16 %v6382, %v6381
        %v6393 = vpack.c.b16 %v6384, %v6383
        %v6394 = vpack.c.b16 %v6386, %v6385
        %6403 = vmatprep.subr.bf16.mxu0 0
        %6404 = vmatpush1.bf16.msra.mxu0 %v6387
        %6405 = vmatprep.subr.bf16.mxu0 0
        %6406 = vmatpush1.bf16.msra.mxu0 %v6388
        %6407 = vmatprep.subr.bf16.mxu0 0
        %6408 = vmatpush1.bf16.msra.mxu0 %v6389
        %6409 = vmatprep.subr.bf16.mxu0 0
        %6410 = vmatpush1.bf16.msra.mxu0 %v6390
        %6411 = vmatprep.subr.bf16.mxu0 0
        %6412 = vmatpush1.bf16.msra.mxu0 %v6391
        %6413 = vmatprep.subr.bf16.mxu0 0
        %6414 = vmatpush1.bf16.msra.mxu0 %v6392
        %6415 = vmatprep.subr.bf16.mxu0 0
        %6416 = vmatpush1.bf16.msra.mxu0 %v6393
        %6417 = vmatprep.subr.bf16.mxu0 0
        %6418 = vmatpush1.bf16.msra.mxu0 %v6394
        %6419 = vmatprep.subr.bf16.mxu0 0
        %6420 = vmatpush1.bf16.msra.mxu0 0
        %6421 = vmatprep.subr.bf16.mxu0 0
        %6422 = vmatpush1.bf16.msra.mxu0 0
        %6423 = vmatprep.subr.bf16.mxu0 0
        %6424 = vmatpush1.bf16.msra.mxu0 0
        %6425 = vmatprep.subr.bf16.mxu0 0
        %6426 = vmatpush1.bf16.msra.mxu0 0
        %6427 = vmatprep.subr.bf16.mxu0 0
        %6428 = vmatpush1.bf16.msra.mxu0 0
        %6429 = vmatprep.subr.bf16.mxu0 0
        %6430 = vmatpush1.bf16.msra.mxu0 0
        %6431 = vmatprep.subr.bf16.mxu0 0
        %6432 = vmatpush1.bf16.msra.mxu0 0
        %6433 = vmatprep.subr.bf16.mxu0 0
        %6434 = vmatpush1.bf16.msra.mxu0 0
        %6435 = vmatprep.mubr.bf16.mxu0 0
        %6436 = vmatmul.mubr.bf16.gmra.mrb[0].mxu0 %v6316
        %v6437 = vpop.f32.mrb[0].mxu0
        %v6438 = vadd.f32 %v6353, %v6437
        %v6439 = vpop.f32.mrb[0].mxu0
        %v6440 = vpop.f32.mrb[0].mxu0
        %v6441 = vadd.f32 %v6353, %v6440
        %v6442 = vpop.f32.mrb[0].mxu0
        %6443 = vmatprep.mubr.bf16.mxu0 0
        %6444 = vmatmul.mubr.bf16.gmra.mrb[0].mxu0 %v6317
        %v6445 = vpop.f32.mrb[0].mxu0
        %v6446 = vadd.f32 %v6353, %v6445
        %v6447 = vpop.f32.mrb[0].mxu0
        %v6448 = vpop.f32.mrb[0].mxu0
        %v6449 = vadd.f32 %v6353, %v6448
        %v6450 = vpop.f32.mrb[0].mxu0
        %6451 = vmatprep.mubr.bf16.mxu0 0
        %6452 = vmatmul.mubr.bf16.gmra.mrb[0].mxu0 %v6318
        %v6453 = vpop.f32.mrb[0].mxu0
        %v6454 = vadd.f32 %v6353, %v6453
        %v6455 = vpop.f32.mrb[0].mxu0
        %v6456 = vpop.f32.mrb[0].mxu0
        %v6457 = vadd.f32 %v6353, %v6456
        %v6458 = vpop.f32.mrb[0].mxu0
        %6459 = vmatprep.mubr.bf16.mxu0 0
        %6460 = vmatmul.mubr.bf16.gmra.mrb[0].mxu0 %v6319
        %v6461 = vpop.f32.mrb[0].mxu0
        %v6462 = vadd.f32 %v6353, %v6461
        %v6463 = vpop.f32.mrb[0].mxu0
        %v6464 = vpop.f32.mrb[0].mxu0
        %v6465 = vadd.f32 %v6353, %v6464
        %v6466 = vpop.f32.mrb[0].mxu0
        %6467 = vmatprep.mubr.bf16.mxu0 0
        %6468 = vmatmul.mubr.bf16.gmra.mrb[0].mxu0 %v6320
        %v6469 = vpop.f32.mrb[0].mxu0
        %v6470 = vadd.f32 %v6353, %v6469
        %v6471 = vpop.f32.mrb[0].mxu0
        %v6472 = vpop.f32.mrb[0].mxu0
        %v6473 = vadd.f32 %v6353, %v6472
        %v6474 = vpop.f32.mrb[0].mxu0
        %6475 = vmatprep.mubr.bf16.mxu0 0
        %6476 = vmatmul.mubr.bf16.gmra.mrb[0].mxu0 %v6321
        %v6477 = vpop.f32.mrb[0].mxu0
        %v6478 = vadd.f32 %v6353, %v6477
        %v6479 = vpop.f32.mrb[0].mxu0
        %v6480 = vpop.f32.mrb[0].mxu0
        %v6481 = vadd.f32 %v6353, %v6480
        %v6482 = vpop.f32.mrb[0].mxu0
        %6483 = vmatprep.mubr.bf16.mxu0 0
        %6484 = vmatmul.mubr.bf16.gmra.mrb[0].mxu0 %v6322
        %v6485 = vpop.f32.mrb[0].mxu0
        %v6486 = vadd.f32 %v6353, %v6485
        %v6487 = vpop.f32.mrb[0].mxu0
        %v6488 = vpop.f32.mrb[0].mxu0
        %v6489 = vadd.f32 %v6353, %v6488
        %v6490 = vpop.f32.mrb[0].mxu0
        %6491 = vmatprep.mubr.bf16.mxu0 0
        %6492 = vmatmul.mubr.bf16.gmra.mrb[0].mxu0 %v6323
        %v6493 = vpop.f32.mrb[0].mxu0
        %v6494 = vadd.f32 %v6353, %v6493
        %v6495 = vpop.f32.mrb[0].mxu0
        %v6496 = vpop.f32.mrb[0].mxu0
        %v6497 = vadd.f32 %v6353, %v6496
        %v6498 = vpop.f32.mrb[0].mxu0
        %6499 = vmatprep.mubr.bf16.mxu0 0
        %6500 = vmatmul.mubr.bf16.gmra.mrb[0].mxu0 %v6324
        %v6501 = vpop.f32.mrb[0].mxu0
        %v6502 = vadd.f32 %v6353, %v6501
        %v6503 = vpop.f32.mrb[0].mxu0
        %v6504 = vpop.f32.mrb[0].mxu0
        %v6505 = vadd.f32 %v6353, %v6504
        %v6506 = vpop.f32.mrb[0].mxu0
        %6507 = vmatprep.mubr.bf16.mxu0 0
        %6508 = vmatmul.mubr.bf16.gmra.mrb[0].mxu0 %v6325
        %v6509 = vpop.f32.mrb[0].mxu0
        %v6510 = vadd.f32 %v6353, %v6509
        %v6511 = vpop.f32.mrb[0].mxu0
        %v6512 = vpop.f32.mrb[0].mxu0
        %v6513 = vadd.f32 %v6353, %v6512
        %v6514 = vpop.f32.mrb[0].mxu0
        %6515 = vmatprep.mubr.bf16.mxu0 0
        %6516 = vmatmul.mubr.bf16.gmra.mrb[0].mxu0 %v6326
        %v6517 = vpop.f32.mrb[0].mxu0
        %v6518 = vadd.f32 %v6353, %v6517
        %v6519 = vpop.f32.mrb[0].mxu0
        %v6520 = vpop.f32.mrb[0].mxu0
        %v6521 = vadd.f32 %v6353, %v6520
        %v6522 = vpop.f32.mrb[0].mxu0
        %6523 = vmatprep.mubr.bf16.mxu0 0
        %6524 = vmatmul.mubr.bf16.gmra.mrb[0].mxu0 %v6327
        %v6525 = vpop.f32.mrb[0].mxu0
        %v6526 = vadd.f32 %v6353, %v6525
        %v6527 = vpop.f32.mrb[0].mxu0
        %v6528 = vpop.f32.mrb[0].mxu0
        %v6529 = vadd.f32 %v6353, %v6528
        %v6530 = vpop.f32.mrb[0].mxu0
        %6531 = vmatprep.mubr.bf16.mxu0 0
        %6532 = vmatmul.mubr.bf16.gmra.mrb[0].mxu0 %v6328
        %v6533 = vpop.f32.mrb[0].mxu0
        %v6534 = vadd.f32 %v6353, %v6533
        %v6535 = vpop.f32.mrb[0].mxu0
        %v6536 = vpop.f32.mrb[0].mxu0
        %v6537 = vadd.f32 %v6353, %v6536
        %v6538 = vpop.f32.mrb[0].mxu0
        %6539 = vmatprep.mubr.bf16.mxu0 0
        %6540 = vmatmul.mubr.bf16.gmra.mrb[0].mxu0 %v6329
        %v6541 = vpop.f32.mrb[0].mxu0
        %v6542 = vadd.f32 %v6353, %v6541
        %v6543 = vpop.f32.mrb[0].mxu0
        %v6544 = vpop.f32.mrb[0].mxu0
        %v6545 = vadd.f32 %v6353, %v6544
        %v6546 = vpop.f32.mrb[0].mxu0
        %6547 = vmatprep.mubr.bf16.mxu0 0
        %6548 = vmatmul.mubr.bf16.gmra.mrb[0].mxu0 %v6330
        %v6549 = vpop.f32.mrb[0].mxu0
        %v6550 = vadd.f32 %v6353, %v6549
        %v6551 = vpop.f32.mrb[0].mxu0
        %v6552 = vpop.f32.mrb[0].mxu0
        %v6553 = vadd.f32 %v6353, %v6552
        %v6554 = vpop.f32.mrb[0].mxu0
        %6555 = vmatprep.mubr.bf16.mxu0 0
        %6556 = vmatmul.mubr.bf16.gmra.mrb[0].mxu0 %v6331
        %v6557 = vpop.f32.mrb[0].mxu0
        %v6558 = vadd.f32 %v6353, %v6557
        %v6559 = vpop.f32.mrb[0].mxu0
        %v6560 = vpop.f32.mrb[0].mxu0
        %v6561 = vadd.f32 %v6353, %v6560
        %v6562 = vpop.f32.mrb[0].mxu0
        %6563 = vdwg.mxu0
        %v6564 = vpack.c.bf16 %v6441, %v6438
        %v6565 = vpack.c.bf16 %v6449, %v6446
        %v6566 = vpack.c.bf16 %v6457, %v6454
        %v6567 = vpack.c.bf16 %v6465, %v6462
        %v6568 = vpack.c.bf16 %v6473, %v6470
        %v6569 = vpack.c.bf16 %v6481, %v6478
        %v6570 = vpack.c.bf16 %v6489, %v6486
        %v6571 = vpack.c.bf16 %v6497, %v6494
        %v6572 = vpack.c.bf16 %v6505, %v6502
        %v6573 = vpack.c.bf16 %v6513, %v6510
        %v6574 = vpack.c.bf16 %v6521, %v6518
        %v6575 = vpack.c.bf16 %v6529, %v6526
        %v6576 = vpack.c.bf16 %v6537, %v6534
        %v6577 = vpack.c.bf16 %v6545, %v6542
        %v6578 = vpack.c.bf16 %v6553, %v6550
        %v6579 = vpack.c.bf16 %v6561, %v6558
        %v6596 = vunpack.c.l.b16 %v6564
        %v6597 = vunpack.c.h.b16 %v6564
        %v6598 = vunpack.c.l.b16 %v6565
        %v6599 = vunpack.c.h.b16 %v6565
        %v6600 = vunpack.c.l.b16 %v6566
        %v6601 = vunpack.c.h.b16 %v6566
        %v6602 = vunpack.c.l.b16 %v6567
        %v6603 = vunpack.c.h.b16 %v6567
        %v6604 = vunpack.c.l.b16 %v6568
        %v6605 = vunpack.c.h.b16 %v6568
        %v6606 = vunpack.c.l.b16 %v6569
        %v6607 = vunpack.c.h.b16 %v6569
        %v6608 = vunpack.c.l.b16 %v6570
        %v6609 = vunpack.c.h.b16 %v6570
        %v6610 = vunpack.c.l.b16 %v6571
        %v6611 = vunpack.c.h.b16 %v6571
        %v6612 = vunpack.c.l.b16 %v6572
        %v6613 = vunpack.c.h.b16 %v6572
        %v6614 = vunpack.c.l.b16 %v6573
        %v6615 = vunpack.c.h.b16 %v6573
        %v6616 = vunpack.c.l.b16 %v6574
        %v6617 = vunpack.c.h.b16 %v6574
        %v6618 = vunpack.c.l.b16 %v6575
        %v6619 = vunpack.c.h.b16 %v6575
        %v6620 = vunpack.c.l.b16 %v6576
        %v6621 = vunpack.c.h.b16 %v6576
        %v6622 = vunpack.c.l.b16 %v6577
        %v6623 = vunpack.c.h.b16 %v6577
        %v6624 = vunpack.c.l.b16 %v6578
        %v6625 = vunpack.c.h.b16 %v6578
        %v6626 = vunpack.c.l.b16 %v6579
        %v6627 = vunpack.c.h.b16 %v6579
        %v6628 = vpack.c.b16 %v6596, %v6596
        %v6629 = vpack.c.b16 %v6597, %v6597
        %v6630 = vpack.c.b16 %v6598, %v6598
        %v6631 = vpack.c.b16 %v6599, %v6599
        %v6632 = vpack.c.b16 %v6600, %v6600
        %v6633 = vpack.c.b16 %v6601, %v6601
        %v6634 = vpack.c.b16 %v6602, %v6602
        %v6635 = vpack.c.b16 %v6603, %v6603
        %v6636 = vpack.c.b16 %v6604, %v6604
        %v6637 = vpack.c.b16 %v6605, %v6605
        %v6638 = vpack.c.b16 %v6606, %v6606
        %v6639 = vpack.c.b16 %v6607, %v6607
        %v6640 = vpack.c.b16 %v6608, %v6608
        %v6641 = vpack.c.b16 %v6609, %v6609
        %v6642 = vpack.c.b16 %v6610, %v6610
        %v6643 = vpack.c.b16 %v6611, %v6611
        %v6644 = vpack.c.b16 %v6612, %v6612
        %v6645 = vpack.c.b16 %v6613, %v6613
        %v6646 = vpack.c.b16 %v6614, %v6614
        %v6647 = vpack.c.b16 %v6615, %v6615
        %v6648 = vpack.c.b16 %v6616, %v6616
        %v6649 = vpack.c.b16 %v6617, %v6617
        %v6650 = vpack.c.b16 %v6618, %v6618
        %v6651 = vpack.c.b16 %v6619, %v6619
        %v6652 = vpack.c.b16 %v6620, %v6620
        %v6653 = vpack.c.b16 %v6621, %v6621
        %v6654 = vpack.c.b16 %v6622, %v6622
        %v6655 = vpack.c.b16 %v6623, %v6623
        %v6656 = vpack.c.b16 %v6624, %v6624
        %v6657 = vpack.c.b16 %v6625, %v6625
        %v6658 = vpack.c.b16 %v6626, %v6626
        %v6659 = vpack.c.b16 %v6627, %v6627
        %6692 = vst [vmem:[%s339] sm:$0xf] %v6628
        %6693 = vst [vmem:[%s339 + $0x4] sm:$0xf] %v6629
        %6694 = vst [vmem:[%s339 + $0x8] sm:$0xf] %v6630
        %6695 = vst [vmem:[%s339 + $0xc] sm:$0xf] %v6631
        %6696 = vst [vmem:[%s339 + $0x10] sm:$0xf] %v6632
        %6697 = vst [vmem:[%s339 + $0x14] sm:$0xf] %v6633
        %6698 = vst [vmem:[%s339 + $0x18] sm:$0xf] %v6634
        %6699 = vst [vmem:[%s339 + $0x1c] sm:$0xf] %v6635
        %6700 = vst [vmem:[%s339 + $0x20] sm:$0xf] %v6636
        %6701 = vst [vmem:[%s339 + $0x24] sm:$0xf] %v6637
        %6702 = vst [vmem:[%s339 + $0x28] sm:$0xf] %v6638
        %6703 = vst [vmem:[%s339 + $0x2c] sm:$0xf] %v6639
        %6704 = vst [vmem:[%s339 + $0x30] sm:$0xf] %v6640
        %6705 = vst [vmem:[%s339 + $0x34] sm:$0xf] %v6641
        %6706 = vst [vmem:[%s339 + $0x38] sm:$0xf] %v6642
        %6707 = vst [vmem:[%s339 + $0x3c] sm:$0xf] %v6643
        %6708 = vst [vmem:[%s339 + $0x40] sm:$0xf] %v6644
        %6709 = vst [vmem:[%s339 + $0x44] sm:$0xf] %v6645
        %6710 = vst [vmem:[%s339 + $0x48] sm:$0xf] %v6646
        %6711 = vst [vmem:[%s339 + $0x4c] sm:$0xf] %v6647
        %6712 = vst [vmem:[%s339 + $0x50] sm:$0xf] %v6648
        %6713 = vst [vmem:[%s339 + $0x54] sm:$0xf] %v6649
        %6714 = vst [vmem:[%s339 + $0x58] sm:$0xf] %v6650
        %6715 = vst [vmem:[%s339 + $0x5c] sm:$0xf] %v6651
        %6716 = vst [vmem:[%s339 + $0x60] sm:$0xf] %v6652
        %6717 = vst [vmem:[%s339 + $0x64] sm:$0xf] %v6653
        %6718 = vst [vmem:[%s339 + $0x68] sm:$0xf] %v6654
        %6719 = vst [vmem:[%s339 + $0x6c] sm:$0xf] %v6655
        %6720 = vst [vmem:[%s339 + $0x70] sm:$0xf] %v6656
        %6721 = vst [vmem:[%s339 + $0x74] sm:$0xf] %v6657
        %6722 = vst [vmem:[%s339 + $0x78] sm:$0xf] %v6658
        %6723 = vst [vmem:[%s339 + $0x7c] sm:$0xf] %v6659
        %s6724 = sand.u32 %s165, 1
        %s6725 = scalar_lea.sflag [#allocation4], %s6724
        %s6726 = sand.u32 %s165, 1
        %s6727 = smul.addr %s6726, 128
        %s6728 = scalar_lea.vmem [#allocation13], %s6727
        // Predicated region
        $region69: #{tpu_custom_call.1} parent=43 // pred_check
          %p6729 = pneg %p175
        $region70: #{tpu_custom_call.1} parent=43 // pred_check_branch
          %6731 = sbr.rel (%p6729) target = $region72
        $region71: #{tpu_custom_call.1} parent=43 // pred_region
          %s6732 = smul.u32 4, %s26
          %s6734 = ssub.s32 2048, 2048
          %6735 = vsyncadd %s6725, %s6734
          %s6736 = smul.addr %s6732, 8
          %s6737 = smul.addr %s6736, 64
          %s6738 = scalar_lea.hbm %s6, %s6737
          %s6739 = sshll.u32 %s6728, 4
          %s6740 = int_to_ptr.vmem [resolvable:$true] %s6739
          %6745 = dma.vmem_to_hbm [thread:$0]  %s6740, 2048, %s6738, %s6725, 64, 64, 4
        $region72: #{tpu_custom_call.1} parent=43 // pred_fallthru
          _
      $region44: #{tpu_custom_call.1} parent=5 // pred_fallthru
        _
      %p6746 = scmp.le.s32.totalorder 2, %s21
      // Predicated region
      $region73: #{tpu_custom_call.1} parent=5 // pred_check
        %p6747 = pneg %p6746
      $region74: #{tpu_custom_call.1} parent=5 // pred_check_branch
        %6749 = sbr.rel (%p6747) target = $region76
      $region75: #{tpu_custom_call.1} parent=5 // pred_region
        %s6750 = ssub.s32 %s21, 2
        // Predicated region
        $region77: #{tpu_custom_call.1} parent=75 // pred_check
          %p6751 = pneg %p181
        $region78: #{tpu_custom_call.1} parent=75 // pred_check_branch
          %6753 = sbr.rel (%p6751) target = $region80
        $region79: #{tpu_custom_call.1} parent=75 // pred_region
          %s6754 = sand.u32 %s166, 1
          %s6755 = scalar_lea.sflag [#allocation4], %s6754
          %s6756 = sand.u32 %s166, 1
          %s6757 = smul.addr %s6756, 128
          %s6758 = scalar_lea.vmem [#allocation13], %s6757
          %6759 = dma.done %s6755, 2048
        $region80: #{tpu_custom_call.1} parent=75 // pred_fallthru
          _
      $region76: #{tpu_custom_call.1} parent=5 // pred_fallthru
        _
    $region6: #{tpu_custom_call.1} parent=1 // loop_footer
      %s25 = sadd.s32 1, %s21
    $region7: #{tpu_custom_call.1} parent=1 // loop_footer_branch
      %20 = sbr.rel target = $region3
    $region8: #{tpu_custom_call.1} parent=1 // loop_exit
      _
    %6760 = vsyncpa [#allocation3], 1
    %s6761 = scalar_lea.sflag [#allocation3], 1
    %6762 = vsyncpa %s6761, 1
    %6763 = vsyncpa [#allocation6], 1
    %6764 = vsyncpa [#allocation9], 1
    %6765 = vsyncpa [#allocation12], 1
    %6766 = vsyncpa [#allocation4], 1
    %s6767 = scalar_lea.sflag [#allocation4], 1
    %6768 = vsyncpa %s6767, 1

</llo_original>
